<compile_context>
chip_gen: v7x
topology: tpu7x:2x2x1
jax: 0.10.0
libtpu: 0.0.40
codegen_flags: <defaults>
</compile_context>

<pallas_src>
import jax
import jax.numpy as jnp
from jax.experimental import pallas as pl
from jax.experimental.pallas import tpu as pltpu


def convnet_kernel(patches_ref, wc_ref, bc_ref, wf_ref, bf_ref, out_ref):
    tb = out_ref.shape[1]                       # batch tile size (lanes)

    # (1) Conv as ONE lane-dense GEMM: [8, 256] @ [256, 64*TB] -> [8, 64*TB].
    #     Sublanes = conv channels (6 real + 2 zero-pad), lanes = o*TB + b.
    act = jnp.dot(wc_ref[...], patches_ref[...],
                  preferred_element_type=jnp.float32)

    bc = bc_ref[...]                            # [8, 1] per-channel conv bias
    wf = wf_ref[...]                            # [16, 8, 8] fc weight per cell
    logits = jnp.zeros((8, tb), jnp.float32)

    # (2)+(3) 2x2 maxpool over the 8x8 conv grid (before bias/tanh -- exact
    # because tanh is monotone and the bias is per-channel), then bias + tanh,
    # then accumulate the fc as 16 tiny MXU matmuls.  Pool slices are whole
    # 128-lane groups (TB is a multiple of 128) -> pure cross-vreg maxes.
    for ph in range(4):
        for pw in range(4):
            p = ph * 4 + pw
            pooled = None
            for dh in range(2):
                for dw in range(2):
                    o = (2 * ph + dh) * 8 + (2 * pw + dw)
                    a = act[:, o * tb:(o + 1) * tb]                 # [8, TB]
                    pooled = a if pooled is None else jnp.maximum(pooled, a)
            feat = jnp.tanh(pooled + bc)                            # [8, TB]
            logits = logits + jnp.dot(wf[p], feat,
                                      preferred_element_type=jnp.float32)

    out_ref[...] = logits + bf_ref[...]                             # [8, TB]


def _convnet_forward(x, conv_w, conv_b, fc_w, fc_b, *, tb=128):
    """x: [B, 3, 64, 64] NCHW float32. Returns [B, 2] logits."""
    B = x.shape[0]
    assert x.shape[1:] == (3, 64, 64)

    # Batch tile: multiple of 128 so pooling lane-slices are vreg-aligned.
    tb = max(128, 128 * (tb // 128))
    bp = ((B + tb - 1) // tb) * tb              # padded batch
    nt = bp // tb                               # grid steps

    # --- glue: im2col built DIRECTLY in the kernel layout (t, f, o*TB + b) ---
    xp = jnp.pad(x, ((0, bp - B), (0, 0), (0, 0), (0, 0)))       # [BP,3,64,64]
    cols = []
    for oh in range(8):
        for ow in range(8):
            cols.append(
                xp[:, :, 7 * oh:7 * oh + 9, 7 * ow:7 * ow + 9].reshape(bp, 243))
    patches = jnp.stack(cols, axis=0)                    # [64, BP, 243] (o,b,f)
    patches = (patches.reshape(64, nt, tb, 243)          # (o, t, j, f)
               .transpose(1, 3, 0, 2)                    # (t, f, o, j)
               .reshape(nt, 243, 64 * tb))
    patches = jnp.pad(patches, ((0, 0), (0, 13), (0, 0)))  # [NT, 256, 64*TB]

    # --- glue: parameter re-layout (transposed orientation, zero-padded) ---
    wc = jnp.pad(conv_w.reshape(6, 243), ((0, 2), (0, 13)))      # [8, 256]
    bc = jnp.pad(conv_b.reshape(6, 1), ((0, 2), (0, 0)))         # [8, 1]
    # torch flatten order f = c*16 + p (p = ph*4 + pw); per-cell [n, c] blocks.
    wf = jnp.transpose(fc_w.reshape(2, 6, 16), (2, 0, 1))        # [16, 2, 6]
    wf = jnp.pad(wf, ((0, 0), (0, 6), (0, 2)))                   # [16, 8, 8]
    bf = jnp.pad(fc_b.reshape(2, 1), ((0, 6), (0, 0)))           # [8, 1]

    out = pl.pallas_call(
        convnet_kernel,
        out_shape=jax.ShapeDtypeStruct((8, bp), jnp.float32),
        grid=(nt,),
        in_specs=[
            # one contiguous, lane-dense patch slab per batch tile
            pl.BlockSpec((None, 256, 64 * tb), lambda i: (i, 0, 0)),
            # weights / biases: full blocks, constant block index (resident)
            pl.BlockSpec((8, 256), lambda i: (0, 0)),
            pl.BlockSpec((8, 1), lambda i: (0, 0)),
            pl.BlockSpec((16, 8, 8), lambda i: (0, 0, 0)),
            pl.BlockSpec((8, 1), lambda i: (0, 0)),
        ],
        out_specs=pl.BlockSpec((8, tb), lambda i: (0, i)),        # lane-dense
        compiler_params=pltpu.CompilerParams(
            dimension_semantics=("parallel",),       # 2-TC split on v7x
            vmem_limit_bytes=48 * 1024 * 1024,       # above v5e's 16 MiB default
        ),
    )(patches, wc, bc, wf, bf)

    return out[:2, :B].T                                          # [B, 2]


# One jit over glue + kernel so the im2col/layout prep fuses into a single pass.
convnet_forward = jax.jit(_convnet_forward, static_argnames=("tb",))


def reference_forward(x, conv_w, conv_b, fc_w, fc_b):
    """Pure-JAX reference matching the PyTorch module exactly."""
    out = jax.lax.conv_general_dilated(
        x, conv_w, window_strides=(7, 7), padding="VALID",
        dimension_numbers=("NCHW", "OIHW", "NCHW"))
    out = out + conv_b[None, :, None, None]
    out = jnp.tanh(out)                                              # [B,6,8,8]
    out = out.reshape(out.shape[0], 6, 4, 2, 4, 2).max(axis=(3, 5))  # pool 2x2
    out = out.reshape(out.shape[0], 6 * 4 * 4)                       # c-major
    return out @ fc_w.T + fc_b


if __name__ == "__main__":
    key = jax.random.PRNGKey(0)
    k1, k2, k3, k4, k5 = jax.random.split(key, 5)
    B = 2
    x = jax.random.normal(k1, (B, 3, 64, 64), dtype=jnp.float32)
    conv_w = jax.random.normal(k2, (6, 3, 9, 9), dtype=jnp.float32) * 0.05
    conv_b = jax.random.normal(k3, (6,), dtype=jnp.float32) * 0.05
    fc_w = jax.random.normal(k4, (2, 6 * 4 * 4), dtype=jnp.float32) * 0.05
    fc_b = jax.random.normal(k5, (2,), dtype=jnp.float32) * 0.05

    out = jax.block_until_ready(convnet_forward(x, conv_w, conv_b, fc_w, fc_b))
    ref = reference_forward(x, conv_w, conv_b, fc_w, fc_b)

    assert out.shape == (B, 2), out.shape
    assert jnp.allclose(out, ref, atol=1e-4, rtol=1e-4), (out, ref)
    print("KERNEL_OK")
</pallas_src>

<mosaic_0001>
module attributes {stable_mosaic.version = 11 : i64} {
  func.func @convnet_kernel(%arg0: i32, %arg1: memref<1x256x8192xf32, #tpu.memory_space<vmem>>, %arg2: memref<8x256xf32, #tpu.memory_space<vmem>>, %arg3: memref<8x1xf32, #tpu.memory_space<vmem>>, %arg4: memref<16x8x8xf32, #tpu.memory_space<vmem>>, %arg5: memref<8x1xf32, #tpu.memory_space<vmem>>, %arg6: memref<8x128xf32, #tpu.memory_space<vmem>>) attributes {dimension_semantics = [#tpu.dimension_semantics<parallel>], iteration_bounds = array<i64: 1>, scalar_prefetch = 0 : i64, scratch_operands = 0 : i64, tpu.core_type = #tpu.core_type<tc>, window_params = [{transform_indices = @transform_0, window_bounds = array<i64: 1, 256, 8192>}, {pipeline_mode = #tpu.pipeline_mode<synchronous>, transform_indices = @transform_1, window_bounds = array<i64: 8, 256>}, {pipeline_mode = #tpu.pipeline_mode<synchronous>, transform_indices = @transform_2, window_bounds = array<i64: 8, 1>}, {pipeline_mode = #tpu.pipeline_mode<synchronous>, transform_indices = @transform_3, window_bounds = array<i64: 16, 8, 8>}, {pipeline_mode = #tpu.pipeline_mode<synchronous>, transform_indices = @transform_4, window_bounds = array<i64: 8, 1>}, {transform_indices = @transform_5, window_bounds = array<i64: 8, 128>}]} {
    %c0 = arith.constant 0 : index
    %c0_0 = arith.constant 0 : index
    %0 = vector.load %arg2[%c0, %c0_0] : memref<8x256xf32, #tpu.memory_space<vmem>>, vector<8x256xf32>
    %c0_1 = arith.constant 0 : index
    %c0_2 = arith.constant 0 : index
    %c0_3 = arith.constant 0 : index
    %1 = vector.load %arg1[%c0_1, %c0_2, %c0_3] : memref<1x256x8192xf32, #tpu.memory_space<vmem>>, vector<1x256x8192xf32>
    %2 = vector.shape_cast %1 : vector<1x256x8192xf32> to vector<256x8192xf32>
    %cst = arith.constant dense<0.000000e+00> : vector<8x8192xf32>
    %3 = tpu.matmul %0, %2, %cst {dimension_numbers = #tpu.dot_dimension_numbers<[1], [0], [0], [1], [0, 0, 1, 1], [], []>} : vector<8x256xf32>, vector<256x8192xf32>, vector<8x8192xf32> -> vector<8x8192xf32>
    %c0_4 = arith.constant 0 : index
    %c0_5 = arith.constant 0 : index
    %4 = vector.load %arg3[%c0_4, %c0_5] : memref<8x1xf32, #tpu.memory_space<vmem>>, vector<8x1xf32>
    %c0_6 = arith.constant 0 : index
    %c0_7 = arith.constant 0 : index
    %c0_8 = arith.constant 0 : index
    %5 = vector.load %arg4[%c0_6, %c0_7, %c0_8] : memref<16x8x8xf32, #tpu.memory_space<vmem>>, vector<16x8x8xf32>
    %cst_9 = arith.constant 0.000000e+00 : f32
    %6 = vector.broadcast %cst_9 : f32 to vector<8x128xf32>
    %7 = vector.extract_strided_slice %3 {offsets = [0, 0], sizes = [8, 128], strides = [1, 1]} : vector<8x8192xf32> to vector<8x128xf32>
    %8 = vector.extract_strided_slice %3 {offsets = [0, 128], sizes = [8, 128], strides = [1, 1]} : vector<8x8192xf32> to vector<8x128xf32>
    %9 = arith.maximumf %7, %8 : vector<8x128xf32>
    %10 = vector.extract_strided_slice %3 {offsets = [0, 1024], sizes = [8, 128], strides = [1, 1]} : vector<8x8192xf32> to vector<8x128xf32>
    %11 = arith.maximumf %9, %10 : vector<8x128xf32>
    %12 = vector.extract_strided_slice %3 {offsets = [0, 1152], sizes = [8, 128], strides = [1, 1]} : vector<8x8192xf32> to vector<8x128xf32>
    %13 = arith.maximumf %11, %12 : vector<8x128xf32>
    %14 = vector.broadcast %4 : vector<8x1xf32> to vector<8x128xf32>
    %15 = arith.addf %13, %14 : vector<8x128xf32>
    %16 = math.tanh %15 : vector<8x128xf32>
    %17 = vector.extract_strided_slice %5 {offsets = [0, 0, 0], sizes = [1, 8, 8], strides = [1, 1, 1]} : vector<16x8x8xf32> to vector<1x8x8xf32>
    %18 = vector.shape_cast %17 : vector<1x8x8xf32> to vector<8x8xf32>
    %cst_10 = arith.constant dense<0.000000e+00> : vector<8x128xf32>
    %19 = tpu.matmul %18, %16, %cst_10 {dimension_numbers = #tpu.dot_dimension_numbers<[1], [0], [0], [1], [0, 0, 1, 1], [], []>} : vector<8x8xf32>, vector<8x128xf32>, vector<8x128xf32> -> vector<8x128xf32>
    %20 = arith.addf %6, %19 : vector<8x128xf32>
    %21 = vector.extract_strided_slice %3 {offsets = [0, 256], sizes = [8, 128], strides = [1, 1]} : vector<8x8192xf32> to vector<8x128xf32>
    %22 = vector.extract_strided_slice %3 {offsets = [0, 384], sizes = [8, 128], strides = [1, 1]} : vector<8x8192xf32> to vector<8x128xf32>
    %23 = arith.maximumf %21, %22 : vector<8x128xf32>
    %24 = vector.extract_strided_slice %3 {offsets = [0, 1280], sizes = [8, 128], strides = [1, 1]} : vector<8x8192xf32> to vector<8x128xf32>
    %25 = arith.maximumf %23, %24 : vector<8x128xf32>
    %26 = vector.extract_strided_slice %3 {offsets = [0, 1408], sizes = [8, 128], strides = [1, 1]} : vector<8x8192xf32> to vector<8x128xf32>
    %27 = arith.maximumf %25, %26 : vector<8x128xf32>
    %28 = vector.broadcast %4 : vector<8x1xf32> to vector<8x128xf32>
    %29 = arith.addf %27, %28 : vector<8x128xf32>
    %30 = math.tanh %29 : vector<8x128xf32>
    %31 = vector.extract_strided_slice %5 {offsets = [1, 0, 0], sizes = [1, 8, 8], strides = [1, 1, 1]} : vector<16x8x8xf32> to vector<1x8x8xf32>
    %32 = vector.shape_cast %31 : vector<1x8x8xf32> to vector<8x8xf32>
    %cst_11 = arith.constant dense<0.000000e+00> : vector<8x128xf32>
    %33 = tpu.matmul %32, %30, %cst_11 {dimension_numbers = #tpu.dot_dimension_numbers<[1], [0], [0], [1], [0, 0, 1, 1], [], []>} : vector<8x8xf32>, vector<8x128xf32>, vector<8x128xf32> -> vector<8x128xf32>
    %34 = arith.addf %20, %33 : vector<8x128xf32>
    %35 = vector.extract_strided_slice %3 {offsets = [0, 512], sizes = [8, 128], strides = [1, 1]} : vector<8x8192xf32> to vector<8x128xf32>
    %36 = vector.extract_strided_slice %3 {offsets = [0, 640], sizes = [8, 128], strides = [1, 1]} : vector<8x8192xf32> to vector<8x128xf32>
    %37 = arith.maximumf %35, %36 : vector<8x128xf32>
    %38 = vector.extract_strided_slice %3 {offsets = [0, 1536], sizes = [8, 128], strides = [1, 1]} : vector<8x8192xf32> to vector<8x128xf32>
    %39 = arith.maximumf %37, %38 : vector<8x128xf32>
    %40 = vector.extract_strided_slice %3 {offsets = [0, 1664], sizes = [8, 128], strides = [1, 1]} : vector<8x8192xf32> to vector<8x128xf32>
    %41 = arith.maximumf %39, %40 : vector<8x128xf32>
    %42 = vector.broadcast %4 : vector<8x1xf32> to vector<8x128xf32>
    %43 = arith.addf %41, %42 : vector<8x128xf32>
    %44 = math.tanh %43 : vector<8x128xf32>
    %45 = vector.extract_strided_slice %5 {offsets = [2, 0, 0], sizes = [1, 8, 8], strides = [1, 1, 1]} : vector<16x8x8xf32> to vector<1x8x8xf32>
    %46 = vector.shape_cast %45 : vector<1x8x8xf32> to vector<8x8xf32>
    %cst_12 = arith.constant dense<0.000000e+00> : vector<8x128xf32>
    %47 = tpu.matmul %46, %44, %cst_12 {dimension_numbers = #tpu.dot_dimension_numbers<[1], [0], [0], [1], [0, 0, 1, 1], [], []>} : vector<8x8xf32>, vector<8x128xf32>, vector<8x128xf32> -> vector<8x128xf32>
    %48 = arith.addf %34, %47 : vector<8x128xf32>
    %49 = vector.extract_strided_slice %3 {offsets = [0, 768], sizes = [8, 128], strides = [1, 1]} : vector<8x8192xf32> to vector<8x128xf32>
    %50 = vector.extract_strided_slice %3 {offsets = [0, 896], sizes = [8, 128], strides = [1, 1]} : vector<8x8192xf32> to vector<8x128xf32>
    %51 = arith.maximumf %49, %50 : vector<8x128xf32>
    %52 = vector.extract_strided_slice %3 {offsets = [0, 1792], sizes = [8, 128], strides = [1, 1]} : vector<8x8192xf32> to vector<8x128xf32>
    %53 = arith.maximumf %51, %52 : vector<8x128xf32>
    %54 = vector.extract_strided_slice %3 {offsets = [0, 1920], sizes = [8, 128], strides = [1, 1]} : vector<8x8192xf32> to vector<8x128xf32>
    %55 = arith.maximumf %53, %54 : vector<8x128xf32>
    %56 = vector.broadcast %4 : vector<8x1xf32> to vector<8x128xf32>
    %57 = arith.addf %55, %56 : vector<8x128xf32>
    %58 = math.tanh %57 : vector<8x128xf32>
    %59 = vector.extract_strided_slice %5 {offsets = [3, 0, 0], sizes = [1, 8, 8], strides = [1, 1, 1]} : vector<16x8x8xf32> to vector<1x8x8xf32>
    %60 = vector.shape_cast %59 : vector<1x8x8xf32> to vector<8x8xf32>
    %cst_13 = arith.constant dense<0.000000e+00> : vector<8x128xf32>
    %61 = tpu.matmul %60, %58, %cst_13 {dimension_numbers = #tpu.dot_dimension_numbers<[1], [0], [0], [1], [0, 0, 1, 1], [], []>} : vector<8x8xf32>, vector<8x128xf32>, vector<8x128xf32> -> vector<8x128xf32>
    %62 = arith.addf %48, %61 : vector<8x128xf32>
    %63 = vector.extract_strided_slice %3 {offsets = [0, 2048], sizes = [8, 128], strides = [1, 1]} : vector<8x8192xf32> to vector<8x128xf32>
    %64 = vector.extract_strided_slice %3 {offsets = [0, 2176], sizes = [8, 128], strides = [1, 1]} : vector<8x8192xf32> to vector<8x128xf32>
    %65 = arith.maximumf %63, %64 : vector<8x128xf32>
    %66 = vector.extract_strided_slice %3 {offsets = [0, 3072], sizes = [8, 128], strides = [1, 1]} : vector<8x8192xf32> to vector<8x128xf32>
    %67 = arith.maximumf %65, %66 : vector<8x128xf32>
    %68 = vector.extract_strided_slice %3 {offsets = [0, 3200], sizes = [8, 128], strides = [1, 1]} : vector<8x8192xf32> to vector<8x128xf32>
    %69 = arith.maximumf %67, %68 : vector<8x128xf32>
    %70 = vector.broadcast %4 : vector<8x1xf32> to vector<8x128xf32>
    %71 = arith.addf %69, %70 : vector<8x128xf32>
    %72 = math.tanh %71 : vector<8x128xf32>
    %73 = vector.extract_strided_slice %5 {offsets = [4, 0, 0], sizes = [1, 8, 8], strides = [1, 1, 1]} : vector<16x8x8xf32> to vector<1x8x8xf32>
    %74 = vector.shape_cast %73 : vector<1x8x8xf32> to vector<8x8xf32>
    %cst_14 = arith.constant dense<0.000000e+00> : vector<8x128xf32>
    %75 = tpu.matmul %74, %72, %cst_14 {dimension_numbers = #tpu.dot_dimension_numbers<[1], [0], [0], [1], [0, 0, 1, 1], [], []>} : vector<8x8xf32>, vector<8x128xf32>, vector<8x128xf32> -> vector<8x128xf32>
    %76 = arith.addf %62, %75 : vector<8x128xf32>
    %77 = vector.extract_strided_slice %3 {offsets = [0, 2304], sizes = [8, 128], strides = [1, 1]} : vector<8x8192xf32> to vector<8x128xf32>
    %78 = vector.extract_strided_slice %3 {offsets = [0, 2432], sizes = [8, 128], strides = [1, 1]} : vector<8x8192xf32> to vector<8x128xf32>
    %79 = arith.maximumf %77, %78 : vector<8x128xf32>
    %80 = vector.extract_strided_slice %3 {offsets = [0, 3328], sizes = [8, 128], strides = [1, 1]} : vector<8x8192xf32> to vector<8x128xf32>
    %81 = arith.maximumf %79, %80 : vector<8x128xf32>
    %82 = vector.extract_strided_slice %3 {offsets = [0, 3456], sizes = [8, 128], strides = [1, 1]} : vector<8x8192xf32> to vector<8x128xf32>
    %83 = arith.maximumf %81, %82 : vector<8x128xf32>
    %84 = vector.broadcast %4 : vector<8x1xf32> to vector<8x128xf32>
    %85 = arith.addf %83, %84 : vector<8x128xf32>
    %86 = math.tanh %85 : vector<8x128xf32>
    %87 = vector.extract_strided_slice %5 {offsets = [5, 0, 0], sizes = [1, 8, 8], strides = [1, 1, 1]} : vector<16x8x8xf32> to vector<1x8x8xf32>
    %88 = vector.shape_cast %87 : vector<1x8x8xf32> to vector<8x8xf32>
    %cst_15 = arith.constant dense<0.000000e+00> : vector<8x128xf32>
    %89 = tpu.matmul %88, %86, %cst_15 {dimension_numbers = #tpu.dot_dimension_numbers<[1], [0], [0], [1], [0, 0, 1, 1], [], []>} : vector<8x8xf32>, vector<8x128xf32>, vector<8x128xf32> -> vector<8x128xf32>
    %90 = arith.addf %76, %89 : vector<8x128xf32>
    %91 = vector.extract_strided_slice %3 {offsets = [0, 2560], sizes = [8, 128], strides = [1, 1]} : vector<8x8192xf32> to vector<8x128xf32>
    %92 = vector.extract_strided_slice %3 {offsets = [0, 2688], sizes = [8, 128], strides = [1, 1]} : vector<8x8192xf32> to vector<8x128xf32>
    %93 = arith.maximumf %91, %92 : vector<8x128xf32>
    %94 = vector.extract_strided_slice %3 {offsets = [0, 3584], sizes = [8, 128], strides = [1, 1]} : vector<8x8192xf32> to vector<8x128xf32>
    %95 = arith.maximumf %93, %94 : vector<8x128xf32>
    %96 = vector.extract_strided_slice %3 {offsets = [0, 3712], sizes = [8, 128], strides = [1, 1]} : vector<8x8192xf32> to vector<8x128xf32>
    %97 = arith.maximumf %95, %96 : vector<8x128xf32>
    %98 = vector.broadcast %4 : vector<8x1xf32> to vector<8x128xf32>
    %99 = arith.addf %97, %98 : vector<8x128xf32>
    %100 = math.tanh %99 : vector<8x128xf32>
    %101 = vector.extract_strided_slice %5 {offsets = [6, 0, 0], sizes = [1, 8, 8], strides = [1, 1, 1]} : vector<16x8x8xf32> to vector<1x8x8xf32>
    %102 = vector.shape_cast %101 : vector<1x8x8xf32> to vector<8x8xf32>
    %cst_16 = arith.constant dense<0.000000e+00> : vector<8x128xf32>
    %103 = tpu.matmul %102, %100, %cst_16 {dimension_numbers = #tpu.dot_dimension_numbers<[1], [0], [0], [1], [0, 0, 1, 1], [], []>} : vector<8x8xf32>, vector<8x128xf32>, vector<8x128xf32> -> vector<8x128xf32>
    %104 = arith.addf %90, %103 : vector<8x128xf32>
    %105 = vector.extract_strided_slice %3 {offsets = [0, 2816], sizes = [8, 128], strides = [1, 1]} : vector<8x8192xf32> to vector<8x128xf32>
    %106 = vector.extract_strided_slice %3 {offsets = [0, 2944], sizes = [8, 128], strides = [1, 1]} : vector<8x8192xf32> to vector<8x128xf32>
    %107 = arith.maximumf %105, %106 : vector<8x128xf32>
    %108 = vector.extract_strided_slice %3 {offsets = [0, 3840], sizes = [8, 128], strides = [1, 1]} : vector<8x8192xf32> to vector<8x128xf32>
    %109 = arith.maximumf %107, %108 : vector<8x128xf32>
    %110 = vector.extract_strided_slice %3 {offsets = [0, 3968], sizes = [8, 128], strides = [1, 1]} : vector<8x8192xf32> to vector<8x128xf32>
    %111 = arith.maximumf %109, %110 : vector<8x128xf32>
    %112 = vector.broadcast %4 : vector<8x1xf32> to vector<8x128xf32>
    %113 = arith.addf %111, %112 : vector<8x128xf32>
    %114 = math.tanh %113 : vector<8x128xf32>
    %115 = vector.extract_strided_slice %5 {offsets = [7, 0, 0], sizes = [1, 8, 8], strides = [1, 1, 1]} : vector<16x8x8xf32> to vector<1x8x8xf32>
    %116 = vector.shape_cast %115 : vector<1x8x8xf32> to vector<8x8xf32>
    %cst_17 = arith.constant dense<0.000000e+00> : vector<8x128xf32>
    %117 = tpu.matmul %116, %114, %cst_17 {dimension_numbers = #tpu.dot_dimension_numbers<[1], [0], [0], [1], [0, 0, 1, 1], [], []>} : vector<8x8xf32>, vector<8x128xf32>, vector<8x128xf32> -> vector<8x128xf32>
    %118 = arith.addf %104, %117 : vector<8x128xf32>
    %119 = vector.extract_strided_slice %3 {offsets = [0, 4096], sizes = [8, 128], strides = [1, 1]} : vector<8x8192xf32> to vector<8x128xf32>
    %120 = vector.extract_strided_slice %3 {offsets = [0, 4224], sizes = [8, 128], strides = [1, 1]} : vector<8x8192xf32> to vector<8x128xf32>
    %121 = arith.maximumf %119, %120 : vector<8x128xf32>
    %122 = vector.extract_strided_slice %3 {offsets = [0, 5120], sizes = [8, 128], strides = [1, 1]} : vector<8x8192xf32> to vector<8x128xf32>
    %123 = arith.maximumf %121, %122 : vector<8x128xf32>
    %124 = vector.extract_strided_slice %3 {offsets = [0, 5248], sizes = [8, 128], strides = [1, 1]} : vector<8x8192xf32> to vector<8x128xf32>
    %125 = arith.maximumf %123, %124 : vector<8x128xf32>
    %126 = vector.broadcast %4 : vector<8x1xf32> to vector<8x128xf32>
    %127 = arith.addf %125, %126 : vector<8x128xf32>
    %128 = math.tanh %127 : vector<8x128xf32>
    %129 = vector.extract_strided_slice %5 {offsets = [8, 0, 0], sizes = [1, 8, 8], strides = [1, 1, 1]} : vector<16x8x8xf32> to vector<1x8x8xf32>
    %130 = vector.shape_cast %129 : vector<1x8x8xf32> to vector<8x8xf32>
    %cst_18 = arith.constant dense<0.000000e+00> : vector<8x128xf32>
    %131 = tpu.matmul %130, %128, %cst_18 {dimension_numbers = #tpu.dot_dimension_numbers<[1], [0], [0], [1], [0, 0, 1, 1], [], []>} : vector<8x8xf32>, vector<8x128xf32>, vector<8x128xf32> -> vector<8x128xf32>
    %132 = arith.addf %118, %131 : vector<8x128xf32>
    %133 = vector.extract_strided_slice %3 {offsets = [0, 4352], sizes = [8, 128], strides = [1, 1]} : vector<8x8192xf32> to vector<8x128xf32>
    %134 = vector.extract_strided_slice %3 {offsets = [0, 4480], sizes = [8, 128], strides = [1, 1]} : vector<8x8192xf32> to vector<8x128xf32>
    %135 = arith.maximumf %133, %134 : vector<8x128xf32>
    %136 = vector.extract_strided_slice %3 {offsets = [0, 5376], sizes = [8, 128], strides = [1, 1]} : vector<8x8192xf32> to vector<8x128xf32>
    %137 = arith.maximumf %135, %136 : vector<8x128xf32>
    %138 = vector.extract_strided_slice %3 {offsets = [0, 5504], sizes = [8, 128], strides = [1, 1]} : vector<8x8192xf32> to vector<8x128xf32>
    %139 = arith.maximumf %137, %138 : vector<8x128xf32>
    %140 = vector.broadcast %4 : vector<8x1xf32> to vector<8x128xf32>
    %141 = arith.addf %139, %140 : vector<8x128xf32>
    %142 = math.tanh %141 : vector<8x128xf32>
    %143 = vector.extract_strided_slice %5 {offsets = [9, 0, 0], sizes = [1, 8, 8], strides = [1, 1, 1]} : vector<16x8x8xf32> to vector<1x8x8xf32>
    %144 = vector.shape_cast %143 : vector<1x8x8xf32> to vector<8x8xf32>
    %cst_19 = arith.constant dense<0.000000e+00> : vector<8x128xf32>
    %145 = tpu.matmul %144, %142, %cst_19 {dimension_numbers = #tpu.dot_dimension_numbers<[1], [0], [0], [1], [0, 0, 1, 1], [], []>} : vector<8x8xf32>, vector<8x128xf32>, vector<8x128xf32> -> vector<8x128xf32>
    %146 = arith.addf %132, %145 : vector<8x128xf32>
    %147 = vector.extract_strided_slice %3 {offsets = [0, 4608], sizes = [8, 128], strides = [1, 1]} : vector<8x8192xf32> to vector<8x128xf32>
    %148 = vector.extract_strided_slice %3 {offsets = [0, 4736], sizes = [8, 128], strides = [1, 1]} : vector<8x8192xf32> to vector<8x128xf32>
    %149 = arith.maximumf %147, %148 : vector<8x128xf32>
    %150 = vector.extract_strided_slice %3 {offsets = [0, 5632], sizes = [8, 128], strides = [1, 1]} : vector<8x8192xf32> to vector<8x128xf32>
    %151 = arith.maximumf %149, %150 : vector<8x128xf32>
    %152 = vector.extract_strided_slice %3 {offsets = [0, 5760], sizes = [8, 128], strides = [1, 1]} : vector<8x8192xf32> to vector<8x128xf32>
    %153 = arith.maximumf %151, %152 : vector<8x128xf32>
    %154 = vector.broadcast %4 : vector<8x1xf32> to vector<8x128xf32>
    %155 = arith.addf %153, %154 : vector<8x128xf32>
    %156 = math.tanh %155 : vector<8x128xf32>
    %157 = vector.extract_strided_slice %5 {offsets = [10, 0, 0], sizes = [1, 8, 8], strides = [1, 1, 1]} : vector<16x8x8xf32> to vector<1x8x8xf32>
    %158 = vector.shape_cast %157 : vector<1x8x8xf32> to vector<8x8xf32>
    %cst_20 = arith.constant dense<0.000000e+00> : vector<8x128xf32>
    %159 = tpu.matmul %158, %156, %cst_20 {dimension_numbers = #tpu.dot_dimension_numbers<[1], [0], [0], [1], [0, 0, 1, 1], [], []>} : vector<8x8xf32>, vector<8x128xf32>, vector<8x128xf32> -> vector<8x128xf32>
    %160 = arith.addf %146, %159 : vector<8x128xf32>
    %161 = vector.extract_strided_slice %3 {offsets = [0, 4864], sizes = [8, 128], strides = [1, 1]} : vector<8x8192xf32> to vector<8x128xf32>
    %162 = vector.extract_strided_slice %3 {offsets = [0, 4992], sizes = [8, 128], strides = [1, 1]} : vector<8x8192xf32> to vector<8x128xf32>
    %163 = arith.maximumf %161, %162 : vector<8x128xf32>
    %164 = vector.extract_strided_slice %3 {offsets = [0, 5888], sizes = [8, 128], strides = [1, 1]} : vector<8x8192xf32> to vector<8x128xf32>
    %165 = arith.maximumf %163, %164 : vector<8x128xf32>
    %166 = vector.extract_strided_slice %3 {offsets = [0, 6016], sizes = [8, 128], strides = [1, 1]} : vector<8x8192xf32> to vector<8x128xf32>
    %167 = arith.maximumf %165, %166 : vector<8x128xf32>
    %168 = vector.broadcast %4 : vector<8x1xf32> to vector<8x128xf32>
    %169 = arith.addf %167, %168 : vector<8x128xf32>
    %170 = math.tanh %169 : vector<8x128xf32>
    %171 = vector.extract_strided_slice %5 {offsets = [11, 0, 0], sizes = [1, 8, 8], strides = [1, 1, 1]} : vector<16x8x8xf32> to vector<1x8x8xf32>
    %172 = vector.shape_cast %171 : vector<1x8x8xf32> to vector<8x8xf32>
    %cst_21 = arith.constant dense<0.000000e+00> : vector<8x128xf32>
    %173 = tpu.matmul %172, %170, %cst_21 {dimension_numbers = #tpu.dot_dimension_numbers<[1], [0], [0], [1], [0, 0, 1, 1], [], []>} : vector<8x8xf32>, vector<8x128xf32>, vector<8x128xf32> -> vector<8x128xf32>
    %174 = arith.addf %160, %173 : vector<8x128xf32>
    %175 = vector.extract_strided_slice %3 {offsets = [0, 6144], sizes = [8, 128], strides = [1, 1]} : vector<8x8192xf32> to vector<8x128xf32>
    %176 = vector.extract_strided_slice %3 {offsets = [0, 6272], sizes = [8, 128], strides = [1, 1]} : vector<8x8192xf32> to vector<8x128xf32>
    %177 = arith.maximumf %175, %176 : vector<8x128xf32>
    %178 = vector.extract_strided_slice %3 {offsets = [0, 7168], sizes = [8, 128], strides = [1, 1]} : vector<8x8192xf32> to vector<8x128xf32>
    %179 = arith.maximumf %177, %178 : vector<8x128xf32>
    %180 = vector.extract_strided_slice %3 {offsets = [0, 7296], sizes = [8, 128], strides = [1, 1]} : vector<8x8192xf32> to vector<8x128xf32>
    %181 = arith.maximumf %179, %180 : vector<8x128xf32>
    %182 = vector.broadcast %4 : vector<8x1xf32> to vector<8x128xf32>
    %183 = arith.addf %181, %182 : vector<8x128xf32>
    %184 = math.tanh %183 : vector<8x128xf32>
    %185 = vector.extract_strided_slice %5 {offsets = [12, 0, 0], sizes = [1, 8, 8], strides = [1, 1, 1]} : vector<16x8x8xf32> to vector<1x8x8xf32>
    %186 = vector.shape_cast %185 : vector<1x8x8xf32> to vector<8x8xf32>
    %cst_22 = arith.constant dense<0.000000e+00> : vector<8x128xf32>
    %187 = tpu.matmul %186, %184, %cst_22 {dimension_numbers = #tpu.dot_dimension_numbers<[1], [0], [0], [1], [0, 0, 1, 1], [], []>} : vector<8x8xf32>, vector<8x128xf32>, vector<8x128xf32> -> vector<8x128xf32>
    %188 = arith.addf %174, %187 : vector<8x128xf32>
    %189 = vector.extract_strided_slice %3 {offsets = [0, 6400], sizes = [8, 128], strides = [1, 1]} : vector<8x8192xf32> to vector<8x128xf32>
    %190 = vector.extract_strided_slice %3 {offsets = [0, 6528], sizes = [8, 128], strides = [1, 1]} : vector<8x8192xf32> to vector<8x128xf32>
    %191 = arith.maximumf %189, %190 : vector<8x128xf32>
    %192 = vector.extract_strided_slice %3 {offsets = [0, 7424], sizes = [8, 128], strides = [1, 1]} : vector<8x8192xf32> to vector<8x128xf32>
    %193 = arith.maximumf %191, %192 : vector<8x128xf32>
    %194 = vector.extract_strided_slice %3 {offsets = [0, 7552], sizes = [8, 128], strides = [1, 1]} : vector<8x8192xf32> to vector<8x128xf32>
    %195 = arith.maximumf %193, %194 : vector<8x128xf32>
    %196 = vector.broadcast %4 : vector<8x1xf32> to vector<8x128xf32>
    %197 = arith.addf %195, %196 : vector<8x128xf32>
    %198 = math.tanh %197 : vector<8x128xf32>
    %199 = vector.extract_strided_slice %5 {offsets = [13, 0, 0], sizes = [1, 8, 8], strides = [1, 1, 1]} : vector<16x8x8xf32> to vector<1x8x8xf32>
    %200 = vector.shape_cast %199 : vector<1x8x8xf32> to vector<8x8xf32>
    %cst_23 = arith.constant dense<0.000000e+00> : vector<8x128xf32>
    %201 = tpu.matmul %200, %198, %cst_23 {dimension_numbers = #tpu.dot_dimension_numbers<[1], [0], [0], [1], [0, 0, 1, 1], [], []>} : vector<8x8xf32>, vector<8x128xf32>, vector<8x128xf32> -> vector<8x128xf32>
    %202 = arith.addf %188, %201 : vector<8x128xf32>
    %203 = vector.extract_strided_slice %3 {offsets = [0, 6656], sizes = [8, 128], strides = [1, 1]} : vector<8x8192xf32> to vector<8x128xf32>
    %204 = vector.extract_strided_slice %3 {offsets = [0, 6784], sizes = [8, 128], strides = [1, 1]} : vector<8x8192xf32> to vector<8x128xf32>
    %205 = arith.maximumf %203, %204 : vector<8x128xf32>
    %206 = vector.extract_strided_slice %3 {offsets = [0, 7680], sizes = [8, 128], strides = [1, 1]} : vector<8x8192xf32> to vector<8x128xf32>
    %207 = arith.maximumf %205, %206 : vector<8x128xf32>
    %208 = vector.extract_strided_slice %3 {offsets = [0, 7808], sizes = [8, 128], strides = [1, 1]} : vector<8x8192xf32> to vector<8x128xf32>
    %209 = arith.maximumf %207, %208 : vector<8x128xf32>
    %210 = vector.broadcast %4 : vector<8x1xf32> to vector<8x128xf32>
    %211 = arith.addf %209, %210 : vector<8x128xf32>
    %212 = math.tanh %211 : vector<8x128xf32>
    %213 = vector.extract_strided_slice %5 {offsets = [14, 0, 0], sizes = [1, 8, 8], strides = [1, 1, 1]} : vector<16x8x8xf32> to vector<1x8x8xf32>
    %214 = vector.shape_cast %213 : vector<1x8x8xf32> to vector<8x8xf32>
    %cst_24 = arith.constant dense<0.000000e+00> : vector<8x128xf32>
    %215 = tpu.matmul %214, %212, %cst_24 {dimension_numbers = #tpu.dot_dimension_numbers<[1], [0], [0], [1], [0, 0, 1, 1], [], []>} : vector<8x8xf32>, vector<8x128xf32>, vector<8x128xf32> -> vector<8x128xf32>
    %216 = arith.addf %202, %215 : vector<8x128xf32>
    %217 = vector.extract_strided_slice %3 {offsets = [0, 6912], sizes = [8, 128], strides = [1, 1]} : vector<8x8192xf32> to vector<8x128xf32>
    %218 = vector.extract_strided_slice %3 {offsets = [0, 7040], sizes = [8, 128], strides = [1, 1]} : vector<8x8192xf32> to vector<8x128xf32>
    %219 = arith.maximumf %217, %218 : vector<8x128xf32>
    %220 = vector.extract_strided_slice %3 {offsets = [0, 7936], sizes = [8, 128], strides = [1, 1]} : vector<8x8192xf32> to vector<8x128xf32>
    %221 = arith.maximumf %219, %220 : vector<8x128xf32>
    %222 = vector.extract_strided_slice %3 {offsets = [0, 8064], sizes = [8, 128], strides = [1, 1]} : vector<8x8192xf32> to vector<8x128xf32>
    %223 = arith.maximumf %221, %222 : vector<8x128xf32>
    %224 = vector.broadcast %4 : vector<8x1xf32> to vector<8x128xf32>
    %225 = arith.addf %223, %224 : vector<8x128xf32>
    %226 = math.tanh %225 : vector<8x128xf32>
    %227 = vector.extract_strided_slice %5 {offsets = [15, 0, 0], sizes = [1, 8, 8], strides = [1, 1, 1]} : vector<16x8x8xf32> to vector<1x8x8xf32>
    %228 = vector.shape_cast %227 : vector<1x8x8xf32> to vector<8x8xf32>
    %cst_25 = arith.constant dense<0.000000e+00> : vector<8x128xf32>
    %229 = tpu.matmul %228, %226, %cst_25 {dimension_numbers = #tpu.dot_dimension_numbers<[1], [0], [0], [1], [0, 0, 1, 1], [], []>} : vector<8x8xf32>, vector<8x128xf32>, vector<8x128xf32> -> vector<8x128xf32>
    %230 = arith.addf %216, %229 : vector<8x128xf32>
    %c0_26 = arith.constant 0 : index
    %c0_27 = arith.constant 0 : index
    %231 = vector.load %arg5[%c0_26, %c0_27] : memref<8x1xf32, #tpu.memory_space<vmem>>, vector<8x1xf32>
    %232 = vector.broadcast %231 : vector<8x1xf32> to vector<8x128xf32>
    %233 = arith.addf %230, %232 : vector<8x128xf32>
    %c0_28 = arith.constant 0 : index
    %c0_29 = arith.constant 0 : index
    %234 = vector.load %arg6[%c0_28, %c0_29] : memref<8x128xf32, #tpu.memory_space<vmem>>, vector<8x128xf32>
    tpu.vector_store %arg6[%c0_28, %c0_29], %233 {strides = array<i32>} : memref<8x128xf32, #tpu.memory_space<vmem>>, vector<8x128xf32>,
    return
  }
  func.func @transform_0(%arg0: i32) -> (i32, i32, i32) {
    %c0_i32 = arith.constant 0 : i32
    %c0_i32_0 = arith.constant 0 : i32
    %c0_i32_1 = arith.constant 0 : i32
    return %arg0, %c0_i32, %c0_i32_0 : i32, i32, i32
  }
  func.func @transform_1(%arg0: i32) -> (i32, i32) {
    %c0_i32 = arith.constant 0 : i32
    %c0_i32_0 = arith.constant 0 : i32
    %c0_i32_1 = arith.constant 0 : i32
    return %c0_i32, %c0_i32_0 : i32, i32
  }
  func.func @transform_2(%arg0: i32) -> (i32, i32) {
    %c0_i32 = arith.constant 0 : i32
    %c0_i32_0 = arith.constant 0 : i32
    %c0_i32_1 = arith.constant 0 : i32
    return %c0_i32, %c0_i32_0 : i32, i32
  }
  func.func @transform_3(%arg0: i32) -> (i32, i32, i32) {
    %c0_i32 = arith.constant 0 : i32
    %c0_i32_0 = arith.constant 0 : i32
    %c0_i32_1 = arith.constant 0 : i32
    %c0_i32_2 = arith.constant 0 : i32
    return %c0_i32, %c0_i32_0, %c0_i32_1 : i32, i32, i32
  }
  func.func @transform_4(%arg0: i32) -> (i32, i32) {
    %c0_i32 = arith.constant 0 : i32
    %c0_i32_0 = arith.constant 0 : i32
    %c0_i32_1 = arith.constant 0 : i32
    return %c0_i32, %c0_i32_0 : i32, i32
  }
  func.func @transform_5(%arg0: i32) -> (i32, i32) {
    %c0_i32 = arith.constant 0 : i32
    %c0_i32_0 = arith.constant 0 : i32
    return %c0_i32, %arg0 : i32, i32
  }
}

</mosaic_0001>

<llo_original>
// kernel: _convnet_forward.1
$region0: #{_convnet_forward.1}
  #allocation0 [shape = 'u32[]', space=smem, size = 0x4, offset = 0x4, fixed_abs, tag = 'smem constant byte address 0x4 - core index']
  #allocation1 [shape = 'u32[144,128]{1,0:T(1,128)}', space=vmem, size = 0x12000, scoped, tag = 'internal scratch']
  %s0 = inlined_call_operand.vmem [shape: f32[1,256,8192], index: 0, kind: input, shape index: {}]
  %s1 = inlined_call_operand.vmem [shape: f32[8,256], index: 1, kind: input, shape index: {}]
  %s2 = inlined_call_operand.vmem [shape: f32[8,1], index: 2, kind: input, shape index: {}]
  %s3 = inlined_call_operand.vmem [shape: f32[16,8,8], index: 3, kind: input, shape index: {}]
  %s4 = inlined_call_operand.vmem [shape: f32[8,1], index: 4, kind: input, shape index: {}]
  %s5 = inlined_call_operand.vmem [shape: f32[8,128], index: 5, kind: output, shape index: {}]
  %s6 = sld [smem:[#allocation0]]
  $region30: #{_convnet_forward.1} parent=0
    _
  %s8 = ssub.s32 1, %s6
  %s9 = scalar_select 0, %s8, %s6
  // Predicated region
  $region2: #{_convnet_forward.1} parent=0 // pred_check
    _
  $region3: #{_convnet_forward.1} parent=0 // pred_check_branch
    %11 = sbr.rel (0) target = $region5
  $region4: #{_convnet_forward.1} parent=0 // pred_region
    _
  $region5: #{_convnet_forward.1} parent=0 // pred_fallthru
    _
  // Predicated region
  $region6: #{_convnet_forward.1} parent=0 // pred_check
    _
  $region7: #{_convnet_forward.1} parent=0 // pred_check_branch
    %13 = sbr.rel (0) target = $region9
  $region8: #{_convnet_forward.1} parent=0 // pred_region
    _
  $region9: #{_convnet_forward.1} parent=0 // pred_fallthru
    _
  // Predicated region
  $region10: #{_convnet_forward.1} parent=0 // pred_check
    _
  $region11: #{_convnet_forward.1} parent=0 // pred_check_branch
    %15 = sbr.rel (0) target = $region13
  $region12: #{_convnet_forward.1} parent=0 // pred_region
    _
  $region13: #{_convnet_forward.1} parent=0 // pred_fallthru
    _
  // Predicated region
  $region14: #{_convnet_forward.1} parent=0 // pred_check
    _
  $region15: #{_convnet_forward.1} parent=0 // pred_check_branch
    %17 = sbr.rel (0) target = $region17
  $region16: #{_convnet_forward.1} parent=0 // pred_region
    _
  $region17: #{_convnet_forward.1} parent=0 // pred_fallthru
    _
  // Predicated region
  $region18: #{_convnet_forward.1} parent=0 // pred_check
    _
  $region19: #{_convnet_forward.1} parent=0 // pred_check_branch
    %19 = sbr.rel (0) target = $region21
  $region20: #{_convnet_forward.1} parent=0 // pred_region
    _
  $region21: #{_convnet_forward.1} parent=0 // pred_fallthru
    _
  %v20 = vld [vmem:[%s1] sm:$0xff]
  %v21 = vld [vmem:[%s1 + $0x8] sm:$0xff]
  %v22 = vld [vmem:[%s0] sm:$0xff]
  %v23 = vld [vmem:[%s0 + $0x8] sm:$0xff]
  %v24 = vld [vmem:[%s0 + $0x10] sm:$0xff]
  %v25 = vld [vmem:[%s0 + $0x18] sm:$0xff]
  %v26 = vld [vmem:[%s0 + $0x20] sm:$0xff]
  %v27 = vld [vmem:[%s0 + $0x28] sm:$0xff]
  %v28 = vld [vmem:[%s0 + $0x30] sm:$0xff]
  %v29 = vld [vmem:[%s0 + $0x38] sm:$0xff]
  %v30 = vld [vmem:[%s0 + $0x40] sm:$0xff]
  %v31 = vld [vmem:[%s0 + $0x48] sm:$0xff]
  %v32 = vld [vmem:[%s0 + $0x50] sm:$0xff]
  %v33 = vld [vmem:[%s0 + $0x58] sm:$0xff]
  %v34 = vld [vmem:[%s0 + $0x60] sm:$0xff]
  %v35 = vld [vmem:[%s0 + $0x68] sm:$0xff]
  %v36 = vld [vmem:[%s0 + $0x70] sm:$0xff]
  %v37 = vld [vmem:[%s0 + $0x78] sm:$0xff]
  %v38 = vld [vmem:[%s0 + $0x80] sm:$0xff]
  %v39 = vld [vmem:[%s0 + $0x88] sm:$0xff]
  %v40 = vld [vmem:[%s0 + $0x90] sm:$0xff]
  %v41 = vld [vmem:[%s0 + $0x98] sm:$0xff]
  %v42 = vld [vmem:[%s0 + $0xa0] sm:$0xff]
  %v43 = vld [vmem:[%s0 + $0xa8] sm:$0xff]
  %v44 = vld [vmem:[%s0 + $0xb0] sm:$0xff]
  %v45 = vld [vmem:[%s0 + $0xb8] sm:$0xff]
  %v46 = vld [vmem:[%s0 + $0xc0] sm:$0xff]
  %v47 = vld [vmem:[%s0 + $0xc8] sm:$0xff]
  %v48 = vld [vmem:[%s0 + $0xd0] sm:$0xff]
  %v49 = vld [vmem:[%s0 + $0xd8] sm:$0xff]
  %v50 = vld [vmem:[%s0 + $0xe0] sm:$0xff]
  %v51 = vld [vmem:[%s0 + $0xe8] sm:$0xff]
  %v52 = vld [vmem:[%s0 + $0xf0] sm:$0xff]
  %v53 = vld [vmem:[%s0 + $0xf8] sm:$0xff]
  %v54 = vld [vmem:[%s0 + $0x100] sm:$0xff]
  %v55 = vld [vmem:[%s0 + $0x108] sm:$0xff]
  %v56 = vld [vmem:[%s0 + $0x110] sm:$0xff]
  %v57 = vld [vmem:[%s0 + $0x118] sm:$0xff]
  %v58 = vld [vmem:[%s0 + $0x120] sm:$0xff]
  %v59 = vld [vmem:[%s0 + $0x128] sm:$0xff]
  %v60 = vld [vmem:[%s0 + $0x130] sm:$0xff]
  %v61 = vld [vmem:[%s0 + $0x138] sm:$0xff]
  %v62 = vld [vmem:[%s0 + $0x140] sm:$0xff]
  %v63 = vld [vmem:[%s0 + $0x148] sm:$0xff]
  %v64 = vld [vmem:[%s0 + $0x150] sm:$0xff]
  %v65 = vld [vmem:[%s0 + $0x158] sm:$0xff]
  %v66 = vld [vmem:[%s0 + $0x160] sm:$0xff]
  %v67 = vld [vmem:[%s0 + $0x168] sm:$0xff]
  %v68 = vld [vmem:[%s0 + $0x170] sm:$0xff]
  %v69 = vld [vmem:[%s0 + $0x178] sm:$0xff]
  %v70 = vld [vmem:[%s0 + $0x180] sm:$0xff]
  %v71 = vld [vmem:[%s0 + $0x188] sm:$0xff]
  %v72 = vld [vmem:[%s0 + $0x190] sm:$0xff]
  %v73 = vld [vmem:[%s0 + $0x198] sm:$0xff]
  %v74 = vld [vmem:[%s0 + $0x1a0] sm:$0xff]
  %v75 = vld [vmem:[%s0 + $0x1a8] sm:$0xff]
  %v76 = vld [vmem:[%s0 + $0x1b0] sm:$0xff]
  %v77 = vld [vmem:[%s0 + $0x1b8] sm:$0xff]
  %v78 = vld [vmem:[%s0 + $0x1c0] sm:$0xff]
  %v79 = vld [vmem:[%s0 + $0x1c8] sm:$0xff]
  %v80 = vld [vmem:[%s0 + $0x1d0] sm:$0xff]
  %v81 = vld [vmem:[%s0 + $0x1d8] sm:$0xff]
  %v82 = vld [vmem:[%s0 + $0x1e0] sm:$0xff]
  %v83 = vld [vmem:[%s0 + $0x1e8] sm:$0xff]
  %v84 = vld [vmem:[%s0 + $0x1f0] sm:$0xff]
  %v85 = vld [vmem:[%s0 + $0x1f8] sm:$0xff]
  %v86 = vld [vmem:[%s0 + $0x200] sm:$0xff]
  %v87 = vld [vmem:[%s0 + $0x208] sm:$0xff]
  %v88 = vld [vmem:[%s0 + $0x210] sm:$0xff]
  %v89 = vld [vmem:[%s0 + $0x218] sm:$0xff]
  %v90 = vld [vmem:[%s0 + $0x220] sm:$0xff]
  %v91 = vld [vmem:[%s0 + $0x228] sm:$0xff]
  %v92 = vld [vmem:[%s0 + $0x230] sm:$0xff]
  %v93 = vld [vmem:[%s0 + $0x238] sm:$0xff]
  %v94 = vld [vmem:[%s0 + $0x240] sm:$0xff]
  %v95 = vld [vmem:[%s0 + $0x248] sm:$0xff]
  %v96 = vld [vmem:[%s0 + $0x250] sm:$0xff]
  %v97 = vld [vmem:[%s0 + $0x258] sm:$0xff]
  %v98 = vld [vmem:[%s0 + $0x260] sm:$0xff]
  %v99 = vld [vmem:[%s0 + $0x268] sm:$0xff]
  %v100 = vld [vmem:[%s0 + $0x270] sm:$0xff]
  %v101 = vld [vmem:[%s0 + $0x278] sm:$0xff]
  %v102 = vld [vmem:[%s0 + $0x280] sm:$0xff]
  %v103 = vld [vmem:[%s0 + $0x288] sm:$0xff]
  %v104 = vld [vmem:[%s0 + $0x290] sm:$0xff]
  %v105 = vld [vmem:[%s0 + $0x298] sm:$0xff]
  %v106 = vld [vmem:[%s0 + $0x2a0] sm:$0xff]
  %v107 = vld [vmem:[%s0 + $0x2a8] sm:$0xff]
  %v108 = vld [vmem:[%s0 + $0x2b0] sm:$0xff]
  %v109 = vld [vmem:[%s0 + $0x2b8] sm:$0xff]
  %v110 = vld [vmem:[%s0 + $0x2c0] sm:$0xff]
  %v111 = vld [vmem:[%s0 + $0x2c8] sm:$0xff]
  %v112 = vld [vmem:[%s0 + $0x2d0] sm:$0xff]
  %v113 = vld [vmem:[%s0 + $0x2d8] sm:$0xff]
  %v114 = vld [vmem:[%s0 + $0x2e0] sm:$0xff]
  %v115 = vld [vmem:[%s0 + $0x2e8] sm:$0xff]
  %v116 = vld [vmem:[%s0 + $0x2f0] sm:$0xff]
  %v117 = vld [vmem:[%s0 + $0x2f8] sm:$0xff]
  %v118 = vld [vmem:[%s0 + $0x300] sm:$0xff]
  %v119 = vld [vmem:[%s0 + $0x308] sm:$0xff]
  %v120 = vld [vmem:[%s0 + $0x310] sm:$0xff]
  %v121 = vld [vmem:[%s0 + $0x318] sm:$0xff]
  %v122 = vld [vmem:[%s0 + $0x320] sm:$0xff]
  %v123 = vld [vmem:[%s0 + $0x328] sm:$0xff]
  %v124 = vld [vmem:[%s0 + $0x330] sm:$0xff]
  %v125 = vld [vmem:[%s0 + $0x338] sm:$0xff]
  %v126 = vld [vmem:[%s0 + $0x340] sm:$0xff]
  %v127 = vld [vmem:[%s0 + $0x348] sm:$0xff]
  %v128 = vld [vmem:[%s0 + $0x350] sm:$0xff]
  %v129 = vld [vmem:[%s0 + $0x358] sm:$0xff]
  %v130 = vld [vmem:[%s0 + $0x360] sm:$0xff]
  %v131 = vld [vmem:[%s0 + $0x368] sm:$0xff]
  %v132 = vld [vmem:[%s0 + $0x370] sm:$0xff]
  %v133 = vld [vmem:[%s0 + $0x378] sm:$0xff]
  %v134 = vld [vmem:[%s0 + $0x380] sm:$0xff]
  %v135 = vld [vmem:[%s0 + $0x388] sm:$0xff]
  %v136 = vld [vmem:[%s0 + $0x390] sm:$0xff]
  %v137 = vld [vmem:[%s0 + $0x398] sm:$0xff]
  %v138 = vld [vmem:[%s0 + $0x3a0] sm:$0xff]
  %v139 = vld [vmem:[%s0 + $0x3a8] sm:$0xff]
  %v140 = vld [vmem:[%s0 + $0x3b0] sm:$0xff]
  %v141 = vld [vmem:[%s0 + $0x3b8] sm:$0xff]
  %v142 = vld [vmem:[%s0 + $0x3c0] sm:$0xff]
  %v143 = vld [vmem:[%s0 + $0x3c8] sm:$0xff]
  %v144 = vld [vmem:[%s0 + $0x3d0] sm:$0xff]
  %v145 = vld [vmem:[%s0 + $0x3d8] sm:$0xff]
  %v146 = vld [vmem:[%s0 + $0x3e0] sm:$0xff]
  %v147 = vld [vmem:[%s0 + $0x3e8] sm:$0xff]
  %v148 = vld [vmem:[%s0 + $0x3f0] sm:$0xff]
  %v149 = vld [vmem:[%s0 + $0x3f8] sm:$0xff]
  %v150 = vld [vmem:[%s0 + $0x400] sm:$0xff]
  %v151 = vld [vmem:[%s0 + $0x408] sm:$0xff]
  %v152 = vld [vmem:[%s0 + $0x410] sm:$0xff]
  %v153 = vld [vmem:[%s0 + $0x418] sm:$0xff]
  %v154 = vld [vmem:[%s0 + $0x420] sm:$0xff]
  %v155 = vld [vmem:[%s0 + $0x428] sm:$0xff]
  %v156 = vld [vmem:[%s0 + $0x430] sm:$0xff]
  %v157 = vld [vmem:[%s0 + $0x438] sm:$0xff]
  %v158 = vld [vmem:[%s0 + $0x440] sm:$0xff]
  %v159 = vld [vmem:[%s0 + $0x448] sm:$0xff]
  %v160 = vld [vmem:[%s0 + $0x450] sm:$0xff]
  %v161 = vld [vmem:[%s0 + $0x458] sm:$0xff]
  %v162 = vld [vmem:[%s0 + $0x460] sm:$0xff]
  %v163 = vld [vmem:[%s0 + $0x468] sm:$0xff]
  %v164 = vld [vmem:[%s0 + $0x470] sm:$0xff]
  %v165 = vld [vmem:[%s0 + $0x478] sm:$0xff]
  %v166 = vld [vmem:[%s0 + $0x480] sm:$0xff]
  %v167 = vld [vmem:[%s0 + $0x488] sm:$0xff]
  %v168 = vld [vmem:[%s0 + $0x490] sm:$0xff]
  %v169 = vld [vmem:[%s0 + $0x498] sm:$0xff]
  %v170 = vld [vmem:[%s0 + $0x4a0] sm:$0xff]
  %v171 = vld [vmem:[%s0 + $0x4a8] sm:$0xff]
  %v172 = vld [vmem:[%s0 + $0x4b0] sm:$0xff]
  %v173 = vld [vmem:[%s0 + $0x4b8] sm:$0xff]
  %v174 = vld [vmem:[%s0 + $0x4c0] sm:$0xff]
  %v175 = vld [vmem:[%s0 + $0x4c8] sm:$0xff]
  %v176 = vld [vmem:[%s0 + $0x4d0] sm:$0xff]
  %v177 = vld [vmem:[%s0 + $0x4d8] sm:$0xff]
  %v178 = vld [vmem:[%s0 + $0x4e0] sm:$0xff]
  %v179 = vld [vmem:[%s0 + $0x4e8] sm:$0xff]
  %v180 = vld [vmem:[%s0 + $0x4f0] sm:$0xff]
  %v181 = vld [vmem:[%s0 + $0x4f8] sm:$0xff]
  %v182 = vld [vmem:[%s0 + $0x500] sm:$0xff]
  %v183 = vld [vmem:[%s0 + $0x508] sm:$0xff]
  %v184 = vld [vmem:[%s0 + $0x510] sm:$0xff]
  %v185 = vld [vmem:[%s0 + $0x518] sm:$0xff]
  %v186 = vld [vmem:[%s0 + $0x520] sm:$0xff]
  %v187 = vld [vmem:[%s0 + $0x528] sm:$0xff]
  %v188 = vld [vmem:[%s0 + $0x530] sm:$0xff]
  %v189 = vld [vmem:[%s0 + $0x538] sm:$0xff]
  %v190 = vld [vmem:[%s0 + $0x540] sm:$0xff]
  %v191 = vld [vmem:[%s0 + $0x548] sm:$0xff]
  %v192 = vld [vmem:[%s0 + $0x550] sm:$0xff]
  %v193 = vld [vmem:[%s0 + $0x558] sm:$0xff]
  %v194 = vld [vmem:[%s0 + $0x560] sm:$0xff]
  %v195 = vld [vmem:[%s0 + $0x568] sm:$0xff]
  %v196 = vld [vmem:[%s0 + $0x570] sm:$0xff]
  %v197 = vld [vmem:[%s0 + $0x578] sm:$0xff]
  %v198 = vld [vmem:[%s0 + $0x580] sm:$0xff]
  %v199 = vld [vmem:[%s0 + $0x588] sm:$0xff]
  %v200 = vld [vmem:[%s0 + $0x590] sm:$0xff]
  %v201 = vld [vmem:[%s0 + $0x598] sm:$0xff]
  %v202 = vld [vmem:[%s0 + $0x5a0] sm:$0xff]
  %v203 = vld [vmem:[%s0 + $0x5a8] sm:$0xff]
  %v204 = vld [vmem:[%s0 + $0x5b0] sm:$0xff]
  %v205 = vld [vmem:[%s0 + $0x5b8] sm:$0xff]
  %v206 = vld [vmem:[%s0 + $0x5c0] sm:$0xff]
  %v207 = vld [vmem:[%s0 + $0x5c8] sm:$0xff]
  %v208 = vld [vmem:[%s0 + $0x5d0] sm:$0xff]
  %v209 = vld [vmem:[%s0 + $0x5d8] sm:$0xff]
  %v210 = vld [vmem:[%s0 + $0x5e0] sm:$0xff]
  %v211 = vld [vmem:[%s0 + $0x5e8] sm:$0xff]
  %v212 = vld [vmem:[%s0 + $0x5f0] sm:$0xff]
  %v213 = vld [vmem:[%s0 + $0x5f8] sm:$0xff]
  %v214 = vld [vmem:[%s0 + $0x600] sm:$0xff]
  %v215 = vld [vmem:[%s0 + $0x608] sm:$0xff]
  %v216 = vld [vmem:[%s0 + $0x610] sm:$0xff]
  %v217 = vld [vmem:[%s0 + $0x618] sm:$0xff]
  %v218 = vld [vmem:[%s0 + $0x620] sm:$0xff]
  %v219 = vld [vmem:[%s0 + $0x628] sm:$0xff]
  %v220 = vld [vmem:[%s0 + $0x630] sm:$0xff]
  %v221 = vld [vmem:[%s0 + $0x638] sm:$0xff]
  %v222 = vld [vmem:[%s0 + $0x640] sm:$0xff]
  %v223 = vld [vmem:[%s0 + $0x648] sm:$0xff]
  %v224 = vld [vmem:[%s0 + $0x650] sm:$0xff]
  %v225 = vld [vmem:[%s0 + $0x658] sm:$0xff]
  %v226 = vld [vmem:[%s0 + $0x660] sm:$0xff]
  %v227 = vld [vmem:[%s0 + $0x668] sm:$0xff]
  %v228 = vld [vmem:[%s0 + $0x670] sm:$0xff]
  %v229 = vld [vmem:[%s0 + $0x678] sm:$0xff]
  %v230 = vld [vmem:[%s0 + $0x680] sm:$0xff]
  %v231 = vld [vmem:[%s0 + $0x688] sm:$0xff]
  %v232 = vld [vmem:[%s0 + $0x690] sm:$0xff]
  %v233 = vld [vmem:[%s0 + $0x698] sm:$0xff]
  %v234 = vld [vmem:[%s0 + $0x6a0] sm:$0xff]
  %v235 = vld [vmem:[%s0 + $0x6a8] sm:$0xff]
  %v236 = vld [vmem:[%s0 + $0x6b0] sm:$0xff]
  %v237 = vld [vmem:[%s0 + $0x6b8] sm:$0xff]
  %v238 = vld [vmem:[%s0 + $0x6c0] sm:$0xff]
  %v239 = vld [vmem:[%s0 + $0x6c8] sm:$0xff]
  %v240 = vld [vmem:[%s0 + $0x6d0] sm:$0xff]
  %v241 = vld [vmem:[%s0 + $0x6d8] sm:$0xff]
  %v242 = vld [vmem:[%s0 + $0x6e0] sm:$0xff]
  %v243 = vld [vmem:[%s0 + $0x6e8] sm:$0xff]
  %v244 = vld [vmem:[%s0 + $0x6f0] sm:$0xff]
  %v245 = vld [vmem:[%s0 + $0x6f8] sm:$0xff]
  %v246 = vld [vmem:[%s0 + $0x700] sm:$0xff]
  %v247 = vld [vmem:[%s0 + $0x708] sm:$0xff]
  %v248 = vld [vmem:[%s0 + $0x710] sm:$0xff]
  %v249 = vld [vmem:[%s0 + $0x718] sm:$0xff]
  %v250 = vld [vmem:[%s0 + $0x720] sm:$0xff]
  %v251 = vld [vmem:[%s0 + $0x728] sm:$0xff]
  %v252 = vld [vmem:[%s0 + $0x730] sm:$0xff]
  %v253 = vld [vmem:[%s0 + $0x738] sm:$0xff]
  %v254 = vld [vmem:[%s0 + $0x740] sm:$0xff]
  %v255 = vld [vmem:[%s0 + $0x748] sm:$0xff]
  %v256 = vld [vmem:[%s0 + $0x750] sm:$0xff]
  %v257 = vld [vmem:[%s0 + $0x758] sm:$0xff]
  %v258 = vld [vmem:[%s0 + $0x760] sm:$0xff]
  %v259 = vld [vmem:[%s0 + $0x768] sm:$0xff]
  %v260 = vld [vmem:[%s0 + $0x770] sm:$0xff]
  %v261 = vld [vmem:[%s0 + $0x778] sm:$0xff]
  %v262 = vld [vmem:[%s0 + $0x780] sm:$0xff]
  %v263 = vld [vmem:[%s0 + $0x788] sm:$0xff]
  %v264 = vld [vmem:[%s0 + $0x790] sm:$0xff]
  %v265 = vld [vmem:[%s0 + $0x798] sm:$0xff]
  %v266 = vld [vmem:[%s0 + $0x7a0] sm:$0xff]
  %v267 = vld [vmem:[%s0 + $0x7a8] sm:$0xff]
  %v268 = vld [vmem:[%s0 + $0x7b0] sm:$0xff]
  %v269 = vld [vmem:[%s0 + $0x7b8] sm:$0xff]
  %v270 = vld [vmem:[%s0 + $0x7c0] sm:$0xff]
  %v271 = vld [vmem:[%s0 + $0x7c8] sm:$0xff]
  %v272 = vld [vmem:[%s0 + $0x7d0] sm:$0xff]
  %v273 = vld [vmem:[%s0 + $0x7d8] sm:$0xff]
  %v274 = vld [vmem:[%s0 + $0x7e0] sm:$0xff]
  %v275 = vld [vmem:[%s0 + $0x7e8] sm:$0xff]
  %v276 = vld [vmem:[%s0 + $0x7f0] sm:$0xff]
  %v277 = vld [vmem:[%s0 + $0x7f8] sm:$0xff]
  %v278 = vld [vmem:[%s0 + $0x800] sm:$0xff]
  %v279 = vld [vmem:[%s0 + $0x808] sm:$0xff]
  %v280 = vld [vmem:[%s0 + $0x810] sm:$0xff]
  %v281 = vld [vmem:[%s0 + $0x818] sm:$0xff]
  %v282 = vld [vmem:[%s0 + $0x820] sm:$0xff]
  %v283 = vld [vmem:[%s0 + $0x828] sm:$0xff]
  %v284 = vld [vmem:[%s0 + $0x830] sm:$0xff]
  %v285 = vld [vmem:[%s0 + $0x838] sm:$0xff]
  %v286 = vld [vmem:[%s0 + $0x840] sm:$0xff]
  %v287 = vld [vmem:[%s0 + $0x848] sm:$0xff]
  %v288 = vld [vmem:[%s0 + $0x850] sm:$0xff]
  %v289 = vld [vmem:[%s0 + $0x858] sm:$0xff]
  %v290 = vld [vmem:[%s0 + $0x860] sm:$0xff]
  %v291 = vld [vmem:[%s0 + $0x868] sm:$0xff]
  %v292 = vld [vmem:[%s0 + $0x870] sm:$0xff]
  %v293 = vld [vmem:[%s0 + $0x878] sm:$0xff]
  %v294 = vld [vmem:[%s0 + $0x880] sm:$0xff]
  %v295 = vld [vmem:[%s0 + $0x888] sm:$0xff]
  %v296 = vld [vmem:[%s0 + $0x890] sm:$0xff]
  %v297 = vld [vmem:[%s0 + $0x898] sm:$0xff]
  %v298 = vld [vmem:[%s0 + $0x8a0] sm:$0xff]
  %v299 = vld [vmem:[%s0 + $0x8a8] sm:$0xff]
  %v300 = vld [vmem:[%s0 + $0x8b0] sm:$0xff]
  %v301 = vld [vmem:[%s0 + $0x8b8] sm:$0xff]
  %v302 = vld [vmem:[%s0 + $0x8c0] sm:$0xff]
  %v303 = vld [vmem:[%s0 + $0x8c8] sm:$0xff]
  %v304 = vld [vmem:[%s0 + $0x8d0] sm:$0xff]
  %v305 = vld [vmem:[%s0 + $0x8d8] sm:$0xff]
  %v306 = vld [vmem:[%s0 + $0x8e0] sm:$0xff]
  %v307 = vld [vmem:[%s0 + $0x8e8] sm:$0xff]
  %v308 = vld [vmem:[%s0 + $0x8f0] sm:$0xff]
  %v309 = vld [vmem:[%s0 + $0x8f8] sm:$0xff]
  %v310 = vld [vmem:[%s0 + $0x900] sm:$0xff]
  %v311 = vld [vmem:[%s0 + $0x908] sm:$0xff]
  %v312 = vld [vmem:[%s0 + $0x910] sm:$0xff]
  %v313 = vld [vmem:[%s0 + $0x918] sm:$0xff]
  %v314 = vld [vmem:[%s0 + $0x920] sm:$0xff]
  %v315 = vld [vmem:[%s0 + $0x928] sm:$0xff]
  %v316 = vld [vmem:[%s0 + $0x930] sm:$0xff]
  %v317 = vld [vmem:[%s0 + $0x938] sm:$0xff]
  %v318 = vld [vmem:[%s0 + $0x940] sm:$0xff]
  %v319 = vld [vmem:[%s0 + $0x948] sm:$0xff]
  %v320 = vld [vmem:[%s0 + $0x950] sm:$0xff]
  %v321 = vld [vmem:[%s0 + $0x958] sm:$0xff]
  %v322 = vld [vmem:[%s0 + $0x960] sm:$0xff]
  %v323 = vld [vmem:[%s0 + $0x968] sm:$0xff]
  %v324 = vld [vmem:[%s0 + $0x970] sm:$0xff]
  %v325 = vld [vmem:[%s0 + $0x978] sm:$0xff]
  %v326 = vld [vmem:[%s0 + $0x980] sm:$0xff]
  %v327 = vld [vmem:[%s0 + $0x988] sm:$0xff]
  %v328 = vld [vmem:[%s0 + $0x990] sm:$0xff]
  %v329 = vld [vmem:[%s0 + $0x998] sm:$0xff]
  %v330 = vld [vmem:[%s0 + $0x9a0] sm:$0xff]
  %v331 = vld [vmem:[%s0 + $0x9a8] sm:$0xff]
  %v332 = vld [vmem:[%s0 + $0x9b0] sm:$0xff]
  %v333 = vld [vmem:[%s0 + $0x9b8] sm:$0xff]
  %v334 = vld [vmem:[%s0 + $0x9c0] sm:$0xff]
  %v335 = vld [vmem:[%s0 + $0x9c8] sm:$0xff]
  %v336 = vld [vmem:[%s0 + $0x9d0] sm:$0xff]
  %v337 = vld [vmem:[%s0 + $0x9d8] sm:$0xff]
  %v338 = vld [vmem:[%s0 + $0x9e0] sm:$0xff]
  %v339 = vld [vmem:[%s0 + $0x9e8] sm:$0xff]
  %v340 = vld [vmem:[%s0 + $0x9f0] sm:$0xff]
  %v341 = vld [vmem:[%s0 + $0x9f8] sm:$0xff]
  %v342 = vld [vmem:[%s0 + $0xa00] sm:$0xff]
  %v343 = vld [vmem:[%s0 + $0xa08] sm:$0xff]
  %v344 = vld [vmem:[%s0 + $0xa10] sm:$0xff]
  %v345 = vld [vmem:[%s0 + $0xa18] sm:$0xff]
  %v346 = vld [vmem:[%s0 + $0xa20] sm:$0xff]
  %v347 = vld [vmem:[%s0 + $0xa28] sm:$0xff]
  %v348 = vld [vmem:[%s0 + $0xa30] sm:$0xff]
  %v349 = vld [vmem:[%s0 + $0xa38] sm:$0xff]
  %v350 = vld [vmem:[%s0 + $0xa40] sm:$0xff]
  %v351 = vld [vmem:[%s0 + $0xa48] sm:$0xff]
  %v352 = vld [vmem:[%s0 + $0xa50] sm:$0xff]
  %v353 = vld [vmem:[%s0 + $0xa58] sm:$0xff]
  %v354 = vld [vmem:[%s0 + $0xa60] sm:$0xff]
  %v355 = vld [vmem:[%s0 + $0xa68] sm:$0xff]
  %v356 = vld [vmem:[%s0 + $0xa70] sm:$0xff]
  %v357 = vld [vmem:[%s0 + $0xa78] sm:$0xff]
  %v358 = vld [vmem:[%s0 + $0xa80] sm:$0xff]
  %v359 = vld [vmem:[%s0 + $0xa88] sm:$0xff]
  %v360 = vld [vmem:[%s0 + $0xa90] sm:$0xff]
  %v361 = vld [vmem:[%s0 + $0xa98] sm:$0xff]
  %v362 = vld [vmem:[%s0 + $0xaa0] sm:$0xff]
  %v363 = vld [vmem:[%s0 + $0xaa8] sm:$0xff]
  %v364 = vld [vmem:[%s0 + $0xab0] sm:$0xff]
  %v365 = vld [vmem:[%s0 + $0xab8] sm:$0xff]
  %v366 = vld [vmem:[%s0 + $0xac0] sm:$0xff]
  %v367 = vld [vmem:[%s0 + $0xac8] sm:$0xff]
  %v368 = vld [vmem:[%s0 + $0xad0] sm:$0xff]
  %v369 = vld [vmem:[%s0 + $0xad8] sm:$0xff]
  %v370 = vld [vmem:[%s0 + $0xae0] sm:$0xff]
  %v371 = vld [vmem:[%s0 + $0xae8] sm:$0xff]
  %v372 = vld [vmem:[%s0 + $0xaf0] sm:$0xff]
  %v373 = vld [vmem:[%s0 + $0xaf8] sm:$0xff]
  %v374 = vld [vmem:[%s0 + $0xb00] sm:$0xff]
  %v375 = vld [vmem:[%s0 + $0xb08] sm:$0xff]
  %v376 = vld [vmem:[%s0 + $0xb10] sm:$0xff]
  %v377 = vld [vmem:[%s0 + $0xb18] sm:$0xff]
  %v378 = vld [vmem:[%s0 + $0xb20] sm:$0xff]
  %v379 = vld [vmem:[%s0 + $0xb28] sm:$0xff]
  %v380 = vld [vmem:[%s0 + $0xb30] sm:$0xff]
  %v381 = vld [vmem:[%s0 + $0xb38] sm:$0xff]
  %v382 = vld [vmem:[%s0 + $0xb40] sm:$0xff]
  %v383 = vld [vmem:[%s0 + $0xb48] sm:$0xff]
  %v384 = vld [vmem:[%s0 + $0xb50] sm:$0xff]
  %v385 = vld [vmem:[%s0 + $0xb58] sm:$0xff]
  %v386 = vld [vmem:[%s0 + $0xb60] sm:$0xff]
  %v387 = vld [vmem:[%s0 + $0xb68] sm:$0xff]
  %v388 = vld [vmem:[%s0 + $0xb70] sm:$0xff]
  %v389 = vld [vmem:[%s0 + $0xb78] sm:$0xff]
  %v390 = vld [vmem:[%s0 + $0xb80] sm:$0xff]
  %v391 = vld [vmem:[%s0 + $0xb88] sm:$0xff]
  %v392 = vld [vmem:[%s0 + $0xb90] sm:$0xff]
  %v393 = vld [vmem:[%s0 + $0xb98] sm:$0xff]
  %v394 = vld [vmem:[%s0 + $0xba0] sm:$0xff]
  %v395 = vld [vmem:[%s0 + $0xba8] sm:$0xff]
  %v396 = vld [vmem:[%s0 + $0xbb0] sm:$0xff]
  %v397 = vld [vmem:[%s0 + $0xbb8] sm:$0xff]
  %v398 = vld [vmem:[%s0 + $0xbc0] sm:$0xff]
  %v399 = vld [vmem:[%s0 + $0xbc8] sm:$0xff]
  %v400 = vld [vmem:[%s0 + $0xbd0] sm:$0xff]
  %v401 = vld [vmem:[%s0 + $0xbd8] sm:$0xff]
  %v402 = vld [vmem:[%s0 + $0xbe0] sm:$0xff]
  %v403 = vld [vmem:[%s0 + $0xbe8] sm:$0xff]
  %v404 = vld [vmem:[%s0 + $0xbf0] sm:$0xff]
  %v405 = vld [vmem:[%s0 + $0xbf8] sm:$0xff]
  %v406 = vld [vmem:[%s0 + $0xc00] sm:$0xff]
  %v407 = vld [vmem:[%s0 + $0xc08] sm:$0xff]
  %v408 = vld [vmem:[%s0 + $0xc10] sm:$0xff]
  %v409 = vld [vmem:[%s0 + $0xc18] sm:$0xff]
  %v410 = vld [vmem:[%s0 + $0xc20] sm:$0xff]
  %v411 = vld [vmem:[%s0 + $0xc28] sm:$0xff]
  %v412 = vld [vmem:[%s0 + $0xc30] sm:$0xff]
  %v413 = vld [vmem:[%s0 + $0xc38] sm:$0xff]
  %v414 = vld [vmem:[%s0 + $0xc40] sm:$0xff]
  %v415 = vld [vmem:[%s0 + $0xc48] sm:$0xff]
  %v416 = vld [vmem:[%s0 + $0xc50] sm:$0xff]
  %v417 = vld [vmem:[%s0 + $0xc58] sm:$0xff]
  %v418 = vld [vmem:[%s0 + $0xc60] sm:$0xff]
  %v419 = vld [vmem:[%s0 + $0xc68] sm:$0xff]
  %v420 = vld [vmem:[%s0 + $0xc70] sm:$0xff]
  %v421 = vld [vmem:[%s0 + $0xc78] sm:$0xff]
  %v422 = vld [vmem:[%s0 + $0xc80] sm:$0xff]
  %v423 = vld [vmem:[%s0 + $0xc88] sm:$0xff]
  %v424 = vld [vmem:[%s0 + $0xc90] sm:$0xff]
  %v425 = vld [vmem:[%s0 + $0xc98] sm:$0xff]
  %v426 = vld [vmem:[%s0 + $0xca0] sm:$0xff]
  %v427 = vld [vmem:[%s0 + $0xca8] sm:$0xff]
  %v428 = vld [vmem:[%s0 + $0xcb0] sm:$0xff]
  %v429 = vld [vmem:[%s0 + $0xcb8] sm:$0xff]
  %v430 = vld [vmem:[%s0 + $0xcc0] sm:$0xff]
  %v431 = vld [vmem:[%s0 + $0xcc8] sm:$0xff]
  %v432 = vld [vmem:[%s0 + $0xcd0] sm:$0xff]
  %v433 = vld [vmem:[%s0 + $0xcd8] sm:$0xff]
  %v434 = vld [vmem:[%s0 + $0xce0] sm:$0xff]
  %v435 = vld [vmem:[%s0 + $0xce8] sm:$0xff]
  %v436 = vld [vmem:[%s0 + $0xcf0] sm:$0xff]
  %v437 = vld [vmem:[%s0 + $0xcf8] sm:$0xff]
  %v438 = vld [vmem:[%s0 + $0xd00] sm:$0xff]
  %v439 = vld [vmem:[%s0 + $0xd08] sm:$0xff]
  %v440 = vld [vmem:[%s0 + $0xd10] sm:$0xff]
  %v441 = vld [vmem:[%s0 + $0xd18] sm:$0xff]
  %v442 = vld [vmem:[%s0 + $0xd20] sm:$0xff]
  %v443 = vld [vmem:[%s0 + $0xd28] sm:$0xff]
  %v444 = vld [vmem:[%s0 + $0xd30] sm:$0xff]
  %v445 = vld [vmem:[%s0 + $0xd38] sm:$0xff]
  %v446 = vld [vmem:[%s0 + $0xd40] sm:$0xff]
  %v447 = vld [vmem:[%s0 + $0xd48] sm:$0xff]
  %v448 = vld [vmem:[%s0 + $0xd50] sm:$0xff]
  %v449 = vld [vmem:[%s0 + $0xd58] sm:$0xff]
  %v450 = vld [vmem:[%s0 + $0xd60] sm:$0xff]
  %v451 = vld [vmem:[%s0 + $0xd68] sm:$0xff]
  %v452 = vld [vmem:[%s0 + $0xd70] sm:$0xff]
  %v453 = vld [vmem:[%s0 + $0xd78] sm:$0xff]
  %v454 = vld [vmem:[%s0 + $0xd80] sm:$0xff]
  %v455 = vld [vmem:[%s0 + $0xd88] sm:$0xff]
  %v456 = vld [vmem:[%s0 + $0xd90] sm:$0xff]
  %v457 = vld [vmem:[%s0 + $0xd98] sm:$0xff]
  %v458 = vld [vmem:[%s0 + $0xda0] sm:$0xff]
  %v459 = vld [vmem:[%s0 + $0xda8] sm:$0xff]
  %v460 = vld [vmem:[%s0 + $0xdb0] sm:$0xff]
  %v461 = vld [vmem:[%s0 + $0xdb8] sm:$0xff]
  %v462 = vld [vmem:[%s0 + $0xdc0] sm:$0xff]
  %v463 = vld [vmem:[%s0 + $0xdc8] sm:$0xff]
  %v464 = vld [vmem:[%s0 + $0xdd0] sm:$0xff]
  %v465 = vld [vmem:[%s0 + $0xdd8] sm:$0xff]
  %v466 = vld [vmem:[%s0 + $0xde0] sm:$0xff]
  %v467 = vld [vmem:[%s0 + $0xde8] sm:$0xff]
  %v468 = vld [vmem:[%s0 + $0xdf0] sm:$0xff]
  %v469 = vld [vmem:[%s0 + $0xdf8] sm:$0xff]
  %v470 = vld [vmem:[%s0 + $0xe00] sm:$0xff]
  %v471 = vld [vmem:[%s0 + $0xe08] sm:$0xff]
  %v472 = vld [vmem:[%s0 + $0xe10] sm:$0xff]
  %v473 = vld [vmem:[%s0 + $0xe18] sm:$0xff]
  %v474 = vld [vmem:[%s0 + $0xe20] sm:$0xff]
  %v475 = vld [vmem:[%s0 + $0xe28] sm:$0xff]
  %v476 = vld [vmem:[%s0 + $0xe30] sm:$0xff]
  %v477 = vld [vmem:[%s0 + $0xe38] sm:$0xff]
  %v478 = vld [vmem:[%s0 + $0xe40] sm:$0xff]
  %v479 = vld [vmem:[%s0 + $0xe48] sm:$0xff]
  %v480 = vld [vmem:[%s0 + $0xe50] sm:$0xff]
  %v481 = vld [vmem:[%s0 + $0xe58] sm:$0xff]
  %v482 = vld [vmem:[%s0 + $0xe60] sm:$0xff]
  %v483 = vld [vmem:[%s0 + $0xe68] sm:$0xff]
  %v484 = vld [vmem:[%s0 + $0xe70] sm:$0xff]
  %v485 = vld [vmem:[%s0 + $0xe78] sm:$0xff]
  %v486 = vld [vmem:[%s0 + $0xe80] sm:$0xff]
  %v487 = vld [vmem:[%s0 + $0xe88] sm:$0xff]
  %v488 = vld [vmem:[%s0 + $0xe90] sm:$0xff]
  %v489 = vld [vmem:[%s0 + $0xe98] sm:$0xff]
  %v490 = vld [vmem:[%s0 + $0xea0] sm:$0xff]
  %v491 = vld [vmem:[%s0 + $0xea8] sm:$0xff]
  %v492 = vld [vmem:[%s0 + $0xeb0] sm:$0xff]
  %v493 = vld [vmem:[%s0 + $0xeb8] sm:$0xff]
  %v494 = vld [vmem:[%s0 + $0xec0] sm:$0xff]
  %v495 = vld [vmem:[%s0 + $0xec8] sm:$0xff]
  %v496 = vld [vmem:[%s0 + $0xed0] sm:$0xff]
  %v497 = vld [vmem:[%s0 + $0xed8] sm:$0xff]
  %v498 = vld [vmem:[%s0 + $0xee0] sm:$0xff]
  %v499 = vld [vmem:[%s0 + $0xee8] sm:$0xff]
  %v500 = vld [vmem:[%s0 + $0xef0] sm:$0xff]
  %v501 = vld [vmem:[%s0 + $0xef8] sm:$0xff]
  %v502 = vld [vmem:[%s0 + $0xf00] sm:$0xff]
  %v503 = vld [vmem:[%s0 + $0xf08] sm:$0xff]
  %v504 = vld [vmem:[%s0 + $0xf10] sm:$0xff]
  %v505 = vld [vmem:[%s0 + $0xf18] sm:$0xff]
  %v506 = vld [vmem:[%s0 + $0xf20] sm:$0xff]
  %v507 = vld [vmem:[%s0 + $0xf28] sm:$0xff]
  %v508 = vld [vmem:[%s0 + $0xf30] sm:$0xff]
  %v509 = vld [vmem:[%s0 + $0xf38] sm:$0xff]
  %v510 = vld [vmem:[%s0 + $0xf40] sm:$0xff]
  %v511 = vld [vmem:[%s0 + $0xf48] sm:$0xff]
  %v512 = vld [vmem:[%s0 + $0xf50] sm:$0xff]
  %v513 = vld [vmem:[%s0 + $0xf58] sm:$0xff]
  %v514 = vld [vmem:[%s0 + $0xf60] sm:$0xff]
  %v515 = vld [vmem:[%s0 + $0xf68] sm:$0xff]
  %v516 = vld [vmem:[%s0 + $0xf70] sm:$0xff]
  %v517 = vld [vmem:[%s0 + $0xf78] sm:$0xff]
  %v518 = vld [vmem:[%s0 + $0xf80] sm:$0xff]
  %v519 = vld [vmem:[%s0 + $0xf88] sm:$0xff]
  %v520 = vld [vmem:[%s0 + $0xf90] sm:$0xff]
  %v521 = vld [vmem:[%s0 + $0xf98] sm:$0xff]
  %v522 = vld [vmem:[%s0 + $0xfa0] sm:$0xff]
  %v523 = vld [vmem:[%s0 + $0xfa8] sm:$0xff]
  %v524 = vld [vmem:[%s0 + $0xfb0] sm:$0xff]
  %v525 = vld [vmem:[%s0 + $0xfb8] sm:$0xff]
  %v526 = vld [vmem:[%s0 + $0xfc0] sm:$0xff]
  %v527 = vld [vmem:[%s0 + $0xfc8] sm:$0xff]
  %v528 = vld [vmem:[%s0 + $0xfd0] sm:$0xff]
  %v529 = vld [vmem:[%s0 + $0xfd8] sm:$0xff]
  %v530 = vld [vmem:[%s0 + $0xfe0] sm:$0xff]
  %v531 = vld [vmem:[%s0 + $0xfe8] sm:$0xff]
  %v532 = vld [vmem:[%s0 + $0xff0] sm:$0xff]
  %v533 = vld [vmem:[%s0 + $0xff8] sm:$0xff]
  %v534 = vld [vmem:[%s0 + $0x1000] sm:$0xff]
  %v535 = vld [vmem:[%s0 + $0x1008] sm:$0xff]
  %v536 = vld [vmem:[%s0 + $0x1010] sm:$0xff]
  %v537 = vld [vmem:[%s0 + $0x1018] sm:$0xff]
  %v538 = vld [vmem:[%s0 + $0x1020] sm:$0xff]
  %v539 = vld [vmem:[%s0 + $0x1028] sm:$0xff]
  %v540 = vld [vmem:[%s0 + $0x1030] sm:$0xff]
  %v541 = vld [vmem:[%s0 + $0x1038] sm:$0xff]
  %v542 = vld [vmem:[%s0 + $0x1040] sm:$0xff]
  %v543 = vld [vmem:[%s0 + $0x1048] sm:$0xff]
  %v544 = vld [vmem:[%s0 + $0x1050] sm:$0xff]
  %v545 = vld [vmem:[%s0 + $0x1058] sm:$0xff]
  %v546 = vld [vmem:[%s0 + $0x1060] sm:$0xff]
  %v547 = vld [vmem:[%s0 + $0x1068] sm:$0xff]
  %v548 = vld [vmem:[%s0 + $0x1070] sm:$0xff]
  %v549 = vld [vmem:[%s0 + $0x1078] sm:$0xff]
  %v550 = vld [vmem:[%s0 + $0x1080] sm:$0xff]
  %v551 = vld [vmem:[%s0 + $0x1088] sm:$0xff]
  %v552 = vld [vmem:[%s0 + $0x1090] sm:$0xff]
  %v553 = vld [vmem:[%s0 + $0x1098] sm:$0xff]
  %v554 = vld [vmem:[%s0 + $0x10a0] sm:$0xff]
  %v555 = vld [vmem:[%s0 + $0x10a8] sm:$0xff]
  %v556 = vld [vmem:[%s0 + $0x10b0] sm:$0xff]
  %v557 = vld [vmem:[%s0 + $0x10b8] sm:$0xff]
  %v558 = vld [vmem:[%s0 + $0x10c0] sm:$0xff]
  %v559 = vld [vmem:[%s0 + $0x10c8] sm:$0xff]
  %v560 = vld [vmem:[%s0 + $0x10d0] sm:$0xff]
  %v561 = vld [vmem:[%s0 + $0x10d8] sm:$0xff]
  %v562 = vld [vmem:[%s0 + $0x10e0] sm:$0xff]
  %v563 = vld [vmem:[%s0 + $0x10e8] sm:$0xff]
  %v564 = vld [vmem:[%s0 + $0x10f0] sm:$0xff]
  %v565 = vld [vmem:[%s0 + $0x10f8] sm:$0xff]
  %v566 = vld [vmem:[%s0 + $0x1100] sm:$0xff]
  %v567 = vld [vmem:[%s0 + $0x1108] sm:$0xff]
  %v568 = vld [vmem:[%s0 + $0x1110] sm:$0xff]
  %v569 = vld [vmem:[%s0 + $0x1118] sm:$0xff]
  %v570 = vld [vmem:[%s0 + $0x1120] sm:$0xff]
  %v571 = vld [vmem:[%s0 + $0x1128] sm:$0xff]
  %v572 = vld [vmem:[%s0 + $0x1130] sm:$0xff]
  %v573 = vld [vmem:[%s0 + $0x1138] sm:$0xff]
  %v574 = vld [vmem:[%s0 + $0x1140] sm:$0xff]
  %v575 = vld [vmem:[%s0 + $0x1148] sm:$0xff]
  %v576 = vld [vmem:[%s0 + $0x1150] sm:$0xff]
  %v577 = vld [vmem:[%s0 + $0x1158] sm:$0xff]
  %v578 = vld [vmem:[%s0 + $0x1160] sm:$0xff]
  %v579 = vld [vmem:[%s0 + $0x1168] sm:$0xff]
  %v580 = vld [vmem:[%s0 + $0x1170] sm:$0xff]
  %v581 = vld [vmem:[%s0 + $0x1178] sm:$0xff]
  %v582 = vld [vmem:[%s0 + $0x1180] sm:$0xff]
  %v583 = vld [vmem:[%s0 + $0x1188] sm:$0xff]
  %v584 = vld [vmem:[%s0 + $0x1190] sm:$0xff]
  %v585 = vld [vmem:[%s0 + $0x1198] sm:$0xff]
  %v586 = vld [vmem:[%s0 + $0x11a0] sm:$0xff]
  %v587 = vld [vmem:[%s0 + $0x11a8] sm:$0xff]
  %v588 = vld [vmem:[%s0 + $0x11b0] sm:$0xff]
  %v589 = vld [vmem:[%s0 + $0x11b8] sm:$0xff]
  %v590 = vld [vmem:[%s0 + $0x11c0] sm:$0xff]
  %v591 = vld [vmem:[%s0 + $0x11c8] sm:$0xff]
  %v592 = vld [vmem:[%s0 + $0x11d0] sm:$0xff]
  %v593 = vld [vmem:[%s0 + $0x11d8] sm:$0xff]
  %v594 = vld [vmem:[%s0 + $0x11e0] sm:$0xff]
  %v595 = vld [vmem:[%s0 + $0x11e8] sm:$0xff]
  %v596 = vld [vmem:[%s0 + $0x11f0] sm:$0xff]
  %v597 = vld [vmem:[%s0 + $0x11f8] sm:$0xff]
  %v598 = vld [vmem:[%s0 + $0x1200] sm:$0xff]
  %v599 = vld [vmem:[%s0 + $0x1208] sm:$0xff]
  %v600 = vld [vmem:[%s0 + $0x1210] sm:$0xff]
  %v601 = vld [vmem:[%s0 + $0x1218] sm:$0xff]
  %v602 = vld [vmem:[%s0 + $0x1220] sm:$0xff]
  %v603 = vld [vmem:[%s0 + $0x1228] sm:$0xff]
  %v604 = vld [vmem:[%s0 + $0x1230] sm:$0xff]
  %v605 = vld [vmem:[%s0 + $0x1238] sm:$0xff]
  %v606 = vld [vmem:[%s0 + $0x1240] sm:$0xff]
  %v607 = vld [vmem:[%s0 + $0x1248] sm:$0xff]
  %v608 = vld [vmem:[%s0 + $0x1250] sm:$0xff]
  %v609 = vld [vmem:[%s0 + $0x1258] sm:$0xff]
  %v610 = vld [vmem:[%s0 + $0x1260] sm:$0xff]
  %v611 = vld [vmem:[%s0 + $0x1268] sm:$0xff]
  %v612 = vld [vmem:[%s0 + $0x1270] sm:$0xff]
  %v613 = vld [vmem:[%s0 + $0x1278] sm:$0xff]
  %v614 = vld [vmem:[%s0 + $0x1280] sm:$0xff]
  %v615 = vld [vmem:[%s0 + $0x1288] sm:$0xff]
  %v616 = vld [vmem:[%s0 + $0x1290] sm:$0xff]
  %v617 = vld [vmem:[%s0 + $0x1298] sm:$0xff]
  %v618 = vld [vmem:[%s0 + $0x12a0] sm:$0xff]
  %v619 = vld [vmem:[%s0 + $0x12a8] sm:$0xff]
  %v620 = vld [vmem:[%s0 + $0x12b0] sm:$0xff]
  %v621 = vld [vmem:[%s0 + $0x12b8] sm:$0xff]
  %v622 = vld [vmem:[%s0 + $0x12c0] sm:$0xff]
  %v623 = vld [vmem:[%s0 + $0x12c8] sm:$0xff]
  %v624 = vld [vmem:[%s0 + $0x12d0] sm:$0xff]
  %v625 = vld [vmem:[%s0 + $0x12d8] sm:$0xff]
  %v626 = vld [vmem:[%s0 + $0x12e0] sm:$0xff]
  %v627 = vld [vmem:[%s0 + $0x12e8] sm:$0xff]
  %v628 = vld [vmem:[%s0 + $0x12f0] sm:$0xff]
  %v629 = vld [vmem:[%s0 + $0x12f8] sm:$0xff]
  %v630 = vld [vmem:[%s0 + $0x1300] sm:$0xff]
  %v631 = vld [vmem:[%s0 + $0x1308] sm:$0xff]
  %v632 = vld [vmem:[%s0 + $0x1310] sm:$0xff]
  %v633 = vld [vmem:[%s0 + $0x1318] sm:$0xff]
  %v634 = vld [vmem:[%s0 + $0x1320] sm:$0xff]
  %v635 = vld [vmem:[%s0 + $0x1328] sm:$0xff]
  %v636 = vld [vmem:[%s0 + $0x1330] sm:$0xff]
  %v637 = vld [vmem:[%s0 + $0x1338] sm:$0xff]
  %v638 = vld [vmem:[%s0 + $0x1340] sm:$0xff]
  %v639 = vld [vmem:[%s0 + $0x1348] sm:$0xff]
  %v640 = vld [vmem:[%s0 + $0x1350] sm:$0xff]
  %v641 = vld [vmem:[%s0 + $0x1358] sm:$0xff]
  %v642 = vld [vmem:[%s0 + $0x1360] sm:$0xff]
  %v643 = vld [vmem:[%s0 + $0x1368] sm:$0xff]
  %v644 = vld [vmem:[%s0 + $0x1370] sm:$0xff]
  %v645 = vld [vmem:[%s0 + $0x1378] sm:$0xff]
  %v646 = vld [vmem:[%s0 + $0x1380] sm:$0xff]
  %v647 = vld [vmem:[%s0 + $0x1388] sm:$0xff]
  %v648 = vld [vmem:[%s0 + $0x1390] sm:$0xff]
  %v649 = vld [vmem:[%s0 + $0x1398] sm:$0xff]
  %v650 = vld [vmem:[%s0 + $0x13a0] sm:$0xff]
  %v651 = vld [vmem:[%s0 + $0x13a8] sm:$0xff]
  %v652 = vld [vmem:[%s0 + $0x13b0] sm:$0xff]
  %v653 = vld [vmem:[%s0 + $0x13b8] sm:$0xff]
  %v654 = vld [vmem:[%s0 + $0x13c0] sm:$0xff]
  %v655 = vld [vmem:[%s0 + $0x13c8] sm:$0xff]
  %v656 = vld [vmem:[%s0 + $0x13d0] sm:$0xff]
  %v657 = vld [vmem:[%s0 + $0x13d8] sm:$0xff]
  %v658 = vld [vmem:[%s0 + $0x13e0] sm:$0xff]
  %v659 = vld [vmem:[%s0 + $0x13e8] sm:$0xff]
  %v660 = vld [vmem:[%s0 + $0x13f0] sm:$0xff]
  %v661 = vld [vmem:[%s0 + $0x13f8] sm:$0xff]
  %v662 = vld [vmem:[%s0 + $0x1400] sm:$0xff]
  %v663 = vld [vmem:[%s0 + $0x1408] sm:$0xff]
  %v664 = vld [vmem:[%s0 + $0x1410] sm:$0xff]
  %v665 = vld [vmem:[%s0 + $0x1418] sm:$0xff]
  %v666 = vld [vmem:[%s0 + $0x1420] sm:$0xff]
  %v667 = vld [vmem:[%s0 + $0x1428] sm:$0xff]
  %v668 = vld [vmem:[%s0 + $0x1430] sm:$0xff]
  %v669 = vld [vmem:[%s0 + $0x1438] sm:$0xff]
  %v670 = vld [vmem:[%s0 + $0x1440] sm:$0xff]
  %v671 = vld [vmem:[%s0 + $0x1448] sm:$0xff]
  %v672 = vld [vmem:[%s0 + $0x1450] sm:$0xff]
  %v673 = vld [vmem:[%s0 + $0x1458] sm:$0xff]
  %v674 = vld [vmem:[%s0 + $0x1460] sm:$0xff]
  %v675 = vld [vmem:[%s0 + $0x1468] sm:$0xff]
  %v676 = vld [vmem:[%s0 + $0x1470] sm:$0xff]
  %v677 = vld [vmem:[%s0 + $0x1478] sm:$0xff]
  %v678 = vld [vmem:[%s0 + $0x1480] sm:$0xff]
  %v679 = vld [vmem:[%s0 + $0x1488] sm:$0xff]
  %v680 = vld [vmem:[%s0 + $0x1490] sm:$0xff]
  %v681 = vld [vmem:[%s0 + $0x1498] sm:$0xff]
  %v682 = vld [vmem:[%s0 + $0x14a0] sm:$0xff]
  %v683 = vld [vmem:[%s0 + $0x14a8] sm:$0xff]
  %v684 = vld [vmem:[%s0 + $0x14b0] sm:$0xff]
  %v685 = vld [vmem:[%s0 + $0x14b8] sm:$0xff]
  %v686 = vld [vmem:[%s0 + $0x14c0] sm:$0xff]
  %v687 = vld [vmem:[%s0 + $0x14c8] sm:$0xff]
  %v688 = vld [vmem:[%s0 + $0x14d0] sm:$0xff]
  %v689 = vld [vmem:[%s0 + $0x14d8] sm:$0xff]
  %v690 = vld [vmem:[%s0 + $0x14e0] sm:$0xff]
  %v691 = vld [vmem:[%s0 + $0x14e8] sm:$0xff]
  %v692 = vld [vmem:[%s0 + $0x14f0] sm:$0xff]
  %v693 = vld [vmem:[%s0 + $0x14f8] sm:$0xff]
  %v694 = vld [vmem:[%s0 + $0x1500] sm:$0xff]
  %v695 = vld [vmem:[%s0 + $0x1508] sm:$0xff]
  %v696 = vld [vmem:[%s0 + $0x1510] sm:$0xff]
  %v697 = vld [vmem:[%s0 + $0x1518] sm:$0xff]
  %v698 = vld [vmem:[%s0 + $0x1520] sm:$0xff]
  %v699 = vld [vmem:[%s0 + $0x1528] sm:$0xff]
  %v700 = vld [vmem:[%s0 + $0x1530] sm:$0xff]
  %v701 = vld [vmem:[%s0 + $0x1538] sm:$0xff]
  %v702 = vld [vmem:[%s0 + $0x1540] sm:$0xff]
  %v703 = vld [vmem:[%s0 + $0x1548] sm:$0xff]
  %v704 = vld [vmem:[%s0 + $0x1550] sm:$0xff]
  %v705 = vld [vmem:[%s0 + $0x1558] sm:$0xff]
  %v706 = vld [vmem:[%s0 + $0x1560] sm:$0xff]
  %v707 = vld [vmem:[%s0 + $0x1568] sm:$0xff]
  %v708 = vld [vmem:[%s0 + $0x1570] sm:$0xff]
  %v709 = vld [vmem:[%s0 + $0x1578] sm:$0xff]
  %v710 = vld [vmem:[%s0 + $0x1580] sm:$0xff]
  %v711 = vld [vmem:[%s0 + $0x1588] sm:$0xff]
  %v712 = vld [vmem:[%s0 + $0x1590] sm:$0xff]
  %v713 = vld [vmem:[%s0 + $0x1598] sm:$0xff]
  %v714 = vld [vmem:[%s0 + $0x15a0] sm:$0xff]
  %v715 = vld [vmem:[%s0 + $0x15a8] sm:$0xff]
  %v716 = vld [vmem:[%s0 + $0x15b0] sm:$0xff]
  %v717 = vld [vmem:[%s0 + $0x15b8] sm:$0xff]
  %v718 = vld [vmem:[%s0 + $0x15c0] sm:$0xff]
  %v719 = vld [vmem:[%s0 + $0x15c8] sm:$0xff]
  %v720 = vld [vmem:[%s0 + $0x15d0] sm:$0xff]
  %v721 = vld [vmem:[%s0 + $0x15d8] sm:$0xff]
  %v722 = vld [vmem:[%s0 + $0x15e0] sm:$0xff]
  %v723 = vld [vmem:[%s0 + $0x15e8] sm:$0xff]
  %v724 = vld [vmem:[%s0 + $0x15f0] sm:$0xff]
  %v725 = vld [vmem:[%s0 + $0x15f8] sm:$0xff]
  %v726 = vld [vmem:[%s0 + $0x1600] sm:$0xff]
  %v727 = vld [vmem:[%s0 + $0x1608] sm:$0xff]
  %v728 = vld [vmem:[%s0 + $0x1610] sm:$0xff]
  %v729 = vld [vmem:[%s0 + $0x1618] sm:$0xff]
  %v730 = vld [vmem:[%s0 + $0x1620] sm:$0xff]
  %v731 = vld [vmem:[%s0 + $0x1628] sm:$0xff]
  %v732 = vld [vmem:[%s0 + $0x1630] sm:$0xff]
  %v733 = vld [vmem:[%s0 + $0x1638] sm:$0xff]
  %v734 = vld [vmem:[%s0 + $0x1640] sm:$0xff]
  %v735 = vld [vmem:[%s0 + $0x1648] sm:$0xff]
  %v736 = vld [vmem:[%s0 + $0x1650] sm:$0xff]
  %v737 = vld [vmem:[%s0 + $0x1658] sm:$0xff]
  %v738 = vld [vmem:[%s0 + $0x1660] sm:$0xff]
  %v739 = vld [vmem:[%s0 + $0x1668] sm:$0xff]
  %v740 = vld [vmem:[%s0 + $0x1670] sm:$0xff]
  %v741 = vld [vmem:[%s0 + $0x1678] sm:$0xff]
  %v742 = vld [vmem:[%s0 + $0x1680] sm:$0xff]
  %v743 = vld [vmem:[%s0 + $0x1688] sm:$0xff]
  %v744 = vld [vmem:[%s0 + $0x1690] sm:$0xff]
  %v745 = vld [vmem:[%s0 + $0x1698] sm:$0xff]
  %v746 = vld [vmem:[%s0 + $0x16a0] sm:$0xff]
  %v747 = vld [vmem:[%s0 + $0x16a8] sm:$0xff]
  %v748 = vld [vmem:[%s0 + $0x16b0] sm:$0xff]
  %v749 = vld [vmem:[%s0 + $0x16b8] sm:$0xff]
  %v750 = vld [vmem:[%s0 + $0x16c0] sm:$0xff]
  %v751 = vld [vmem:[%s0 + $0x16c8] sm:$0xff]
  %v752 = vld [vmem:[%s0 + $0x16d0] sm:$0xff]
  %v753 = vld [vmem:[%s0 + $0x16d8] sm:$0xff]
  %v754 = vld [vmem:[%s0 + $0x16e0] sm:$0xff]
  %v755 = vld [vmem:[%s0 + $0x16e8] sm:$0xff]
  %v756 = vld [vmem:[%s0 + $0x16f0] sm:$0xff]
  %v757 = vld [vmem:[%s0 + $0x16f8] sm:$0xff]
  %v758 = vld [vmem:[%s0 + $0x1700] sm:$0xff]
  %v759 = vld [vmem:[%s0 + $0x1708] sm:$0xff]
  %v760 = vld [vmem:[%s0 + $0x1710] sm:$0xff]
  %v761 = vld [vmem:[%s0 + $0x1718] sm:$0xff]
  %v762 = vld [vmem:[%s0 + $0x1720] sm:$0xff]
  %v763 = vld [vmem:[%s0 + $0x1728] sm:$0xff]
  %v764 = vld [vmem:[%s0 + $0x1730] sm:$0xff]
  %v765 = vld [vmem:[%s0 + $0x1738] sm:$0xff]
  %v766 = vld [vmem:[%s0 + $0x1740] sm:$0xff]
  %v767 = vld [vmem:[%s0 + $0x1748] sm:$0xff]
  %v768 = vld [vmem:[%s0 + $0x1750] sm:$0xff]
  %v769 = vld [vmem:[%s0 + $0x1758] sm:$0xff]
  %v770 = vld [vmem:[%s0 + $0x1760] sm:$0xff]
  %v771 = vld [vmem:[%s0 + $0x1768] sm:$0xff]
  %v772 = vld [vmem:[%s0 + $0x1770] sm:$0xff]
  %v773 = vld [vmem:[%s0 + $0x1778] sm:$0xff]
  %v774 = vld [vmem:[%s0 + $0x1780] sm:$0xff]
  %v775 = vld [vmem:[%s0 + $0x1788] sm:$0xff]
  %v776 = vld [vmem:[%s0 + $0x1790] sm:$0xff]
  %v777 = vld [vmem:[%s0 + $0x1798] sm:$0xff]
  %v778 = vld [vmem:[%s0 + $0x17a0] sm:$0xff]
  %v779 = vld [vmem:[%s0 + $0x17a8] sm:$0xff]
  %v780 = vld [vmem:[%s0 + $0x17b0] sm:$0xff]
  %v781 = vld [vmem:[%s0 + $0x17b8] sm:$0xff]
  %v782 = vld [vmem:[%s0 + $0x17c0] sm:$0xff]
  %v783 = vld [vmem:[%s0 + $0x17c8] sm:$0xff]
  %v784 = vld [vmem:[%s0 + $0x17d0] sm:$0xff]
  %v785 = vld [vmem:[%s0 + $0x17d8] sm:$0xff]
  %v786 = vld [vmem:[%s0 + $0x17e0] sm:$0xff]
  %v787 = vld [vmem:[%s0 + $0x17e8] sm:$0xff]
  %v788 = vld [vmem:[%s0 + $0x17f0] sm:$0xff]
  %v789 = vld [vmem:[%s0 + $0x17f8] sm:$0xff]
  %v790 = vld [vmem:[%s0 + $0x1800] sm:$0xff]
  %v791 = vld [vmem:[%s0 + $0x1808] sm:$0xff]
  %v792 = vld [vmem:[%s0 + $0x1810] sm:$0xff]
  %v793 = vld [vmem:[%s0 + $0x1818] sm:$0xff]
  %v794 = vld [vmem:[%s0 + $0x1820] sm:$0xff]
  %v795 = vld [vmem:[%s0 + $0x1828] sm:$0xff]
  %v796 = vld [vmem:[%s0 + $0x1830] sm:$0xff]
  %v797 = vld [vmem:[%s0 + $0x1838] sm:$0xff]
  %v798 = vld [vmem:[%s0 + $0x1840] sm:$0xff]
  %v799 = vld [vmem:[%s0 + $0x1848] sm:$0xff]
  %v800 = vld [vmem:[%s0 + $0x1850] sm:$0xff]
  %v801 = vld [vmem:[%s0 + $0x1858] sm:$0xff]
  %v802 = vld [vmem:[%s0 + $0x1860] sm:$0xff]
  %v803 = vld [vmem:[%s0 + $0x1868] sm:$0xff]
  %v804 = vld [vmem:[%s0 + $0x1870] sm:$0xff]
  %v805 = vld [vmem:[%s0 + $0x1878] sm:$0xff]
  %v806 = vld [vmem:[%s0 + $0x1880] sm:$0xff]
  %v807 = vld [vmem:[%s0 + $0x1888] sm:$0xff]
  %v808 = vld [vmem:[%s0 + $0x1890] sm:$0xff]
  %v809 = vld [vmem:[%s0 + $0x1898] sm:$0xff]
  %v810 = vld [vmem:[%s0 + $0x18a0] sm:$0xff]
  %v811 = vld [vmem:[%s0 + $0x18a8] sm:$0xff]
  %v812 = vld [vmem:[%s0 + $0x18b0] sm:$0xff]
  %v813 = vld [vmem:[%s0 + $0x18b8] sm:$0xff]
  %v814 = vld [vmem:[%s0 + $0x18c0] sm:$0xff]
  %v815 = vld [vmem:[%s0 + $0x18c8] sm:$0xff]
  %v816 = vld [vmem:[%s0 + $0x18d0] sm:$0xff]
  %v817 = vld [vmem:[%s0 + $0x18d8] sm:$0xff]
  %v818 = vld [vmem:[%s0 + $0x18e0] sm:$0xff]
  %v819 = vld [vmem:[%s0 + $0x18e8] sm:$0xff]
  %v820 = vld [vmem:[%s0 + $0x18f0] sm:$0xff]
  %v821 = vld [vmem:[%s0 + $0x18f8] sm:$0xff]
  %v822 = vld [vmem:[%s0 + $0x1900] sm:$0xff]
  %v823 = vld [vmem:[%s0 + $0x1908] sm:$0xff]
  %v824 = vld [vmem:[%s0 + $0x1910] sm:$0xff]
  %v825 = vld [vmem:[%s0 + $0x1918] sm:$0xff]
  %v826 = vld [vmem:[%s0 + $0x1920] sm:$0xff]
  %v827 = vld [vmem:[%s0 + $0x1928] sm:$0xff]
  %v828 = vld [vmem:[%s0 + $0x1930] sm:$0xff]
  %v829 = vld [vmem:[%s0 + $0x1938] sm:$0xff]
  %v830 = vld [vmem:[%s0 + $0x1940] sm:$0xff]
  %v831 = vld [vmem:[%s0 + $0x1948] sm:$0xff]
  %v832 = vld [vmem:[%s0 + $0x1950] sm:$0xff]
  %v833 = vld [vmem:[%s0 + $0x1958] sm:$0xff]
  %v834 = vld [vmem:[%s0 + $0x1960] sm:$0xff]
  %v835 = vld [vmem:[%s0 + $0x1968] sm:$0xff]
  %v836 = vld [vmem:[%s0 + $0x1970] sm:$0xff]
  %v837 = vld [vmem:[%s0 + $0x1978] sm:$0xff]
  %v838 = vld [vmem:[%s0 + $0x1980] sm:$0xff]
  %v839 = vld [vmem:[%s0 + $0x1988] sm:$0xff]
  %v840 = vld [vmem:[%s0 + $0x1990] sm:$0xff]
  %v841 = vld [vmem:[%s0 + $0x1998] sm:$0xff]
  %v842 = vld [vmem:[%s0 + $0x19a0] sm:$0xff]
  %v843 = vld [vmem:[%s0 + $0x19a8] sm:$0xff]
  %v844 = vld [vmem:[%s0 + $0x19b0] sm:$0xff]
  %v845 = vld [vmem:[%s0 + $0x19b8] sm:$0xff]
  %v846 = vld [vmem:[%s0 + $0x19c0] sm:$0xff]
  %v847 = vld [vmem:[%s0 + $0x19c8] sm:$0xff]
  %v848 = vld [vmem:[%s0 + $0x19d0] sm:$0xff]
  %v849 = vld [vmem:[%s0 + $0x19d8] sm:$0xff]
  %v850 = vld [vmem:[%s0 + $0x19e0] sm:$0xff]
  %v851 = vld [vmem:[%s0 + $0x19e8] sm:$0xff]
  %v852 = vld [vmem:[%s0 + $0x19f0] sm:$0xff]
  %v853 = vld [vmem:[%s0 + $0x19f8] sm:$0xff]
  %v854 = vld [vmem:[%s0 + $0x1a00] sm:$0xff]
  %v855 = vld [vmem:[%s0 + $0x1a08] sm:$0xff]
  %v856 = vld [vmem:[%s0 + $0x1a10] sm:$0xff]
  %v857 = vld [vmem:[%s0 + $0x1a18] sm:$0xff]
  %v858 = vld [vmem:[%s0 + $0x1a20] sm:$0xff]
  %v859 = vld [vmem:[%s0 + $0x1a28] sm:$0xff]
  %v860 = vld [vmem:[%s0 + $0x1a30] sm:$0xff]
  %v861 = vld [vmem:[%s0 + $0x1a38] sm:$0xff]
  %v862 = vld [vmem:[%s0 + $0x1a40] sm:$0xff]
  %v863 = vld [vmem:[%s0 + $0x1a48] sm:$0xff]
  %v864 = vld [vmem:[%s0 + $0x1a50] sm:$0xff]
  %v865 = vld [vmem:[%s0 + $0x1a58] sm:$0xff]
  %v866 = vld [vmem:[%s0 + $0x1a60] sm:$0xff]
  %v867 = vld [vmem:[%s0 + $0x1a68] sm:$0xff]
  %v868 = vld [vmem:[%s0 + $0x1a70] sm:$0xff]
  %v869 = vld [vmem:[%s0 + $0x1a78] sm:$0xff]
  %v870 = vld [vmem:[%s0 + $0x1a80] sm:$0xff]
  %v871 = vld [vmem:[%s0 + $0x1a88] sm:$0xff]
  %v872 = vld [vmem:[%s0 + $0x1a90] sm:$0xff]
  %v873 = vld [vmem:[%s0 + $0x1a98] sm:$0xff]
  %v874 = vld [vmem:[%s0 + $0x1aa0] sm:$0xff]
  %v875 = vld [vmem:[%s0 + $0x1aa8] sm:$0xff]
  %v876 = vld [vmem:[%s0 + $0x1ab0] sm:$0xff]
  %v877 = vld [vmem:[%s0 + $0x1ab8] sm:$0xff]
  %v878 = vld [vmem:[%s0 + $0x1ac0] sm:$0xff]
  %v879 = vld [vmem:[%s0 + $0x1ac8] sm:$0xff]
  %v880 = vld [vmem:[%s0 + $0x1ad0] sm:$0xff]
  %v881 = vld [vmem:[%s0 + $0x1ad8] sm:$0xff]
  %v882 = vld [vmem:[%s0 + $0x1ae0] sm:$0xff]
  %v883 = vld [vmem:[%s0 + $0x1ae8] sm:$0xff]
  %v884 = vld [vmem:[%s0 + $0x1af0] sm:$0xff]
  %v885 = vld [vmem:[%s0 + $0x1af8] sm:$0xff]
  %v886 = vld [vmem:[%s0 + $0x1b00] sm:$0xff]
  %v887 = vld [vmem:[%s0 + $0x1b08] sm:$0xff]
  %v888 = vld [vmem:[%s0 + $0x1b10] sm:$0xff]
  %v889 = vld [vmem:[%s0 + $0x1b18] sm:$0xff]
  %v890 = vld [vmem:[%s0 + $0x1b20] sm:$0xff]
  %v891 = vld [vmem:[%s0 + $0x1b28] sm:$0xff]
  %v892 = vld [vmem:[%s0 + $0x1b30] sm:$0xff]
  %v893 = vld [vmem:[%s0 + $0x1b38] sm:$0xff]
  %v894 = vld [vmem:[%s0 + $0x1b40] sm:$0xff]
  %v895 = vld [vmem:[%s0 + $0x1b48] sm:$0xff]
  %v896 = vld [vmem:[%s0 + $0x1b50] sm:$0xff]
  %v897 = vld [vmem:[%s0 + $0x1b58] sm:$0xff]
  %v898 = vld [vmem:[%s0 + $0x1b60] sm:$0xff]
  %v899 = vld [vmem:[%s0 + $0x1b68] sm:$0xff]
  %v900 = vld [vmem:[%s0 + $0x1b70] sm:$0xff]
  %v901 = vld [vmem:[%s0 + $0x1b78] sm:$0xff]
  %v902 = vld [vmem:[%s0 + $0x1b80] sm:$0xff]
  %v903 = vld [vmem:[%s0 + $0x1b88] sm:$0xff]
  %v904 = vld [vmem:[%s0 + $0x1b90] sm:$0xff]
  %v905 = vld [vmem:[%s0 + $0x1b98] sm:$0xff]
  %v906 = vld [vmem:[%s0 + $0x1ba0] sm:$0xff]
  %v907 = vld [vmem:[%s0 + $0x1ba8] sm:$0xff]
  %v908 = vld [vmem:[%s0 + $0x1bb0] sm:$0xff]
  %v909 = vld [vmem:[%s0 + $0x1bb8] sm:$0xff]
  %v910 = vld [vmem:[%s0 + $0x1bc0] sm:$0xff]
  %v911 = vld [vmem:[%s0 + $0x1bc8] sm:$0xff]
  %v912 = vld [vmem:[%s0 + $0x1bd0] sm:$0xff]
  %v913 = vld [vmem:[%s0 + $0x1bd8] sm:$0xff]
  %v914 = vld [vmem:[%s0 + $0x1be0] sm:$0xff]
  %v915 = vld [vmem:[%s0 + $0x1be8] sm:$0xff]
  %v916 = vld [vmem:[%s0 + $0x1bf0] sm:$0xff]
  %v917 = vld [vmem:[%s0 + $0x1bf8] sm:$0xff]
  %v918 = vld [vmem:[%s0 + $0x1c00] sm:$0xff]
  %v919 = vld [vmem:[%s0 + $0x1c08] sm:$0xff]
  %v920 = vld [vmem:[%s0 + $0x1c10] sm:$0xff]
  %v921 = vld [vmem:[%s0 + $0x1c18] sm:$0xff]
  %v922 = vld [vmem:[%s0 + $0x1c20] sm:$0xff]
  %v923 = vld [vmem:[%s0 + $0x1c28] sm:$0xff]
  %v924 = vld [vmem:[%s0 + $0x1c30] sm:$0xff]
  %v925 = vld [vmem:[%s0 + $0x1c38] sm:$0xff]
  %v926 = vld [vmem:[%s0 + $0x1c40] sm:$0xff]
  %v927 = vld [vmem:[%s0 + $0x1c48] sm:$0xff]
  %v928 = vld [vmem:[%s0 + $0x1c50] sm:$0xff]
  %v929 = vld [vmem:[%s0 + $0x1c58] sm:$0xff]
  %v930 = vld [vmem:[%s0 + $0x1c60] sm:$0xff]
  %v931 = vld [vmem:[%s0 + $0x1c68] sm:$0xff]
  %v932 = vld [vmem:[%s0 + $0x1c70] sm:$0xff]
  %v933 = vld [vmem:[%s0 + $0x1c78] sm:$0xff]
  %v934 = vld [vmem:[%s0 + $0x1c80] sm:$0xff]
  %v935 = vld [vmem:[%s0 + $0x1c88] sm:$0xff]
  %v936 = vld [vmem:[%s0 + $0x1c90] sm:$0xff]
  %v937 = vld [vmem:[%s0 + $0x1c98] sm:$0xff]
  %v938 = vld [vmem:[%s0 + $0x1ca0] sm:$0xff]
  %v939 = vld [vmem:[%s0 + $0x1ca8] sm:$0xff]
  %v940 = vld [vmem:[%s0 + $0x1cb0] sm:$0xff]
  %v941 = vld [vmem:[%s0 + $0x1cb8] sm:$0xff]
  %v942 = vld [vmem:[%s0 + $0x1cc0] sm:$0xff]
  %v943 = vld [vmem:[%s0 + $0x1cc8] sm:$0xff]
  %v944 = vld [vmem:[%s0 + $0x1cd0] sm:$0xff]
  %v945 = vld [vmem:[%s0 + $0x1cd8] sm:$0xff]
  %v946 = vld [vmem:[%s0 + $0x1ce0] sm:$0xff]
  %v947 = vld [vmem:[%s0 + $0x1ce8] sm:$0xff]
  %v948 = vld [vmem:[%s0 + $0x1cf0] sm:$0xff]
  %v949 = vld [vmem:[%s0 + $0x1cf8] sm:$0xff]
  %v950 = vld [vmem:[%s0 + $0x1d00] sm:$0xff]
  %v951 = vld [vmem:[%s0 + $0x1d08] sm:$0xff]
  %v952 = vld [vmem:[%s0 + $0x1d10] sm:$0xff]
  %v953 = vld [vmem:[%s0 + $0x1d18] sm:$0xff]
  %v954 = vld [vmem:[%s0 + $0x1d20] sm:$0xff]
  %v955 = vld [vmem:[%s0 + $0x1d28] sm:$0xff]
  %v956 = vld [vmem:[%s0 + $0x1d30] sm:$0xff]
  %v957 = vld [vmem:[%s0 + $0x1d38] sm:$0xff]
  %v958 = vld [vmem:[%s0 + $0x1d40] sm:$0xff]
  %v959 = vld [vmem:[%s0 + $0x1d48] sm:$0xff]
  %v960 = vld [vmem:[%s0 + $0x1d50] sm:$0xff]
  %v961 = vld [vmem:[%s0 + $0x1d58] sm:$0xff]
  %v962 = vld [vmem:[%s0 + $0x1d60] sm:$0xff]
  %v963 = vld [vmem:[%s0 + $0x1d68] sm:$0xff]
  %v964 = vld [vmem:[%s0 + $0x1d70] sm:$0xff]
  %v965 = vld [vmem:[%s0 + $0x1d78] sm:$0xff]
  %v966 = vld [vmem:[%s0 + $0x1d80] sm:$0xff]
  %v967 = vld [vmem:[%s0 + $0x1d88] sm:$0xff]
  %v968 = vld [vmem:[%s0 + $0x1d90] sm:$0xff]
  %v969 = vld [vmem:[%s0 + $0x1d98] sm:$0xff]
  %v970 = vld [vmem:[%s0 + $0x1da0] sm:$0xff]
  %v971 = vld [vmem:[%s0 + $0x1da8] sm:$0xff]
  %v972 = vld [vmem:[%s0 + $0x1db0] sm:$0xff]
  %v973 = vld [vmem:[%s0 + $0x1db8] sm:$0xff]
  %v974 = vld [vmem:[%s0 + $0x1dc0] sm:$0xff]
  %v975 = vld [vmem:[%s0 + $0x1dc8] sm:$0xff]
  %v976 = vld [vmem:[%s0 + $0x1dd0] sm:$0xff]
  %v977 = vld [vmem:[%s0 + $0x1dd8] sm:$0xff]
  %v978 = vld [vmem:[%s0 + $0x1de0] sm:$0xff]
  %v979 = vld [vmem:[%s0 + $0x1de8] sm:$0xff]
  %v980 = vld [vmem:[%s0 + $0x1df0] sm:$0xff]
  %v981 = vld [vmem:[%s0 + $0x1df8] sm:$0xff]
  %v982 = vld [vmem:[%s0 + $0x1e00] sm:$0xff]
  %v983 = vld [vmem:[%s0 + $0x1e08] sm:$0xff]
  %v984 = vld [vmem:[%s0 + $0x1e10] sm:$0xff]
  %v985 = vld [vmem:[%s0 + $0x1e18] sm:$0xff]
  %v986 = vld [vmem:[%s0 + $0x1e20] sm:$0xff]
  %v987 = vld [vmem:[%s0 + $0x1e28] sm:$0xff]
  %v988 = vld [vmem:[%s0 + $0x1e30] sm:$0xff]
  %v989 = vld [vmem:[%s0 + $0x1e38] sm:$0xff]
  %v990 = vld [vmem:[%s0 + $0x1e40] sm:$0xff]
  %v991 = vld [vmem:[%s0 + $0x1e48] sm:$0xff]
  %v992 = vld [vmem:[%s0 + $0x1e50] sm:$0xff]
  %v993 = vld [vmem:[%s0 + $0x1e58] sm:$0xff]
  %v994 = vld [vmem:[%s0 + $0x1e60] sm:$0xff]
  %v995 = vld [vmem:[%s0 + $0x1e68] sm:$0xff]
  %v996 = vld [vmem:[%s0 + $0x1e70] sm:$0xff]
  %v997 = vld [vmem:[%s0 + $0x1e78] sm:$0xff]
  %v998 = vld [vmem:[%s0 + $0x1e80] sm:$0xff]
  %v999 = vld [vmem:[%s0 + $0x1e88] sm:$0xff]
  %v1000 = vld [vmem:[%s0 + $0x1e90] sm:$0xff]
  %v1001 = vld [vmem:[%s0 + $0x1e98] sm:$0xff]
  %v1002 = vld [vmem:[%s0 + $0x1ea0] sm:$0xff]
  %v1003 = vld [vmem:[%s0 + $0x1ea8] sm:$0xff]
  %v1004 = vld [vmem:[%s0 + $0x1eb0] sm:$0xff]
  %v1005 = vld [vmem:[%s0 + $0x1eb8] sm:$0xff]
  %v1006 = vld [vmem:[%s0 + $0x1ec0] sm:$0xff]
  %v1007 = vld [vmem:[%s0 + $0x1ec8] sm:$0xff]
  %v1008 = vld [vmem:[%s0 + $0x1ed0] sm:$0xff]
  %v1009 = vld [vmem:[%s0 + $0x1ed8] sm:$0xff]
  %v1010 = vld [vmem:[%s0 + $0x1ee0] sm:$0xff]
  %v1011 = vld [vmem:[%s0 + $0x1ee8] sm:$0xff]
  %v1012 = vld [vmem:[%s0 + $0x1ef0] sm:$0xff]
  %v1013 = vld [vmem:[%s0 + $0x1ef8] sm:$0xff]
  %v1014 = vld [vmem:[%s0 + $0x1f00] sm:$0xff]
  %v1015 = vld [vmem:[%s0 + $0x1f08] sm:$0xff]
  %v1016 = vld [vmem:[%s0 + $0x1f10] sm:$0xff]
  %v1017 = vld [vmem:[%s0 + $0x1f18] sm:$0xff]
  %v1018 = vld [vmem:[%s0 + $0x1f20] sm:$0xff]
  %v1019 = vld [vmem:[%s0 + $0x1f28] sm:$0xff]
  %v1020 = vld [vmem:[%s0 + $0x1f30] sm:$0xff]
  %v1021 = vld [vmem:[%s0 + $0x1f38] sm:$0xff]
  %v1022 = vld [vmem:[%s0 + $0x1f40] sm:$0xff]
  %v1023 = vld [vmem:[%s0 + $0x1f48] sm:$0xff]
  %v1024 = vld [vmem:[%s0 + $0x1f50] sm:$0xff]
  %v1025 = vld [vmem:[%s0 + $0x1f58] sm:$0xff]
  %v1026 = vld [vmem:[%s0 + $0x1f60] sm:$0xff]
  %v1027 = vld [vmem:[%s0 + $0x1f68] sm:$0xff]
  %v1028 = vld [vmem:[%s0 + $0x1f70] sm:$0xff]
  %v1029 = vld [vmem:[%s0 + $0x1f78] sm:$0xff]
  %v1030 = vld [vmem:[%s0 + $0x1f80] sm:$0xff]
  %v1031 = vld [vmem:[%s0 + $0x1f88] sm:$0xff]
  %v1032 = vld [vmem:[%s0 + $0x1f90] sm:$0xff]
  %v1033 = vld [vmem:[%s0 + $0x1f98] sm:$0xff]
  %v1034 = vld [vmem:[%s0 + $0x1fa0] sm:$0xff]
  %v1035 = vld [vmem:[%s0 + $0x1fa8] sm:$0xff]
  %v1036 = vld [vmem:[%s0 + $0x1fb0] sm:$0xff]
  %v1037 = vld [vmem:[%s0 + $0x1fb8] sm:$0xff]
  %v1038 = vld [vmem:[%s0 + $0x1fc0] sm:$0xff]
  %v1039 = vld [vmem:[%s0 + $0x1fc8] sm:$0xff]
  %v1040 = vld [vmem:[%s0 + $0x1fd0] sm:$0xff]
  %v1041 = vld [vmem:[%s0 + $0x1fd8] sm:$0xff]
  %v1042 = vld [vmem:[%s0 + $0x1fe0] sm:$0xff]
  %v1043 = vld [vmem:[%s0 + $0x1fe8] sm:$0xff]
  %v1044 = vld [vmem:[%s0 + $0x1ff0] sm:$0xff]
  %v1045 = vld [vmem:[%s0 + $0x1ff8] sm:$0xff]
  %v1046 = vld [vmem:[%s0 + $0x2000] sm:$0xff]
  %v1047 = vld [vmem:[%s0 + $0x2008] sm:$0xff]
  %v1048 = vld [vmem:[%s0 + $0x2010] sm:$0xff]
  %v1049 = vld [vmem:[%s0 + $0x2018] sm:$0xff]
  %v1050 = vld [vmem:[%s0 + $0x2020] sm:$0xff]
  %v1051 = vld [vmem:[%s0 + $0x2028] sm:$0xff]
  %v1052 = vld [vmem:[%s0 + $0x2030] sm:$0xff]
  %v1053 = vld [vmem:[%s0 + $0x2038] sm:$0xff]
  %v1054 = vld [vmem:[%s0 + $0x2040] sm:$0xff]
  %v1055 = vld [vmem:[%s0 + $0x2048] sm:$0xff]
  %v1056 = vld [vmem:[%s0 + $0x2050] sm:$0xff]
  %v1057 = vld [vmem:[%s0 + $0x2058] sm:$0xff]
  %v1058 = vld [vmem:[%s0 + $0x2060] sm:$0xff]
  %v1059 = vld [vmem:[%s0 + $0x2068] sm:$0xff]
  %v1060 = vld [vmem:[%s0 + $0x2070] sm:$0xff]
  %v1061 = vld [vmem:[%s0 + $0x2078] sm:$0xff]
  %v1062 = vld [vmem:[%s0 + $0x2080] sm:$0xff]
  %v1063 = vld [vmem:[%s0 + $0x2088] sm:$0xff]
  %v1064 = vld [vmem:[%s0 + $0x2090] sm:$0xff]
  %v1065 = vld [vmem:[%s0 + $0x2098] sm:$0xff]
  %v1066 = vld [vmem:[%s0 + $0x20a0] sm:$0xff]
  %v1067 = vld [vmem:[%s0 + $0x20a8] sm:$0xff]
  %v1068 = vld [vmem:[%s0 + $0x20b0] sm:$0xff]
  %v1069 = vld [vmem:[%s0 + $0x20b8] sm:$0xff]
  %v1070 = vld [vmem:[%s0 + $0x20c0] sm:$0xff]
  %v1071 = vld [vmem:[%s0 + $0x20c8] sm:$0xff]
  %v1072 = vld [vmem:[%s0 + $0x20d0] sm:$0xff]
  %v1073 = vld [vmem:[%s0 + $0x20d8] sm:$0xff]
  %v1074 = vld [vmem:[%s0 + $0x20e0] sm:$0xff]
  %v1075 = vld [vmem:[%s0 + $0x20e8] sm:$0xff]
  %v1076 = vld [vmem:[%s0 + $0x20f0] sm:$0xff]
  %v1077 = vld [vmem:[%s0 + $0x20f8] sm:$0xff]
  %v1078 = vld [vmem:[%s0 + $0x2100] sm:$0xff]
  %v1079 = vld [vmem:[%s0 + $0x2108] sm:$0xff]
  %v1080 = vld [vmem:[%s0 + $0x2110] sm:$0xff]
  %v1081 = vld [vmem:[%s0 + $0x2118] sm:$0xff]
  %v1082 = vld [vmem:[%s0 + $0x2120] sm:$0xff]
  %v1083 = vld [vmem:[%s0 + $0x2128] sm:$0xff]
  %v1084 = vld [vmem:[%s0 + $0x2130] sm:$0xff]
  %v1085 = vld [vmem:[%s0 + $0x2138] sm:$0xff]
  %v1086 = vld [vmem:[%s0 + $0x2140] sm:$0xff]
  %v1087 = vld [vmem:[%s0 + $0x2148] sm:$0xff]
  %v1088 = vld [vmem:[%s0 + $0x2150] sm:$0xff]
  %v1089 = vld [vmem:[%s0 + $0x2158] sm:$0xff]
  %v1090 = vld [vmem:[%s0 + $0x2160] sm:$0xff]
  %v1091 = vld [vmem:[%s0 + $0x2168] sm:$0xff]
  %v1092 = vld [vmem:[%s0 + $0x2170] sm:$0xff]
  %v1093 = vld [vmem:[%s0 + $0x2178] sm:$0xff]
  %v1094 = vld [vmem:[%s0 + $0x2180] sm:$0xff]
  %v1095 = vld [vmem:[%s0 + $0x2188] sm:$0xff]
  %v1096 = vld [vmem:[%s0 + $0x2190] sm:$0xff]
  %v1097 = vld [vmem:[%s0 + $0x2198] sm:$0xff]
  %v1098 = vld [vmem:[%s0 + $0x21a0] sm:$0xff]
  %v1099 = vld [vmem:[%s0 + $0x21a8] sm:$0xff]
  %v1100 = vld [vmem:[%s0 + $0x21b0] sm:$0xff]
  %v1101 = vld [vmem:[%s0 + $0x21b8] sm:$0xff]
  %v1102 = vld [vmem:[%s0 + $0x21c0] sm:$0xff]
  %v1103 = vld [vmem:[%s0 + $0x21c8] sm:$0xff]
  %v1104 = vld [vmem:[%s0 + $0x21d0] sm:$0xff]
  %v1105 = vld [vmem:[%s0 + $0x21d8] sm:$0xff]
  %v1106 = vld [vmem:[%s0 + $0x21e0] sm:$0xff]
  %v1107 = vld [vmem:[%s0 + $0x21e8] sm:$0xff]
  %v1108 = vld [vmem:[%s0 + $0x21f0] sm:$0xff]
  %v1109 = vld [vmem:[%s0 + $0x21f8] sm:$0xff]
  %v1110 = vld [vmem:[%s0 + $0x2200] sm:$0xff]
  %v1111 = vld [vmem:[%s0 + $0x2208] sm:$0xff]
  %v1112 = vld [vmem:[%s0 + $0x2210] sm:$0xff]
  %v1113 = vld [vmem:[%s0 + $0x2218] sm:$0xff]
  %v1114 = vld [vmem:[%s0 + $0x2220] sm:$0xff]
  %v1115 = vld [vmem:[%s0 + $0x2228] sm:$0xff]
  %v1116 = vld [vmem:[%s0 + $0x2230] sm:$0xff]
  %v1117 = vld [vmem:[%s0 + $0x2238] sm:$0xff]
  %v1118 = vld [vmem:[%s0 + $0x2240] sm:$0xff]
  %v1119 = vld [vmem:[%s0 + $0x2248] sm:$0xff]
  %v1120 = vld [vmem:[%s0 + $0x2250] sm:$0xff]
  %v1121 = vld [vmem:[%s0 + $0x2258] sm:$0xff]
  %v1122 = vld [vmem:[%s0 + $0x2260] sm:$0xff]
  %v1123 = vld [vmem:[%s0 + $0x2268] sm:$0xff]
  %v1124 = vld [vmem:[%s0 + $0x2270] sm:$0xff]
  %v1125 = vld [vmem:[%s0 + $0x2278] sm:$0xff]
  %v1126 = vld [vmem:[%s0 + $0x2280] sm:$0xff]
  %v1127 = vld [vmem:[%s0 + $0x2288] sm:$0xff]
  %v1128 = vld [vmem:[%s0 + $0x2290] sm:$0xff]
  %v1129 = vld [vmem:[%s0 + $0x2298] sm:$0xff]
  %v1130 = vld [vmem:[%s0 + $0x22a0] sm:$0xff]
  %v1131 = vld [vmem:[%s0 + $0x22a8] sm:$0xff]
  %v1132 = vld [vmem:[%s0 + $0x22b0] sm:$0xff]
  %v1133 = vld [vmem:[%s0 + $0x22b8] sm:$0xff]
  %v1134 = vld [vmem:[%s0 + $0x22c0] sm:$0xff]
  %v1135 = vld [vmem:[%s0 + $0x22c8] sm:$0xff]
  %v1136 = vld [vmem:[%s0 + $0x22d0] sm:$0xff]
  %v1137 = vld [vmem:[%s0 + $0x22d8] sm:$0xff]
  %v1138 = vld [vmem:[%s0 + $0x22e0] sm:$0xff]
  %v1139 = vld [vmem:[%s0 + $0x22e8] sm:$0xff]
  %v1140 = vld [vmem:[%s0 + $0x22f0] sm:$0xff]
  %v1141 = vld [vmem:[%s0 + $0x22f8] sm:$0xff]
  %v1142 = vld [vmem:[%s0 + $0x2300] sm:$0xff]
  %v1143 = vld [vmem:[%s0 + $0x2308] sm:$0xff]
  %v1144 = vld [vmem:[%s0 + $0x2310] sm:$0xff]
  %v1145 = vld [vmem:[%s0 + $0x2318] sm:$0xff]
  %v1146 = vld [vmem:[%s0 + $0x2320] sm:$0xff]
  %v1147 = vld [vmem:[%s0 + $0x2328] sm:$0xff]
  %v1148 = vld [vmem:[%s0 + $0x2330] sm:$0xff]
  %v1149 = vld [vmem:[%s0 + $0x2338] sm:$0xff]
  %v1150 = vld [vmem:[%s0 + $0x2340] sm:$0xff]
  %v1151 = vld [vmem:[%s0 + $0x2348] sm:$0xff]
  %v1152 = vld [vmem:[%s0 + $0x2350] sm:$0xff]
  %v1153 = vld [vmem:[%s0 + $0x2358] sm:$0xff]
  %v1154 = vld [vmem:[%s0 + $0x2360] sm:$0xff]
  %v1155 = vld [vmem:[%s0 + $0x2368] sm:$0xff]
  %v1156 = vld [vmem:[%s0 + $0x2370] sm:$0xff]
  %v1157 = vld [vmem:[%s0 + $0x2378] sm:$0xff]
  %v1158 = vld [vmem:[%s0 + $0x2380] sm:$0xff]
  %v1159 = vld [vmem:[%s0 + $0x2388] sm:$0xff]
  %v1160 = vld [vmem:[%s0 + $0x2390] sm:$0xff]
  %v1161 = vld [vmem:[%s0 + $0x2398] sm:$0xff]
  %v1162 = vld [vmem:[%s0 + $0x23a0] sm:$0xff]
  %v1163 = vld [vmem:[%s0 + $0x23a8] sm:$0xff]
  %v1164 = vld [vmem:[%s0 + $0x23b0] sm:$0xff]
  %v1165 = vld [vmem:[%s0 + $0x23b8] sm:$0xff]
  %v1166 = vld [vmem:[%s0 + $0x23c0] sm:$0xff]
  %v1167 = vld [vmem:[%s0 + $0x23c8] sm:$0xff]
  %v1168 = vld [vmem:[%s0 + $0x23d0] sm:$0xff]
  %v1169 = vld [vmem:[%s0 + $0x23d8] sm:$0xff]
  %v1170 = vld [vmem:[%s0 + $0x23e0] sm:$0xff]
  %v1171 = vld [vmem:[%s0 + $0x23e8] sm:$0xff]
  %v1172 = vld [vmem:[%s0 + $0x23f0] sm:$0xff]
  %v1173 = vld [vmem:[%s0 + $0x23f8] sm:$0xff]
  %v1174 = vld [vmem:[%s0 + $0x2400] sm:$0xff]
  %v1175 = vld [vmem:[%s0 + $0x2408] sm:$0xff]
  %v1176 = vld [vmem:[%s0 + $0x2410] sm:$0xff]
  %v1177 = vld [vmem:[%s0 + $0x2418] sm:$0xff]
  %v1178 = vld [vmem:[%s0 + $0x2420] sm:$0xff]
  %v1179 = vld [vmem:[%s0 + $0x2428] sm:$0xff]
  %v1180 = vld [vmem:[%s0 + $0x2430] sm:$0xff]
  %v1181 = vld [vmem:[%s0 + $0x2438] sm:$0xff]
  %v1182 = vld [vmem:[%s0 + $0x2440] sm:$0xff]
  %v1183 = vld [vmem:[%s0 + $0x2448] sm:$0xff]
  %v1184 = vld [vmem:[%s0 + $0x2450] sm:$0xff]
  %v1185 = vld [vmem:[%s0 + $0x2458] sm:$0xff]
  %v1186 = vld [vmem:[%s0 + $0x2460] sm:$0xff]
  %v1187 = vld [vmem:[%s0 + $0x2468] sm:$0xff]
  %v1188 = vld [vmem:[%s0 + $0x2470] sm:$0xff]
  %v1189 = vld [vmem:[%s0 + $0x2478] sm:$0xff]
  %v1190 = vld [vmem:[%s0 + $0x2480] sm:$0xff]
  %v1191 = vld [vmem:[%s0 + $0x2488] sm:$0xff]
  %v1192 = vld [vmem:[%s0 + $0x2490] sm:$0xff]
  %v1193 = vld [vmem:[%s0 + $0x2498] sm:$0xff]
  %v1194 = vld [vmem:[%s0 + $0x24a0] sm:$0xff]
  %v1195 = vld [vmem:[%s0 + $0x24a8] sm:$0xff]
  %v1196 = vld [vmem:[%s0 + $0x24b0] sm:$0xff]
  %v1197 = vld [vmem:[%s0 + $0x24b8] sm:$0xff]
  %v1198 = vld [vmem:[%s0 + $0x24c0] sm:$0xff]
  %v1199 = vld [vmem:[%s0 + $0x24c8] sm:$0xff]
  %v1200 = vld [vmem:[%s0 + $0x24d0] sm:$0xff]
  %v1201 = vld [vmem:[%s0 + $0x24d8] sm:$0xff]
  %v1202 = vld [vmem:[%s0 + $0x24e0] sm:$0xff]
  %v1203 = vld [vmem:[%s0 + $0x24e8] sm:$0xff]
  %v1204 = vld [vmem:[%s0 + $0x24f0] sm:$0xff]
  %v1205 = vld [vmem:[%s0 + $0x24f8] sm:$0xff]
  %v1206 = vld [vmem:[%s0 + $0x2500] sm:$0xff]
  %v1207 = vld [vmem:[%s0 + $0x2508] sm:$0xff]
  %v1208 = vld [vmem:[%s0 + $0x2510] sm:$0xff]
  %v1209 = vld [vmem:[%s0 + $0x2518] sm:$0xff]
  %v1210 = vld [vmem:[%s0 + $0x2520] sm:$0xff]
  %v1211 = vld [vmem:[%s0 + $0x2528] sm:$0xff]
  %v1212 = vld [vmem:[%s0 + $0x2530] sm:$0xff]
  %v1213 = vld [vmem:[%s0 + $0x2538] sm:$0xff]
  %v1214 = vld [vmem:[%s0 + $0x2540] sm:$0xff]
  %v1215 = vld [vmem:[%s0 + $0x2548] sm:$0xff]
  %v1216 = vld [vmem:[%s0 + $0x2550] sm:$0xff]
  %v1217 = vld [vmem:[%s0 + $0x2558] sm:$0xff]
  %v1218 = vld [vmem:[%s0 + $0x2560] sm:$0xff]
  %v1219 = vld [vmem:[%s0 + $0x2568] sm:$0xff]
  %v1220 = vld [vmem:[%s0 + $0x2570] sm:$0xff]
  %v1221 = vld [vmem:[%s0 + $0x2578] sm:$0xff]
  %v1222 = vld [vmem:[%s0 + $0x2580] sm:$0xff]
  %v1223 = vld [vmem:[%s0 + $0x2588] sm:$0xff]
  %v1224 = vld [vmem:[%s0 + $0x2590] sm:$0xff]
  %v1225 = vld [vmem:[%s0 + $0x2598] sm:$0xff]
  %v1226 = vld [vmem:[%s0 + $0x25a0] sm:$0xff]
  %v1227 = vld [vmem:[%s0 + $0x25a8] sm:$0xff]
  %v1228 = vld [vmem:[%s0 + $0x25b0] sm:$0xff]
  %v1229 = vld [vmem:[%s0 + $0x25b8] sm:$0xff]
  %v1230 = vld [vmem:[%s0 + $0x25c0] sm:$0xff]
  %v1231 = vld [vmem:[%s0 + $0x25c8] sm:$0xff]
  %v1232 = vld [vmem:[%s0 + $0x25d0] sm:$0xff]
  %v1233 = vld [vmem:[%s0 + $0x25d8] sm:$0xff]
  %v1234 = vld [vmem:[%s0 + $0x25e0] sm:$0xff]
  %v1235 = vld [vmem:[%s0 + $0x25e8] sm:$0xff]
  %v1236 = vld [vmem:[%s0 + $0x25f0] sm:$0xff]
  %v1237 = vld [vmem:[%s0 + $0x25f8] sm:$0xff]
  %v1238 = vld [vmem:[%s0 + $0x2600] sm:$0xff]
  %v1239 = vld [vmem:[%s0 + $0x2608] sm:$0xff]
  %v1240 = vld [vmem:[%s0 + $0x2610] sm:$0xff]
  %v1241 = vld [vmem:[%s0 + $0x2618] sm:$0xff]
  %v1242 = vld [vmem:[%s0 + $0x2620] sm:$0xff]
  %v1243 = vld [vmem:[%s0 + $0x2628] sm:$0xff]
  %v1244 = vld [vmem:[%s0 + $0x2630] sm:$0xff]
  %v1245 = vld [vmem:[%s0 + $0x2638] sm:$0xff]
  %v1246 = vld [vmem:[%s0 + $0x2640] sm:$0xff]
  %v1247 = vld [vmem:[%s0 + $0x2648] sm:$0xff]
  %v1248 = vld [vmem:[%s0 + $0x2650] sm:$0xff]
  %v1249 = vld [vmem:[%s0 + $0x2658] sm:$0xff]
  %v1250 = vld [vmem:[%s0 + $0x2660] sm:$0xff]
  %v1251 = vld [vmem:[%s0 + $0x2668] sm:$0xff]
  %v1252 = vld [vmem:[%s0 + $0x2670] sm:$0xff]
  %v1253 = vld [vmem:[%s0 + $0x2678] sm:$0xff]
  %v1254 = vld [vmem:[%s0 + $0x2680] sm:$0xff]
  %v1255 = vld [vmem:[%s0 + $0x2688] sm:$0xff]
  %v1256 = vld [vmem:[%s0 + $0x2690] sm:$0xff]
  %v1257 = vld [vmem:[%s0 + $0x2698] sm:$0xff]
  %v1258 = vld [vmem:[%s0 + $0x26a0] sm:$0xff]
  %v1259 = vld [vmem:[%s0 + $0x26a8] sm:$0xff]
  %v1260 = vld [vmem:[%s0 + $0x26b0] sm:$0xff]
  %v1261 = vld [vmem:[%s0 + $0x26b8] sm:$0xff]
  %v1262 = vld [vmem:[%s0 + $0x26c0] sm:$0xff]
  %v1263 = vld [vmem:[%s0 + $0x26c8] sm:$0xff]
  %v1264 = vld [vmem:[%s0 + $0x26d0] sm:$0xff]
  %v1265 = vld [vmem:[%s0 + $0x26d8] sm:$0xff]
  %v1266 = vld [vmem:[%s0 + $0x26e0] sm:$0xff]
  %v1267 = vld [vmem:[%s0 + $0x26e8] sm:$0xff]
  %v1268 = vld [vmem:[%s0 + $0x26f0] sm:$0xff]
  %v1269 = vld [vmem:[%s0 + $0x26f8] sm:$0xff]
  %v1270 = vld [vmem:[%s0 + $0x2700] sm:$0xff]
  %v1271 = vld [vmem:[%s0 + $0x2708] sm:$0xff]
  %v1272 = vld [vmem:[%s0 + $0x2710] sm:$0xff]
  %v1273 = vld [vmem:[%s0 + $0x2718] sm:$0xff]
  %v1274 = vld [vmem:[%s0 + $0x2720] sm:$0xff]
  %v1275 = vld [vmem:[%s0 + $0x2728] sm:$0xff]
  %v1276 = vld [vmem:[%s0 + $0x2730] sm:$0xff]
  %v1277 = vld [vmem:[%s0 + $0x2738] sm:$0xff]
  %v1278 = vld [vmem:[%s0 + $0x2740] sm:$0xff]
  %v1279 = vld [vmem:[%s0 + $0x2748] sm:$0xff]
  %v1280 = vld [vmem:[%s0 + $0x2750] sm:$0xff]
  %v1281 = vld [vmem:[%s0 + $0x2758] sm:$0xff]
  %v1282 = vld [vmem:[%s0 + $0x2760] sm:$0xff]
  %v1283 = vld [vmem:[%s0 + $0x2768] sm:$0xff]
  %v1284 = vld [vmem:[%s0 + $0x2770] sm:$0xff]
  %v1285 = vld [vmem:[%s0 + $0x2778] sm:$0xff]
  %v1286 = vld [vmem:[%s0 + $0x2780] sm:$0xff]
  %v1287 = vld [vmem:[%s0 + $0x2788] sm:$0xff]
  %v1288 = vld [vmem:[%s0 + $0x2790] sm:$0xff]
  %v1289 = vld [vmem:[%s0 + $0x2798] sm:$0xff]
  %v1290 = vld [vmem:[%s0 + $0x27a0] sm:$0xff]
  %v1291 = vld [vmem:[%s0 + $0x27a8] sm:$0xff]
  %v1292 = vld [vmem:[%s0 + $0x27b0] sm:$0xff]
  %v1293 = vld [vmem:[%s0 + $0x27b8] sm:$0xff]
  %v1294 = vld [vmem:[%s0 + $0x27c0] sm:$0xff]
  %v1295 = vld [vmem:[%s0 + $0x27c8] sm:$0xff]
  %v1296 = vld [vmem:[%s0 + $0x27d0] sm:$0xff]
  %v1297 = vld [vmem:[%s0 + $0x27d8] sm:$0xff]
  %v1298 = vld [vmem:[%s0 + $0x27e0] sm:$0xff]
  %v1299 = vld [vmem:[%s0 + $0x27e8] sm:$0xff]
  %v1300 = vld [vmem:[%s0 + $0x27f0] sm:$0xff]
  %v1301 = vld [vmem:[%s0 + $0x27f8] sm:$0xff]
  %v1302 = vld [vmem:[%s0 + $0x2800] sm:$0xff]
  %v1303 = vld [vmem:[%s0 + $0x2808] sm:$0xff]
  %v1304 = vld [vmem:[%s0 + $0x2810] sm:$0xff]
  %v1305 = vld [vmem:[%s0 + $0x2818] sm:$0xff]
  %v1306 = vld [vmem:[%s0 + $0x2820] sm:$0xff]
  %v1307 = vld [vmem:[%s0 + $0x2828] sm:$0xff]
  %v1308 = vld [vmem:[%s0 + $0x2830] sm:$0xff]
  %v1309 = vld [vmem:[%s0 + $0x2838] sm:$0xff]
  %v1310 = vld [vmem:[%s0 + $0x2840] sm:$0xff]
  %v1311 = vld [vmem:[%s0 + $0x2848] sm:$0xff]
  %v1312 = vld [vmem:[%s0 + $0x2850] sm:$0xff]
  %v1313 = vld [vmem:[%s0 + $0x2858] sm:$0xff]
  %v1314 = vld [vmem:[%s0 + $0x2860] sm:$0xff]
  %v1315 = vld [vmem:[%s0 + $0x2868] sm:$0xff]
  %v1316 = vld [vmem:[%s0 + $0x2870] sm:$0xff]
  %v1317 = vld [vmem:[%s0 + $0x2878] sm:$0xff]
  %v1318 = vld [vmem:[%s0 + $0x2880] sm:$0xff]
  %v1319 = vld [vmem:[%s0 + $0x2888] sm:$0xff]
  %v1320 = vld [vmem:[%s0 + $0x2890] sm:$0xff]
  %v1321 = vld [vmem:[%s0 + $0x2898] sm:$0xff]
  %v1322 = vld [vmem:[%s0 + $0x28a0] sm:$0xff]
  %v1323 = vld [vmem:[%s0 + $0x28a8] sm:$0xff]
  %v1324 = vld [vmem:[%s0 + $0x28b0] sm:$0xff]
  %v1325 = vld [vmem:[%s0 + $0x28b8] sm:$0xff]
  %v1326 = vld [vmem:[%s0 + $0x28c0] sm:$0xff]
  %v1327 = vld [vmem:[%s0 + $0x28c8] sm:$0xff]
  %v1328 = vld [vmem:[%s0 + $0x28d0] sm:$0xff]
  %v1329 = vld [vmem:[%s0 + $0x28d8] sm:$0xff]
  %v1330 = vld [vmem:[%s0 + $0x28e0] sm:$0xff]
  %v1331 = vld [vmem:[%s0 + $0x28e8] sm:$0xff]
  %v1332 = vld [vmem:[%s0 + $0x28f0] sm:$0xff]
  %v1333 = vld [vmem:[%s0 + $0x28f8] sm:$0xff]
  %v1334 = vld [vmem:[%s0 + $0x2900] sm:$0xff]
  %v1335 = vld [vmem:[%s0 + $0x2908] sm:$0xff]
  %v1336 = vld [vmem:[%s0 + $0x2910] sm:$0xff]
  %v1337 = vld [vmem:[%s0 + $0x2918] sm:$0xff]
  %v1338 = vld [vmem:[%s0 + $0x2920] sm:$0xff]
  %v1339 = vld [vmem:[%s0 + $0x2928] sm:$0xff]
  %v1340 = vld [vmem:[%s0 + $0x2930] sm:$0xff]
  %v1341 = vld [vmem:[%s0 + $0x2938] sm:$0xff]
  %v1342 = vld [vmem:[%s0 + $0x2940] sm:$0xff]
  %v1343 = vld [vmem:[%s0 + $0x2948] sm:$0xff]
  %v1344 = vld [vmem:[%s0 + $0x2950] sm:$0xff]
  %v1345 = vld [vmem:[%s0 + $0x2958] sm:$0xff]
  %v1346 = vld [vmem:[%s0 + $0x2960] sm:$0xff]
  %v1347 = vld [vmem:[%s0 + $0x2968] sm:$0xff]
  %v1348 = vld [vmem:[%s0 + $0x2970] sm:$0xff]
  %v1349 = vld [vmem:[%s0 + $0x2978] sm:$0xff]
  %v1350 = vld [vmem:[%s0 + $0x2980] sm:$0xff]
  %v1351 = vld [vmem:[%s0 + $0x2988] sm:$0xff]
  %v1352 = vld [vmem:[%s0 + $0x2990] sm:$0xff]
  %v1353 = vld [vmem:[%s0 + $0x2998] sm:$0xff]
  %v1354 = vld [vmem:[%s0 + $0x29a0] sm:$0xff]
  %v1355 = vld [vmem:[%s0 + $0x29a8] sm:$0xff]
  %v1356 = vld [vmem:[%s0 + $0x29b0] sm:$0xff]
  %v1357 = vld [vmem:[%s0 + $0x29b8] sm:$0xff]
  %v1358 = vld [vmem:[%s0 + $0x29c0] sm:$0xff]
  %v1359 = vld [vmem:[%s0 + $0x29c8] sm:$0xff]
  %v1360 = vld [vmem:[%s0 + $0x29d0] sm:$0xff]
  %v1361 = vld [vmem:[%s0 + $0x29d8] sm:$0xff]
  %v1362 = vld [vmem:[%s0 + $0x29e0] sm:$0xff]
  %v1363 = vld [vmem:[%s0 + $0x29e8] sm:$0xff]
  %v1364 = vld [vmem:[%s0 + $0x29f0] sm:$0xff]
  %v1365 = vld [vmem:[%s0 + $0x29f8] sm:$0xff]
  %v1366 = vld [vmem:[%s0 + $0x2a00] sm:$0xff]
  %v1367 = vld [vmem:[%s0 + $0x2a08] sm:$0xff]
  %v1368 = vld [vmem:[%s0 + $0x2a10] sm:$0xff]
  %v1369 = vld [vmem:[%s0 + $0x2a18] sm:$0xff]
  %v1370 = vld [vmem:[%s0 + $0x2a20] sm:$0xff]
  %v1371 = vld [vmem:[%s0 + $0x2a28] sm:$0xff]
  %v1372 = vld [vmem:[%s0 + $0x2a30] sm:$0xff]
  %v1373 = vld [vmem:[%s0 + $0x2a38] sm:$0xff]
  %v1374 = vld [vmem:[%s0 + $0x2a40] sm:$0xff]
  %v1375 = vld [vmem:[%s0 + $0x2a48] sm:$0xff]
  %v1376 = vld [vmem:[%s0 + $0x2a50] sm:$0xff]
  %v1377 = vld [vmem:[%s0 + $0x2a58] sm:$0xff]
  %v1378 = vld [vmem:[%s0 + $0x2a60] sm:$0xff]
  %v1379 = vld [vmem:[%s0 + $0x2a68] sm:$0xff]
  %v1380 = vld [vmem:[%s0 + $0x2a70] sm:$0xff]
  %v1381 = vld [vmem:[%s0 + $0x2a78] sm:$0xff]
  %v1382 = vld [vmem:[%s0 + $0x2a80] sm:$0xff]
  %v1383 = vld [vmem:[%s0 + $0x2a88] sm:$0xff]
  %v1384 = vld [vmem:[%s0 + $0x2a90] sm:$0xff]
  %v1385 = vld [vmem:[%s0 + $0x2a98] sm:$0xff]
  %v1386 = vld [vmem:[%s0 + $0x2aa0] sm:$0xff]
  %v1387 = vld [vmem:[%s0 + $0x2aa8] sm:$0xff]
  %v1388 = vld [vmem:[%s0 + $0x2ab0] sm:$0xff]
  %v1389 = vld [vmem:[%s0 + $0x2ab8] sm:$0xff]
  %v1390 = vld [vmem:[%s0 + $0x2ac0] sm:$0xff]
  %v1391 = vld [vmem:[%s0 + $0x2ac8] sm:$0xff]
  %v1392 = vld [vmem:[%s0 + $0x2ad0] sm:$0xff]
  %v1393 = vld [vmem:[%s0 + $0x2ad8] sm:$0xff]
  %v1394 = vld [vmem:[%s0 + $0x2ae0] sm:$0xff]
  %v1395 = vld [vmem:[%s0 + $0x2ae8] sm:$0xff]
  %v1396 = vld [vmem:[%s0 + $0x2af0] sm:$0xff]
  %v1397 = vld [vmem:[%s0 + $0x2af8] sm:$0xff]
  %v1398 = vld [vmem:[%s0 + $0x2b00] sm:$0xff]
  %v1399 = vld [vmem:[%s0 + $0x2b08] sm:$0xff]
  %v1400 = vld [vmem:[%s0 + $0x2b10] sm:$0xff]
  %v1401 = vld [vmem:[%s0 + $0x2b18] sm:$0xff]
  %v1402 = vld [vmem:[%s0 + $0x2b20] sm:$0xff]
  %v1403 = vld [vmem:[%s0 + $0x2b28] sm:$0xff]
  %v1404 = vld [vmem:[%s0 + $0x2b30] sm:$0xff]
  %v1405 = vld [vmem:[%s0 + $0x2b38] sm:$0xff]
  %v1406 = vld [vmem:[%s0 + $0x2b40] sm:$0xff]
  %v1407 = vld [vmem:[%s0 + $0x2b48] sm:$0xff]
  %v1408 = vld [vmem:[%s0 + $0x2b50] sm:$0xff]
  %v1409 = vld [vmem:[%s0 + $0x2b58] sm:$0xff]
  %v1410 = vld [vmem:[%s0 + $0x2b60] sm:$0xff]
  %v1411 = vld [vmem:[%s0 + $0x2b68] sm:$0xff]
  %v1412 = vld [vmem:[%s0 + $0x2b70] sm:$0xff]
  %v1413 = vld [vmem:[%s0 + $0x2b78] sm:$0xff]
  %v1414 = vld [vmem:[%s0 + $0x2b80] sm:$0xff]
  %v1415 = vld [vmem:[%s0 + $0x2b88] sm:$0xff]
  %v1416 = vld [vmem:[%s0 + $0x2b90] sm:$0xff]
  %v1417 = vld [vmem:[%s0 + $0x2b98] sm:$0xff]
  %v1418 = vld [vmem:[%s0 + $0x2ba0] sm:$0xff]
  %v1419 = vld [vmem:[%s0 + $0x2ba8] sm:$0xff]
  %v1420 = vld [vmem:[%s0 + $0x2bb0] sm:$0xff]
  %v1421 = vld [vmem:[%s0 + $0x2bb8] sm:$0xff]
  %v1422 = vld [vmem:[%s0 + $0x2bc0] sm:$0xff]
  %v1423 = vld [vmem:[%s0 + $0x2bc8] sm:$0xff]
  %v1424 = vld [vmem:[%s0 + $0x2bd0] sm:$0xff]
  %v1425 = vld [vmem:[%s0 + $0x2bd8] sm:$0xff]
  %v1426 = vld [vmem:[%s0 + $0x2be0] sm:$0xff]
  %v1427 = vld [vmem:[%s0 + $0x2be8] sm:$0xff]
  %v1428 = vld [vmem:[%s0 + $0x2bf0] sm:$0xff]
  %v1429 = vld [vmem:[%s0 + $0x2bf8] sm:$0xff]
  %v1430 = vld [vmem:[%s0 + $0x2c00] sm:$0xff]
  %v1431 = vld [vmem:[%s0 + $0x2c08] sm:$0xff]
  %v1432 = vld [vmem:[%s0 + $0x2c10] sm:$0xff]
  %v1433 = vld [vmem:[%s0 + $0x2c18] sm:$0xff]
  %v1434 = vld [vmem:[%s0 + $0x2c20] sm:$0xff]
  %v1435 = vld [vmem:[%s0 + $0x2c28] sm:$0xff]
  %v1436 = vld [vmem:[%s0 + $0x2c30] sm:$0xff]
  %v1437 = vld [vmem:[%s0 + $0x2c38] sm:$0xff]
  %v1438 = vld [vmem:[%s0 + $0x2c40] sm:$0xff]
  %v1439 = vld [vmem:[%s0 + $0x2c48] sm:$0xff]
  %v1440 = vld [vmem:[%s0 + $0x2c50] sm:$0xff]
  %v1441 = vld [vmem:[%s0 + $0x2c58] sm:$0xff]
  %v1442 = vld [vmem:[%s0 + $0x2c60] sm:$0xff]
  %v1443 = vld [vmem:[%s0 + $0x2c68] sm:$0xff]
  %v1444 = vld [vmem:[%s0 + $0x2c70] sm:$0xff]
  %v1445 = vld [vmem:[%s0 + $0x2c78] sm:$0xff]
  %v1446 = vld [vmem:[%s0 + $0x2c80] sm:$0xff]
  %v1447 = vld [vmem:[%s0 + $0x2c88] sm:$0xff]
  %v1448 = vld [vmem:[%s0 + $0x2c90] sm:$0xff]
  %v1449 = vld [vmem:[%s0 + $0x2c98] sm:$0xff]
  %v1450 = vld [vmem:[%s0 + $0x2ca0] sm:$0xff]
  %v1451 = vld [vmem:[%s0 + $0x2ca8] sm:$0xff]
  %v1452 = vld [vmem:[%s0 + $0x2cb0] sm:$0xff]
  %v1453 = vld [vmem:[%s0 + $0x2cb8] sm:$0xff]
  %v1454 = vld [vmem:[%s0 + $0x2cc0] sm:$0xff]
  %v1455 = vld [vmem:[%s0 + $0x2cc8] sm:$0xff]
  %v1456 = vld [vmem:[%s0 + $0x2cd0] sm:$0xff]
  %v1457 = vld [vmem:[%s0 + $0x2cd8] sm:$0xff]
  %v1458 = vld [vmem:[%s0 + $0x2ce0] sm:$0xff]
  %v1459 = vld [vmem:[%s0 + $0x2ce8] sm:$0xff]
  %v1460 = vld [vmem:[%s0 + $0x2cf0] sm:$0xff]
  %v1461 = vld [vmem:[%s0 + $0x2cf8] sm:$0xff]
  %v1462 = vld [vmem:[%s0 + $0x2d00] sm:$0xff]
  %v1463 = vld [vmem:[%s0 + $0x2d08] sm:$0xff]
  %v1464 = vld [vmem:[%s0 + $0x2d10] sm:$0xff]
  %v1465 = vld [vmem:[%s0 + $0x2d18] sm:$0xff]
  %v1466 = vld [vmem:[%s0 + $0x2d20] sm:$0xff]
  %v1467 = vld [vmem:[%s0 + $0x2d28] sm:$0xff]
  %v1468 = vld [vmem:[%s0 + $0x2d30] sm:$0xff]
  %v1469 = vld [vmem:[%s0 + $0x2d38] sm:$0xff]
  %v1470 = vld [vmem:[%s0 + $0x2d40] sm:$0xff]
  %v1471 = vld [vmem:[%s0 + $0x2d48] sm:$0xff]
  %v1472 = vld [vmem:[%s0 + $0x2d50] sm:$0xff]
  %v1473 = vld [vmem:[%s0 + $0x2d58] sm:$0xff]
  %v1474 = vld [vmem:[%s0 + $0x2d60] sm:$0xff]
  %v1475 = vld [vmem:[%s0 + $0x2d68] sm:$0xff]
  %v1476 = vld [vmem:[%s0 + $0x2d70] sm:$0xff]
  %v1477 = vld [vmem:[%s0 + $0x2d78] sm:$0xff]
  %v1478 = vld [vmem:[%s0 + $0x2d80] sm:$0xff]
  %v1479 = vld [vmem:[%s0 + $0x2d88] sm:$0xff]
  %v1480 = vld [vmem:[%s0 + $0x2d90] sm:$0xff]
  %v1481 = vld [vmem:[%s0 + $0x2d98] sm:$0xff]
  %v1482 = vld [vmem:[%s0 + $0x2da0] sm:$0xff]
  %v1483 = vld [vmem:[%s0 + $0x2da8] sm:$0xff]
  %v1484 = vld [vmem:[%s0 + $0x2db0] sm:$0xff]
  %v1485 = vld [vmem:[%s0 + $0x2db8] sm:$0xff]
  %v1486 = vld [vmem:[%s0 + $0x2dc0] sm:$0xff]
  %v1487 = vld [vmem:[%s0 + $0x2dc8] sm:$0xff]
  %v1488 = vld [vmem:[%s0 + $0x2dd0] sm:$0xff]
  %v1489 = vld [vmem:[%s0 + $0x2dd8] sm:$0xff]
  %v1490 = vld [vmem:[%s0 + $0x2de0] sm:$0xff]
  %v1491 = vld [vmem:[%s0 + $0x2de8] sm:$0xff]
  %v1492 = vld [vmem:[%s0 + $0x2df0] sm:$0xff]
  %v1493 = vld [vmem:[%s0 + $0x2df8] sm:$0xff]
  %v1494 = vld [vmem:[%s0 + $0x2e00] sm:$0xff]
  %v1495 = vld [vmem:[%s0 + $0x2e08] sm:$0xff]
  %v1496 = vld [vmem:[%s0 + $0x2e10] sm:$0xff]
  %v1497 = vld [vmem:[%s0 + $0x2e18] sm:$0xff]
  %v1498 = vld [vmem:[%s0 + $0x2e20] sm:$0xff]
  %v1499 = vld [vmem:[%s0 + $0x2e28] sm:$0xff]
  %v1500 = vld [vmem:[%s0 + $0x2e30] sm:$0xff]
  %v1501 = vld [vmem:[%s0 + $0x2e38] sm:$0xff]
  %v1502 = vld [vmem:[%s0 + $0x2e40] sm:$0xff]
  %v1503 = vld [vmem:[%s0 + $0x2e48] sm:$0xff]
  %v1504 = vld [vmem:[%s0 + $0x2e50] sm:$0xff]
  %v1505 = vld [vmem:[%s0 + $0x2e58] sm:$0xff]
  %v1506 = vld [vmem:[%s0 + $0x2e60] sm:$0xff]
  %v1507 = vld [vmem:[%s0 + $0x2e68] sm:$0xff]
  %v1508 = vld [vmem:[%s0 + $0x2e70] sm:$0xff]
  %v1509 = vld [vmem:[%s0 + $0x2e78] sm:$0xff]
  %v1510 = vld [vmem:[%s0 + $0x2e80] sm:$0xff]
  %v1511 = vld [vmem:[%s0 + $0x2e88] sm:$0xff]
  %v1512 = vld [vmem:[%s0 + $0x2e90] sm:$0xff]
  %v1513 = vld [vmem:[%s0 + $0x2e98] sm:$0xff]
  %v1514 = vld [vmem:[%s0 + $0x2ea0] sm:$0xff]
  %v1515 = vld [vmem:[%s0 + $0x2ea8] sm:$0xff]
  %v1516 = vld [vmem:[%s0 + $0x2eb0] sm:$0xff]
  %v1517 = vld [vmem:[%s0 + $0x2eb8] sm:$0xff]
  %v1518 = vld [vmem:[%s0 + $0x2ec0] sm:$0xff]
  %v1519 = vld [vmem:[%s0 + $0x2ec8] sm:$0xff]
  %v1520 = vld [vmem:[%s0 + $0x2ed0] sm:$0xff]
  %v1521 = vld [vmem:[%s0 + $0x2ed8] sm:$0xff]
  %v1522 = vld [vmem:[%s0 + $0x2ee0] sm:$0xff]
  %v1523 = vld [vmem:[%s0 + $0x2ee8] sm:$0xff]
  %v1524 = vld [vmem:[%s0 + $0x2ef0] sm:$0xff]
  %v1525 = vld [vmem:[%s0 + $0x2ef8] sm:$0xff]
  %v1526 = vld [vmem:[%s0 + $0x2f00] sm:$0xff]
  %v1527 = vld [vmem:[%s0 + $0x2f08] sm:$0xff]
  %v1528 = vld [vmem:[%s0 + $0x2f10] sm:$0xff]
  %v1529 = vld [vmem:[%s0 + $0x2f18] sm:$0xff]
  %v1530 = vld [vmem:[%s0 + $0x2f20] sm:$0xff]
  %v1531 = vld [vmem:[%s0 + $0x2f28] sm:$0xff]
  %v1532 = vld [vmem:[%s0 + $0x2f30] sm:$0xff]
  %v1533 = vld [vmem:[%s0 + $0x2f38] sm:$0xff]
  %v1534 = vld [vmem:[%s0 + $0x2f40] sm:$0xff]
  %v1535 = vld [vmem:[%s0 + $0x2f48] sm:$0xff]
  %v1536 = vld [vmem:[%s0 + $0x2f50] sm:$0xff]
  %v1537 = vld [vmem:[%s0 + $0x2f58] sm:$0xff]
  %v1538 = vld [vmem:[%s0 + $0x2f60] sm:$0xff]
  %v1539 = vld [vmem:[%s0 + $0x2f68] sm:$0xff]
  %v1540 = vld [vmem:[%s0 + $0x2f70] sm:$0xff]
  %v1541 = vld [vmem:[%s0 + $0x2f78] sm:$0xff]
  %v1542 = vld [vmem:[%s0 + $0x2f80] sm:$0xff]
  %v1543 = vld [vmem:[%s0 + $0x2f88] sm:$0xff]
  %v1544 = vld [vmem:[%s0 + $0x2f90] sm:$0xff]
  %v1545 = vld [vmem:[%s0 + $0x2f98] sm:$0xff]
  %v1546 = vld [vmem:[%s0 + $0x2fa0] sm:$0xff]
  %v1547 = vld [vmem:[%s0 + $0x2fa8] sm:$0xff]
  %v1548 = vld [vmem:[%s0 + $0x2fb0] sm:$0xff]
  %v1549 = vld [vmem:[%s0 + $0x2fb8] sm:$0xff]
  %v1550 = vld [vmem:[%s0 + $0x2fc0] sm:$0xff]
  %v1551 = vld [vmem:[%s0 + $0x2fc8] sm:$0xff]
  %v1552 = vld [vmem:[%s0 + $0x2fd0] sm:$0xff]
  %v1553 = vld [vmem:[%s0 + $0x2fd8] sm:$0xff]
  %v1554 = vld [vmem:[%s0 + $0x2fe0] sm:$0xff]
  %v1555 = vld [vmem:[%s0 + $0x2fe8] sm:$0xff]
  %v1556 = vld [vmem:[%s0 + $0x2ff0] sm:$0xff]
  %v1557 = vld [vmem:[%s0 + $0x2ff8] sm:$0xff]
  %v1558 = vld [vmem:[%s0 + $0x3000] sm:$0xff]
  %v1559 = vld [vmem:[%s0 + $0x3008] sm:$0xff]
  %v1560 = vld [vmem:[%s0 + $0x3010] sm:$0xff]
  %v1561 = vld [vmem:[%s0 + $0x3018] sm:$0xff]
  %v1562 = vld [vmem:[%s0 + $0x3020] sm:$0xff]
  %v1563 = vld [vmem:[%s0 + $0x3028] sm:$0xff]
  %v1564 = vld [vmem:[%s0 + $0x3030] sm:$0xff]
  %v1565 = vld [vmem:[%s0 + $0x3038] sm:$0xff]
  %v1566 = vld [vmem:[%s0 + $0x3040] sm:$0xff]
  %v1567 = vld [vmem:[%s0 + $0x3048] sm:$0xff]
  %v1568 = vld [vmem:[%s0 + $0x3050] sm:$0xff]
  %v1569 = vld [vmem:[%s0 + $0x3058] sm:$0xff]
  %v1570 = vld [vmem:[%s0 + $0x3060] sm:$0xff]
  %v1571 = vld [vmem:[%s0 + $0x3068] sm:$0xff]
  %v1572 = vld [vmem:[%s0 + $0x3070] sm:$0xff]
  %v1573 = vld [vmem:[%s0 + $0x3078] sm:$0xff]
  %v1574 = vld [vmem:[%s0 + $0x3080] sm:$0xff]
  %v1575 = vld [vmem:[%s0 + $0x3088] sm:$0xff]
  %v1576 = vld [vmem:[%s0 + $0x3090] sm:$0xff]
  %v1577 = vld [vmem:[%s0 + $0x3098] sm:$0xff]
  %v1578 = vld [vmem:[%s0 + $0x30a0] sm:$0xff]
  %v1579 = vld [vmem:[%s0 + $0x30a8] sm:$0xff]
  %v1580 = vld [vmem:[%s0 + $0x30b0] sm:$0xff]
  %v1581 = vld [vmem:[%s0 + $0x30b8] sm:$0xff]
  %v1582 = vld [vmem:[%s0 + $0x30c0] sm:$0xff]
  %v1583 = vld [vmem:[%s0 + $0x30c8] sm:$0xff]
  %v1584 = vld [vmem:[%s0 + $0x30d0] sm:$0xff]
  %v1585 = vld [vmem:[%s0 + $0x30d8] sm:$0xff]
  %v1586 = vld [vmem:[%s0 + $0x30e0] sm:$0xff]
  %v1587 = vld [vmem:[%s0 + $0x30e8] sm:$0xff]
  %v1588 = vld [vmem:[%s0 + $0x30f0] sm:$0xff]
  %v1589 = vld [vmem:[%s0 + $0x30f8] sm:$0xff]
  %v1590 = vld [vmem:[%s0 + $0x3100] sm:$0xff]
  %v1591 = vld [vmem:[%s0 + $0x3108] sm:$0xff]
  %v1592 = vld [vmem:[%s0 + $0x3110] sm:$0xff]
  %v1593 = vld [vmem:[%s0 + $0x3118] sm:$0xff]
  %v1594 = vld [vmem:[%s0 + $0x3120] sm:$0xff]
  %v1595 = vld [vmem:[%s0 + $0x3128] sm:$0xff]
  %v1596 = vld [vmem:[%s0 + $0x3130] sm:$0xff]
  %v1597 = vld [vmem:[%s0 + $0x3138] sm:$0xff]
  %v1598 = vld [vmem:[%s0 + $0x3140] sm:$0xff]
  %v1599 = vld [vmem:[%s0 + $0x3148] sm:$0xff]
  %v1600 = vld [vmem:[%s0 + $0x3150] sm:$0xff]
  %v1601 = vld [vmem:[%s0 + $0x3158] sm:$0xff]
  %v1602 = vld [vmem:[%s0 + $0x3160] sm:$0xff]
  %v1603 = vld [vmem:[%s0 + $0x3168] sm:$0xff]
  %v1604 = vld [vmem:[%s0 + $0x3170] sm:$0xff]
  %v1605 = vld [vmem:[%s0 + $0x3178] sm:$0xff]
  %v1606 = vld [vmem:[%s0 + $0x3180] sm:$0xff]
  %v1607 = vld [vmem:[%s0 + $0x3188] sm:$0xff]
  %v1608 = vld [vmem:[%s0 + $0x3190] sm:$0xff]
  %v1609 = vld [vmem:[%s0 + $0x3198] sm:$0xff]
  %v1610 = vld [vmem:[%s0 + $0x31a0] sm:$0xff]
  %v1611 = vld [vmem:[%s0 + $0x31a8] sm:$0xff]
  %v1612 = vld [vmem:[%s0 + $0x31b0] sm:$0xff]
  %v1613 = vld [vmem:[%s0 + $0x31b8] sm:$0xff]
  %v1614 = vld [vmem:[%s0 + $0x31c0] sm:$0xff]
  %v1615 = vld [vmem:[%s0 + $0x31c8] sm:$0xff]
  %v1616 = vld [vmem:[%s0 + $0x31d0] sm:$0xff]
  %v1617 = vld [vmem:[%s0 + $0x31d8] sm:$0xff]
  %v1618 = vld [vmem:[%s0 + $0x31e0] sm:$0xff]
  %v1619 = vld [vmem:[%s0 + $0x31e8] sm:$0xff]
  %v1620 = vld [vmem:[%s0 + $0x31f0] sm:$0xff]
  %v1621 = vld [vmem:[%s0 + $0x31f8] sm:$0xff]
  %v1622 = vld [vmem:[%s0 + $0x3200] sm:$0xff]
  %v1623 = vld [vmem:[%s0 + $0x3208] sm:$0xff]
  %v1624 = vld [vmem:[%s0 + $0x3210] sm:$0xff]
  %v1625 = vld [vmem:[%s0 + $0x3218] sm:$0xff]
  %v1626 = vld [vmem:[%s0 + $0x3220] sm:$0xff]
  %v1627 = vld [vmem:[%s0 + $0x3228] sm:$0xff]
  %v1628 = vld [vmem:[%s0 + $0x3230] sm:$0xff]
  %v1629 = vld [vmem:[%s0 + $0x3238] sm:$0xff]
  %v1630 = vld [vmem:[%s0 + $0x3240] sm:$0xff]
  %v1631 = vld [vmem:[%s0 + $0x3248] sm:$0xff]
  %v1632 = vld [vmem:[%s0 + $0x3250] sm:$0xff]
  %v1633 = vld [vmem:[%s0 + $0x3258] sm:$0xff]
  %v1634 = vld [vmem:[%s0 + $0x3260] sm:$0xff]
  %v1635 = vld [vmem:[%s0 + $0x3268] sm:$0xff]
  %v1636 = vld [vmem:[%s0 + $0x3270] sm:$0xff]
  %v1637 = vld [vmem:[%s0 + $0x3278] sm:$0xff]
  %v1638 = vld [vmem:[%s0 + $0x3280] sm:$0xff]
  %v1639 = vld [vmem:[%s0 + $0x3288] sm:$0xff]
  %v1640 = vld [vmem:[%s0 + $0x3290] sm:$0xff]
  %v1641 = vld [vmem:[%s0 + $0x3298] sm:$0xff]
  %v1642 = vld [vmem:[%s0 + $0x32a0] sm:$0xff]
  %v1643 = vld [vmem:[%s0 + $0x32a8] sm:$0xff]
  %v1644 = vld [vmem:[%s0 + $0x32b0] sm:$0xff]
  %v1645 = vld [vmem:[%s0 + $0x32b8] sm:$0xff]
  %v1646 = vld [vmem:[%s0 + $0x32c0] sm:$0xff]
  %v1647 = vld [vmem:[%s0 + $0x32c8] sm:$0xff]
  %v1648 = vld [vmem:[%s0 + $0x32d0] sm:$0xff]
  %v1649 = vld [vmem:[%s0 + $0x32d8] sm:$0xff]
  %v1650 = vld [vmem:[%s0 + $0x32e0] sm:$0xff]
  %v1651 = vld [vmem:[%s0 + $0x32e8] sm:$0xff]
  %v1652 = vld [vmem:[%s0 + $0x32f0] sm:$0xff]
  %v1653 = vld [vmem:[%s0 + $0x32f8] sm:$0xff]
  %v1654 = vld [vmem:[%s0 + $0x3300] sm:$0xff]
  %v1655 = vld [vmem:[%s0 + $0x3308] sm:$0xff]
  %v1656 = vld [vmem:[%s0 + $0x3310] sm:$0xff]
  %v1657 = vld [vmem:[%s0 + $0x3318] sm:$0xff]
  %v1658 = vld [vmem:[%s0 + $0x3320] sm:$0xff]
  %v1659 = vld [vmem:[%s0 + $0x3328] sm:$0xff]
  %v1660 = vld [vmem:[%s0 + $0x3330] sm:$0xff]
  %v1661 = vld [vmem:[%s0 + $0x3338] sm:$0xff]
  %v1662 = vld [vmem:[%s0 + $0x3340] sm:$0xff]
  %v1663 = vld [vmem:[%s0 + $0x3348] sm:$0xff]
  %v1664 = vld [vmem:[%s0 + $0x3350] sm:$0xff]
  %v1665 = vld [vmem:[%s0 + $0x3358] sm:$0xff]
  %v1666 = vld [vmem:[%s0 + $0x3360] sm:$0xff]
  %v1667 = vld [vmem:[%s0 + $0x3368] sm:$0xff]
  %v1668 = vld [vmem:[%s0 + $0x3370] sm:$0xff]
  %v1669 = vld [vmem:[%s0 + $0x3378] sm:$0xff]
  %v1670 = vld [vmem:[%s0 + $0x3380] sm:$0xff]
  %v1671 = vld [vmem:[%s0 + $0x3388] sm:$0xff]
  %v1672 = vld [vmem:[%s0 + $0x3390] sm:$0xff]
  %v1673 = vld [vmem:[%s0 + $0x3398] sm:$0xff]
  %v1674 = vld [vmem:[%s0 + $0x33a0] sm:$0xff]
  %v1675 = vld [vmem:[%s0 + $0x33a8] sm:$0xff]
  %v1676 = vld [vmem:[%s0 + $0x33b0] sm:$0xff]
  %v1677 = vld [vmem:[%s0 + $0x33b8] sm:$0xff]
  %v1678 = vld [vmem:[%s0 + $0x33c0] sm:$0xff]
  %v1679 = vld [vmem:[%s0 + $0x33c8] sm:$0xff]
  %v1680 = vld [vmem:[%s0 + $0x33d0] sm:$0xff]
  %v1681 = vld [vmem:[%s0 + $0x33d8] sm:$0xff]
  %v1682 = vld [vmem:[%s0 + $0x33e0] sm:$0xff]
  %v1683 = vld [vmem:[%s0 + $0x33e8] sm:$0xff]
  %v1684 = vld [vmem:[%s0 + $0x33f0] sm:$0xff]
  %v1685 = vld [vmem:[%s0 + $0x33f8] sm:$0xff]
  %v1686 = vld [vmem:[%s0 + $0x3400] sm:$0xff]
  %v1687 = vld [vmem:[%s0 + $0x3408] sm:$0xff]
  %v1688 = vld [vmem:[%s0 + $0x3410] sm:$0xff]
  %v1689 = vld [vmem:[%s0 + $0x3418] sm:$0xff]
  %v1690 = vld [vmem:[%s0 + $0x3420] sm:$0xff]
  %v1691 = vld [vmem:[%s0 + $0x3428] sm:$0xff]
  %v1692 = vld [vmem:[%s0 + $0x3430] sm:$0xff]
  %v1693 = vld [vmem:[%s0 + $0x3438] sm:$0xff]
  %v1694 = vld [vmem:[%s0 + $0x3440] sm:$0xff]
  %v1695 = vld [vmem:[%s0 + $0x3448] sm:$0xff]
  %v1696 = vld [vmem:[%s0 + $0x3450] sm:$0xff]
  %v1697 = vld [vmem:[%s0 + $0x3458] sm:$0xff]
  %v1698 = vld [vmem:[%s0 + $0x3460] sm:$0xff]
  %v1699 = vld [vmem:[%s0 + $0x3468] sm:$0xff]
  %v1700 = vld [vmem:[%s0 + $0x3470] sm:$0xff]
  %v1701 = vld [vmem:[%s0 + $0x3478] sm:$0xff]
  %v1702 = vld [vmem:[%s0 + $0x3480] sm:$0xff]
  %v1703 = vld [vmem:[%s0 + $0x3488] sm:$0xff]
  %v1704 = vld [vmem:[%s0 + $0x3490] sm:$0xff]
  %v1705 = vld [vmem:[%s0 + $0x3498] sm:$0xff]
  %v1706 = vld [vmem:[%s0 + $0x34a0] sm:$0xff]
  %v1707 = vld [vmem:[%s0 + $0x34a8] sm:$0xff]
  %v1708 = vld [vmem:[%s0 + $0x34b0] sm:$0xff]
  %v1709 = vld [vmem:[%s0 + $0x34b8] sm:$0xff]
  %v1710 = vld [vmem:[%s0 + $0x34c0] sm:$0xff]
  %v1711 = vld [vmem:[%s0 + $0x34c8] sm:$0xff]
  %v1712 = vld [vmem:[%s0 + $0x34d0] sm:$0xff]
  %v1713 = vld [vmem:[%s0 + $0x34d8] sm:$0xff]
  %v1714 = vld [vmem:[%s0 + $0x34e0] sm:$0xff]
  %v1715 = vld [vmem:[%s0 + $0x34e8] sm:$0xff]
  %v1716 = vld [vmem:[%s0 + $0x34f0] sm:$0xff]
  %v1717 = vld [vmem:[%s0 + $0x34f8] sm:$0xff]
  %v1718 = vld [vmem:[%s0 + $0x3500] sm:$0xff]
  %v1719 = vld [vmem:[%s0 + $0x3508] sm:$0xff]
  %v1720 = vld [vmem:[%s0 + $0x3510] sm:$0xff]
  %v1721 = vld [vmem:[%s0 + $0x3518] sm:$0xff]
  %v1722 = vld [vmem:[%s0 + $0x3520] sm:$0xff]
  %v1723 = vld [vmem:[%s0 + $0x3528] sm:$0xff]
  %v1724 = vld [vmem:[%s0 + $0x3530] sm:$0xff]
  %v1725 = vld [vmem:[%s0 + $0x3538] sm:$0xff]
  %v1726 = vld [vmem:[%s0 + $0x3540] sm:$0xff]
  %v1727 = vld [vmem:[%s0 + $0x3548] sm:$0xff]
  %v1728 = vld [vmem:[%s0 + $0x3550] sm:$0xff]
  %v1729 = vld [vmem:[%s0 + $0x3558] sm:$0xff]
  %v1730 = vld [vmem:[%s0 + $0x3560] sm:$0xff]
  %v1731 = vld [vmem:[%s0 + $0x3568] sm:$0xff]
  %v1732 = vld [vmem:[%s0 + $0x3570] sm:$0xff]
  %v1733 = vld [vmem:[%s0 + $0x3578] sm:$0xff]
  %v1734 = vld [vmem:[%s0 + $0x3580] sm:$0xff]
  %v1735 = vld [vmem:[%s0 + $0x3588] sm:$0xff]
  %v1736 = vld [vmem:[%s0 + $0x3590] sm:$0xff]
  %v1737 = vld [vmem:[%s0 + $0x3598] sm:$0xff]
  %v1738 = vld [vmem:[%s0 + $0x35a0] sm:$0xff]
  %v1739 = vld [vmem:[%s0 + $0x35a8] sm:$0xff]
  %v1740 = vld [vmem:[%s0 + $0x35b0] sm:$0xff]
  %v1741 = vld [vmem:[%s0 + $0x35b8] sm:$0xff]
  %v1742 = vld [vmem:[%s0 + $0x35c0] sm:$0xff]
  %v1743 = vld [vmem:[%s0 + $0x35c8] sm:$0xff]
  %v1744 = vld [vmem:[%s0 + $0x35d0] sm:$0xff]
  %v1745 = vld [vmem:[%s0 + $0x35d8] sm:$0xff]
  %v1746 = vld [vmem:[%s0 + $0x35e0] sm:$0xff]
  %v1747 = vld [vmem:[%s0 + $0x35e8] sm:$0xff]
  %v1748 = vld [vmem:[%s0 + $0x35f0] sm:$0xff]
  %v1749 = vld [vmem:[%s0 + $0x35f8] sm:$0xff]
  %v1750 = vld [vmem:[%s0 + $0x3600] sm:$0xff]
  %v1751 = vld [vmem:[%s0 + $0x3608] sm:$0xff]
  %v1752 = vld [vmem:[%s0 + $0x3610] sm:$0xff]
  %v1753 = vld [vmem:[%s0 + $0x3618] sm:$0xff]
  %v1754 = vld [vmem:[%s0 + $0x3620] sm:$0xff]
  %v1755 = vld [vmem:[%s0 + $0x3628] sm:$0xff]
  %v1756 = vld [vmem:[%s0 + $0x3630] sm:$0xff]
  %v1757 = vld [vmem:[%s0 + $0x3638] sm:$0xff]
  %v1758 = vld [vmem:[%s0 + $0x3640] sm:$0xff]
  %v1759 = vld [vmem:[%s0 + $0x3648] sm:$0xff]
  %v1760 = vld [vmem:[%s0 + $0x3650] sm:$0xff]
  %v1761 = vld [vmem:[%s0 + $0x3658] sm:$0xff]
  %v1762 = vld [vmem:[%s0 + $0x3660] sm:$0xff]
  %v1763 = vld [vmem:[%s0 + $0x3668] sm:$0xff]
  %v1764 = vld [vmem:[%s0 + $0x3670] sm:$0xff]
  %v1765 = vld [vmem:[%s0 + $0x3678] sm:$0xff]
  %v1766 = vld [vmem:[%s0 + $0x3680] sm:$0xff]
  %v1767 = vld [vmem:[%s0 + $0x3688] sm:$0xff]
  %v1768 = vld [vmem:[%s0 + $0x3690] sm:$0xff]
  %v1769 = vld [vmem:[%s0 + $0x3698] sm:$0xff]
  %v1770 = vld [vmem:[%s0 + $0x36a0] sm:$0xff]
  %v1771 = vld [vmem:[%s0 + $0x36a8] sm:$0xff]
  %v1772 = vld [vmem:[%s0 + $0x36b0] sm:$0xff]
  %v1773 = vld [vmem:[%s0 + $0x36b8] sm:$0xff]
  %v1774 = vld [vmem:[%s0 + $0x36c0] sm:$0xff]
  %v1775 = vld [vmem:[%s0 + $0x36c8] sm:$0xff]
  %v1776 = vld [vmem:[%s0 + $0x36d0] sm:$0xff]
  %v1777 = vld [vmem:[%s0 + $0x36d8] sm:$0xff]
  %v1778 = vld [vmem:[%s0 + $0x36e0] sm:$0xff]
  %v1779 = vld [vmem:[%s0 + $0x36e8] sm:$0xff]
  %v1780 = vld [vmem:[%s0 + $0x36f0] sm:$0xff]
  %v1781 = vld [vmem:[%s0 + $0x36f8] sm:$0xff]
  %v1782 = vld [vmem:[%s0 + $0x3700] sm:$0xff]
  %v1783 = vld [vmem:[%s0 + $0x3708] sm:$0xff]
  %v1784 = vld [vmem:[%s0 + $0x3710] sm:$0xff]
  %v1785 = vld [vmem:[%s0 + $0x3718] sm:$0xff]
  %v1786 = vld [vmem:[%s0 + $0x3720] sm:$0xff]
  %v1787 = vld [vmem:[%s0 + $0x3728] sm:$0xff]
  %v1788 = vld [vmem:[%s0 + $0x3730] sm:$0xff]
  %v1789 = vld [vmem:[%s0 + $0x3738] sm:$0xff]
  %v1790 = vld [vmem:[%s0 + $0x3740] sm:$0xff]
  %v1791 = vld [vmem:[%s0 + $0x3748] sm:$0xff]
  %v1792 = vld [vmem:[%s0 + $0x3750] sm:$0xff]
  %v1793 = vld [vmem:[%s0 + $0x3758] sm:$0xff]
  %v1794 = vld [vmem:[%s0 + $0x3760] sm:$0xff]
  %v1795 = vld [vmem:[%s0 + $0x3768] sm:$0xff]
  %v1796 = vld [vmem:[%s0 + $0x3770] sm:$0xff]
  %v1797 = vld [vmem:[%s0 + $0x3778] sm:$0xff]
  %v1798 = vld [vmem:[%s0 + $0x3780] sm:$0xff]
  %v1799 = vld [vmem:[%s0 + $0x3788] sm:$0xff]
  %v1800 = vld [vmem:[%s0 + $0x3790] sm:$0xff]
  %v1801 = vld [vmem:[%s0 + $0x3798] sm:$0xff]
  %v1802 = vld [vmem:[%s0 + $0x37a0] sm:$0xff]
  %v1803 = vld [vmem:[%s0 + $0x37a8] sm:$0xff]
  %v1804 = vld [vmem:[%s0 + $0x37b0] sm:$0xff]
  %v1805 = vld [vmem:[%s0 + $0x37b8] sm:$0xff]
  %v1806 = vld [vmem:[%s0 + $0x37c0] sm:$0xff]
  %v1807 = vld [vmem:[%s0 + $0x37c8] sm:$0xff]
  %v1808 = vld [vmem:[%s0 + $0x37d0] sm:$0xff]
  %v1809 = vld [vmem:[%s0 + $0x37d8] sm:$0xff]
  %v1810 = vld [vmem:[%s0 + $0x37e0] sm:$0xff]
  %v1811 = vld [vmem:[%s0 + $0x37e8] sm:$0xff]
  %v1812 = vld [vmem:[%s0 + $0x37f0] sm:$0xff]
  %v1813 = vld [vmem:[%s0 + $0x37f8] sm:$0xff]
  %v1814 = vld [vmem:[%s0 + $0x3800] sm:$0xff]
  %v1815 = vld [vmem:[%s0 + $0x3808] sm:$0xff]
  %v1816 = vld [vmem:[%s0 + $0x3810] sm:$0xff]
  %v1817 = vld [vmem:[%s0 + $0x3818] sm:$0xff]
  %v1818 = vld [vmem:[%s0 + $0x3820] sm:$0xff]
  %v1819 = vld [vmem:[%s0 + $0x3828] sm:$0xff]
  %v1820 = vld [vmem:[%s0 + $0x3830] sm:$0xff]
  %v1821 = vld [vmem:[%s0 + $0x3838] sm:$0xff]
  %v1822 = vld [vmem:[%s0 + $0x3840] sm:$0xff]
  %v1823 = vld [vmem:[%s0 + $0x3848] sm:$0xff]
  %v1824 = vld [vmem:[%s0 + $0x3850] sm:$0xff]
  %v1825 = vld [vmem:[%s0 + $0x3858] sm:$0xff]
  %v1826 = vld [vmem:[%s0 + $0x3860] sm:$0xff]
  %v1827 = vld [vmem:[%s0 + $0x3868] sm:$0xff]
  %v1828 = vld [vmem:[%s0 + $0x3870] sm:$0xff]
  %v1829 = vld [vmem:[%s0 + $0x3878] sm:$0xff]
  %v1830 = vld [vmem:[%s0 + $0x3880] sm:$0xff]
  %v1831 = vld [vmem:[%s0 + $0x3888] sm:$0xff]
  %v1832 = vld [vmem:[%s0 + $0x3890] sm:$0xff]
  %v1833 = vld [vmem:[%s0 + $0x3898] sm:$0xff]
  %v1834 = vld [vmem:[%s0 + $0x38a0] sm:$0xff]
  %v1835 = vld [vmem:[%s0 + $0x38a8] sm:$0xff]
  %v1836 = vld [vmem:[%s0 + $0x38b0] sm:$0xff]
  %v1837 = vld [vmem:[%s0 + $0x38b8] sm:$0xff]
  %v1838 = vld [vmem:[%s0 + $0x38c0] sm:$0xff]
  %v1839 = vld [vmem:[%s0 + $0x38c8] sm:$0xff]
  %v1840 = vld [vmem:[%s0 + $0x38d0] sm:$0xff]
  %v1841 = vld [vmem:[%s0 + $0x38d8] sm:$0xff]
  %v1842 = vld [vmem:[%s0 + $0x38e0] sm:$0xff]
  %v1843 = vld [vmem:[%s0 + $0x38e8] sm:$0xff]
  %v1844 = vld [vmem:[%s0 + $0x38f0] sm:$0xff]
  %v1845 = vld [vmem:[%s0 + $0x38f8] sm:$0xff]
  %v1846 = vld [vmem:[%s0 + $0x3900] sm:$0xff]
  %v1847 = vld [vmem:[%s0 + $0x3908] sm:$0xff]
  %v1848 = vld [vmem:[%s0 + $0x3910] sm:$0xff]
  %v1849 = vld [vmem:[%s0 + $0x3918] sm:$0xff]
  %v1850 = vld [vmem:[%s0 + $0x3920] sm:$0xff]
  %v1851 = vld [vmem:[%s0 + $0x3928] sm:$0xff]
  %v1852 = vld [vmem:[%s0 + $0x3930] sm:$0xff]
  %v1853 = vld [vmem:[%s0 + $0x3938] sm:$0xff]
  %v1854 = vld [vmem:[%s0 + $0x3940] sm:$0xff]
  %v1855 = vld [vmem:[%s0 + $0x3948] sm:$0xff]
  %v1856 = vld [vmem:[%s0 + $0x3950] sm:$0xff]
  %v1857 = vld [vmem:[%s0 + $0x3958] sm:$0xff]
  %v1858 = vld [vmem:[%s0 + $0x3960] sm:$0xff]
  %v1859 = vld [vmem:[%s0 + $0x3968] sm:$0xff]
  %v1860 = vld [vmem:[%s0 + $0x3970] sm:$0xff]
  %v1861 = vld [vmem:[%s0 + $0x3978] sm:$0xff]
  %v1862 = vld [vmem:[%s0 + $0x3980] sm:$0xff]
  %v1863 = vld [vmem:[%s0 + $0x3988] sm:$0xff]
  %v1864 = vld [vmem:[%s0 + $0x3990] sm:$0xff]
  %v1865 = vld [vmem:[%s0 + $0x3998] sm:$0xff]
  %v1866 = vld [vmem:[%s0 + $0x39a0] sm:$0xff]
  %v1867 = vld [vmem:[%s0 + $0x39a8] sm:$0xff]
  %v1868 = vld [vmem:[%s0 + $0x39b0] sm:$0xff]
  %v1869 = vld [vmem:[%s0 + $0x39b8] sm:$0xff]
  %v1870 = vld [vmem:[%s0 + $0x39c0] sm:$0xff]
  %v1871 = vld [vmem:[%s0 + $0x39c8] sm:$0xff]
  %v1872 = vld [vmem:[%s0 + $0x39d0] sm:$0xff]
  %v1873 = vld [vmem:[%s0 + $0x39d8] sm:$0xff]
  %v1874 = vld [vmem:[%s0 + $0x39e0] sm:$0xff]
  %v1875 = vld [vmem:[%s0 + $0x39e8] sm:$0xff]
  %v1876 = vld [vmem:[%s0 + $0x39f0] sm:$0xff]
  %v1877 = vld [vmem:[%s0 + $0x39f8] sm:$0xff]
  %v1878 = vld [vmem:[%s0 + $0x3a00] sm:$0xff]
  %v1879 = vld [vmem:[%s0 + $0x3a08] sm:$0xff]
  %v1880 = vld [vmem:[%s0 + $0x3a10] sm:$0xff]
  %v1881 = vld [vmem:[%s0 + $0x3a18] sm:$0xff]
  %v1882 = vld [vmem:[%s0 + $0x3a20] sm:$0xff]
  %v1883 = vld [vmem:[%s0 + $0x3a28] sm:$0xff]
  %v1884 = vld [vmem:[%s0 + $0x3a30] sm:$0xff]
  %v1885 = vld [vmem:[%s0 + $0x3a38] sm:$0xff]
  %v1886 = vld [vmem:[%s0 + $0x3a40] sm:$0xff]
  %v1887 = vld [vmem:[%s0 + $0x3a48] sm:$0xff]
  %v1888 = vld [vmem:[%s0 + $0x3a50] sm:$0xff]
  %v1889 = vld [vmem:[%s0 + $0x3a58] sm:$0xff]
  %v1890 = vld [vmem:[%s0 + $0x3a60] sm:$0xff]
  %v1891 = vld [vmem:[%s0 + $0x3a68] sm:$0xff]
  %v1892 = vld [vmem:[%s0 + $0x3a70] sm:$0xff]
  %v1893 = vld [vmem:[%s0 + $0x3a78] sm:$0xff]
  %v1894 = vld [vmem:[%s0 + $0x3a80] sm:$0xff]
  %v1895 = vld [vmem:[%s0 + $0x3a88] sm:$0xff]
  %v1896 = vld [vmem:[%s0 + $0x3a90] sm:$0xff]
  %v1897 = vld [vmem:[%s0 + $0x3a98] sm:$0xff]
  %v1898 = vld [vmem:[%s0 + $0x3aa0] sm:$0xff]
  %v1899 = vld [vmem:[%s0 + $0x3aa8] sm:$0xff]
  %v1900 = vld [vmem:[%s0 + $0x3ab0] sm:$0xff]
  %v1901 = vld [vmem:[%s0 + $0x3ab8] sm:$0xff]
  %v1902 = vld [vmem:[%s0 + $0x3ac0] sm:$0xff]
  %v1903 = vld [vmem:[%s0 + $0x3ac8] sm:$0xff]
  %v1904 = vld [vmem:[%s0 + $0x3ad0] sm:$0xff]
  %v1905 = vld [vmem:[%s0 + $0x3ad8] sm:$0xff]
  %v1906 = vld [vmem:[%s0 + $0x3ae0] sm:$0xff]
  %v1907 = vld [vmem:[%s0 + $0x3ae8] sm:$0xff]
  %v1908 = vld [vmem:[%s0 + $0x3af0] sm:$0xff]
  %v1909 = vld [vmem:[%s0 + $0x3af8] sm:$0xff]
  %v1910 = vld [vmem:[%s0 + $0x3b00] sm:$0xff]
  %v1911 = vld [vmem:[%s0 + $0x3b08] sm:$0xff]
  %v1912 = vld [vmem:[%s0 + $0x3b10] sm:$0xff]
  %v1913 = vld [vmem:[%s0 + $0x3b18] sm:$0xff]
  %v1914 = vld [vmem:[%s0 + $0x3b20] sm:$0xff]
  %v1915 = vld [vmem:[%s0 + $0x3b28] sm:$0xff]
  %v1916 = vld [vmem:[%s0 + $0x3b30] sm:$0xff]
  %v1917 = vld [vmem:[%s0 + $0x3b38] sm:$0xff]
  %v1918 = vld [vmem:[%s0 + $0x3b40] sm:$0xff]
  %v1919 = vld [vmem:[%s0 + $0x3b48] sm:$0xff]
  %v1920 = vld [vmem:[%s0 + $0x3b50] sm:$0xff]
  %v1921 = vld [vmem:[%s0 + $0x3b58] sm:$0xff]
  %v1922 = vld [vmem:[%s0 + $0x3b60] sm:$0xff]
  %v1923 = vld [vmem:[%s0 + $0x3b68] sm:$0xff]
  %v1924 = vld [vmem:[%s0 + $0x3b70] sm:$0xff]
  %v1925 = vld [vmem:[%s0 + $0x3b78] sm:$0xff]
  %v1926 = vld [vmem:[%s0 + $0x3b80] sm:$0xff]
  %v1927 = vld [vmem:[%s0 + $0x3b88] sm:$0xff]
  %v1928 = vld [vmem:[%s0 + $0x3b90] sm:$0xff]
  %v1929 = vld [vmem:[%s0 + $0x3b98] sm:$0xff]
  %v1930 = vld [vmem:[%s0 + $0x3ba0] sm:$0xff]
  %v1931 = vld [vmem:[%s0 + $0x3ba8] sm:$0xff]
  %v1932 = vld [vmem:[%s0 + $0x3bb0] sm:$0xff]
  %v1933 = vld [vmem:[%s0 + $0x3bb8] sm:$0xff]
  %v1934 = vld [vmem:[%s0 + $0x3bc0] sm:$0xff]
  %v1935 = vld [vmem:[%s0 + $0x3bc8] sm:$0xff]
  %v1936 = vld [vmem:[%s0 + $0x3bd0] sm:$0xff]
  %v1937 = vld [vmem:[%s0 + $0x3bd8] sm:$0xff]
  %v1938 = vld [vmem:[%s0 + $0x3be0] sm:$0xff]
  %v1939 = vld [vmem:[%s0 + $0x3be8] sm:$0xff]
  %v1940 = vld [vmem:[%s0 + $0x3bf0] sm:$0xff]
  %v1941 = vld [vmem:[%s0 + $0x3bf8] sm:$0xff]
  %v1942 = vld [vmem:[%s0 + $0x3c00] sm:$0xff]
  %v1943 = vld [vmem:[%s0 + $0x3c08] sm:$0xff]
  %v1944 = vld [vmem:[%s0 + $0x3c10] sm:$0xff]
  %v1945 = vld [vmem:[%s0 + $0x3c18] sm:$0xff]
  %v1946 = vld [vmem:[%s0 + $0x3c20] sm:$0xff]
  %v1947 = vld [vmem:[%s0 + $0x3c28] sm:$0xff]
  %v1948 = vld [vmem:[%s0 + $0x3c30] sm:$0xff]
  %v1949 = vld [vmem:[%s0 + $0x3c38] sm:$0xff]
  %v1950 = vld [vmem:[%s0 + $0x3c40] sm:$0xff]
  %v1951 = vld [vmem:[%s0 + $0x3c48] sm:$0xff]
  %v1952 = vld [vmem:[%s0 + $0x3c50] sm:$0xff]
  %v1953 = vld [vmem:[%s0 + $0x3c58] sm:$0xff]
  %v1954 = vld [vmem:[%s0 + $0x3c60] sm:$0xff]
  %v1955 = vld [vmem:[%s0 + $0x3c68] sm:$0xff]
  %v1956 = vld [vmem:[%s0 + $0x3c70] sm:$0xff]
  %v1957 = vld [vmem:[%s0 + $0x3c78] sm:$0xff]
  %v1958 = vld [vmem:[%s0 + $0x3c80] sm:$0xff]
  %v1959 = vld [vmem:[%s0 + $0x3c88] sm:$0xff]
  %v1960 = vld [vmem:[%s0 + $0x3c90] sm:$0xff]
  %v1961 = vld [vmem:[%s0 + $0x3c98] sm:$0xff]
  %v1962 = vld [vmem:[%s0 + $0x3ca0] sm:$0xff]
  %v1963 = vld [vmem:[%s0 + $0x3ca8] sm:$0xff]
  %v1964 = vld [vmem:[%s0 + $0x3cb0] sm:$0xff]
  %v1965 = vld [vmem:[%s0 + $0x3cb8] sm:$0xff]
  %v1966 = vld [vmem:[%s0 + $0x3cc0] sm:$0xff]
  %v1967 = vld [vmem:[%s0 + $0x3cc8] sm:$0xff]
  %v1968 = vld [vmem:[%s0 + $0x3cd0] sm:$0xff]
  %v1969 = vld [vmem:[%s0 + $0x3cd8] sm:$0xff]
  %v1970 = vld [vmem:[%s0 + $0x3ce0] sm:$0xff]
  %v1971 = vld [vmem:[%s0 + $0x3ce8] sm:$0xff]
  %v1972 = vld [vmem:[%s0 + $0x3cf0] sm:$0xff]
  %v1973 = vld [vmem:[%s0 + $0x3cf8] sm:$0xff]
  %v1974 = vld [vmem:[%s0 + $0x3d00] sm:$0xff]
  %v1975 = vld [vmem:[%s0 + $0x3d08] sm:$0xff]
  %v1976 = vld [vmem:[%s0 + $0x3d10] sm:$0xff]
  %v1977 = vld [vmem:[%s0 + $0x3d18] sm:$0xff]
  %v1978 = vld [vmem:[%s0 + $0x3d20] sm:$0xff]
  %v1979 = vld [vmem:[%s0 + $0x3d28] sm:$0xff]
  %v1980 = vld [vmem:[%s0 + $0x3d30] sm:$0xff]
  %v1981 = vld [vmem:[%s0 + $0x3d38] sm:$0xff]
  %v1982 = vld [vmem:[%s0 + $0x3d40] sm:$0xff]
  %v1983 = vld [vmem:[%s0 + $0x3d48] sm:$0xff]
  %v1984 = vld [vmem:[%s0 + $0x3d50] sm:$0xff]
  %v1985 = vld [vmem:[%s0 + $0x3d58] sm:$0xff]
  %v1986 = vld [vmem:[%s0 + $0x3d60] sm:$0xff]
  %v1987 = vld [vmem:[%s0 + $0x3d68] sm:$0xff]
  %v1988 = vld [vmem:[%s0 + $0x3d70] sm:$0xff]
  %v1989 = vld [vmem:[%s0 + $0x3d78] sm:$0xff]
  %v1990 = vld [vmem:[%s0 + $0x3d80] sm:$0xff]
  %v1991 = vld [vmem:[%s0 + $0x3d88] sm:$0xff]
  %v1992 = vld [vmem:[%s0 + $0x3d90] sm:$0xff]
  %v1993 = vld [vmem:[%s0 + $0x3d98] sm:$0xff]
  %v1994 = vld [vmem:[%s0 + $0x3da0] sm:$0xff]
  %v1995 = vld [vmem:[%s0 + $0x3da8] sm:$0xff]
  %v1996 = vld [vmem:[%s0 + $0x3db0] sm:$0xff]
  %v1997 = vld [vmem:[%s0 + $0x3db8] sm:$0xff]
  %v1998 = vld [vmem:[%s0 + $0x3dc0] sm:$0xff]
  %v1999 = vld [vmem:[%s0 + $0x3dc8] sm:$0xff]
  %v2000 = vld [vmem:[%s0 + $0x3dd0] sm:$0xff]
  %v2001 = vld [vmem:[%s0 + $0x3dd8] sm:$0xff]
  %v2002 = vld [vmem:[%s0 + $0x3de0] sm:$0xff]
  %v2003 = vld [vmem:[%s0 + $0x3de8] sm:$0xff]
  %v2004 = vld [vmem:[%s0 + $0x3df0] sm:$0xff]
  %v2005 = vld [vmem:[%s0 + $0x3df8] sm:$0xff]
  %v2006 = vld [vmem:[%s0 + $0x3e00] sm:$0xff]
  %v2007 = vld [vmem:[%s0 + $0x3e08] sm:$0xff]
  %v2008 = vld [vmem:[%s0 + $0x3e10] sm:$0xff]
  %v2009 = vld [vmem:[%s0 + $0x3e18] sm:$0xff]
  %v2010 = vld [vmem:[%s0 + $0x3e20] sm:$0xff]
  %v2011 = vld [vmem:[%s0 + $0x3e28] sm:$0xff]
  %v2012 = vld [vmem:[%s0 + $0x3e30] sm:$0xff]
  %v2013 = vld [vmem:[%s0 + $0x3e38] sm:$0xff]
  %v2014 = vld [vmem:[%s0 + $0x3e40] sm:$0xff]
  %v2015 = vld [vmem:[%s0 + $0x3e48] sm:$0xff]
  %v2016 = vld [vmem:[%s0 + $0x3e50] sm:$0xff]
  %v2017 = vld [vmem:[%s0 + $0x3e58] sm:$0xff]
  %v2018 = vld [vmem:[%s0 + $0x3e60] sm:$0xff]
  %v2019 = vld [vmem:[%s0 + $0x3e68] sm:$0xff]
  %v2020 = vld [vmem:[%s0 + $0x3e70] sm:$0xff]
  %v2021 = vld [vmem:[%s0 + $0x3e78] sm:$0xff]
  %v2022 = vld [vmem:[%s0 + $0x3e80] sm:$0xff]
  %v2023 = vld [vmem:[%s0 + $0x3e88] sm:$0xff]
  %v2024 = vld [vmem:[%s0 + $0x3e90] sm:$0xff]
  %v2025 = vld [vmem:[%s0 + $0x3e98] sm:$0xff]
  %v2026 = vld [vmem:[%s0 + $0x3ea0] sm:$0xff]
  %v2027 = vld [vmem:[%s0 + $0x3ea8] sm:$0xff]
  %v2028 = vld [vmem:[%s0 + $0x3eb0] sm:$0xff]
  %v2029 = vld [vmem:[%s0 + $0x3eb8] sm:$0xff]
  %v2030 = vld [vmem:[%s0 + $0x3ec0] sm:$0xff]
  %v2031 = vld [vmem:[%s0 + $0x3ec8] sm:$0xff]
  %v2032 = vld [vmem:[%s0 + $0x3ed0] sm:$0xff]
  %v2033 = vld [vmem:[%s0 + $0x3ed8] sm:$0xff]
  %v2034 = vld [vmem:[%s0 + $0x3ee0] sm:$0xff]
  %v2035 = vld [vmem:[%s0 + $0x3ee8] sm:$0xff]
  %v2036 = vld [vmem:[%s0 + $0x3ef0] sm:$0xff]
  %v2037 = vld [vmem:[%s0 + $0x3ef8] sm:$0xff]
  %v2038 = vld [vmem:[%s0 + $0x3f00] sm:$0xff]
  %v2039 = vld [vmem:[%s0 + $0x3f08] sm:$0xff]
  %v2040 = vld [vmem:[%s0 + $0x3f10] sm:$0xff]
  %v2041 = vld [vmem:[%s0 + $0x3f18] sm:$0xff]
  %v2042 = vld [vmem:[%s0 + $0x3f20] sm:$0xff]
  %v2043 = vld [vmem:[%s0 + $0x3f28] sm:$0xff]
  %v2044 = vld [vmem:[%s0 + $0x3f30] sm:$0xff]
  %v2045 = vld [vmem:[%s0 + $0x3f38] sm:$0xff]
  %v2046 = vld [vmem:[%s0 + $0x3f40] sm:$0xff]
  %v2047 = vld [vmem:[%s0 + $0x3f48] sm:$0xff]
  %v2048 = vld [vmem:[%s0 + $0x3f50] sm:$0xff]
  %v2049 = vld [vmem:[%s0 + $0x3f58] sm:$0xff]
  %v2050 = vld [vmem:[%s0 + $0x3f60] sm:$0xff]
  %v2051 = vld [vmem:[%s0 + $0x3f68] sm:$0xff]
  %v2052 = vld [vmem:[%s0 + $0x3f70] sm:$0xff]
  %v2053 = vld [vmem:[%s0 + $0x3f78] sm:$0xff]
  %v2054 = vld [vmem:[%s0 + $0x3f80] sm:$0xff]
  %v2055 = vld [vmem:[%s0 + $0x3f88] sm:$0xff]
  %v2056 = vld [vmem:[%s0 + $0x3f90] sm:$0xff]
  %v2057 = vld [vmem:[%s0 + $0x3f98] sm:$0xff]
  %v2058 = vld [vmem:[%s0 + $0x3fa0] sm:$0xff]
  %v2059 = vld [vmem:[%s0 + $0x3fa8] sm:$0xff]
  %v2060 = vld [vmem:[%s0 + $0x3fb0] sm:$0xff]
  %v2061 = vld [vmem:[%s0 + $0x3fb8] sm:$0xff]
  %v2062 = vld [vmem:[%s0 + $0x3fc0] sm:$0xff]
  %v2063 = vld [vmem:[%s0 + $0x3fc8] sm:$0xff]
  %v2064 = vld [vmem:[%s0 + $0x3fd0] sm:$0xff]
  %v2065 = vld [vmem:[%s0 + $0x3fd8] sm:$0xff]
  %v2066 = vld [vmem:[%s0 + $0x3fe0] sm:$0xff]
  %v2067 = vld [vmem:[%s0 + $0x3fe8] sm:$0xff]
  %v2068 = vld [vmem:[%s0 + $0x3ff0] sm:$0xff]
  %v2069 = vld [vmem:[%s0 + $0x3ff8] sm:$0xff]
  %2070 = vmatprep.subr.mxu0 %v23
  %2071 = vmatpush1.msra.mxu0 %v22
  %2072 = vmatprep.subr.mxu0 %v87
  %2073 = vmatpush1.msra.mxu0 %v86
  %2074 = vmatprep.subr.mxu0 %v151
  %2075 = vmatpush1.msra.mxu0 %v150
  %2076 = vmatprep.subr.mxu0 %v215
  %2077 = vmatpush1.msra.mxu0 %v214
  %2078 = vmatprep.subr.mxu0 %v279
  %2079 = vmatpush1.msra.mxu0 %v278
  %2080 = vmatprep.subr.mxu0 %v343
  %2081 = vmatpush1.msra.mxu0 %v342
  %2082 = vmatprep.subr.mxu0 %v407
  %2083 = vmatpush1.msra.mxu0 %v406
  %2084 = vmatprep.subr.mxu0 %v471
  %2085 = vmatpush1.msra.mxu0 %v470
  %2086 = vmatprep.subr.mxu0 %v535
  %2087 = vmatpush1.msra.mxu0 %v534
  %2088 = vmatprep.subr.mxu0 %v599
  %2089 = vmatpush1.msra.mxu0 %v598
  %2090 = vmatprep.subr.mxu0 %v663
  %2091 = vmatpush1.msra.mxu0 %v662
  %2092 = vmatprep.subr.mxu0 %v727
  %2093 = vmatpush1.msra.mxu0 %v726
  %2094 = vmatprep.subr.mxu0 %v791
  %2095 = vmatpush1.msra.mxu0 %v790
  %2096 = vmatprep.subr.mxu0 %v855
  %2097 = vmatpush1.msra.mxu0 %v854
  %2098 = vmatprep.subr.mxu0 %v919
  %2099 = vmatpush1.msra.mxu0 %v918
  %2100 = vmatprep.subr.mxu0 %v983
  %2101 = vmatpush1.msra.mxu0 %v982
  %2102 = vmatprep.subr.mxu0 %v1047
  %2103 = vmatpush1.msra.mxu0 %v1046
  %2104 = vmatprep.subr.mxu0 %v1111
  %2105 = vmatpush1.msra.mxu0 %v1110
  %2106 = vmatprep.subr.mxu0 %v1175
  %2107 = vmatpush1.msra.mxu0 %v1174
  %2108 = vmatprep.subr.mxu0 %v1239
  %2109 = vmatpush1.msra.mxu0 %v1238
  %2110 = vmatprep.subr.mxu0 %v1303
  %2111 = vmatpush1.msra.mxu0 %v1302
  %2112 = vmatprep.subr.mxu0 %v1367
  %2113 = vmatpush1.msra.mxu0 %v1366
  %2114 = vmatprep.subr.mxu0 %v1431
  %2115 = vmatpush1.msra.mxu0 %v1430
  %2116 = vmatprep.subr.mxu0 %v1495
  %2117 = vmatpush1.msra.mxu0 %v1494
  %2118 = vmatprep.subr.mxu0 %v1559
  %2119 = vmatpush1.msra.mxu0 %v1558
  %2120 = vmatprep.subr.mxu0 %v1623
  %2121 = vmatpush1.msra.mxu0 %v1622
  %2122 = vmatprep.subr.mxu0 %v1687
  %2123 = vmatpush1.msra.mxu0 %v1686
  %2124 = vmatprep.subr.mxu0 %v1751
  %2125 = vmatpush1.msra.mxu0 %v1750
  %2126 = vmatprep.subr.mxu0 %v1815
  %2127 = vmatpush1.msra.mxu0 %v1814
  %2128 = vmatprep.subr.mxu0 %v1879
  %2129 = vmatpush1.msra.mxu0 %v1878
  %2130 = vmatprep.subr.mxu0 %v1943
  %2131 = vmatpush1.msra.mxu0 %v1942
  %2132 = vmatprep.subr.mxu0 %v2007
  %2133 = vmatpush1.msra.mxu0 %v2006
  %2134 = vmatprep.mubr.f32.mxu0 %v21
  %2135 = vmatmul.mubr.f32.gmra.mrb[0].mxu0 %v20
  %v2136 = vpop.f32.mrb[0].mxu0
  %v2137 = vadd.f32 0.0, %v2136
  %v2138 = vpop.f32.mrb[0].mxu0
  %v2139 = vadd.f32 0.0, %v2138
  %2140 = vdwg.mxu0
  %2141 = vmatprep.subr.mxu0 %v25
  %2142 = vmatpush1.msra.mxu0 %v24
  %2143 = vmatprep.subr.mxu0 %v89
  %2144 = vmatpush1.msra.mxu0 %v88
  %2145 = vmatprep.subr.mxu0 %v153
  %2146 = vmatpush1.msra.mxu0 %v152
  %2147 = vmatprep.subr.mxu0 %v217
  %2148 = vmatpush1.msra.mxu0 %v216
  %2149 = vmatprep.subr.mxu0 %v281
  %2150 = vmatpush1.msra.mxu0 %v280
  %2151 = vmatprep.subr.mxu0 %v345
  %2152 = vmatpush1.msra.mxu0 %v344
  %2153 = vmatprep.subr.mxu0 %v409
  %2154 = vmatpush1.msra.mxu0 %v408
  %2155 = vmatprep.subr.mxu0 %v473
  %2156 = vmatpush1.msra.mxu0 %v472
  %2157 = vmatprep.subr.mxu0 %v537
  %2158 = vmatpush1.msra.mxu0 %v536
  %2159 = vmatprep.subr.mxu0 %v601
  %2160 = vmatpush1.msra.mxu0 %v600
  %2161 = vmatprep.subr.mxu0 %v665
  %2162 = vmatpush1.msra.mxu0 %v664
  %2163 = vmatprep.subr.mxu0 %v729
  %2164 = vmatpush1.msra.mxu0 %v728
  %2165 = vmatprep.subr.mxu0 %v793
  %2166 = vmatpush1.msra.mxu0 %v792
  %2167 = vmatprep.subr.mxu0 %v857
  %2168 = vmatpush1.msra.mxu0 %v856
  %2169 = vmatprep.subr.mxu0 %v921
  %2170 = vmatpush1.msra.mxu0 %v920
  %2171 = vmatprep.subr.mxu0 %v985
  %2172 = vmatpush1.msra.mxu0 %v984
  %2173 = vmatprep.subr.mxu0 %v1049
  %2174 = vmatpush1.msra.mxu0 %v1048
  %2175 = vmatprep.subr.mxu0 %v1113
  %2176 = vmatpush1.msra.mxu0 %v1112
  %2177 = vmatprep.subr.mxu0 %v1177
  %2178 = vmatpush1.msra.mxu0 %v1176
  %2179 = vmatprep.subr.mxu0 %v1241
  %2180 = vmatpush1.msra.mxu0 %v1240
  %2181 = vmatprep.subr.mxu0 %v1305
  %2182 = vmatpush1.msra.mxu0 %v1304
  %2183 = vmatprep.subr.mxu0 %v1369
  %2184 = vmatpush1.msra.mxu0 %v1368
  %2185 = vmatprep.subr.mxu0 %v1433
  %2186 = vmatpush1.msra.mxu0 %v1432
  %2187 = vmatprep.subr.mxu0 %v1497
  %2188 = vmatpush1.msra.mxu0 %v1496
  %2189 = vmatprep.subr.mxu0 %v1561
  %2190 = vmatpush1.msra.mxu0 %v1560
  %2191 = vmatprep.subr.mxu0 %v1625
  %2192 = vmatpush1.msra.mxu0 %v1624
  %2193 = vmatprep.subr.mxu0 %v1689
  %2194 = vmatpush1.msra.mxu0 %v1688
  %2195 = vmatprep.subr.mxu0 %v1753
  %2196 = vmatpush1.msra.mxu0 %v1752
  %2197 = vmatprep.subr.mxu0 %v1817
  %2198 = vmatpush1.msra.mxu0 %v1816
  %2199 = vmatprep.subr.mxu0 %v1881
  %2200 = vmatpush1.msra.mxu0 %v1880
  %2201 = vmatprep.subr.mxu0 %v1945
  %2202 = vmatpush1.msra.mxu0 %v1944
  %2203 = vmatprep.subr.mxu0 %v2009
  %2204 = vmatpush1.msra.mxu0 %v2008
  %2205 = vmatprep.mubr.f32.mxu0 %v21
  %2206 = vmatmul.mubr.f32.gmra.mrb[0].mxu0 %v20
  %v2207 = vpop.f32.mrb[0].mxu0
  %v2208 = vadd.f32 0.0, %v2207
  %v2209 = vpop.f32.mrb[0].mxu0
  %v2210 = vadd.f32 0.0, %v2209
  %2211 = vdwg.mxu0
  %2212 = vmatprep.subr.mxu0 %v27
  %2213 = vmatpush1.msra.mxu0 %v26
  %2214 = vmatprep.subr.mxu0 %v91
  %2215 = vmatpush1.msra.mxu0 %v90
  %2216 = vmatprep.subr.mxu0 %v155
  %2217 = vmatpush1.msra.mxu0 %v154
  %2218 = vmatprep.subr.mxu0 %v219
  %2219 = vmatpush1.msra.mxu0 %v218
  %2220 = vmatprep.subr.mxu0 %v283
  %2221 = vmatpush1.msra.mxu0 %v282
  %2222 = vmatprep.subr.mxu0 %v347
  %2223 = vmatpush1.msra.mxu0 %v346
  %2224 = vmatprep.subr.mxu0 %v411
  %2225 = vmatpush1.msra.mxu0 %v410
  %2226 = vmatprep.subr.mxu0 %v475
  %2227 = vmatpush1.msra.mxu0 %v474
  %2228 = vmatprep.subr.mxu0 %v539
  %2229 = vmatpush1.msra.mxu0 %v538
  %2230 = vmatprep.subr.mxu0 %v603
  %2231 = vmatpush1.msra.mxu0 %v602
  %2232 = vmatprep.subr.mxu0 %v667
  %2233 = vmatpush1.msra.mxu0 %v666
  %2234 = vmatprep.subr.mxu0 %v731
  %2235 = vmatpush1.msra.mxu0 %v730
  %2236 = vmatprep.subr.mxu0 %v795
  %2237 = vmatpush1.msra.mxu0 %v794
  %2238 = vmatprep.subr.mxu0 %v859
  %2239 = vmatpush1.msra.mxu0 %v858
  %2240 = vmatprep.subr.mxu0 %v923
  %2241 = vmatpush1.msra.mxu0 %v922
  %2242 = vmatprep.subr.mxu0 %v987
  %2243 = vmatpush1.msra.mxu0 %v986
  %2244 = vmatprep.subr.mxu0 %v1051
  %2245 = vmatpush1.msra.mxu0 %v1050
  %2246 = vmatprep.subr.mxu0 %v1115
  %2247 = vmatpush1.msra.mxu0 %v1114
  %2248 = vmatprep.subr.mxu0 %v1179
  %2249 = vmatpush1.msra.mxu0 %v1178
  %2250 = vmatprep.subr.mxu0 %v1243
  %2251 = vmatpush1.msra.mxu0 %v1242
  %2252 = vmatprep.subr.mxu0 %v1307
  %2253 = vmatpush1.msra.mxu0 %v1306
  %2254 = vmatprep.subr.mxu0 %v1371
  %2255 = vmatpush1.msra.mxu0 %v1370
  %2256 = vmatprep.subr.mxu0 %v1435
  %2257 = vmatpush1.msra.mxu0 %v1434
  %2258 = vmatprep.subr.mxu0 %v1499
  %2259 = vmatpush1.msra.mxu0 %v1498
  %2260 = vmatprep.subr.mxu0 %v1563
  %2261 = vmatpush1.msra.mxu0 %v1562
  %2262 = vmatprep.subr.mxu0 %v1627
  %2263 = vmatpush1.msra.mxu0 %v1626
  %2264 = vmatprep.subr.mxu0 %v1691
  %2265 = vmatpush1.msra.mxu0 %v1690
  %2266 = vmatprep.subr.mxu0 %v1755
  %2267 = vmatpush1.msra.mxu0 %v1754
  %2268 = vmatprep.subr.mxu0 %v1819
  %2269 = vmatpush1.msra.mxu0 %v1818
  %2270 = vmatprep.subr.mxu0 %v1883
  %2271 = vmatpush1.msra.mxu0 %v1882
  %2272 = vmatprep.subr.mxu0 %v1947
  %2273 = vmatpush1.msra.mxu0 %v1946
  %2274 = vmatprep.subr.mxu0 %v2011
  %2275 = vmatpush1.msra.mxu0 %v2010
  %2276 = vmatprep.mubr.f32.mxu0 %v21
  %2277 = vmatmul.mubr.f32.gmra.mrb[0].mxu0 %v20
  %v2278 = vpop.f32.mrb[0].mxu0
  %v2279 = vadd.f32 0.0, %v2278
  %v2280 = vpop.f32.mrb[0].mxu0
  %v2281 = vadd.f32 0.0, %v2280
  %2282 = vdwg.mxu0
  %2283 = vmatprep.subr.mxu0 %v29
  %2284 = vmatpush1.msra.mxu0 %v28
  %2285 = vmatprep.subr.mxu0 %v93
  %2286 = vmatpush1.msra.mxu0 %v92
  %2287 = vmatprep.subr.mxu0 %v157
  %2288 = vmatpush1.msra.mxu0 %v156
  %2289 = vmatprep.subr.mxu0 %v221
  %2290 = vmatpush1.msra.mxu0 %v220
  %2291 = vmatprep.subr.mxu0 %v285
  %2292 = vmatpush1.msra.mxu0 %v284
  %2293 = vmatprep.subr.mxu0 %v349
  %2294 = vmatpush1.msra.mxu0 %v348
  %2295 = vmatprep.subr.mxu0 %v413
  %2296 = vmatpush1.msra.mxu0 %v412
  %2297 = vmatprep.subr.mxu0 %v477
  %2298 = vmatpush1.msra.mxu0 %v476
  %2299 = vmatprep.subr.mxu0 %v541
  %2300 = vmatpush1.msra.mxu0 %v540
  %2301 = vmatprep.subr.mxu0 %v605
  %2302 = vmatpush1.msra.mxu0 %v604
  %2303 = vmatprep.subr.mxu0 %v669
  %2304 = vmatpush1.msra.mxu0 %v668
  %2305 = vmatprep.subr.mxu0 %v733
  %2306 = vmatpush1.msra.mxu0 %v732
  %2307 = vmatprep.subr.mxu0 %v797
  %2308 = vmatpush1.msra.mxu0 %v796
  %2309 = vmatprep.subr.mxu0 %v861
  %2310 = vmatpush1.msra.mxu0 %v860
  %2311 = vmatprep.subr.mxu0 %v925
  %2312 = vmatpush1.msra.mxu0 %v924
  %2313 = vmatprep.subr.mxu0 %v989
  %2314 = vmatpush1.msra.mxu0 %v988
  %2315 = vmatprep.subr.mxu0 %v1053
  %2316 = vmatpush1.msra.mxu0 %v1052
  %2317 = vmatprep.subr.mxu0 %v1117
  %2318 = vmatpush1.msra.mxu0 %v1116
  %2319 = vmatprep.subr.mxu0 %v1181
  %2320 = vmatpush1.msra.mxu0 %v1180
  %2321 = vmatprep.subr.mxu0 %v1245
  %2322 = vmatpush1.msra.mxu0 %v1244
  %2323 = vmatprep.subr.mxu0 %v1309
  %2324 = vmatpush1.msra.mxu0 %v1308
  %2325 = vmatprep.subr.mxu0 %v1373
  %2326 = vmatpush1.msra.mxu0 %v1372
  %2327 = vmatprep.subr.mxu0 %v1437
  %2328 = vmatpush1.msra.mxu0 %v1436
  %2329 = vmatprep.subr.mxu0 %v1501
  %2330 = vmatpush1.msra.mxu0 %v1500
  %2331 = vmatprep.subr.mxu0 %v1565
  %2332 = vmatpush1.msra.mxu0 %v1564
  %2333 = vmatprep.subr.mxu0 %v1629
  %2334 = vmatpush1.msra.mxu0 %v1628
  %2335 = vmatprep.subr.mxu0 %v1693
  %2336 = vmatpush1.msra.mxu0 %v1692
  %2337 = vmatprep.subr.mxu0 %v1757
  %2338 = vmatpush1.msra.mxu0 %v1756
  %2339 = vmatprep.subr.mxu0 %v1821
  %2340 = vmatpush1.msra.mxu0 %v1820
  %2341 = vmatprep.subr.mxu0 %v1885
  %2342 = vmatpush1.msra.mxu0 %v1884
  %2343 = vmatprep.subr.mxu0 %v1949
  %2344 = vmatpush1.msra.mxu0 %v1948
  %2345 = vmatprep.subr.mxu0 %v2013
  %2346 = vmatpush1.msra.mxu0 %v2012
  %2347 = vmatprep.mubr.f32.mxu0 %v21
  %2348 = vmatmul.mubr.f32.gmra.mrb[0].mxu0 %v20
  %v2349 = vpop.f32.mrb[0].mxu0
  %v2350 = vadd.f32 0.0, %v2349
  %v2351 = vpop.f32.mrb[0].mxu0
  %v2352 = vadd.f32 0.0, %v2351
  %2353 = vdwg.mxu0
  %2354 = vmatprep.subr.mxu0 %v31
  %2355 = vmatpush1.msra.mxu0 %v30
  %2356 = vmatprep.subr.mxu0 %v95
  %2357 = vmatpush1.msra.mxu0 %v94
  %2358 = vmatprep.subr.mxu0 %v159
  %2359 = vmatpush1.msra.mxu0 %v158
  %2360 = vmatprep.subr.mxu0 %v223
  %2361 = vmatpush1.msra.mxu0 %v222
  %2362 = vmatprep.subr.mxu0 %v287
  %2363 = vmatpush1.msra.mxu0 %v286
  %2364 = vmatprep.subr.mxu0 %v351
  %2365 = vmatpush1.msra.mxu0 %v350
  %2366 = vmatprep.subr.mxu0 %v415
  %2367 = vmatpush1.msra.mxu0 %v414
  %2368 = vmatprep.subr.mxu0 %v479
  %2369 = vmatpush1.msra.mxu0 %v478
  %2370 = vmatprep.subr.mxu0 %v543
  %2371 = vmatpush1.msra.mxu0 %v542
  %2372 = vmatprep.subr.mxu0 %v607
  %2373 = vmatpush1.msra.mxu0 %v606
  %2374 = vmatprep.subr.mxu0 %v671
  %2375 = vmatpush1.msra.mxu0 %v670
  %2376 = vmatprep.subr.mxu0 %v735
  %2377 = vmatpush1.msra.mxu0 %v734
  %2378 = vmatprep.subr.mxu0 %v799
  %2379 = vmatpush1.msra.mxu0 %v798
  %2380 = vmatprep.subr.mxu0 %v863
  %2381 = vmatpush1.msra.mxu0 %v862
  %2382 = vmatprep.subr.mxu0 %v927
  %2383 = vmatpush1.msra.mxu0 %v926
  %2384 = vmatprep.subr.mxu0 %v991
  %2385 = vmatpush1.msra.mxu0 %v990
  %2386 = vmatprep.subr.mxu0 %v1055
  %2387 = vmatpush1.msra.mxu0 %v1054
  %2388 = vmatprep.subr.mxu0 %v1119
  %2389 = vmatpush1.msra.mxu0 %v1118
  %2390 = vmatprep.subr.mxu0 %v1183
  %2391 = vmatpush1.msra.mxu0 %v1182
  %2392 = vmatprep.subr.mxu0 %v1247
  %2393 = vmatpush1.msra.mxu0 %v1246
  %2394 = vmatprep.subr.mxu0 %v1311
  %2395 = vmatpush1.msra.mxu0 %v1310
  %2396 = vmatprep.subr.mxu0 %v1375
  %2397 = vmatpush1.msra.mxu0 %v1374
  %2398 = vmatprep.subr.mxu0 %v1439
  %2399 = vmatpush1.msra.mxu0 %v1438
  %2400 = vmatprep.subr.mxu0 %v1503
  %2401 = vmatpush1.msra.mxu0 %v1502
  %2402 = vmatprep.subr.mxu0 %v1567
  %2403 = vmatpush1.msra.mxu0 %v1566
  %2404 = vmatprep.subr.mxu0 %v1631
  %2405 = vmatpush1.msra.mxu0 %v1630
  %2406 = vmatprep.subr.mxu0 %v1695
  %2407 = vmatpush1.msra.mxu0 %v1694
  %2408 = vmatprep.subr.mxu0 %v1759
  %2409 = vmatpush1.msra.mxu0 %v1758
  %2410 = vmatprep.subr.mxu0 %v1823
  %2411 = vmatpush1.msra.mxu0 %v1822
  %2412 = vmatprep.subr.mxu0 %v1887
  %2413 = vmatpush1.msra.mxu0 %v1886
  %2414 = vmatprep.subr.mxu0 %v1951
  %2415 = vmatpush1.msra.mxu0 %v1950
  %2416 = vmatprep.subr.mxu0 %v2015
  %2417 = vmatpush1.msra.mxu0 %v2014
  %2418 = vmatprep.mubr.f32.mxu0 %v21
  %2419 = vmatmul.mubr.f32.gmra.mrb[0].mxu0 %v20
  %v2420 = vpop.f32.mrb[0].mxu0
  %v2421 = vadd.f32 0.0, %v2420
  %v2422 = vpop.f32.mrb[0].mxu0
  %v2423 = vadd.f32 0.0, %v2422
  %2424 = vdwg.mxu0
  %2425 = vmatprep.subr.mxu0 %v33
  %2426 = vmatpush1.msra.mxu0 %v32
  %2427 = vmatprep.subr.mxu0 %v97
  %2428 = vmatpush1.msra.mxu0 %v96
  %2429 = vmatprep.subr.mxu0 %v161
  %2430 = vmatpush1.msra.mxu0 %v160
  %2431 = vmatprep.subr.mxu0 %v225
  %2432 = vmatpush1.msra.mxu0 %v224
  %2433 = vmatprep.subr.mxu0 %v289
  %2434 = vmatpush1.msra.mxu0 %v288
  %2435 = vmatprep.subr.mxu0 %v353
  %2436 = vmatpush1.msra.mxu0 %v352
  %2437 = vmatprep.subr.mxu0 %v417
  %2438 = vmatpush1.msra.mxu0 %v416
  %2439 = vmatprep.subr.mxu0 %v481
  %2440 = vmatpush1.msra.mxu0 %v480
  %2441 = vmatprep.subr.mxu0 %v545
  %2442 = vmatpush1.msra.mxu0 %v544
  %2443 = vmatprep.subr.mxu0 %v609
  %2444 = vmatpush1.msra.mxu0 %v608
  %2445 = vmatprep.subr.mxu0 %v673
  %2446 = vmatpush1.msra.mxu0 %v672
  %2447 = vmatprep.subr.mxu0 %v737
  %2448 = vmatpush1.msra.mxu0 %v736
  %2449 = vmatprep.subr.mxu0 %v801
  %2450 = vmatpush1.msra.mxu0 %v800
  %2451 = vmatprep.subr.mxu0 %v865
  %2452 = vmatpush1.msra.mxu0 %v864
  %2453 = vmatprep.subr.mxu0 %v929
  %2454 = vmatpush1.msra.mxu0 %v928
  %2455 = vmatprep.subr.mxu0 %v993
  %2456 = vmatpush1.msra.mxu0 %v992
  %2457 = vmatprep.subr.mxu0 %v1057
  %2458 = vmatpush1.msra.mxu0 %v1056
  %2459 = vmatprep.subr.mxu0 %v1121
  %2460 = vmatpush1.msra.mxu0 %v1120
  %2461 = vmatprep.subr.mxu0 %v1185
  %2462 = vmatpush1.msra.mxu0 %v1184
  %2463 = vmatprep.subr.mxu0 %v1249
  %2464 = vmatpush1.msra.mxu0 %v1248
  %2465 = vmatprep.subr.mxu0 %v1313
  %2466 = vmatpush1.msra.mxu0 %v1312
  %2467 = vmatprep.subr.mxu0 %v1377
  %2468 = vmatpush1.msra.mxu0 %v1376
  %2469 = vmatprep.subr.mxu0 %v1441
  %2470 = vmatpush1.msra.mxu0 %v1440
  %2471 = vmatprep.subr.mxu0 %v1505
  %2472 = vmatpush1.msra.mxu0 %v1504
  %2473 = vmatprep.subr.mxu0 %v1569
  %2474 = vmatpush1.msra.mxu0 %v1568
  %2475 = vmatprep.subr.mxu0 %v1633
  %2476 = vmatpush1.msra.mxu0 %v1632
  %2477 = vmatprep.subr.mxu0 %v1697
  %2478 = vmatpush1.msra.mxu0 %v1696
  %2479 = vmatprep.subr.mxu0 %v1761
  %2480 = vmatpush1.msra.mxu0 %v1760
  %2481 = vmatprep.subr.mxu0 %v1825
  %2482 = vmatpush1.msra.mxu0 %v1824
  %2483 = vmatprep.subr.mxu0 %v1889
  %2484 = vmatpush1.msra.mxu0 %v1888
  %2485 = vmatprep.subr.mxu0 %v1953
  %2486 = vmatpush1.msra.mxu0 %v1952
  %2487 = vmatprep.subr.mxu0 %v2017
  %2488 = vmatpush1.msra.mxu0 %v2016
  %2489 = vmatprep.mubr.f32.mxu0 %v21
  %2490 = vmatmul.mubr.f32.gmra.mrb[0].mxu0 %v20
  %v2491 = vpop.f32.mrb[0].mxu0
  %v2492 = vadd.f32 0.0, %v2491
  %v2493 = vpop.f32.mrb[0].mxu0
  %v2494 = vadd.f32 0.0, %v2493
  %2495 = vdwg.mxu0
  %2496 = vmatprep.subr.mxu0 %v35
  %2497 = vmatpush1.msra.mxu0 %v34
  %2498 = vmatprep.subr.mxu0 %v99
  %2499 = vmatpush1.msra.mxu0 %v98
  %2500 = vmatprep.subr.mxu0 %v163
  %2501 = vmatpush1.msra.mxu0 %v162
  %2502 = vmatprep.subr.mxu0 %v227
  %2503 = vmatpush1.msra.mxu0 %v226
  %2504 = vmatprep.subr.mxu0 %v291
  %2505 = vmatpush1.msra.mxu0 %v290
  %2506 = vmatprep.subr.mxu0 %v355
  %2507 = vmatpush1.msra.mxu0 %v354
  %2508 = vmatprep.subr.mxu0 %v419
  %2509 = vmatpush1.msra.mxu0 %v418
  %2510 = vmatprep.subr.mxu0 %v483
  %2511 = vmatpush1.msra.mxu0 %v482
  %2512 = vmatprep.subr.mxu0 %v547
  %2513 = vmatpush1.msra.mxu0 %v546
  %2514 = vmatprep.subr.mxu0 %v611
  %2515 = vmatpush1.msra.mxu0 %v610
  %2516 = vmatprep.subr.mxu0 %v675
  %2517 = vmatpush1.msra.mxu0 %v674
  %2518 = vmatprep.subr.mxu0 %v739
  %2519 = vmatpush1.msra.mxu0 %v738
  %2520 = vmatprep.subr.mxu0 %v803
  %2521 = vmatpush1.msra.mxu0 %v802
  %2522 = vmatprep.subr.mxu0 %v867
  %2523 = vmatpush1.msra.mxu0 %v866
  %2524 = vmatprep.subr.mxu0 %v931
  %2525 = vmatpush1.msra.mxu0 %v930
  %2526 = vmatprep.subr.mxu0 %v995
  %2527 = vmatpush1.msra.mxu0 %v994
  %2528 = vmatprep.subr.mxu0 %v1059
  %2529 = vmatpush1.msra.mxu0 %v1058
  %2530 = vmatprep.subr.mxu0 %v1123
  %2531 = vmatpush1.msra.mxu0 %v1122
  %2532 = vmatprep.subr.mxu0 %v1187
  %2533 = vmatpush1.msra.mxu0 %v1186
  %2534 = vmatprep.subr.mxu0 %v1251
  %2535 = vmatpush1.msra.mxu0 %v1250
  %2536 = vmatprep.subr.mxu0 %v1315
  %2537 = vmatpush1.msra.mxu0 %v1314
  %2538 = vmatprep.subr.mxu0 %v1379
  %2539 = vmatpush1.msra.mxu0 %v1378
  %2540 = vmatprep.subr.mxu0 %v1443
  %2541 = vmatpush1.msra.mxu0 %v1442
  %2542 = vmatprep.subr.mxu0 %v1507
  %2543 = vmatpush1.msra.mxu0 %v1506
  %2544 = vmatprep.subr.mxu0 %v1571
  %2545 = vmatpush1.msra.mxu0 %v1570
  %2546 = vmatprep.subr.mxu0 %v1635
  %2547 = vmatpush1.msra.mxu0 %v1634
  %2548 = vmatprep.subr.mxu0 %v1699
  %2549 = vmatpush1.msra.mxu0 %v1698
  %2550 = vmatprep.subr.mxu0 %v1763
  %2551 = vmatpush1.msra.mxu0 %v1762
  %2552 = vmatprep.subr.mxu0 %v1827
  %2553 = vmatpush1.msra.mxu0 %v1826
  %2554 = vmatprep.subr.mxu0 %v1891
  %2555 = vmatpush1.msra.mxu0 %v1890
  %2556 = vmatprep.subr.mxu0 %v1955
  %2557 = vmatpush1.msra.mxu0 %v1954
  %2558 = vmatprep.subr.mxu0 %v2019
  %2559 = vmatpush1.msra.mxu0 %v2018
  %2560 = vmatprep.mubr.f32.mxu0 %v21
  %2561 = vmatmul.mubr.f32.gmra.mrb[0].mxu0 %v20
  %v2562 = vpop.f32.mrb[0].mxu0
  %v2563 = vadd.f32 0.0, %v2562
  %v2564 = vpop.f32.mrb[0].mxu0
  %v2565 = vadd.f32 0.0, %v2564
  %2566 = vdwg.mxu0
  %2567 = vmatprep.subr.mxu0 %v37
  %2568 = vmatpush1.msra.mxu0 %v36
  %2569 = vmatprep.subr.mxu0 %v101
  %2570 = vmatpush1.msra.mxu0 %v100
  %2571 = vmatprep.subr.mxu0 %v165
  %2572 = vmatpush1.msra.mxu0 %v164
  %2573 = vmatprep.subr.mxu0 %v229
  %2574 = vmatpush1.msra.mxu0 %v228
  %2575 = vmatprep.subr.mxu0 %v293
  %2576 = vmatpush1.msra.mxu0 %v292
  %2577 = vmatprep.subr.mxu0 %v357
  %2578 = vmatpush1.msra.mxu0 %v356
  %2579 = vmatprep.subr.mxu0 %v421
  %2580 = vmatpush1.msra.mxu0 %v420
  %2581 = vmatprep.subr.mxu0 %v485
  %2582 = vmatpush1.msra.mxu0 %v484
  %2583 = vmatprep.subr.mxu0 %v549
  %2584 = vmatpush1.msra.mxu0 %v548
  %2585 = vmatprep.subr.mxu0 %v613
  %2586 = vmatpush1.msra.mxu0 %v612
  %2587 = vmatprep.subr.mxu0 %v677
  %2588 = vmatpush1.msra.mxu0 %v676
  %2589 = vmatprep.subr.mxu0 %v741
  %2590 = vmatpush1.msra.mxu0 %v740
  %2591 = vmatprep.subr.mxu0 %v805
  %2592 = vmatpush1.msra.mxu0 %v804
  %2593 = vmatprep.subr.mxu0 %v869
  %2594 = vmatpush1.msra.mxu0 %v868
  %2595 = vmatprep.subr.mxu0 %v933
  %2596 = vmatpush1.msra.mxu0 %v932
  %2597 = vmatprep.subr.mxu0 %v997
  %2598 = vmatpush1.msra.mxu0 %v996
  %2599 = vmatprep.subr.mxu0 %v1061
  %2600 = vmatpush1.msra.mxu0 %v1060
  %2601 = vmatprep.subr.mxu0 %v1125
  %2602 = vmatpush1.msra.mxu0 %v1124
  %2603 = vmatprep.subr.mxu0 %v1189
  %2604 = vmatpush1.msra.mxu0 %v1188
  %2605 = vmatprep.subr.mxu0 %v1253
  %2606 = vmatpush1.msra.mxu0 %v1252
  %2607 = vmatprep.subr.mxu0 %v1317
  %2608 = vmatpush1.msra.mxu0 %v1316
  %2609 = vmatprep.subr.mxu0 %v1381
  %2610 = vmatpush1.msra.mxu0 %v1380
  %2611 = vmatprep.subr.mxu0 %v1445
  %2612 = vmatpush1.msra.mxu0 %v1444
  %2613 = vmatprep.subr.mxu0 %v1509
  %2614 = vmatpush1.msra.mxu0 %v1508
  %2615 = vmatprep.subr.mxu0 %v1573
  %2616 = vmatpush1.msra.mxu0 %v1572
  %2617 = vmatprep.subr.mxu0 %v1637
  %2618 = vmatpush1.msra.mxu0 %v1636
  %2619 = vmatprep.subr.mxu0 %v1701
  %2620 = vmatpush1.msra.mxu0 %v1700
  %2621 = vmatprep.subr.mxu0 %v1765
  %2622 = vmatpush1.msra.mxu0 %v1764
  %2623 = vmatprep.subr.mxu0 %v1829
  %2624 = vmatpush1.msra.mxu0 %v1828
  %2625 = vmatprep.subr.mxu0 %v1893
  %2626 = vmatpush1.msra.mxu0 %v1892
  %2627 = vmatprep.subr.mxu0 %v1957
  %2628 = vmatpush1.msra.mxu0 %v1956
  %2629 = vmatprep.subr.mxu0 %v2021
  %2630 = vmatpush1.msra.mxu0 %v2020
  %2631 = vmatprep.mubr.f32.mxu0 %v21
  %2632 = vmatmul.mubr.f32.gmra.mrb[0].mxu0 %v20
  %v2633 = vpop.f32.mrb[0].mxu0
  %v2634 = vadd.f32 0.0, %v2633
  %v2635 = vpop.f32.mrb[0].mxu0
  %v2636 = vadd.f32 0.0, %v2635
  %2637 = vdwg.mxu0
  %2638 = vmatprep.subr.mxu0 %v39
  %2639 = vmatpush1.msra.mxu0 %v38
  %2640 = vmatprep.subr.mxu0 %v103
  %2641 = vmatpush1.msra.mxu0 %v102
  %2642 = vmatprep.subr.mxu0 %v167
  %2643 = vmatpush1.msra.mxu0 %v166
  %2644 = vmatprep.subr.mxu0 %v231
  %2645 = vmatpush1.msra.mxu0 %v230
  %2646 = vmatprep.subr.mxu0 %v295
  %2647 = vmatpush1.msra.mxu0 %v294
  %2648 = vmatprep.subr.mxu0 %v359
  %2649 = vmatpush1.msra.mxu0 %v358
  %2650 = vmatprep.subr.mxu0 %v423
  %2651 = vmatpush1.msra.mxu0 %v422
  %2652 = vmatprep.subr.mxu0 %v487
  %2653 = vmatpush1.msra.mxu0 %v486
  %2654 = vmatprep.subr.mxu0 %v551
  %2655 = vmatpush1.msra.mxu0 %v550
  %2656 = vmatprep.subr.mxu0 %v615
  %2657 = vmatpush1.msra.mxu0 %v614
  %2658 = vmatprep.subr.mxu0 %v679
  %2659 = vmatpush1.msra.mxu0 %v678
  %2660 = vmatprep.subr.mxu0 %v743
  %2661 = vmatpush1.msra.mxu0 %v742
  %2662 = vmatprep.subr.mxu0 %v807
  %2663 = vmatpush1.msra.mxu0 %v806
  %2664 = vmatprep.subr.mxu0 %v871
  %2665 = vmatpush1.msra.mxu0 %v870
  %2666 = vmatprep.subr.mxu0 %v935
  %2667 = vmatpush1.msra.mxu0 %v934
  %2668 = vmatprep.subr.mxu0 %v999
  %2669 = vmatpush1.msra.mxu0 %v998
  %2670 = vmatprep.subr.mxu0 %v1063
  %2671 = vmatpush1.msra.mxu0 %v1062
  %2672 = vmatprep.subr.mxu0 %v1127
  %2673 = vmatpush1.msra.mxu0 %v1126
  %2674 = vmatprep.subr.mxu0 %v1191
  %2675 = vmatpush1.msra.mxu0 %v1190
  %2676 = vmatprep.subr.mxu0 %v1255
  %2677 = vmatpush1.msra.mxu0 %v1254
  %2678 = vmatprep.subr.mxu0 %v1319
  %2679 = vmatpush1.msra.mxu0 %v1318
  %2680 = vmatprep.subr.mxu0 %v1383
  %2681 = vmatpush1.msra.mxu0 %v1382
  %2682 = vmatprep.subr.mxu0 %v1447
  %2683 = vmatpush1.msra.mxu0 %v1446
  %2684 = vmatprep.subr.mxu0 %v1511
  %2685 = vmatpush1.msra.mxu0 %v1510
  %2686 = vmatprep.subr.mxu0 %v1575
  %2687 = vmatpush1.msra.mxu0 %v1574
  %2688 = vmatprep.subr.mxu0 %v1639
  %2689 = vmatpush1.msra.mxu0 %v1638
  %2690 = vmatprep.subr.mxu0 %v1703
  %2691 = vmatpush1.msra.mxu0 %v1702
  %2692 = vmatprep.subr.mxu0 %v1767
  %2693 = vmatpush1.msra.mxu0 %v1766
  %2694 = vmatprep.subr.mxu0 %v1831
  %2695 = vmatpush1.msra.mxu0 %v1830
  %2696 = vmatprep.subr.mxu0 %v1895
  %2697 = vmatpush1.msra.mxu0 %v1894
  %2698 = vmatprep.subr.mxu0 %v1959
  %2699 = vmatpush1.msra.mxu0 %v1958
  %2700 = vmatprep.subr.mxu0 %v2023
  %2701 = vmatpush1.msra.mxu0 %v2022
  %2702 = vmatprep.mubr.f32.mxu0 %v21
  %2703 = vmatmul.mubr.f32.gmra.mrb[0].mxu0 %v20
  %v2704 = vpop.f32.mrb[0].mxu0
  %v2705 = vadd.f32 0.0, %v2704
  %v2706 = vpop.f32.mrb[0].mxu0
  %v2707 = vadd.f32 0.0, %v2706
  %2708 = vdwg.mxu0
  %2709 = vmatprep.subr.mxu0 %v41
  %2710 = vmatpush1.msra.mxu0 %v40
  %2711 = vmatprep.subr.mxu0 %v105
  %2712 = vmatpush1.msra.mxu0 %v104
  %2713 = vmatprep.subr.mxu0 %v169
  %2714 = vmatpush1.msra.mxu0 %v168
  %2715 = vmatprep.subr.mxu0 %v233
  %2716 = vmatpush1.msra.mxu0 %v232
  %2717 = vmatprep.subr.mxu0 %v297
  %2718 = vmatpush1.msra.mxu0 %v296
  %2719 = vmatprep.subr.mxu0 %v361
  %2720 = vmatpush1.msra.mxu0 %v360
  %2721 = vmatprep.subr.mxu0 %v425
  %2722 = vmatpush1.msra.mxu0 %v424
  %2723 = vmatprep.subr.mxu0 %v489
  %2724 = vmatpush1.msra.mxu0 %v488
  %2725 = vmatprep.subr.mxu0 %v553
  %2726 = vmatpush1.msra.mxu0 %v552
  %2727 = vmatprep.subr.mxu0 %v617
  %2728 = vmatpush1.msra.mxu0 %v616
  %2729 = vmatprep.subr.mxu0 %v681
  %2730 = vmatpush1.msra.mxu0 %v680
  %2731 = vmatprep.subr.mxu0 %v745
  %2732 = vmatpush1.msra.mxu0 %v744
  %2733 = vmatprep.subr.mxu0 %v809
  %2734 = vmatpush1.msra.mxu0 %v808
  %2735 = vmatprep.subr.mxu0 %v873
  %2736 = vmatpush1.msra.mxu0 %v872
  %2737 = vmatprep.subr.mxu0 %v937
  %2738 = vmatpush1.msra.mxu0 %v936
  %2739 = vmatprep.subr.mxu0 %v1001
  %2740 = vmatpush1.msra.mxu0 %v1000
  %2741 = vmatprep.subr.mxu0 %v1065
  %2742 = vmatpush1.msra.mxu0 %v1064
  %2743 = vmatprep.subr.mxu0 %v1129
  %2744 = vmatpush1.msra.mxu0 %v1128
  %2745 = vmatprep.subr.mxu0 %v1193
  %2746 = vmatpush1.msra.mxu0 %v1192
  %2747 = vmatprep.subr.mxu0 %v1257
  %2748 = vmatpush1.msra.mxu0 %v1256
  %2749 = vmatprep.subr.mxu0 %v1321
  %2750 = vmatpush1.msra.mxu0 %v1320
  %2751 = vmatprep.subr.mxu0 %v1385
  %2752 = vmatpush1.msra.mxu0 %v1384
  %2753 = vmatprep.subr.mxu0 %v1449
  %2754 = vmatpush1.msra.mxu0 %v1448
  %2755 = vmatprep.subr.mxu0 %v1513
  %2756 = vmatpush1.msra.mxu0 %v1512
  %2757 = vmatprep.subr.mxu0 %v1577
  %2758 = vmatpush1.msra.mxu0 %v1576
  %2759 = vmatprep.subr.mxu0 %v1641
  %2760 = vmatpush1.msra.mxu0 %v1640
  %2761 = vmatprep.subr.mxu0 %v1705
  %2762 = vmatpush1.msra.mxu0 %v1704
  %2763 = vmatprep.subr.mxu0 %v1769
  %2764 = vmatpush1.msra.mxu0 %v1768
  %2765 = vmatprep.subr.mxu0 %v1833
  %2766 = vmatpush1.msra.mxu0 %v1832
  %2767 = vmatprep.subr.mxu0 %v1897
  %2768 = vmatpush1.msra.mxu0 %v1896
  %2769 = vmatprep.subr.mxu0 %v1961
  %2770 = vmatpush1.msra.mxu0 %v1960
  %2771 = vmatprep.subr.mxu0 %v2025
  %2772 = vmatpush1.msra.mxu0 %v2024
  %2773 = vmatprep.mubr.f32.mxu0 %v21
  %2774 = vmatmul.mubr.f32.gmra.mrb[0].mxu0 %v20
  %v2775 = vpop.f32.mrb[0].mxu0
  %v2776 = vadd.f32 0.0, %v2775
  %v2777 = vpop.f32.mrb[0].mxu0
  %v2778 = vadd.f32 0.0, %v2777
  %2779 = vdwg.mxu0
  %2780 = vmatprep.subr.mxu0 %v43
  %2781 = vmatpush1.msra.mxu0 %v42
  %2782 = vmatprep.subr.mxu0 %v107
  %2783 = vmatpush1.msra.mxu0 %v106
  %2784 = vmatprep.subr.mxu0 %v171
  %2785 = vmatpush1.msra.mxu0 %v170
  %2786 = vmatprep.subr.mxu0 %v235
  %2787 = vmatpush1.msra.mxu0 %v234
  %2788 = vmatprep.subr.mxu0 %v299
  %2789 = vmatpush1.msra.mxu0 %v298
  %2790 = vmatprep.subr.mxu0 %v363
  %2791 = vmatpush1.msra.mxu0 %v362
  %2792 = vmatprep.subr.mxu0 %v427
  %2793 = vmatpush1.msra.mxu0 %v426
  %2794 = vmatprep.subr.mxu0 %v491
  %2795 = vmatpush1.msra.mxu0 %v490
  %2796 = vmatprep.subr.mxu0 %v555
  %2797 = vmatpush1.msra.mxu0 %v554
  %2798 = vmatprep.subr.mxu0 %v619
  %2799 = vmatpush1.msra.mxu0 %v618
  %2800 = vmatprep.subr.mxu0 %v683
  %2801 = vmatpush1.msra.mxu0 %v682
  %2802 = vmatprep.subr.mxu0 %v747
  %2803 = vmatpush1.msra.mxu0 %v746
  %2804 = vmatprep.subr.mxu0 %v811
  %2805 = vmatpush1.msra.mxu0 %v810
  %2806 = vmatprep.subr.mxu0 %v875
  %2807 = vmatpush1.msra.mxu0 %v874
  %2808 = vmatprep.subr.mxu0 %v939
  %2809 = vmatpush1.msra.mxu0 %v938
  %2810 = vmatprep.subr.mxu0 %v1003
  %2811 = vmatpush1.msra.mxu0 %v1002
  %2812 = vmatprep.subr.mxu0 %v1067
  %2813 = vmatpush1.msra.mxu0 %v1066
  %2814 = vmatprep.subr.mxu0 %v1131
  %2815 = vmatpush1.msra.mxu0 %v1130
  %2816 = vmatprep.subr.mxu0 %v1195
  %2817 = vmatpush1.msra.mxu0 %v1194
  %2818 = vmatprep.subr.mxu0 %v1259
  %2819 = vmatpush1.msra.mxu0 %v1258
  %2820 = vmatprep.subr.mxu0 %v1323
  %2821 = vmatpush1.msra.mxu0 %v1322
  %2822 = vmatprep.subr.mxu0 %v1387
  %2823 = vmatpush1.msra.mxu0 %v1386
  %2824 = vmatprep.subr.mxu0 %v1451
  %2825 = vmatpush1.msra.mxu0 %v1450
  %2826 = vmatprep.subr.mxu0 %v1515
  %2827 = vmatpush1.msra.mxu0 %v1514
  %2828 = vmatprep.subr.mxu0 %v1579
  %2829 = vmatpush1.msra.mxu0 %v1578
  %2830 = vmatprep.subr.mxu0 %v1643
  %2831 = vmatpush1.msra.mxu0 %v1642
  %2832 = vmatprep.subr.mxu0 %v1707
  %2833 = vmatpush1.msra.mxu0 %v1706
  %2834 = vmatprep.subr.mxu0 %v1771
  %2835 = vmatpush1.msra.mxu0 %v1770
  %2836 = vmatprep.subr.mxu0 %v1835
  %2837 = vmatpush1.msra.mxu0 %v1834
  %2838 = vmatprep.subr.mxu0 %v1899
  %2839 = vmatpush1.msra.mxu0 %v1898
  %2840 = vmatprep.subr.mxu0 %v1963
  %2841 = vmatpush1.msra.mxu0 %v1962
  %2842 = vmatprep.subr.mxu0 %v2027
  %2843 = vmatpush1.msra.mxu0 %v2026
  %2844 = vmatprep.mubr.f32.mxu0 %v21
  %2845 = vmatmul.mubr.f32.gmra.mrb[0].mxu0 %v20
  %v2846 = vpop.f32.mrb[0].mxu0
  %v2847 = vadd.f32 0.0, %v2846
  %v2848 = vpop.f32.mrb[0].mxu0
  %v2849 = vadd.f32 0.0, %v2848
  %2850 = vdwg.mxu0
  %2851 = vmatprep.subr.mxu0 %v45
  %2852 = vmatpush1.msra.mxu0 %v44
  %2853 = vmatprep.subr.mxu0 %v109
  %2854 = vmatpush1.msra.mxu0 %v108
  %2855 = vmatprep.subr.mxu0 %v173
  %2856 = vmatpush1.msra.mxu0 %v172
  %2857 = vmatprep.subr.mxu0 %v237
  %2858 = vmatpush1.msra.mxu0 %v236
  %2859 = vmatprep.subr.mxu0 %v301
  %2860 = vmatpush1.msra.mxu0 %v300
  %2861 = vmatprep.subr.mxu0 %v365
  %2862 = vmatpush1.msra.mxu0 %v364
  %2863 = vmatprep.subr.mxu0 %v429
  %2864 = vmatpush1.msra.mxu0 %v428
  %2865 = vmatprep.subr.mxu0 %v493
  %2866 = vmatpush1.msra.mxu0 %v492
  %2867 = vmatprep.subr.mxu0 %v557
  %2868 = vmatpush1.msra.mxu0 %v556
  %2869 = vmatprep.subr.mxu0 %v621
  %2870 = vmatpush1.msra.mxu0 %v620
  %2871 = vmatprep.subr.mxu0 %v685
  %2872 = vmatpush1.msra.mxu0 %v684
  %2873 = vmatprep.subr.mxu0 %v749
  %2874 = vmatpush1.msra.mxu0 %v748
  %2875 = vmatprep.subr.mxu0 %v813
  %2876 = vmatpush1.msra.mxu0 %v812
  %2877 = vmatprep.subr.mxu0 %v877
  %2878 = vmatpush1.msra.mxu0 %v876
  %2879 = vmatprep.subr.mxu0 %v941
  %2880 = vmatpush1.msra.mxu0 %v940
  %2881 = vmatprep.subr.mxu0 %v1005
  %2882 = vmatpush1.msra.mxu0 %v1004
  %2883 = vmatprep.subr.mxu0 %v1069
  %2884 = vmatpush1.msra.mxu0 %v1068
  %2885 = vmatprep.subr.mxu0 %v1133
  %2886 = vmatpush1.msra.mxu0 %v1132
  %2887 = vmatprep.subr.mxu0 %v1197
  %2888 = vmatpush1.msra.mxu0 %v1196
  %2889 = vmatprep.subr.mxu0 %v1261
  %2890 = vmatpush1.msra.mxu0 %v1260
  %2891 = vmatprep.subr.mxu0 %v1325
  %2892 = vmatpush1.msra.mxu0 %v1324
  %2893 = vmatprep.subr.mxu0 %v1389
  %2894 = vmatpush1.msra.mxu0 %v1388
  %2895 = vmatprep.subr.mxu0 %v1453
  %2896 = vmatpush1.msra.mxu0 %v1452
  %2897 = vmatprep.subr.mxu0 %v1517
  %2898 = vmatpush1.msra.mxu0 %v1516
  %2899 = vmatprep.subr.mxu0 %v1581
  %2900 = vmatpush1.msra.mxu0 %v1580
  %2901 = vmatprep.subr.mxu0 %v1645
  %2902 = vmatpush1.msra.mxu0 %v1644
  %2903 = vmatprep.subr.mxu0 %v1709
  %2904 = vmatpush1.msra.mxu0 %v1708
  %2905 = vmatprep.subr.mxu0 %v1773
  %2906 = vmatpush1.msra.mxu0 %v1772
  %2907 = vmatprep.subr.mxu0 %v1837
  %2908 = vmatpush1.msra.mxu0 %v1836
  %2909 = vmatprep.subr.mxu0 %v1901
  %2910 = vmatpush1.msra.mxu0 %v1900
  %2911 = vmatprep.subr.mxu0 %v1965
  %2912 = vmatpush1.msra.mxu0 %v1964
  %2913 = vmatprep.subr.mxu0 %v2029
  %2914 = vmatpush1.msra.mxu0 %v2028
  %2915 = vmatprep.mubr.f32.mxu0 %v21
  %2916 = vmatmul.mubr.f32.gmra.mrb[0].mxu0 %v20
  %v2917 = vpop.f32.mrb[0].mxu0
  %v2918 = vadd.f32 0.0, %v2917
  %v2919 = vpop.f32.mrb[0].mxu0
  %v2920 = vadd.f32 0.0, %v2919
  %2921 = vdwg.mxu0
  %2922 = vmatprep.subr.mxu0 %v47
  %2923 = vmatpush1.msra.mxu0 %v46
  %2924 = vmatprep.subr.mxu0 %v111
  %2925 = vmatpush1.msra.mxu0 %v110
  %2926 = vmatprep.subr.mxu0 %v175
  %2927 = vmatpush1.msra.mxu0 %v174
  %2928 = vmatprep.subr.mxu0 %v239
  %2929 = vmatpush1.msra.mxu0 %v238
  %2930 = vmatprep.subr.mxu0 %v303
  %2931 = vmatpush1.msra.mxu0 %v302
  %2932 = vmatprep.subr.mxu0 %v367
  %2933 = vmatpush1.msra.mxu0 %v366
  %2934 = vmatprep.subr.mxu0 %v431
  %2935 = vmatpush1.msra.mxu0 %v430
  %2936 = vmatprep.subr.mxu0 %v495
  %2937 = vmatpush1.msra.mxu0 %v494
  %2938 = vmatprep.subr.mxu0 %v559
  %2939 = vmatpush1.msra.mxu0 %v558
  %2940 = vmatprep.subr.mxu0 %v623
  %2941 = vmatpush1.msra.mxu0 %v622
  %2942 = vmatprep.subr.mxu0 %v687
  %2943 = vmatpush1.msra.mxu0 %v686
  %2944 = vmatprep.subr.mxu0 %v751
  %2945 = vmatpush1.msra.mxu0 %v750
  %2946 = vmatprep.subr.mxu0 %v815
  %2947 = vmatpush1.msra.mxu0 %v814
  %2948 = vmatprep.subr.mxu0 %v879
  %2949 = vmatpush1.msra.mxu0 %v878
  %2950 = vmatprep.subr.mxu0 %v943
  %2951 = vmatpush1.msra.mxu0 %v942
  %2952 = vmatprep.subr.mxu0 %v1007
  %2953 = vmatpush1.msra.mxu0 %v1006
  %2954 = vmatprep.subr.mxu0 %v1071
  %2955 = vmatpush1.msra.mxu0 %v1070
  %2956 = vmatprep.subr.mxu0 %v1135
  %2957 = vmatpush1.msra.mxu0 %v1134
  %2958 = vmatprep.subr.mxu0 %v1199
  %2959 = vmatpush1.msra.mxu0 %v1198
  %2960 = vmatprep.subr.mxu0 %v1263
  %2961 = vmatpush1.msra.mxu0 %v1262
  %2962 = vmatprep.subr.mxu0 %v1327
  %2963 = vmatpush1.msra.mxu0 %v1326
  %2964 = vmatprep.subr.mxu0 %v1391
  %2965 = vmatpush1.msra.mxu0 %v1390
  %2966 = vmatprep.subr.mxu0 %v1455
  %2967 = vmatpush1.msra.mxu0 %v1454
  %2968 = vmatprep.subr.mxu0 %v1519
  %2969 = vmatpush1.msra.mxu0 %v1518
  %2970 = vmatprep.subr.mxu0 %v1583
  %2971 = vmatpush1.msra.mxu0 %v1582
  %2972 = vmatprep.subr.mxu0 %v1647
  %2973 = vmatpush1.msra.mxu0 %v1646
  %2974 = vmatprep.subr.mxu0 %v1711
  %2975 = vmatpush1.msra.mxu0 %v1710
  %2976 = vmatprep.subr.mxu0 %v1775
  %2977 = vmatpush1.msra.mxu0 %v1774
  %2978 = vmatprep.subr.mxu0 %v1839
  %2979 = vmatpush1.msra.mxu0 %v1838
  %2980 = vmatprep.subr.mxu0 %v1903
  %2981 = vmatpush1.msra.mxu0 %v1902
  %2982 = vmatprep.subr.mxu0 %v1967
  %2983 = vmatpush1.msra.mxu0 %v1966
  %2984 = vmatprep.subr.mxu0 %v2031
  %2985 = vmatpush1.msra.mxu0 %v2030
  %2986 = vmatprep.mubr.f32.mxu0 %v21
  %2987 = vmatmul.mubr.f32.gmra.mrb[0].mxu0 %v20
  %v2988 = vpop.f32.mrb[0].mxu0
  %v2989 = vadd.f32 0.0, %v2988
  %v2990 = vpop.f32.mrb[0].mxu0
  %v2991 = vadd.f32 0.0, %v2990
  %2992 = vdwg.mxu0
  %2993 = vmatprep.subr.mxu0 %v49
  %2994 = vmatpush1.msra.mxu0 %v48
  %2995 = vmatprep.subr.mxu0 %v113
  %2996 = vmatpush1.msra.mxu0 %v112
  %2997 = vmatprep.subr.mxu0 %v177
  %2998 = vmatpush1.msra.mxu0 %v176
  %2999 = vmatprep.subr.mxu0 %v241
  %3000 = vmatpush1.msra.mxu0 %v240
  %3001 = vmatprep.subr.mxu0 %v305
  %3002 = vmatpush1.msra.mxu0 %v304
  %3003 = vmatprep.subr.mxu0 %v369
  %3004 = vmatpush1.msra.mxu0 %v368
  %3005 = vmatprep.subr.mxu0 %v433
  %3006 = vmatpush1.msra.mxu0 %v432
  %3007 = vmatprep.subr.mxu0 %v497
  %3008 = vmatpush1.msra.mxu0 %v496
  %3009 = vmatprep.subr.mxu0 %v561
  %3010 = vmatpush1.msra.mxu0 %v560
  %3011 = vmatprep.subr.mxu0 %v625
  %3012 = vmatpush1.msra.mxu0 %v624
  %3013 = vmatprep.subr.mxu0 %v689
  %3014 = vmatpush1.msra.mxu0 %v688
  %3015 = vmatprep.subr.mxu0 %v753
  %3016 = vmatpush1.msra.mxu0 %v752
  %3017 = vmatprep.subr.mxu0 %v817
  %3018 = vmatpush1.msra.mxu0 %v816
  %3019 = vmatprep.subr.mxu0 %v881
  %3020 = vmatpush1.msra.mxu0 %v880
  %3021 = vmatprep.subr.mxu0 %v945
  %3022 = vmatpush1.msra.mxu0 %v944
  %3023 = vmatprep.subr.mxu0 %v1009
  %3024 = vmatpush1.msra.mxu0 %v1008
  %3025 = vmatprep.subr.mxu0 %v1073
  %3026 = vmatpush1.msra.mxu0 %v1072
  %3027 = vmatprep.subr.mxu0 %v1137
  %3028 = vmatpush1.msra.mxu0 %v1136
  %3029 = vmatprep.subr.mxu0 %v1201
  %3030 = vmatpush1.msra.mxu0 %v1200
  %3031 = vmatprep.subr.mxu0 %v1265
  %3032 = vmatpush1.msra.mxu0 %v1264
  %3033 = vmatprep.subr.mxu0 %v1329
  %3034 = vmatpush1.msra.mxu0 %v1328
  %3035 = vmatprep.subr.mxu0 %v1393
  %3036 = vmatpush1.msra.mxu0 %v1392
  %3037 = vmatprep.subr.mxu0 %v1457
  %3038 = vmatpush1.msra.mxu0 %v1456
  %3039 = vmatprep.subr.mxu0 %v1521
  %3040 = vmatpush1.msra.mxu0 %v1520
  %3041 = vmatprep.subr.mxu0 %v1585
  %3042 = vmatpush1.msra.mxu0 %v1584
  %3043 = vmatprep.subr.mxu0 %v1649
  %3044 = vmatpush1.msra.mxu0 %v1648
  %3045 = vmatprep.subr.mxu0 %v1713
  %3046 = vmatpush1.msra.mxu0 %v1712
  %3047 = vmatprep.subr.mxu0 %v1777
  %3048 = vmatpush1.msra.mxu0 %v1776
  %3049 = vmatprep.subr.mxu0 %v1841
  %3050 = vmatpush1.msra.mxu0 %v1840
  %3051 = vmatprep.subr.mxu0 %v1905
  %3052 = vmatpush1.msra.mxu0 %v1904
  %3053 = vmatprep.subr.mxu0 %v1969
  %3054 = vmatpush1.msra.mxu0 %v1968
  %3055 = vmatprep.subr.mxu0 %v2033
  %3056 = vmatpush1.msra.mxu0 %v2032
  %3057 = vmatprep.mubr.f32.mxu0 %v21
  %3058 = vmatmul.mubr.f32.gmra.mrb[0].mxu0 %v20
  %v3059 = vpop.f32.mrb[0].mxu0
  %v3060 = vadd.f32 0.0, %v3059
  %v3061 = vpop.f32.mrb[0].mxu0
  %v3062 = vadd.f32 0.0, %v3061
  %3063 = vdwg.mxu0
  %3064 = vmatprep.subr.mxu0 %v51
  %3065 = vmatpush1.msra.mxu0 %v50
  %3066 = vmatprep.subr.mxu0 %v115
  %3067 = vmatpush1.msra.mxu0 %v114
  %3068 = vmatprep.subr.mxu0 %v179
  %3069 = vmatpush1.msra.mxu0 %v178
  %3070 = vmatprep.subr.mxu0 %v243
  %3071 = vmatpush1.msra.mxu0 %v242
  %3072 = vmatprep.subr.mxu0 %v307
  %3073 = vmatpush1.msra.mxu0 %v306
  %3074 = vmatprep.subr.mxu0 %v371
  %3075 = vmatpush1.msra.mxu0 %v370
  %3076 = vmatprep.subr.mxu0 %v435
  %3077 = vmatpush1.msra.mxu0 %v434
  %3078 = vmatprep.subr.mxu0 %v499
  %3079 = vmatpush1.msra.mxu0 %v498
  %3080 = vmatprep.subr.mxu0 %v563
  %3081 = vmatpush1.msra.mxu0 %v562
  %3082 = vmatprep.subr.mxu0 %v627
  %3083 = vmatpush1.msra.mxu0 %v626
  %3084 = vmatprep.subr.mxu0 %v691
  %3085 = vmatpush1.msra.mxu0 %v690
  %3086 = vmatprep.subr.mxu0 %v755
  %3087 = vmatpush1.msra.mxu0 %v754
  %3088 = vmatprep.subr.mxu0 %v819
  %3089 = vmatpush1.msra.mxu0 %v818
  %3090 = vmatprep.subr.mxu0 %v883
  %3091 = vmatpush1.msra.mxu0 %v882
  %3092 = vmatprep.subr.mxu0 %v947
  %3093 = vmatpush1.msra.mxu0 %v946
  %3094 = vmatprep.subr.mxu0 %v1011
  %3095 = vmatpush1.msra.mxu0 %v1010
  %3096 = vmatprep.subr.mxu0 %v1075
  %3097 = vmatpush1.msra.mxu0 %v1074
  %3098 = vmatprep.subr.mxu0 %v1139
  %3099 = vmatpush1.msra.mxu0 %v1138
  %3100 = vmatprep.subr.mxu0 %v1203
  %3101 = vmatpush1.msra.mxu0 %v1202
  %3102 = vmatprep.subr.mxu0 %v1267
  %3103 = vmatpush1.msra.mxu0 %v1266
  %3104 = vmatprep.subr.mxu0 %v1331
  %3105 = vmatpush1.msra.mxu0 %v1330
  %3106 = vmatprep.subr.mxu0 %v1395
  %3107 = vmatpush1.msra.mxu0 %v1394
  %3108 = vmatprep.subr.mxu0 %v1459
  %3109 = vmatpush1.msra.mxu0 %v1458
  %3110 = vmatprep.subr.mxu0 %v1523
  %3111 = vmatpush1.msra.mxu0 %v1522
  %3112 = vmatprep.subr.mxu0 %v1587
  %3113 = vmatpush1.msra.mxu0 %v1586
  %3114 = vmatprep.subr.mxu0 %v1651
  %3115 = vmatpush1.msra.mxu0 %v1650
  %3116 = vmatprep.subr.mxu0 %v1715
  %3117 = vmatpush1.msra.mxu0 %v1714
  %3118 = vmatprep.subr.mxu0 %v1779
  %3119 = vmatpush1.msra.mxu0 %v1778
  %3120 = vmatprep.subr.mxu0 %v1843
  %3121 = vmatpush1.msra.mxu0 %v1842
  %3122 = vmatprep.subr.mxu0 %v1907
  %3123 = vmatpush1.msra.mxu0 %v1906
  %3124 = vmatprep.subr.mxu0 %v1971
  %3125 = vmatpush1.msra.mxu0 %v1970
  %3126 = vmatprep.subr.mxu0 %v2035
  %3127 = vmatpush1.msra.mxu0 %v2034
  %3128 = vmatprep.mubr.f32.mxu0 %v21
  %3129 = vmatmul.mubr.f32.gmra.mrb[0].mxu0 %v20
  %v3130 = vpop.f32.mrb[0].mxu0
  %v3131 = vadd.f32 0.0, %v3130
  %v3132 = vpop.f32.mrb[0].mxu0
  %v3133 = vadd.f32 0.0, %v3132
  %3134 = vdwg.mxu0
  %3135 = vmatprep.subr.mxu0 %v53
  %3136 = vmatpush1.msra.mxu0 %v52
  %3137 = vmatprep.subr.mxu0 %v117
  %3138 = vmatpush1.msra.mxu0 %v116
  %3139 = vmatprep.subr.mxu0 %v181
  %3140 = vmatpush1.msra.mxu0 %v180
  %3141 = vmatprep.subr.mxu0 %v245
  %3142 = vmatpush1.msra.mxu0 %v244
  %3143 = vmatprep.subr.mxu0 %v309
  %3144 = vmatpush1.msra.mxu0 %v308
  %3145 = vmatprep.subr.mxu0 %v373
  %3146 = vmatpush1.msra.mxu0 %v372
  %3147 = vmatprep.subr.mxu0 %v437
  %3148 = vmatpush1.msra.mxu0 %v436
  %3149 = vmatprep.subr.mxu0 %v501
  %3150 = vmatpush1.msra.mxu0 %v500
  %3151 = vmatprep.subr.mxu0 %v565
  %3152 = vmatpush1.msra.mxu0 %v564
  %3153 = vmatprep.subr.mxu0 %v629
  %3154 = vmatpush1.msra.mxu0 %v628
  %3155 = vmatprep.subr.mxu0 %v693
  %3156 = vmatpush1.msra.mxu0 %v692
  %3157 = vmatprep.subr.mxu0 %v757
  %3158 = vmatpush1.msra.mxu0 %v756
  %3159 = vmatprep.subr.mxu0 %v821
  %3160 = vmatpush1.msra.mxu0 %v820
  %3161 = vmatprep.subr.mxu0 %v885
  %3162 = vmatpush1.msra.mxu0 %v884
  %3163 = vmatprep.subr.mxu0 %v949
  %3164 = vmatpush1.msra.mxu0 %v948
  %3165 = vmatprep.subr.mxu0 %v1013
  %3166 = vmatpush1.msra.mxu0 %v1012
  %3167 = vmatprep.subr.mxu0 %v1077
  %3168 = vmatpush1.msra.mxu0 %v1076
  %3169 = vmatprep.subr.mxu0 %v1141
  %3170 = vmatpush1.msra.mxu0 %v1140
  %3171 = vmatprep.subr.mxu0 %v1205
  %3172 = vmatpush1.msra.mxu0 %v1204
  %3173 = vmatprep.subr.mxu0 %v1269
  %3174 = vmatpush1.msra.mxu0 %v1268
  %3175 = vmatprep.subr.mxu0 %v1333
  %3176 = vmatpush1.msra.mxu0 %v1332
  %3177 = vmatprep.subr.mxu0 %v1397
  %3178 = vmatpush1.msra.mxu0 %v1396
  %3179 = vmatprep.subr.mxu0 %v1461
  %3180 = vmatpush1.msra.mxu0 %v1460
  %3181 = vmatprep.subr.mxu0 %v1525
  %3182 = vmatpush1.msra.mxu0 %v1524
  %3183 = vmatprep.subr.mxu0 %v1589
  %3184 = vmatpush1.msra.mxu0 %v1588
  %3185 = vmatprep.subr.mxu0 %v1653
  %3186 = vmatpush1.msra.mxu0 %v1652
  %3187 = vmatprep.subr.mxu0 %v1717
  %3188 = vmatpush1.msra.mxu0 %v1716
  %3189 = vmatprep.subr.mxu0 %v1781
  %3190 = vmatpush1.msra.mxu0 %v1780
  %3191 = vmatprep.subr.mxu0 %v1845
  %3192 = vmatpush1.msra.mxu0 %v1844
  %3193 = vmatprep.subr.mxu0 %v1909
  %3194 = vmatpush1.msra.mxu0 %v1908
  %3195 = vmatprep.subr.mxu0 %v1973
  %3196 = vmatpush1.msra.mxu0 %v1972
  %3197 = vmatprep.subr.mxu0 %v2037
  %3198 = vmatpush1.msra.mxu0 %v2036
  %3199 = vmatprep.mubr.f32.mxu0 %v21
  %3200 = vmatmul.mubr.f32.gmra.mrb[0].mxu0 %v20
  %v3201 = vpop.f32.mrb[0].mxu0
  %v3202 = vadd.f32 0.0, %v3201
  %v3203 = vpop.f32.mrb[0].mxu0
  %v3204 = vadd.f32 0.0, %v3203
  %3205 = vdwg.mxu0
  %3206 = vmatprep.subr.mxu0 %v55
  %3207 = vmatpush1.msra.mxu0 %v54
  %3208 = vmatprep.subr.mxu0 %v119
  %3209 = vmatpush1.msra.mxu0 %v118
  %3210 = vmatprep.subr.mxu0 %v183
  %3211 = vmatpush1.msra.mxu0 %v182
  %3212 = vmatprep.subr.mxu0 %v247
  %3213 = vmatpush1.msra.mxu0 %v246
  %3214 = vmatprep.subr.mxu0 %v311
  %3215 = vmatpush1.msra.mxu0 %v310
  %3216 = vmatprep.subr.mxu0 %v375
  %3217 = vmatpush1.msra.mxu0 %v374
  %3218 = vmatprep.subr.mxu0 %v439
  %3219 = vmatpush1.msra.mxu0 %v438
  %3220 = vmatprep.subr.mxu0 %v503
  %3221 = vmatpush1.msra.mxu0 %v502
  %3222 = vmatprep.subr.mxu0 %v567
  %3223 = vmatpush1.msra.mxu0 %v566
  %3224 = vmatprep.subr.mxu0 %v631
  %3225 = vmatpush1.msra.mxu0 %v630
  %3226 = vmatprep.subr.mxu0 %v695
  %3227 = vmatpush1.msra.mxu0 %v694
  %3228 = vmatprep.subr.mxu0 %v759
  %3229 = vmatpush1.msra.mxu0 %v758
  %3230 = vmatprep.subr.mxu0 %v823
  %3231 = vmatpush1.msra.mxu0 %v822
  %3232 = vmatprep.subr.mxu0 %v887
  %3233 = vmatpush1.msra.mxu0 %v886
  %3234 = vmatprep.subr.mxu0 %v951
  %3235 = vmatpush1.msra.mxu0 %v950
  %3236 = vmatprep.subr.mxu0 %v1015
  %3237 = vmatpush1.msra.mxu0 %v1014
  %3238 = vmatprep.subr.mxu0 %v1079
  %3239 = vmatpush1.msra.mxu0 %v1078
  %3240 = vmatprep.subr.mxu0 %v1143
  %3241 = vmatpush1.msra.mxu0 %v1142
  %3242 = vmatprep.subr.mxu0 %v1207
  %3243 = vmatpush1.msra.mxu0 %v1206
  %3244 = vmatprep.subr.mxu0 %v1271
  %3245 = vmatpush1.msra.mxu0 %v1270
  %3246 = vmatprep.subr.mxu0 %v1335
  %3247 = vmatpush1.msra.mxu0 %v1334
  %3248 = vmatprep.subr.mxu0 %v1399
  %3249 = vmatpush1.msra.mxu0 %v1398
  %3250 = vmatprep.subr.mxu0 %v1463
  %3251 = vmatpush1.msra.mxu0 %v1462
  %3252 = vmatprep.subr.mxu0 %v1527
  %3253 = vmatpush1.msra.mxu0 %v1526
  %3254 = vmatprep.subr.mxu0 %v1591
  %3255 = vmatpush1.msra.mxu0 %v1590
  %3256 = vmatprep.subr.mxu0 %v1655
  %3257 = vmatpush1.msra.mxu0 %v1654
  %3258 = vmatprep.subr.mxu0 %v1719
  %3259 = vmatpush1.msra.mxu0 %v1718
  %3260 = vmatprep.subr.mxu0 %v1783
  %3261 = vmatpush1.msra.mxu0 %v1782
  %3262 = vmatprep.subr.mxu0 %v1847
  %3263 = vmatpush1.msra.mxu0 %v1846
  %3264 = vmatprep.subr.mxu0 %v1911
  %3265 = vmatpush1.msra.mxu0 %v1910
  %3266 = vmatprep.subr.mxu0 %v1975
  %3267 = vmatpush1.msra.mxu0 %v1974
  %3268 = vmatprep.subr.mxu0 %v2039
  %3269 = vmatpush1.msra.mxu0 %v2038
  %3270 = vmatprep.mubr.f32.mxu0 %v21
  %3271 = vmatmul.mubr.f32.gmra.mrb[0].mxu0 %v20
  %v3272 = vpop.f32.mrb[0].mxu0
  %v3273 = vadd.f32 0.0, %v3272
  %v3274 = vpop.f32.mrb[0].mxu0
  %v3275 = vadd.f32 0.0, %v3274
  %3276 = vdwg.mxu0
  %3277 = vmatprep.subr.mxu0 %v57
  %3278 = vmatpush1.msra.mxu0 %v56
  %3279 = vmatprep.subr.mxu0 %v121
  %3280 = vmatpush1.msra.mxu0 %v120
  %3281 = vmatprep.subr.mxu0 %v185
  %3282 = vmatpush1.msra.mxu0 %v184
  %3283 = vmatprep.subr.mxu0 %v249
  %3284 = vmatpush1.msra.mxu0 %v248
  %3285 = vmatprep.subr.mxu0 %v313
  %3286 = vmatpush1.msra.mxu0 %v312
  %3287 = vmatprep.subr.mxu0 %v377
  %3288 = vmatpush1.msra.mxu0 %v376
  %3289 = vmatprep.subr.mxu0 %v441
  %3290 = vmatpush1.msra.mxu0 %v440
  %3291 = vmatprep.subr.mxu0 %v505
  %3292 = vmatpush1.msra.mxu0 %v504
  %3293 = vmatprep.subr.mxu0 %v569
  %3294 = vmatpush1.msra.mxu0 %v568
  %3295 = vmatprep.subr.mxu0 %v633
  %3296 = vmatpush1.msra.mxu0 %v632
  %3297 = vmatprep.subr.mxu0 %v697
  %3298 = vmatpush1.msra.mxu0 %v696
  %3299 = vmatprep.subr.mxu0 %v761
  %3300 = vmatpush1.msra.mxu0 %v760
  %3301 = vmatprep.subr.mxu0 %v825
  %3302 = vmatpush1.msra.mxu0 %v824
  %3303 = vmatprep.subr.mxu0 %v889
  %3304 = vmatpush1.msra.mxu0 %v888
  %3305 = vmatprep.subr.mxu0 %v953
  %3306 = vmatpush1.msra.mxu0 %v952
  %3307 = vmatprep.subr.mxu0 %v1017
  %3308 = vmatpush1.msra.mxu0 %v1016
  %3309 = vmatprep.subr.mxu0 %v1081
  %3310 = vmatpush1.msra.mxu0 %v1080
  %3311 = vmatprep.subr.mxu0 %v1145
  %3312 = vmatpush1.msra.mxu0 %v1144
  %3313 = vmatprep.subr.mxu0 %v1209
  %3314 = vmatpush1.msra.mxu0 %v1208
  %3315 = vmatprep.subr.mxu0 %v1273
  %3316 = vmatpush1.msra.mxu0 %v1272
  %3317 = vmatprep.subr.mxu0 %v1337
  %3318 = vmatpush1.msra.mxu0 %v1336
  %3319 = vmatprep.subr.mxu0 %v1401
  %3320 = vmatpush1.msra.mxu0 %v1400
  %3321 = vmatprep.subr.mxu0 %v1465
  %3322 = vmatpush1.msra.mxu0 %v1464
  %3323 = vmatprep.subr.mxu0 %v1529
  %3324 = vmatpush1.msra.mxu0 %v1528
  %3325 = vmatprep.subr.mxu0 %v1593
  %3326 = vmatpush1.msra.mxu0 %v1592
  %3327 = vmatprep.subr.mxu0 %v1657
  %3328 = vmatpush1.msra.mxu0 %v1656
  %3329 = vmatprep.subr.mxu0 %v1721
  %3330 = vmatpush1.msra.mxu0 %v1720
  %3331 = vmatprep.subr.mxu0 %v1785
  %3332 = vmatpush1.msra.mxu0 %v1784
  %3333 = vmatprep.subr.mxu0 %v1849
  %3334 = vmatpush1.msra.mxu0 %v1848
  %3335 = vmatprep.subr.mxu0 %v1913
  %3336 = vmatpush1.msra.mxu0 %v1912
  %3337 = vmatprep.subr.mxu0 %v1977
  %3338 = vmatpush1.msra.mxu0 %v1976
  %3339 = vmatprep.subr.mxu0 %v2041
  %3340 = vmatpush1.msra.mxu0 %v2040
  %3341 = vmatprep.mubr.f32.mxu0 %v21
  %3342 = vmatmul.mubr.f32.gmra.mrb[0].mxu0 %v20
  %v3343 = vpop.f32.mrb[0].mxu0
  %v3344 = vadd.f32 0.0, %v3343
  %v3345 = vpop.f32.mrb[0].mxu0
  %v3346 = vadd.f32 0.0, %v3345
  %3347 = vdwg.mxu0
  %3348 = vmatprep.subr.mxu0 %v59
  %3349 = vmatpush1.msra.mxu0 %v58
  %3350 = vmatprep.subr.mxu0 %v123
  %3351 = vmatpush1.msra.mxu0 %v122
  %3352 = vmatprep.subr.mxu0 %v187
  %3353 = vmatpush1.msra.mxu0 %v186
  %3354 = vmatprep.subr.mxu0 %v251
  %3355 = vmatpush1.msra.mxu0 %v250
  %3356 = vmatprep.subr.mxu0 %v315
  %3357 = vmatpush1.msra.mxu0 %v314
  %3358 = vmatprep.subr.mxu0 %v379
  %3359 = vmatpush1.msra.mxu0 %v378
  %3360 = vmatprep.subr.mxu0 %v443
  %3361 = vmatpush1.msra.mxu0 %v442
  %3362 = vmatprep.subr.mxu0 %v507
  %3363 = vmatpush1.msra.mxu0 %v506
  %3364 = vmatprep.subr.mxu0 %v571
  %3365 = vmatpush1.msra.mxu0 %v570
  %3366 = vmatprep.subr.mxu0 %v635
  %3367 = vmatpush1.msra.mxu0 %v634
  %3368 = vmatprep.subr.mxu0 %v699
  %3369 = vmatpush1.msra.mxu0 %v698
  %3370 = vmatprep.subr.mxu0 %v763
  %3371 = vmatpush1.msra.mxu0 %v762
  %3372 = vmatprep.subr.mxu0 %v827
  %3373 = vmatpush1.msra.mxu0 %v826
  %3374 = vmatprep.subr.mxu0 %v891
  %3375 = vmatpush1.msra.mxu0 %v890
  %3376 = vmatprep.subr.mxu0 %v955
  %3377 = vmatpush1.msra.mxu0 %v954
  %3378 = vmatprep.subr.mxu0 %v1019
  %3379 = vmatpush1.msra.mxu0 %v1018
  %3380 = vmatprep.subr.mxu0 %v1083
  %3381 = vmatpush1.msra.mxu0 %v1082
  %3382 = vmatprep.subr.mxu0 %v1147
  %3383 = vmatpush1.msra.mxu0 %v1146
  %3384 = vmatprep.subr.mxu0 %v1211
  %3385 = vmatpush1.msra.mxu0 %v1210
  %3386 = vmatprep.subr.mxu0 %v1275
  %3387 = vmatpush1.msra.mxu0 %v1274
  %3388 = vmatprep.subr.mxu0 %v1339
  %3389 = vmatpush1.msra.mxu0 %v1338
  %3390 = vmatprep.subr.mxu0 %v1403
  %3391 = vmatpush1.msra.mxu0 %v1402
  %3392 = vmatprep.subr.mxu0 %v1467
  %3393 = vmatpush1.msra.mxu0 %v1466
  %3394 = vmatprep.subr.mxu0 %v1531
  %3395 = vmatpush1.msra.mxu0 %v1530
  %3396 = vmatprep.subr.mxu0 %v1595
  %3397 = vmatpush1.msra.mxu0 %v1594
  %3398 = vmatprep.subr.mxu0 %v1659
  %3399 = vmatpush1.msra.mxu0 %v1658
  %3400 = vmatprep.subr.mxu0 %v1723
  %3401 = vmatpush1.msra.mxu0 %v1722
  %3402 = vmatprep.subr.mxu0 %v1787
  %3403 = vmatpush1.msra.mxu0 %v1786
  %3404 = vmatprep.subr.mxu0 %v1851
  %3405 = vmatpush1.msra.mxu0 %v1850
  %3406 = vmatprep.subr.mxu0 %v1915
  %3407 = vmatpush1.msra.mxu0 %v1914
  %3408 = vmatprep.subr.mxu0 %v1979
  %3409 = vmatpush1.msra.mxu0 %v1978
  %3410 = vmatprep.subr.mxu0 %v2043
  %3411 = vmatpush1.msra.mxu0 %v2042
  %3412 = vmatprep.mubr.f32.mxu0 %v21
  %3413 = vmatmul.mubr.f32.gmra.mrb[0].mxu0 %v20
  %v3414 = vpop.f32.mrb[0].mxu0
  %v3415 = vadd.f32 0.0, %v3414
  %v3416 = vpop.f32.mrb[0].mxu0
  %v3417 = vadd.f32 0.0, %v3416
  %3418 = vdwg.mxu0
  %3419 = vmatprep.subr.mxu0 %v61
  %3420 = vmatpush1.msra.mxu0 %v60
  %3421 = vmatprep.subr.mxu0 %v125
  %3422 = vmatpush1.msra.mxu0 %v124
  %3423 = vmatprep.subr.mxu0 %v189
  %3424 = vmatpush1.msra.mxu0 %v188
  %3425 = vmatprep.subr.mxu0 %v253
  %3426 = vmatpush1.msra.mxu0 %v252
  %3427 = vmatprep.subr.mxu0 %v317
  %3428 = vmatpush1.msra.mxu0 %v316
  %3429 = vmatprep.subr.mxu0 %v381
  %3430 = vmatpush1.msra.mxu0 %v380
  %3431 = vmatprep.subr.mxu0 %v445
  %3432 = vmatpush1.msra.mxu0 %v444
  %3433 = vmatprep.subr.mxu0 %v509
  %3434 = vmatpush1.msra.mxu0 %v508
  %3435 = vmatprep.subr.mxu0 %v573
  %3436 = vmatpush1.msra.mxu0 %v572
  %3437 = vmatprep.subr.mxu0 %v637
  %3438 = vmatpush1.msra.mxu0 %v636
  %3439 = vmatprep.subr.mxu0 %v701
  %3440 = vmatpush1.msra.mxu0 %v700
  %3441 = vmatprep.subr.mxu0 %v765
  %3442 = vmatpush1.msra.mxu0 %v764
  %3443 = vmatprep.subr.mxu0 %v829
  %3444 = vmatpush1.msra.mxu0 %v828
  %3445 = vmatprep.subr.mxu0 %v893
  %3446 = vmatpush1.msra.mxu0 %v892
  %3447 = vmatprep.subr.mxu0 %v957
  %3448 = vmatpush1.msra.mxu0 %v956
  %3449 = vmatprep.subr.mxu0 %v1021
  %3450 = vmatpush1.msra.mxu0 %v1020
  %3451 = vmatprep.subr.mxu0 %v1085
  %3452 = vmatpush1.msra.mxu0 %v1084
  %3453 = vmatprep.subr.mxu0 %v1149
  %3454 = vmatpush1.msra.mxu0 %v1148
  %3455 = vmatprep.subr.mxu0 %v1213
  %3456 = vmatpush1.msra.mxu0 %v1212
  %3457 = vmatprep.subr.mxu0 %v1277
  %3458 = vmatpush1.msra.mxu0 %v1276
  %3459 = vmatprep.subr.mxu0 %v1341
  %3460 = vmatpush1.msra.mxu0 %v1340
  %3461 = vmatprep.subr.mxu0 %v1405
  %3462 = vmatpush1.msra.mxu0 %v1404
  %3463 = vmatprep.subr.mxu0 %v1469
  %3464 = vmatpush1.msra.mxu0 %v1468
  %3465 = vmatprep.subr.mxu0 %v1533
  %3466 = vmatpush1.msra.mxu0 %v1532
  %3467 = vmatprep.subr.mxu0 %v1597
  %3468 = vmatpush1.msra.mxu0 %v1596
  %3469 = vmatprep.subr.mxu0 %v1661
  %3470 = vmatpush1.msra.mxu0 %v1660
  %3471 = vmatprep.subr.mxu0 %v1725
  %3472 = vmatpush1.msra.mxu0 %v1724
  %3473 = vmatprep.subr.mxu0 %v1789
  %3474 = vmatpush1.msra.mxu0 %v1788
  %3475 = vmatprep.subr.mxu0 %v1853
  %3476 = vmatpush1.msra.mxu0 %v1852
  %3477 = vmatprep.subr.mxu0 %v1917
  %3478 = vmatpush1.msra.mxu0 %v1916
  %3479 = vmatprep.subr.mxu0 %v1981
  %3480 = vmatpush1.msra.mxu0 %v1980
  %3481 = vmatprep.subr.mxu0 %v2045
  %3482 = vmatpush1.msra.mxu0 %v2044
  %3483 = vmatprep.mubr.f32.mxu0 %v21
  %3484 = vmatmul.mubr.f32.gmra.mrb[0].mxu0 %v20
  %v3485 = vpop.f32.mrb[0].mxu0
  %v3486 = vadd.f32 0.0, %v3485
  %v3487 = vpop.f32.mrb[0].mxu0
  %v3488 = vadd.f32 0.0, %v3487
  %3489 = vdwg.mxu0
  %3490 = vmatprep.subr.mxu0 %v63
  %3491 = vmatpush1.msra.mxu0 %v62
  %3492 = vmatprep.subr.mxu0 %v127
  %3493 = vmatpush1.msra.mxu0 %v126
  %3494 = vmatprep.subr.mxu0 %v191
  %3495 = vmatpush1.msra.mxu0 %v190
  %3496 = vmatprep.subr.mxu0 %v255
  %3497 = vmatpush1.msra.mxu0 %v254
  %3498 = vmatprep.subr.mxu0 %v319
  %3499 = vmatpush1.msra.mxu0 %v318
  %3500 = vmatprep.subr.mxu0 %v383
  %3501 = vmatpush1.msra.mxu0 %v382
  %3502 = vmatprep.subr.mxu0 %v447
  %3503 = vmatpush1.msra.mxu0 %v446
  %3504 = vmatprep.subr.mxu0 %v511
  %3505 = vmatpush1.msra.mxu0 %v510
  %3506 = vmatprep.subr.mxu0 %v575
  %3507 = vmatpush1.msra.mxu0 %v574
  %3508 = vmatprep.subr.mxu0 %v639
  %3509 = vmatpush1.msra.mxu0 %v638
  %3510 = vmatprep.subr.mxu0 %v703
  %3511 = vmatpush1.msra.mxu0 %v702
  %3512 = vmatprep.subr.mxu0 %v767
  %3513 = vmatpush1.msra.mxu0 %v766
  %3514 = vmatprep.subr.mxu0 %v831
  %3515 = vmatpush1.msra.mxu0 %v830
  %3516 = vmatprep.subr.mxu0 %v895
  %3517 = vmatpush1.msra.mxu0 %v894
  %3518 = vmatprep.subr.mxu0 %v959
  %3519 = vmatpush1.msra.mxu0 %v958
  %3520 = vmatprep.subr.mxu0 %v1023
  %3521 = vmatpush1.msra.mxu0 %v1022
  %3522 = vmatprep.subr.mxu0 %v1087
  %3523 = vmatpush1.msra.mxu0 %v1086
  %3524 = vmatprep.subr.mxu0 %v1151
  %3525 = vmatpush1.msra.mxu0 %v1150
  %3526 = vmatprep.subr.mxu0 %v1215
  %3527 = vmatpush1.msra.mxu0 %v1214
  %3528 = vmatprep.subr.mxu0 %v1279
  %3529 = vmatpush1.msra.mxu0 %v1278
  %3530 = vmatprep.subr.mxu0 %v1343
  %3531 = vmatpush1.msra.mxu0 %v1342
  %3532 = vmatprep.subr.mxu0 %v1407
  %3533 = vmatpush1.msra.mxu0 %v1406
  %3534 = vmatprep.subr.mxu0 %v1471
  %3535 = vmatpush1.msra.mxu0 %v1470
  %3536 = vmatprep.subr.mxu0 %v1535
  %3537 = vmatpush1.msra.mxu0 %v1534
  %3538 = vmatprep.subr.mxu0 %v1599
  %3539 = vmatpush1.msra.mxu0 %v1598
  %3540 = vmatprep.subr.mxu0 %v1663
  %3541 = vmatpush1.msra.mxu0 %v1662
  %3542 = vmatprep.subr.mxu0 %v1727
  %3543 = vmatpush1.msra.mxu0 %v1726
  %3544 = vmatprep.subr.mxu0 %v1791
  %3545 = vmatpush1.msra.mxu0 %v1790
  %3546 = vmatprep.subr.mxu0 %v1855
  %3547 = vmatpush1.msra.mxu0 %v1854
  %3548 = vmatprep.subr.mxu0 %v1919
  %3549 = vmatpush1.msra.mxu0 %v1918
  %3550 = vmatprep.subr.mxu0 %v1983
  %3551 = vmatpush1.msra.mxu0 %v1982
  %3552 = vmatprep.subr.mxu0 %v2047
  %3553 = vmatpush1.msra.mxu0 %v2046
  %3554 = vmatprep.mubr.f32.mxu0 %v21
  %3555 = vmatmul.mubr.f32.gmra.mrb[0].mxu0 %v20
  %v3556 = vpop.f32.mrb[0].mxu0
  %v3557 = vadd.f32 0.0, %v3556
  %v3558 = vpop.f32.mrb[0].mxu0
  %v3559 = vadd.f32 0.0, %v3558
  %3560 = vdwg.mxu0
  %3561 = vmatprep.subr.mxu0 %v65
  %3562 = vmatpush1.msra.mxu0 %v64
  %3563 = vmatprep.subr.mxu0 %v129
  %3564 = vmatpush1.msra.mxu0 %v128
  %3565 = vmatprep.subr.mxu0 %v193
  %3566 = vmatpush1.msra.mxu0 %v192
  %3567 = vmatprep.subr.mxu0 %v257
  %3568 = vmatpush1.msra.mxu0 %v256
  %3569 = vmatprep.subr.mxu0 %v321
  %3570 = vmatpush1.msra.mxu0 %v320
  %3571 = vmatprep.subr.mxu0 %v385
  %3572 = vmatpush1.msra.mxu0 %v384
  %3573 = vmatprep.subr.mxu0 %v449
  %3574 = vmatpush1.msra.mxu0 %v448
  %3575 = vmatprep.subr.mxu0 %v513
  %3576 = vmatpush1.msra.mxu0 %v512
  %3577 = vmatprep.subr.mxu0 %v577
  %3578 = vmatpush1.msra.mxu0 %v576
  %3579 = vmatprep.subr.mxu0 %v641
  %3580 = vmatpush1.msra.mxu0 %v640
  %3581 = vmatprep.subr.mxu0 %v705
  %3582 = vmatpush1.msra.mxu0 %v704
  %3583 = vmatprep.subr.mxu0 %v769
  %3584 = vmatpush1.msra.mxu0 %v768
  %3585 = vmatprep.subr.mxu0 %v833
  %3586 = vmatpush1.msra.mxu0 %v832
  %3587 = vmatprep.subr.mxu0 %v897
  %3588 = vmatpush1.msra.mxu0 %v896
  %3589 = vmatprep.subr.mxu0 %v961
  %3590 = vmatpush1.msra.mxu0 %v960
  %3591 = vmatprep.subr.mxu0 %v1025
  %3592 = vmatpush1.msra.mxu0 %v1024
  %3593 = vmatprep.subr.mxu0 %v1089
  %3594 = vmatpush1.msra.mxu0 %v1088
  %3595 = vmatprep.subr.mxu0 %v1153
  %3596 = vmatpush1.msra.mxu0 %v1152
  %3597 = vmatprep.subr.mxu0 %v1217
  %3598 = vmatpush1.msra.mxu0 %v1216
  %3599 = vmatprep.subr.mxu0 %v1281
  %3600 = vmatpush1.msra.mxu0 %v1280
  %3601 = vmatprep.subr.mxu0 %v1345
  %3602 = vmatpush1.msra.mxu0 %v1344
  %3603 = vmatprep.subr.mxu0 %v1409
  %3604 = vmatpush1.msra.mxu0 %v1408
  %3605 = vmatprep.subr.mxu0 %v1473
  %3606 = vmatpush1.msra.mxu0 %v1472
  %3607 = vmatprep.subr.mxu0 %v1537
  %3608 = vmatpush1.msra.mxu0 %v1536
  %3609 = vmatprep.subr.mxu0 %v1601
  %3610 = vmatpush1.msra.mxu0 %v1600
  %3611 = vmatprep.subr.mxu0 %v1665
  %3612 = vmatpush1.msra.mxu0 %v1664
  %3613 = vmatprep.subr.mxu0 %v1729
  %3614 = vmatpush1.msra.mxu0 %v1728
  %3615 = vmatprep.subr.mxu0 %v1793
  %3616 = vmatpush1.msra.mxu0 %v1792
  %3617 = vmatprep.subr.mxu0 %v1857
  %3618 = vmatpush1.msra.mxu0 %v1856
  %3619 = vmatprep.subr.mxu0 %v1921
  %3620 = vmatpush1.msra.mxu0 %v1920
  %3621 = vmatprep.subr.mxu0 %v1985
  %3622 = vmatpush1.msra.mxu0 %v1984
  %3623 = vmatprep.subr.mxu0 %v2049
  %3624 = vmatpush1.msra.mxu0 %v2048
  %3625 = vmatprep.mubr.f32.mxu0 %v21
  %3626 = vmatmul.mubr.f32.gmra.mrb[0].mxu0 %v20
  %v3627 = vpop.f32.mrb[0].mxu0
  %v3628 = vadd.f32 0.0, %v3627
  %v3629 = vpop.f32.mrb[0].mxu0
  %v3630 = vadd.f32 0.0, %v3629
  %3631 = vdwg.mxu0
  %3632 = vmatprep.subr.mxu0 %v67
  %3633 = vmatpush1.msra.mxu0 %v66
  %3634 = vmatprep.subr.mxu0 %v131
  %3635 = vmatpush1.msra.mxu0 %v130
  %3636 = vmatprep.subr.mxu0 %v195
  %3637 = vmatpush1.msra.mxu0 %v194
  %3638 = vmatprep.subr.mxu0 %v259
  %3639 = vmatpush1.msra.mxu0 %v258
  %3640 = vmatprep.subr.mxu0 %v323
  %3641 = vmatpush1.msra.mxu0 %v322
  %3642 = vmatprep.subr.mxu0 %v387
  %3643 = vmatpush1.msra.mxu0 %v386
  %3644 = vmatprep.subr.mxu0 %v451
  %3645 = vmatpush1.msra.mxu0 %v450
  %3646 = vmatprep.subr.mxu0 %v515
  %3647 = vmatpush1.msra.mxu0 %v514
  %3648 = vmatprep.subr.mxu0 %v579
  %3649 = vmatpush1.msra.mxu0 %v578
  %3650 = vmatprep.subr.mxu0 %v643
  %3651 = vmatpush1.msra.mxu0 %v642
  %3652 = vmatprep.subr.mxu0 %v707
  %3653 = vmatpush1.msra.mxu0 %v706
  %3654 = vmatprep.subr.mxu0 %v771
  %3655 = vmatpush1.msra.mxu0 %v770
  %3656 = vmatprep.subr.mxu0 %v835
  %3657 = vmatpush1.msra.mxu0 %v834
  %3658 = vmatprep.subr.mxu0 %v899
  %3659 = vmatpush1.msra.mxu0 %v898
  %3660 = vmatprep.subr.mxu0 %v963
  %3661 = vmatpush1.msra.mxu0 %v962
  %3662 = vmatprep.subr.mxu0 %v1027
  %3663 = vmatpush1.msra.mxu0 %v1026
  %3664 = vmatprep.subr.mxu0 %v1091
  %3665 = vmatpush1.msra.mxu0 %v1090
  %3666 = vmatprep.subr.mxu0 %v1155
  %3667 = vmatpush1.msra.mxu0 %v1154
  %3668 = vmatprep.subr.mxu0 %v1219
  %3669 = vmatpush1.msra.mxu0 %v1218
  %3670 = vmatprep.subr.mxu0 %v1283
  %3671 = vmatpush1.msra.mxu0 %v1282
  %3672 = vmatprep.subr.mxu0 %v1347
  %3673 = vmatpush1.msra.mxu0 %v1346
  %3674 = vmatprep.subr.mxu0 %v1411
  %3675 = vmatpush1.msra.mxu0 %v1410
  %3676 = vmatprep.subr.mxu0 %v1475
  %3677 = vmatpush1.msra.mxu0 %v1474
  %3678 = vmatprep.subr.mxu0 %v1539
  %3679 = vmatpush1.msra.mxu0 %v1538
  %3680 = vmatprep.subr.mxu0 %v1603
  %3681 = vmatpush1.msra.mxu0 %v1602
  %3682 = vmatprep.subr.mxu0 %v1667
  %3683 = vmatpush1.msra.mxu0 %v1666
  %3684 = vmatprep.subr.mxu0 %v1731
  %3685 = vmatpush1.msra.mxu0 %v1730
  %3686 = vmatprep.subr.mxu0 %v1795
  %3687 = vmatpush1.msra.mxu0 %v1794
  %3688 = vmatprep.subr.mxu0 %v1859
  %3689 = vmatpush1.msra.mxu0 %v1858
  %3690 = vmatprep.subr.mxu0 %v1923
  %3691 = vmatpush1.msra.mxu0 %v1922
  %3692 = vmatprep.subr.mxu0 %v1987
  %3693 = vmatpush1.msra.mxu0 %v1986
  %3694 = vmatprep.subr.mxu0 %v2051
  %3695 = vmatpush1.msra.mxu0 %v2050
  %3696 = vmatprep.mubr.f32.mxu0 %v21
  %3697 = vmatmul.mubr.f32.gmra.mrb[0].mxu0 %v20
  %v3698 = vpop.f32.mrb[0].mxu0
  %v3699 = vadd.f32 0.0, %v3698
  %v3700 = vpop.f32.mrb[0].mxu0
  %v3701 = vadd.f32 0.0, %v3700
  %3702 = vdwg.mxu0
  %3703 = vmatprep.subr.mxu0 %v69
  %3704 = vmatpush1.msra.mxu0 %v68
  %3705 = vmatprep.subr.mxu0 %v133
  %3706 = vmatpush1.msra.mxu0 %v132
  %3707 = vmatprep.subr.mxu0 %v197
  %3708 = vmatpush1.msra.mxu0 %v196
  %3709 = vmatprep.subr.mxu0 %v261
  %3710 = vmatpush1.msra.mxu0 %v260
  %3711 = vmatprep.subr.mxu0 %v325
  %3712 = vmatpush1.msra.mxu0 %v324
  %3713 = vmatprep.subr.mxu0 %v389
  %3714 = vmatpush1.msra.mxu0 %v388
  %3715 = vmatprep.subr.mxu0 %v453
  %3716 = vmatpush1.msra.mxu0 %v452
  %3717 = vmatprep.subr.mxu0 %v517
  %3718 = vmatpush1.msra.mxu0 %v516
  %3719 = vmatprep.subr.mxu0 %v581
  %3720 = vmatpush1.msra.mxu0 %v580
  %3721 = vmatprep.subr.mxu0 %v645
  %3722 = vmatpush1.msra.mxu0 %v644
  %3723 = vmatprep.subr.mxu0 %v709
  %3724 = vmatpush1.msra.mxu0 %v708
  %3725 = vmatprep.subr.mxu0 %v773
  %3726 = vmatpush1.msra.mxu0 %v772
  %3727 = vmatprep.subr.mxu0 %v837
  %3728 = vmatpush1.msra.mxu0 %v836
  %3729 = vmatprep.subr.mxu0 %v901
  %3730 = vmatpush1.msra.mxu0 %v900
  %3731 = vmatprep.subr.mxu0 %v965
  %3732 = vmatpush1.msra.mxu0 %v964
  %3733 = vmatprep.subr.mxu0 %v1029
  %3734 = vmatpush1.msra.mxu0 %v1028
  %3735 = vmatprep.subr.mxu0 %v1093
  %3736 = vmatpush1.msra.mxu0 %v1092
  %3737 = vmatprep.subr.mxu0 %v1157
  %3738 = vmatpush1.msra.mxu0 %v1156
  %3739 = vmatprep.subr.mxu0 %v1221
  %3740 = vmatpush1.msra.mxu0 %v1220
  %3741 = vmatprep.subr.mxu0 %v1285
  %3742 = vmatpush1.msra.mxu0 %v1284
  %3743 = vmatprep.subr.mxu0 %v1349
  %3744 = vmatpush1.msra.mxu0 %v1348
  %3745 = vmatprep.subr.mxu0 %v1413
  %3746 = vmatpush1.msra.mxu0 %v1412
  %3747 = vmatprep.subr.mxu0 %v1477
  %3748 = vmatpush1.msra.mxu0 %v1476
  %3749 = vmatprep.subr.mxu0 %v1541
  %3750 = vmatpush1.msra.mxu0 %v1540
  %3751 = vmatprep.subr.mxu0 %v1605
  %3752 = vmatpush1.msra.mxu0 %v1604
  %3753 = vmatprep.subr.mxu0 %v1669
  %3754 = vmatpush1.msra.mxu0 %v1668
  %3755 = vmatprep.subr.mxu0 %v1733
  %3756 = vmatpush1.msra.mxu0 %v1732
  %3757 = vmatprep.subr.mxu0 %v1797
  %3758 = vmatpush1.msra.mxu0 %v1796
  %3759 = vmatprep.subr.mxu0 %v1861
  %3760 = vmatpush1.msra.mxu0 %v1860
  %3761 = vmatprep.subr.mxu0 %v1925
  %3762 = vmatpush1.msra.mxu0 %v1924
  %3763 = vmatprep.subr.mxu0 %v1989
  %3764 = vmatpush1.msra.mxu0 %v1988
  %3765 = vmatprep.subr.mxu0 %v2053
  %3766 = vmatpush1.msra.mxu0 %v2052
  %3767 = vmatprep.mubr.f32.mxu0 %v21
  %3768 = vmatmul.mubr.f32.gmra.mrb[0].mxu0 %v20
  %v3769 = vpop.f32.mrb[0].mxu0
  %v3770 = vadd.f32 0.0, %v3769
  %v3771 = vpop.f32.mrb[0].mxu0
  %v3772 = vadd.f32 0.0, %v3771
  %3773 = vdwg.mxu0
  %3774 = vmatprep.subr.mxu0 %v71
  %3775 = vmatpush1.msra.mxu0 %v70
  %3776 = vmatprep.subr.mxu0 %v135
  %3777 = vmatpush1.msra.mxu0 %v134
  %3778 = vmatprep.subr.mxu0 %v199
  %3779 = vmatpush1.msra.mxu0 %v198
  %3780 = vmatprep.subr.mxu0 %v263
  %3781 = vmatpush1.msra.mxu0 %v262
  %3782 = vmatprep.subr.mxu0 %v327
  %3783 = vmatpush1.msra.mxu0 %v326
  %3784 = vmatprep.subr.mxu0 %v391
  %3785 = vmatpush1.msra.mxu0 %v390
  %3786 = vmatprep.subr.mxu0 %v455
  %3787 = vmatpush1.msra.mxu0 %v454
  %3788 = vmatprep.subr.mxu0 %v519
  %3789 = vmatpush1.msra.mxu0 %v518
  %3790 = vmatprep.subr.mxu0 %v583
  %3791 = vmatpush1.msra.mxu0 %v582
  %3792 = vmatprep.subr.mxu0 %v647
  %3793 = vmatpush1.msra.mxu0 %v646
  %3794 = vmatprep.subr.mxu0 %v711
  %3795 = vmatpush1.msra.mxu0 %v710
  %3796 = vmatprep.subr.mxu0 %v775
  %3797 = vmatpush1.msra.mxu0 %v774
  %3798 = vmatprep.subr.mxu0 %v839
  %3799 = vmatpush1.msra.mxu0 %v838
  %3800 = vmatprep.subr.mxu0 %v903
  %3801 = vmatpush1.msra.mxu0 %v902
  %3802 = vmatprep.subr.mxu0 %v967
  %3803 = vmatpush1.msra.mxu0 %v966
  %3804 = vmatprep.subr.mxu0 %v1031
  %3805 = vmatpush1.msra.mxu0 %v1030
  %3806 = vmatprep.subr.mxu0 %v1095
  %3807 = vmatpush1.msra.mxu0 %v1094
  %3808 = vmatprep.subr.mxu0 %v1159
  %3809 = vmatpush1.msra.mxu0 %v1158
  %3810 = vmatprep.subr.mxu0 %v1223
  %3811 = vmatpush1.msra.mxu0 %v1222
  %3812 = vmatprep.subr.mxu0 %v1287
  %3813 = vmatpush1.msra.mxu0 %v1286
  %3814 = vmatprep.subr.mxu0 %v1351
  %3815 = vmatpush1.msra.mxu0 %v1350
  %3816 = vmatprep.subr.mxu0 %v1415
  %3817 = vmatpush1.msra.mxu0 %v1414
  %3818 = vmatprep.subr.mxu0 %v1479
  %3819 = vmatpush1.msra.mxu0 %v1478
  %3820 = vmatprep.subr.mxu0 %v1543
  %3821 = vmatpush1.msra.mxu0 %v1542
  %3822 = vmatprep.subr.mxu0 %v1607
  %3823 = vmatpush1.msra.mxu0 %v1606
  %3824 = vmatprep.subr.mxu0 %v1671
  %3825 = vmatpush1.msra.mxu0 %v1670
  %3826 = vmatprep.subr.mxu0 %v1735
  %3827 = vmatpush1.msra.mxu0 %v1734
  %3828 = vmatprep.subr.mxu0 %v1799
  %3829 = vmatpush1.msra.mxu0 %v1798
  %3830 = vmatprep.subr.mxu0 %v1863
  %3831 = vmatpush1.msra.mxu0 %v1862
  %3832 = vmatprep.subr.mxu0 %v1927
  %3833 = vmatpush1.msra.mxu0 %v1926
  %3834 = vmatprep.subr.mxu0 %v1991
  %3835 = vmatpush1.msra.mxu0 %v1990
  %3836 = vmatprep.subr.mxu0 %v2055
  %3837 = vmatpush1.msra.mxu0 %v2054
  %3838 = vmatprep.mubr.f32.mxu0 %v21
  %3839 = vmatmul.mubr.f32.gmra.mrb[0].mxu0 %v20
  %v3840 = vpop.f32.mrb[0].mxu0
  %v3841 = vadd.f32 0.0, %v3840
  %v3842 = vpop.f32.mrb[0].mxu0
  %v3843 = vadd.f32 0.0, %v3842
  %3844 = vdwg.mxu0
  %3845 = vmatprep.subr.mxu0 %v73
  %3846 = vmatpush1.msra.mxu0 %v72
  %3847 = vmatprep.subr.mxu0 %v137
  %3848 = vmatpush1.msra.mxu0 %v136
  %3849 = vmatprep.subr.mxu0 %v201
  %3850 = vmatpush1.msra.mxu0 %v200
  %3851 = vmatprep.subr.mxu0 %v265
  %3852 = vmatpush1.msra.mxu0 %v264
  %3853 = vmatprep.subr.mxu0 %v329
  %3854 = vmatpush1.msra.mxu0 %v328
  %3855 = vmatprep.subr.mxu0 %v393
  %3856 = vmatpush1.msra.mxu0 %v392
  %3857 = vmatprep.subr.mxu0 %v457
  %3858 = vmatpush1.msra.mxu0 %v456
  %3859 = vmatprep.subr.mxu0 %v521
  %3860 = vmatpush1.msra.mxu0 %v520
  %3861 = vmatprep.subr.mxu0 %v585
  %3862 = vmatpush1.msra.mxu0 %v584
  %3863 = vmatprep.subr.mxu0 %v649
  %3864 = vmatpush1.msra.mxu0 %v648
  %3865 = vmatprep.subr.mxu0 %v713
  %3866 = vmatpush1.msra.mxu0 %v712
  %3867 = vmatprep.subr.mxu0 %v777
  %3868 = vmatpush1.msra.mxu0 %v776
  %3869 = vmatprep.subr.mxu0 %v841
  %3870 = vmatpush1.msra.mxu0 %v840
  %3871 = vmatprep.subr.mxu0 %v905
  %3872 = vmatpush1.msra.mxu0 %v904
  %3873 = vmatprep.subr.mxu0 %v969
  %3874 = vmatpush1.msra.mxu0 %v968
  %3875 = vmatprep.subr.mxu0 %v1033
  %3876 = vmatpush1.msra.mxu0 %v1032
  %3877 = vmatprep.subr.mxu0 %v1097
  %3878 = vmatpush1.msra.mxu0 %v1096
  %3879 = vmatprep.subr.mxu0 %v1161
  %3880 = vmatpush1.msra.mxu0 %v1160
  %3881 = vmatprep.subr.mxu0 %v1225
  %3882 = vmatpush1.msra.mxu0 %v1224
  %3883 = vmatprep.subr.mxu0 %v1289
  %3884 = vmatpush1.msra.mxu0 %v1288
  %3885 = vmatprep.subr.mxu0 %v1353
  %3886 = vmatpush1.msra.mxu0 %v1352
  %3887 = vmatprep.subr.mxu0 %v1417
  %3888 = vmatpush1.msra.mxu0 %v1416
  %3889 = vmatprep.subr.mxu0 %v1481
  %3890 = vmatpush1.msra.mxu0 %v1480
  %3891 = vmatprep.subr.mxu0 %v1545
  %3892 = vmatpush1.msra.mxu0 %v1544
  %3893 = vmatprep.subr.mxu0 %v1609
  %3894 = vmatpush1.msra.mxu0 %v1608
  %3895 = vmatprep.subr.mxu0 %v1673
  %3896 = vmatpush1.msra.mxu0 %v1672
  %3897 = vmatprep.subr.mxu0 %v1737
  %3898 = vmatpush1.msra.mxu0 %v1736
  %3899 = vmatprep.subr.mxu0 %v1801
  %3900 = vmatpush1.msra.mxu0 %v1800
  %3901 = vmatprep.subr.mxu0 %v1865
  %3902 = vmatpush1.msra.mxu0 %v1864
  %3903 = vmatprep.subr.mxu0 %v1929
  %3904 = vmatpush1.msra.mxu0 %v1928
  %3905 = vmatprep.subr.mxu0 %v1993
  %3906 = vmatpush1.msra.mxu0 %v1992
  %3907 = vmatprep.subr.mxu0 %v2057
  %3908 = vmatpush1.msra.mxu0 %v2056
  %3909 = vmatprep.mubr.f32.mxu0 %v21
  %3910 = vmatmul.mubr.f32.gmra.mrb[0].mxu0 %v20
  %v3911 = vpop.f32.mrb[0].mxu0
  %v3912 = vadd.f32 0.0, %v3911
  %v3913 = vpop.f32.mrb[0].mxu0
  %v3914 = vadd.f32 0.0, %v3913
  %3915 = vdwg.mxu0
  %3916 = vmatprep.subr.mxu0 %v75
  %3917 = vmatpush1.msra.mxu0 %v74
  %3918 = vmatprep.subr.mxu0 %v139
  %3919 = vmatpush1.msra.mxu0 %v138
  %3920 = vmatprep.subr.mxu0 %v203
  %3921 = vmatpush1.msra.mxu0 %v202
  %3922 = vmatprep.subr.mxu0 %v267
  %3923 = vmatpush1.msra.mxu0 %v266
  %3924 = vmatprep.subr.mxu0 %v331
  %3925 = vmatpush1.msra.mxu0 %v330
  %3926 = vmatprep.subr.mxu0 %v395
  %3927 = vmatpush1.msra.mxu0 %v394
  %3928 = vmatprep.subr.mxu0 %v459
  %3929 = vmatpush1.msra.mxu0 %v458
  %3930 = vmatprep.subr.mxu0 %v523
  %3931 = vmatpush1.msra.mxu0 %v522
  %3932 = vmatprep.subr.mxu0 %v587
  %3933 = vmatpush1.msra.mxu0 %v586
  %3934 = vmatprep.subr.mxu0 %v651
  %3935 = vmatpush1.msra.mxu0 %v650
  %3936 = vmatprep.subr.mxu0 %v715
  %3937 = vmatpush1.msra.mxu0 %v714
  %3938 = vmatprep.subr.mxu0 %v779
  %3939 = vmatpush1.msra.mxu0 %v778
  %3940 = vmatprep.subr.mxu0 %v843
  %3941 = vmatpush1.msra.mxu0 %v842
  %3942 = vmatprep.subr.mxu0 %v907
  %3943 = vmatpush1.msra.mxu0 %v906
  %3944 = vmatprep.subr.mxu0 %v971
  %3945 = vmatpush1.msra.mxu0 %v970
  %3946 = vmatprep.subr.mxu0 %v1035
  %3947 = vmatpush1.msra.mxu0 %v1034
  %3948 = vmatprep.subr.mxu0 %v1099
  %3949 = vmatpush1.msra.mxu0 %v1098
  %3950 = vmatprep.subr.mxu0 %v1163
  %3951 = vmatpush1.msra.mxu0 %v1162
  %3952 = vmatprep.subr.mxu0 %v1227
  %3953 = vmatpush1.msra.mxu0 %v1226
  %3954 = vmatprep.subr.mxu0 %v1291
  %3955 = vmatpush1.msra.mxu0 %v1290
  %3956 = vmatprep.subr.mxu0 %v1355
  %3957 = vmatpush1.msra.mxu0 %v1354
  %3958 = vmatprep.subr.mxu0 %v1419
  %3959 = vmatpush1.msra.mxu0 %v1418
  %3960 = vmatprep.subr.mxu0 %v1483
  %3961 = vmatpush1.msra.mxu0 %v1482
  %3962 = vmatprep.subr.mxu0 %v1547
  %3963 = vmatpush1.msra.mxu0 %v1546
  %3964 = vmatprep.subr.mxu0 %v1611
  %3965 = vmatpush1.msra.mxu0 %v1610
  %3966 = vmatprep.subr.mxu0 %v1675
  %3967 = vmatpush1.msra.mxu0 %v1674
  %3968 = vmatprep.subr.mxu0 %v1739
  %3969 = vmatpush1.msra.mxu0 %v1738
  %3970 = vmatprep.subr.mxu0 %v1803
  %3971 = vmatpush1.msra.mxu0 %v1802
  %3972 = vmatprep.subr.mxu0 %v1867
  %3973 = vmatpush1.msra.mxu0 %v1866
  %3974 = vmatprep.subr.mxu0 %v1931
  %3975 = vmatpush1.msra.mxu0 %v1930
  %3976 = vmatprep.subr.mxu0 %v1995
  %3977 = vmatpush1.msra.mxu0 %v1994
  %3978 = vmatprep.subr.mxu0 %v2059
  %3979 = vmatpush1.msra.mxu0 %v2058
  %3980 = vmatprep.mubr.f32.mxu0 %v21
  %3981 = vmatmul.mubr.f32.gmra.mrb[0].mxu0 %v20
  %v3982 = vpop.f32.mrb[0].mxu0
  %v3983 = vadd.f32 0.0, %v3982
  %v3984 = vpop.f32.mrb[0].mxu0
  %v3985 = vadd.f32 0.0, %v3984
  %3986 = vdwg.mxu0
  %3987 = vmatprep.subr.mxu0 %v77
  %3988 = vmatpush1.msra.mxu0 %v76
  %3989 = vmatprep.subr.mxu0 %v141
  %3990 = vmatpush1.msra.mxu0 %v140
  %3991 = vmatprep.subr.mxu0 %v205
  %3992 = vmatpush1.msra.mxu0 %v204
  %3993 = vmatprep.subr.mxu0 %v269
  %3994 = vmatpush1.msra.mxu0 %v268
  %3995 = vmatprep.subr.mxu0 %v333
  %3996 = vmatpush1.msra.mxu0 %v332
  %3997 = vmatprep.subr.mxu0 %v397
  %3998 = vmatpush1.msra.mxu0 %v396
  %3999 = vmatprep.subr.mxu0 %v461
  %4000 = vmatpush1.msra.mxu0 %v460
  %4001 = vmatprep.subr.mxu0 %v525
  %4002 = vmatpush1.msra.mxu0 %v524
  %4003 = vmatprep.subr.mxu0 %v589
  %4004 = vmatpush1.msra.mxu0 %v588
  %4005 = vmatprep.subr.mxu0 %v653
  %4006 = vmatpush1.msra.mxu0 %v652
  %4007 = vmatprep.subr.mxu0 %v717
  %4008 = vmatpush1.msra.mxu0 %v716
  %4009 = vmatprep.subr.mxu0 %v781
  %4010 = vmatpush1.msra.mxu0 %v780
  %4011 = vmatprep.subr.mxu0 %v845
  %4012 = vmatpush1.msra.mxu0 %v844
  %4013 = vmatprep.subr.mxu0 %v909
  %4014 = vmatpush1.msra.mxu0 %v908
  %4015 = vmatprep.subr.mxu0 %v973
  %4016 = vmatpush1.msra.mxu0 %v972
  %4017 = vmatprep.subr.mxu0 %v1037
  %4018 = vmatpush1.msra.mxu0 %v1036
  %4019 = vmatprep.subr.mxu0 %v1101
  %4020 = vmatpush1.msra.mxu0 %v1100
  %4021 = vmatprep.subr.mxu0 %v1165
  %4022 = vmatpush1.msra.mxu0 %v1164
  %4023 = vmatprep.subr.mxu0 %v1229
  %4024 = vmatpush1.msra.mxu0 %v1228
  %4025 = vmatprep.subr.mxu0 %v1293
  %4026 = vmatpush1.msra.mxu0 %v1292
  %4027 = vmatprep.subr.mxu0 %v1357
  %4028 = vmatpush1.msra.mxu0 %v1356
  %4029 = vmatprep.subr.mxu0 %v1421
  %4030 = vmatpush1.msra.mxu0 %v1420
  %4031 = vmatprep.subr.mxu0 %v1485
  %4032 = vmatpush1.msra.mxu0 %v1484
  %4033 = vmatprep.subr.mxu0 %v1549
  %4034 = vmatpush1.msra.mxu0 %v1548
  %4035 = vmatprep.subr.mxu0 %v1613
  %4036 = vmatpush1.msra.mxu0 %v1612
  %4037 = vmatprep.subr.mxu0 %v1677
  %4038 = vmatpush1.msra.mxu0 %v1676
  %4039 = vmatprep.subr.mxu0 %v1741
  %4040 = vmatpush1.msra.mxu0 %v1740
  %4041 = vmatprep.subr.mxu0 %v1805
  %4042 = vmatpush1.msra.mxu0 %v1804
  %4043 = vmatprep.subr.mxu0 %v1869
  %4044 = vmatpush1.msra.mxu0 %v1868
  %4045 = vmatprep.subr.mxu0 %v1933
  %4046 = vmatpush1.msra.mxu0 %v1932
  %4047 = vmatprep.subr.mxu0 %v1997
  %4048 = vmatpush1.msra.mxu0 %v1996
  %4049 = vmatprep.subr.mxu0 %v2061
  %4050 = vmatpush1.msra.mxu0 %v2060
  %4051 = vmatprep.mubr.f32.mxu0 %v21
  %4052 = vmatmul.mubr.f32.gmra.mrb[0].mxu0 %v20
  %v4053 = vpop.f32.mrb[0].mxu0
  %v4054 = vadd.f32 0.0, %v4053
  %v4055 = vpop.f32.mrb[0].mxu0
  %v4056 = vadd.f32 0.0, %v4055
  %4057 = vdwg.mxu0
  %4058 = vmatprep.subr.mxu0 %v79
  %4059 = vmatpush1.msra.mxu0 %v78
  %4060 = vmatprep.subr.mxu0 %v143
  %4061 = vmatpush1.msra.mxu0 %v142
  %4062 = vmatprep.subr.mxu0 %v207
  %4063 = vmatpush1.msra.mxu0 %v206
  %4064 = vmatprep.subr.mxu0 %v271
  %4065 = vmatpush1.msra.mxu0 %v270
  %4066 = vmatprep.subr.mxu0 %v335
  %4067 = vmatpush1.msra.mxu0 %v334
  %4068 = vmatprep.subr.mxu0 %v399
  %4069 = vmatpush1.msra.mxu0 %v398
  %4070 = vmatprep.subr.mxu0 %v463
  %4071 = vmatpush1.msra.mxu0 %v462
  %4072 = vmatprep.subr.mxu0 %v527
  %4073 = vmatpush1.msra.mxu0 %v526
  %4074 = vmatprep.subr.mxu0 %v591
  %4075 = vmatpush1.msra.mxu0 %v590
  %4076 = vmatprep.subr.mxu0 %v655
  %4077 = vmatpush1.msra.mxu0 %v654
  %4078 = vmatprep.subr.mxu0 %v719
  %4079 = vmatpush1.msra.mxu0 %v718
  %4080 = vmatprep.subr.mxu0 %v783
  %4081 = vmatpush1.msra.mxu0 %v782
  %4082 = vmatprep.subr.mxu0 %v847
  %4083 = vmatpush1.msra.mxu0 %v846
  %4084 = vmatprep.subr.mxu0 %v911
  %4085 = vmatpush1.msra.mxu0 %v910
  %4086 = vmatprep.subr.mxu0 %v975
  %4087 = vmatpush1.msra.mxu0 %v974
  %4088 = vmatprep.subr.mxu0 %v1039
  %4089 = vmatpush1.msra.mxu0 %v1038
  %4090 = vmatprep.subr.mxu0 %v1103
  %4091 = vmatpush1.msra.mxu0 %v1102
  %4092 = vmatprep.subr.mxu0 %v1167
  %4093 = vmatpush1.msra.mxu0 %v1166
  %4094 = vmatprep.subr.mxu0 %v1231
  %4095 = vmatpush1.msra.mxu0 %v1230
  %4096 = vmatprep.subr.mxu0 %v1295
  %4097 = vmatpush1.msra.mxu0 %v1294
  %4098 = vmatprep.subr.mxu0 %v1359
  %4099 = vmatpush1.msra.mxu0 %v1358
  %4100 = vmatprep.subr.mxu0 %v1423
  %4101 = vmatpush1.msra.mxu0 %v1422
  %4102 = vmatprep.subr.mxu0 %v1487
  %4103 = vmatpush1.msra.mxu0 %v1486
  %4104 = vmatprep.subr.mxu0 %v1551
  %4105 = vmatpush1.msra.mxu0 %v1550
  %4106 = vmatprep.subr.mxu0 %v1615
  %4107 = vmatpush1.msra.mxu0 %v1614
  %4108 = vmatprep.subr.mxu0 %v1679
  %4109 = vmatpush1.msra.mxu0 %v1678
  %4110 = vmatprep.subr.mxu0 %v1743
  %4111 = vmatpush1.msra.mxu0 %v1742
  %4112 = vmatprep.subr.mxu0 %v1807
  %4113 = vmatpush1.msra.mxu0 %v1806
  %4114 = vmatprep.subr.mxu0 %v1871
  %4115 = vmatpush1.msra.mxu0 %v1870
  %4116 = vmatprep.subr.mxu0 %v1935
  %4117 = vmatpush1.msra.mxu0 %v1934
  %4118 = vmatprep.subr.mxu0 %v1999
  %4119 = vmatpush1.msra.mxu0 %v1998
  %4120 = vmatprep.subr.mxu0 %v2063
  %4121 = vmatpush1.msra.mxu0 %v2062
  %4122 = vmatprep.mubr.f32.mxu0 %v21
  %4123 = vmatmul.mubr.f32.gmra.mrb[0].mxu0 %v20
  %v4124 = vpop.f32.mrb[0].mxu0
  %v4125 = vadd.f32 0.0, %v4124
  %v4126 = vpop.f32.mrb[0].mxu0
  %v4127 = vadd.f32 0.0, %v4126
  %4128 = vdwg.mxu0
  %4129 = vmatprep.subr.mxu0 %v81
  %4130 = vmatpush1.msra.mxu0 %v80
  %4131 = vmatprep.subr.mxu0 %v145
  %4132 = vmatpush1.msra.mxu0 %v144
  %4133 = vmatprep.subr.mxu0 %v209
  %4134 = vmatpush1.msra.mxu0 %v208
  %4135 = vmatprep.subr.mxu0 %v273
  %4136 = vmatpush1.msra.mxu0 %v272
  %4137 = vmatprep.subr.mxu0 %v337
  %4138 = vmatpush1.msra.mxu0 %v336
  %4139 = vmatprep.subr.mxu0 %v401
  %4140 = vmatpush1.msra.mxu0 %v400
  %4141 = vmatprep.subr.mxu0 %v465
  %4142 = vmatpush1.msra.mxu0 %v464
  %4143 = vmatprep.subr.mxu0 %v529
  %4144 = vmatpush1.msra.mxu0 %v528
  %4145 = vmatprep.subr.mxu0 %v593
  %4146 = vmatpush1.msra.mxu0 %v592
  %4147 = vmatprep.subr.mxu0 %v657
  %4148 = vmatpush1.msra.mxu0 %v656
  %4149 = vmatprep.subr.mxu0 %v721
  %4150 = vmatpush1.msra.mxu0 %v720
  %4151 = vmatprep.subr.mxu0 %v785
  %4152 = vmatpush1.msra.mxu0 %v784
  %4153 = vmatprep.subr.mxu0 %v849
  %4154 = vmatpush1.msra.mxu0 %v848
  %4155 = vmatprep.subr.mxu0 %v913
  %4156 = vmatpush1.msra.mxu0 %v912
  %4157 = vmatprep.subr.mxu0 %v977
  %4158 = vmatpush1.msra.mxu0 %v976
  %4159 = vmatprep.subr.mxu0 %v1041
  %4160 = vmatpush1.msra.mxu0 %v1040
  %4161 = vmatprep.subr.mxu0 %v1105
  %4162 = vmatpush1.msra.mxu0 %v1104
  %4163 = vmatprep.subr.mxu0 %v1169
  %4164 = vmatpush1.msra.mxu0 %v1168
  %4165 = vmatprep.subr.mxu0 %v1233
  %4166 = vmatpush1.msra.mxu0 %v1232
  %4167 = vmatprep.subr.mxu0 %v1297
  %4168 = vmatpush1.msra.mxu0 %v1296
  %4169 = vmatprep.subr.mxu0 %v1361
  %4170 = vmatpush1.msra.mxu0 %v1360
  %4171 = vmatprep.subr.mxu0 %v1425
  %4172 = vmatpush1.msra.mxu0 %v1424
  %4173 = vmatprep.subr.mxu0 %v1489
  %4174 = vmatpush1.msra.mxu0 %v1488
  %4175 = vmatprep.subr.mxu0 %v1553
  %4176 = vmatpush1.msra.mxu0 %v1552
  %4177 = vmatprep.subr.mxu0 %v1617
  %4178 = vmatpush1.msra.mxu0 %v1616
  %4179 = vmatprep.subr.mxu0 %v1681
  %4180 = vmatpush1.msra.mxu0 %v1680
  %4181 = vmatprep.subr.mxu0 %v1745
  %4182 = vmatpush1.msra.mxu0 %v1744
  %4183 = vmatprep.subr.mxu0 %v1809
  %4184 = vmatpush1.msra.mxu0 %v1808
  %4185 = vmatprep.subr.mxu0 %v1873
  %4186 = vmatpush1.msra.mxu0 %v1872
  %4187 = vmatprep.subr.mxu0 %v1937
  %4188 = vmatpush1.msra.mxu0 %v1936
  %4189 = vmatprep.subr.mxu0 %v2001
  %4190 = vmatpush1.msra.mxu0 %v2000
  %4191 = vmatprep.subr.mxu0 %v2065
  %4192 = vmatpush1.msra.mxu0 %v2064
  %4193 = vmatprep.mubr.f32.mxu0 %v21
  %4194 = vmatmul.mubr.f32.gmra.mrb[0].mxu0 %v20
  %v4195 = vpop.f32.mrb[0].mxu0
  %v4196 = vadd.f32 0.0, %v4195
  %v4197 = vpop.f32.mrb[0].mxu0
  %v4198 = vadd.f32 0.0, %v4197
  %4199 = vdwg.mxu0
  %4200 = vmatprep.subr.mxu0 %v83
  %4201 = vmatpush1.msra.mxu0 %v82
  %4202 = vmatprep.subr.mxu0 %v147
  %4203 = vmatpush1.msra.mxu0 %v146
  %4204 = vmatprep.subr.mxu0 %v211
  %4205 = vmatpush1.msra.mxu0 %v210
  %4206 = vmatprep.subr.mxu0 %v275
  %4207 = vmatpush1.msra.mxu0 %v274
  %4208 = vmatprep.subr.mxu0 %v339
  %4209 = vmatpush1.msra.mxu0 %v338
  %4210 = vmatprep.subr.mxu0 %v403
  %4211 = vmatpush1.msra.mxu0 %v402
  %4212 = vmatprep.subr.mxu0 %v467
  %4213 = vmatpush1.msra.mxu0 %v466
  %4214 = vmatprep.subr.mxu0 %v531
  %4215 = vmatpush1.msra.mxu0 %v530
  %4216 = vmatprep.subr.mxu0 %v595
  %4217 = vmatpush1.msra.mxu0 %v594
  %4218 = vmatprep.subr.mxu0 %v659
  %4219 = vmatpush1.msra.mxu0 %v658
  %4220 = vmatprep.subr.mxu0 %v723
  %4221 = vmatpush1.msra.mxu0 %v722
  %4222 = vmatprep.subr.mxu0 %v787
  %4223 = vmatpush1.msra.mxu0 %v786
  %4224 = vmatprep.subr.mxu0 %v851
  %4225 = vmatpush1.msra.mxu0 %v850
  %4226 = vmatprep.subr.mxu0 %v915
  %4227 = vmatpush1.msra.mxu0 %v914
  %4228 = vmatprep.subr.mxu0 %v979
  %4229 = vmatpush1.msra.mxu0 %v978
  %4230 = vmatprep.subr.mxu0 %v1043
  %4231 = vmatpush1.msra.mxu0 %v1042
  %4232 = vmatprep.subr.mxu0 %v1107
  %4233 = vmatpush1.msra.mxu0 %v1106
  %4234 = vmatprep.subr.mxu0 %v1171
  %4235 = vmatpush1.msra.mxu0 %v1170
  %4236 = vmatprep.subr.mxu0 %v1235
  %4237 = vmatpush1.msra.mxu0 %v1234
  %4238 = vmatprep.subr.mxu0 %v1299
  %4239 = vmatpush1.msra.mxu0 %v1298
  %4240 = vmatprep.subr.mxu0 %v1363
  %4241 = vmatpush1.msra.mxu0 %v1362
  %4242 = vmatprep.subr.mxu0 %v1427
  %4243 = vmatpush1.msra.mxu0 %v1426
  %4244 = vmatprep.subr.mxu0 %v1491
  %4245 = vmatpush1.msra.mxu0 %v1490
  %4246 = vmatprep.subr.mxu0 %v1555
  %4247 = vmatpush1.msra.mxu0 %v1554
  %4248 = vmatprep.subr.mxu0 %v1619
  %4249 = vmatpush1.msra.mxu0 %v1618
  %4250 = vmatprep.subr.mxu0 %v1683
  %4251 = vmatpush1.msra.mxu0 %v1682
  %4252 = vmatprep.subr.mxu0 %v1747
  %4253 = vmatpush1.msra.mxu0 %v1746
  %4254 = vmatprep.subr.mxu0 %v1811
  %4255 = vmatpush1.msra.mxu0 %v1810
  %4256 = vmatprep.subr.mxu0 %v1875
  %4257 = vmatpush1.msra.mxu0 %v1874
  %4258 = vmatprep.subr.mxu0 %v1939
  %4259 = vmatpush1.msra.mxu0 %v1938
  %4260 = vmatprep.subr.mxu0 %v2003
  %4261 = vmatpush1.msra.mxu0 %v2002
  %4262 = vmatprep.subr.mxu0 %v2067
  %4263 = vmatpush1.msra.mxu0 %v2066
  %4264 = vmatprep.mubr.f32.mxu0 %v21
  %4265 = vmatmul.mubr.f32.gmra.mrb[0].mxu0 %v20
  %v4266 = vpop.f32.mrb[0].mxu0
  %v4267 = vadd.f32 0.0, %v4266
  %v4268 = vpop.f32.mrb[0].mxu0
  %v4269 = vadd.f32 0.0, %v4268
  %4270 = vdwg.mxu0
  %4271 = vmatprep.subr.mxu0 %v85
  %4272 = vmatpush1.msra.mxu0 %v84
  %4273 = vmatprep.subr.mxu0 %v149
  %4274 = vmatpush1.msra.mxu0 %v148
  %4275 = vmatprep.subr.mxu0 %v213
  %4276 = vmatpush1.msra.mxu0 %v212
  %4277 = vmatprep.subr.mxu0 %v277
  %4278 = vmatpush1.msra.mxu0 %v276
  %4279 = vmatprep.subr.mxu0 %v341
  %4280 = vmatpush1.msra.mxu0 %v340
  %4281 = vmatprep.subr.mxu0 %v405
  %4282 = vmatpush1.msra.mxu0 %v404
  %4283 = vmatprep.subr.mxu0 %v469
  %4284 = vmatpush1.msra.mxu0 %v468
  %4285 = vmatprep.subr.mxu0 %v533
  %4286 = vmatpush1.msra.mxu0 %v532
  %4287 = vmatprep.subr.mxu0 %v597
  %4288 = vmatpush1.msra.mxu0 %v596
  %4289 = vmatprep.subr.mxu0 %v661
  %4290 = vmatpush1.msra.mxu0 %v660
  %4291 = vmatprep.subr.mxu0 %v725
  %4292 = vmatpush1.msra.mxu0 %v724
  %4293 = vmatprep.subr.mxu0 %v789
  %4294 = vmatpush1.msra.mxu0 %v788
  %4295 = vmatprep.subr.mxu0 %v853
  %4296 = vmatpush1.msra.mxu0 %v852
  %4297 = vmatprep.subr.mxu0 %v917
  %4298 = vmatpush1.msra.mxu0 %v916
  %4299 = vmatprep.subr.mxu0 %v981
  %4300 = vmatpush1.msra.mxu0 %v980
  %4301 = vmatprep.subr.mxu0 %v1045
  %4302 = vmatpush1.msra.mxu0 %v1044
  %4303 = vmatprep.subr.mxu0 %v1109
  %4304 = vmatpush1.msra.mxu0 %v1108
  %4305 = vmatprep.subr.mxu0 %v1173
  %4306 = vmatpush1.msra.mxu0 %v1172
  %4307 = vmatprep.subr.mxu0 %v1237
  %4308 = vmatpush1.msra.mxu0 %v1236
  %4309 = vmatprep.subr.mxu0 %v1301
  %4310 = vmatpush1.msra.mxu0 %v1300
  %4311 = vmatprep.subr.mxu0 %v1365
  %4312 = vmatpush1.msra.mxu0 %v1364
  %4313 = vmatprep.subr.mxu0 %v1429
  %4314 = vmatpush1.msra.mxu0 %v1428
  %4315 = vmatprep.subr.mxu0 %v1493
  %4316 = vmatpush1.msra.mxu0 %v1492
  %4317 = vmatprep.subr.mxu0 %v1557
  %4318 = vmatpush1.msra.mxu0 %v1556
  %4319 = vmatprep.subr.mxu0 %v1621
  %4320 = vmatpush1.msra.mxu0 %v1620
  %4321 = vmatprep.subr.mxu0 %v1685
  %4322 = vmatpush1.msra.mxu0 %v1684
  %4323 = vmatprep.subr.mxu0 %v1749
  %4324 = vmatpush1.msra.mxu0 %v1748
  %4325 = vmatprep.subr.mxu0 %v1813
  %4326 = vmatpush1.msra.mxu0 %v1812
  %4327 = vmatprep.subr.mxu0 %v1877
  %4328 = vmatpush1.msra.mxu0 %v1876
  %4329 = vmatprep.subr.mxu0 %v1941
  %4330 = vmatpush1.msra.mxu0 %v1940
  %4331 = vmatprep.subr.mxu0 %v2005
  %4332 = vmatpush1.msra.mxu0 %v2004
  %4333 = vmatprep.subr.mxu0 %v2069
  %4334 = vmatpush1.msra.mxu0 %v2068
  %4335 = vmatprep.mubr.f32.mxu0 %v21
  %4336 = vmatmul.mubr.f32.gmra.mrb[0].mxu0 %v20
  %v4337 = vpop.f32.mrb[0].mxu0
  %v4338 = vadd.f32 0.0, %v4337
  %v4339 = vpop.f32.mrb[0].mxu0
  %v4340 = vadd.f32 0.0, %v4339
  %4341 = vdwg.mxu0
  %v4342 = vld [vmem:[%s2] sm:$0xff]
  %v4343 = vld [vmem:[%s3] sm:$0xff]
  %v4344 = vld [vmem:[%s3 + $0x8] sm:$0xff]
  %v4345 = vld [vmem:[%s3 + $0x10] sm:$0xff]
  %v4346 = vld [vmem:[%s3 + $0x18] sm:$0xff]
  %v4347 = vld [vmem:[%s3 + $0x20] sm:$0xff]
  %v4348 = vld [vmem:[%s3 + $0x28] sm:$0xff]
  %v4349 = vld [vmem:[%s3 + $0x30] sm:$0xff]
  %v4350 = vld [vmem:[%s3 + $0x38] sm:$0xff]
  %v4351 = vld [vmem:[%s3 + $0x40] sm:$0xff]
  %v4352 = vld [vmem:[%s3 + $0x48] sm:$0xff]
  %v4353 = vld [vmem:[%s3 + $0x50] sm:$0xff]
  %v4354 = vld [vmem:[%s3 + $0x58] sm:$0xff]
  %v4355 = vld [vmem:[%s3 + $0x60] sm:$0xff]
  %v4356 = vld [vmem:[%s3 + $0x68] sm:$0xff]
  %v4357 = vld [vmem:[%s3 + $0x70] sm:$0xff]
  %v4358 = vld [vmem:[%s3 + $0x78] sm:$0xff]
  %v4359 = vmax.f32 %v2137, %v2139
  %v4360 = vmax.f32 %v4359, %v2421
  %v4361 = vmax.f32 %v4360, %v2423
  %4363 = vset.pattern.permute.xlu0 0
  %4364 = vperm.xlu0 %4363, %v4342
  %v4365 = vpop.permute.xlu0 %4364
  %v4367 = vadd.f32 %v4361, %v4365
  %v4368 = vtanh.pop %v4367
  %v4369 = vmax.f32 %v2208, %v2210
  %v4370 = vmax.f32 %v4369, %v2492
  %v4371 = vmax.f32 %v4370, %v2494
  %v4372 = vadd.f32 %v4371, %v4365
  %v4373 = vtanh.pop %v4372
  %vm4374 = vcmask 64512
  %v4376 = vsel %vm4374, %v4344, 0
  %4378 = vmatprep.subr.mxu0 0.0
  %4379 = vmatpush1.msra.mxu0 %v4373
  %4380 = vmatprep.subr.mxu0 0.0
  %4381 = vmatpush1.msra.mxu0 0.0
  %4382 = vmatprep.subr.mxu0 0.0
  %4383 = vmatpush1.msra.mxu0 0.0
  %4384 = vmatprep.subr.mxu0 0.0
  %4385 = vmatpush1.msra.mxu0 0.0
  %4386 = vmatprep.subr.mxu0 0.0
  %4387 = vmatpush1.msra.mxu0 0.0
  %4388 = vmatprep.subr.mxu0 0.0
  %4389 = vmatpush1.msra.mxu0 0.0
  %4390 = vmatprep.subr.mxu0 0.0
  %4391 = vmatpush1.msra.mxu0 0.0
  %4392 = vmatprep.subr.mxu0 0.0
  %4393 = vmatpush1.msra.mxu0 0.0
  %4394 = vmatprep.subr.mxu0 0.0
  %4395 = vmatpush1.msra.mxu0 0.0
  %4396 = vmatprep.subr.mxu0 0.0
  %4397 = vmatpush1.msra.mxu0 0.0
  %4398 = vmatprep.subr.mxu0 0.0
  %4399 = vmatpush1.msra.mxu0 0.0
  %4400 = vmatprep.subr.mxu0 0.0
  %4401 = vmatpush1.msra.mxu0 0.0
  %4402 = vmatprep.subr.mxu0 0.0
  %4403 = vmatpush1.msra.mxu0 0.0
  %4404 = vmatprep.subr.mxu0 0.0
  %4405 = vmatpush1.msra.mxu0 0.0
  %4406 = vmatprep.subr.mxu0 0.0
  %4407 = vmatpush1.msra.mxu0 0.0
  %4408 = vmatprep.subr.mxu0 0.0
  %4409 = vmatpush1.msra.mxu0 0.0
  %4410 = vmatprep.subr.mxu0 0.0
  %4411 = vmatpush1.msra.mxu0 0.0
  %4412 = vmatprep.subr.mxu0 0.0
  %4413 = vmatpush1.msra.mxu0 0.0
  %4414 = vmatprep.subr.mxu0 0.0
  %4415 = vmatpush1.msra.mxu0 0.0
  %4416 = vmatprep.subr.mxu0 0.0
  %4417 = vmatpush1.msra.mxu0 0.0
  %4418 = vmatprep.subr.mxu0 0.0
  %4419 = vmatpush1.msra.mxu0 0.0
  %4420 = vmatprep.subr.mxu0 0.0
  %4421 = vmatpush1.msra.mxu0 0.0
  %4422 = vmatprep.subr.mxu0 0.0
  %4423 = vmatpush1.msra.mxu0 0.0
  %4424 = vmatprep.subr.mxu0 0.0
  %4425 = vmatpush1.msra.mxu0 0.0
  %4426 = vmatprep.subr.mxu0 0.0
  %4427 = vmatpush1.msra.mxu0 0.0
  %4428 = vmatprep.subr.mxu0 0.0
  %4429 = vmatpush1.msra.mxu0 0.0
  %4430 = vmatprep.subr.mxu0 0.0
  %4431 = vmatpush1.msra.mxu0 0.0
  %4432 = vmatprep.subr.mxu0 0.0
  %4433 = vmatpush1.msra.mxu0 0.0
  %4434 = vmatprep.subr.mxu0 0.0
  %4435 = vmatpush1.msra.mxu0 0.0
  %4436 = vmatprep.subr.mxu0 0.0
  %4437 = vmatpush1.msra.mxu0 0.0
  %4438 = vmatprep.subr.mxu0 0.0
  %4439 = vmatpush1.msra.mxu0 0.0
  %4440 = vmatprep.subr.mxu0 0.0
  %4441 = vmatpush1.msra.mxu0 0.0
  %4442 = vmatprep.mubr.f32.mxu0 0.0
  %4443 = vmatmul.mubr.f32.gmra.mrb[0].mxu0 %v4376
  %v4444 = vpop.f32.mrb[0].mxu0
  %v4445 = vadd.f32 0.0, %v4444
  %v4446 = vpop.f32.mrb[0].mxu0
  %4447 = vdwg.mxu0
  %v4449 = vsel %vm4374, %v4343, 0
  %4451 = vmatprep.subr.mxu0 0.0
  %4452 = vmatpush1.msra.mxu0 %v4368
  %4453 = vmatprep.subr.mxu0 0.0
  %4454 = vmatpush1.msra.mxu0 0.0
  %4455 = vmatprep.subr.mxu0 0.0
  %4456 = vmatpush1.msra.mxu0 0.0
  %4457 = vmatprep.subr.mxu0 0.0
  %4458 = vmatpush1.msra.mxu0 0.0
  %4459 = vmatprep.subr.mxu0 0.0
  %4460 = vmatpush1.msra.mxu0 0.0
  %4461 = vmatprep.subr.mxu0 0.0
  %4462 = vmatpush1.msra.mxu0 0.0
  %4463 = vmatprep.subr.mxu0 0.0
  %4464 = vmatpush1.msra.mxu0 0.0
  %4465 = vmatprep.subr.mxu0 0.0
  %4466 = vmatpush1.msra.mxu0 0.0
  %4467 = vmatprep.subr.mxu0 0.0
  %4468 = vmatpush1.msra.mxu0 0.0
  %4469 = vmatprep.subr.mxu0 0.0
  %4470 = vmatpush1.msra.mxu0 0.0
  %4471 = vmatprep.subr.mxu0 0.0
  %4472 = vmatpush1.msra.mxu0 0.0
  %4473 = vmatprep.subr.mxu0 0.0
  %4474 = vmatpush1.msra.mxu0 0.0
  %4475 = vmatprep.subr.mxu0 0.0
  %4476 = vmatpush1.msra.mxu0 0.0
  %4477 = vmatprep.subr.mxu0 0.0
  %4478 = vmatpush1.msra.mxu0 0.0
  %4479 = vmatprep.subr.mxu0 0.0
  %4480 = vmatpush1.msra.mxu0 0.0
  %4481 = vmatprep.subr.mxu0 0.0
  %4482 = vmatpush1.msra.mxu0 0.0
  %4483 = vmatprep.subr.mxu0 0.0
  %4484 = vmatpush1.msra.mxu0 0.0
  %4485 = vmatprep.subr.mxu0 0.0
  %4486 = vmatpush1.msra.mxu0 0.0
  %4487 = vmatprep.subr.mxu0 0.0
  %4488 = vmatpush1.msra.mxu0 0.0
  %4489 = vmatprep.subr.mxu0 0.0
  %4490 = vmatpush1.msra.mxu0 0.0
  %4491 = vmatprep.subr.mxu0 0.0
  %4492 = vmatpush1.msra.mxu0 0.0
  %4493 = vmatprep.subr.mxu0 0.0
  %4494 = vmatpush1.msra.mxu0 0.0
  %4495 = vmatprep.subr.mxu0 0.0
  %4496 = vmatpush1.msra.mxu0 0.0
  %4497 = vmatprep.subr.mxu0 0.0
  %4498 = vmatpush1.msra.mxu0 0.0
  %4499 = vmatprep.subr.mxu0 0.0
  %4500 = vmatpush1.msra.mxu0 0.0
  %4501 = vmatprep.subr.mxu0 0.0
  %4502 = vmatpush1.msra.mxu0 0.0
  %4503 = vmatprep.subr.mxu0 0.0
  %4504 = vmatpush1.msra.mxu0 0.0
  %4505 = vmatprep.subr.mxu0 0.0
  %4506 = vmatpush1.msra.mxu0 0.0
  %4507 = vmatprep.subr.mxu0 0.0
  %4508 = vmatpush1.msra.mxu0 0.0
  %4509 = vmatprep.subr.mxu0 0.0
  %4510 = vmatpush1.msra.mxu0 0.0
  %4511 = vmatprep.subr.mxu0 0.0
  %4512 = vmatpush1.msra.mxu0 0.0
  %4513 = vmatprep.subr.mxu0 0.0
  %4514 = vmatpush1.msra.mxu0 0.0
  %4515 = vmatprep.mubr.f32.mxu0 0.0
  %4516 = vmatmul.mubr.f32.gmra.mrb[0].mxu0 %v4449
  %v4517 = vpop.f32.mrb[0].mxu0
  %v4518 = vadd.f32 %v4445, %v4517
  %v4519 = vpop.f32.mrb[0].mxu0
  %4520 = vdwg.mxu0
  %v4521 = vmax.f32 %v2279, %v2281
  %v4522 = vmax.f32 %v4521, %v2563
  %v4523 = vmax.f32 %v4522, %v2565
  %v4524 = vadd.f32 %v4523, %v4365
  %v4525 = vtanh.pop %v4524
  %v4527 = vsel %vm4374, %v4345, 0
  %4529 = vmatprep.subr.mxu0 0.0
  %4530 = vmatpush1.msra.mxu0 %v4525
  %4531 = vmatprep.subr.mxu0 0.0
  %4532 = vmatpush1.msra.mxu0 0.0
  %4533 = vmatprep.subr.mxu0 0.0
  %4534 = vmatpush1.msra.mxu0 0.0
  %4535 = vmatprep.subr.mxu0 0.0
  %4536 = vmatpush1.msra.mxu0 0.0
  %4537 = vmatprep.subr.mxu0 0.0
  %4538 = vmatpush1.msra.mxu0 0.0
  %4539 = vmatprep.subr.mxu0 0.0
  %4540 = vmatpush1.msra.mxu0 0.0
  %4541 = vmatprep.subr.mxu0 0.0
  %4542 = vmatpush1.msra.mxu0 0.0
  %4543 = vmatprep.subr.mxu0 0.0
  %4544 = vmatpush1.msra.mxu0 0.0
  %4545 = vmatprep.subr.mxu0 0.0
  %4546 = vmatpush1.msra.mxu0 0.0
  %4547 = vmatprep.subr.mxu0 0.0
  %4548 = vmatpush1.msra.mxu0 0.0
  %4549 = vmatprep.subr.mxu0 0.0
  %4550 = vmatpush1.msra.mxu0 0.0
  %4551 = vmatprep.subr.mxu0 0.0
  %4552 = vmatpush1.msra.mxu0 0.0
  %4553 = vmatprep.subr.mxu0 0.0
  %4554 = vmatpush1.msra.mxu0 0.0
  %4555 = vmatprep.subr.mxu0 0.0
  %4556 = vmatpush1.msra.mxu0 0.0
  %4557 = vmatprep.subr.mxu0 0.0
  %4558 = vmatpush1.msra.mxu0 0.0
  %4559 = vmatprep.subr.mxu0 0.0
  %4560 = vmatpush1.msra.mxu0 0.0
  %4561 = vmatprep.subr.mxu0 0.0
  %4562 = vmatpush1.msra.mxu0 0.0
  %4563 = vmatprep.subr.mxu0 0.0
  %4564 = vmatpush1.msra.mxu0 0.0
  %4565 = vmatprep.subr.mxu0 0.0
  %4566 = vmatpush1.msra.mxu0 0.0
  %4567 = vmatprep.subr.mxu0 0.0
  %4568 = vmatpush1.msra.mxu0 0.0
  %4569 = vmatprep.subr.mxu0 0.0
  %4570 = vmatpush1.msra.mxu0 0.0
  %4571 = vmatprep.subr.mxu0 0.0
  %4572 = vmatpush1.msra.mxu0 0.0
  %4573 = vmatprep.subr.mxu0 0.0
  %4574 = vmatpush1.msra.mxu0 0.0
  %4575 = vmatprep.subr.mxu0 0.0
  %4576 = vmatpush1.msra.mxu0 0.0
  %4577 = vmatprep.subr.mxu0 0.0
  %4578 = vmatpush1.msra.mxu0 0.0
  %4579 = vmatprep.subr.mxu0 0.0
  %4580 = vmatpush1.msra.mxu0 0.0
  %4581 = vmatprep.subr.mxu0 0.0
  %4582 = vmatpush1.msra.mxu0 0.0
  %4583 = vmatprep.subr.mxu0 0.0
  %4584 = vmatpush1.msra.mxu0 0.0
  %4585 = vmatprep.subr.mxu0 0.0
  %4586 = vmatpush1.msra.mxu0 0.0
  %4587 = vmatprep.subr.mxu0 0.0
  %4588 = vmatpush1.msra.mxu0 0.0
  %4589 = vmatprep.subr.mxu0 0.0
  %4590 = vmatpush1.msra.mxu0 0.0
  %4591 = vmatprep.subr.mxu0 0.0
  %4592 = vmatpush1.msra.mxu0 0.0
  %4593 = vmatprep.mubr.f32.mxu0 0.0
  %4594 = vmatmul.mubr.f32.gmra.mrb[0].mxu0 %v4527
  %v4595 = vpop.f32.mrb[0].mxu0
  %v4596 = vadd.f32 0.0, %v4595
  %v4597 = vpop.f32.mrb[0].mxu0
  %4598 = vdwg.mxu0
  %v4599 = vadd.f32 %v4518, %v4596
  %v4600 = vmax.f32 %v2350, %v2352
  %v4601 = vmax.f32 %v4600, %v2634
  %v4602 = vmax.f32 %v4601, %v2636
  %v4603 = vadd.f32 %v4602, %v4365
  %v4604 = vtanh.pop %v4603
  %v4606 = vsel %vm4374, %v4346, 0
  %4608 = vmatprep.subr.mxu0 0.0
  %4609 = vmatpush1.msra.mxu0 %v4604
  %4610 = vmatprep.subr.mxu0 0.0
  %4611 = vmatpush1.msra.mxu0 0.0
  %4612 = vmatprep.subr.mxu0 0.0
  %4613 = vmatpush1.msra.mxu0 0.0
  %4614 = vmatprep.subr.mxu0 0.0
  %4615 = vmatpush1.msra.mxu0 0.0
  %4616 = vmatprep.subr.mxu0 0.0
  %4617 = vmatpush1.msra.mxu0 0.0
  %4618 = vmatprep.subr.mxu0 0.0
  %4619 = vmatpush1.msra.mxu0 0.0
  %4620 = vmatprep.subr.mxu0 0.0
  %4621 = vmatpush1.msra.mxu0 0.0
  %4622 = vmatprep.subr.mxu0 0.0
  %4623 = vmatpush1.msra.mxu0 0.0
  %4624 = vmatprep.subr.mxu0 0.0
  %4625 = vmatpush1.msra.mxu0 0.0
  %4626 = vmatprep.subr.mxu0 0.0
  %4627 = vmatpush1.msra.mxu0 0.0
  %4628 = vmatprep.subr.mxu0 0.0
  %4629 = vmatpush1.msra.mxu0 0.0
  %4630 = vmatprep.subr.mxu0 0.0
  %4631 = vmatpush1.msra.mxu0 0.0
  %4632 = vmatprep.subr.mxu0 0.0
  %4633 = vmatpush1.msra.mxu0 0.0
  %4634 = vmatprep.subr.mxu0 0.0
  %4635 = vmatpush1.msra.mxu0 0.0
  %4636 = vmatprep.subr.mxu0 0.0
  %4637 = vmatpush1.msra.mxu0 0.0
  %4638 = vmatprep.subr.mxu0 0.0
  %4639 = vmatpush1.msra.mxu0 0.0
  %4640 = vmatprep.subr.mxu0 0.0
  %4641 = vmatpush1.msra.mxu0 0.0
  %4642 = vmatprep.subr.mxu0 0.0
  %4643 = vmatpush1.msra.mxu0 0.0
  %4644 = vmatprep.subr.mxu0 0.0
  %4645 = vmatpush1.msra.mxu0 0.0
  %4646 = vmatprep.subr.mxu0 0.0
  %4647 = vmatpush1.msra.mxu0 0.0
  %4648 = vmatprep.subr.mxu0 0.0
  %4649 = vmatpush1.msra.mxu0 0.0
  %4650 = vmatprep.subr.mxu0 0.0
  %4651 = vmatpush1.msra.mxu0 0.0
  %4652 = vmatprep.subr.mxu0 0.0
  %4653 = vmatpush1.msra.mxu0 0.0
  %4654 = vmatprep.subr.mxu0 0.0
  %4655 = vmatpush1.msra.mxu0 0.0
  %4656 = vmatprep.subr.mxu0 0.0
  %4657 = vmatpush1.msra.mxu0 0.0
  %4658 = vmatprep.subr.mxu0 0.0
  %4659 = vmatpush1.msra.mxu0 0.0
  %4660 = vmatprep.subr.mxu0 0.0
  %4661 = vmatpush1.msra.mxu0 0.0
  %4662 = vmatprep.subr.mxu0 0.0
  %4663 = vmatpush1.msra.mxu0 0.0
  %4664 = vmatprep.subr.mxu0 0.0
  %4665 = vmatpush1.msra.mxu0 0.0
  %4666 = vmatprep.subr.mxu0 0.0
  %4667 = vmatpush1.msra.mxu0 0.0
  %4668 = vmatprep.subr.mxu0 0.0
  %4669 = vmatpush1.msra.mxu0 0.0
  %4670 = vmatprep.subr.mxu0 0.0
  %4671 = vmatpush1.msra.mxu0 0.0
  %4672 = vmatprep.mubr.f32.mxu0 0.0
  %4673 = vmatmul.mubr.f32.gmra.mrb[0].mxu0 %v4606
  %v4674 = vpop.f32.mrb[0].mxu0
  %v4675 = vadd.f32 0.0, %v4674
  %v4676 = vpop.f32.mrb[0].mxu0
  %4677 = vdwg.mxu0
  %v4678 = vadd.f32 %v4599, %v4675
  %v4679 = vmax.f32 %v2705, %v2707
  %v4680 = vmax.f32 %v4679, %v2989
  %v4681 = vmax.f32 %v4680, %v2991
  %v4682 = vadd.f32 %v4681, %v4365
  %v4683 = vtanh.pop %v4682
  %v4685 = vsel %vm4374, %v4347, 0
  %4687 = vmatprep.subr.mxu0 0.0
  %4688 = vmatpush1.msra.mxu0 %v4683
  %4689 = vmatprep.subr.mxu0 0.0
  %4690 = vmatpush1.msra.mxu0 0.0
  %4691 = vmatprep.subr.mxu0 0.0
  %4692 = vmatpush1.msra.mxu0 0.0
  %4693 = vmatprep.subr.mxu0 0.0
  %4694 = vmatpush1.msra.mxu0 0.0
  %4695 = vmatprep.subr.mxu0 0.0
  %4696 = vmatpush1.msra.mxu0 0.0
  %4697 = vmatprep.subr.mxu0 0.0
  %4698 = vmatpush1.msra.mxu0 0.0
  %4699 = vmatprep.subr.mxu0 0.0
  %4700 = vmatpush1.msra.mxu0 0.0
  %4701 = vmatprep.subr.mxu0 0.0
  %4702 = vmatpush1.msra.mxu0 0.0
  %4703 = vmatprep.subr.mxu0 0.0
  %4704 = vmatpush1.msra.mxu0 0.0
  %4705 = vmatprep.subr.mxu0 0.0
  %4706 = vmatpush1.msra.mxu0 0.0
  %4707 = vmatprep.subr.mxu0 0.0
  %4708 = vmatpush1.msra.mxu0 0.0
  %4709 = vmatprep.subr.mxu0 0.0
  %4710 = vmatpush1.msra.mxu0 0.0
  %4711 = vmatprep.subr.mxu0 0.0
  %4712 = vmatpush1.msra.mxu0 0.0
  %4713 = vmatprep.subr.mxu0 0.0
  %4714 = vmatpush1.msra.mxu0 0.0
  %4715 = vmatprep.subr.mxu0 0.0
  %4716 = vmatpush1.msra.mxu0 0.0
  %4717 = vmatprep.subr.mxu0 0.0
  %4718 = vmatpush1.msra.mxu0 0.0
  %4719 = vmatprep.subr.mxu0 0.0
  %4720 = vmatpush1.msra.mxu0 0.0
  %4721 = vmatprep.subr.mxu0 0.0
  %4722 = vmatpush1.msra.mxu0 0.0
  %4723 = vmatprep.subr.mxu0 0.0
  %4724 = vmatpush1.msra.mxu0 0.0
  %4725 = vmatprep.subr.mxu0 0.0
  %4726 = vmatpush1.msra.mxu0 0.0
  %4727 = vmatprep.subr.mxu0 0.0
  %4728 = vmatpush1.msra.mxu0 0.0
  %4729 = vmatprep.subr.mxu0 0.0
  %4730 = vmatpush1.msra.mxu0 0.0
  %4731 = vmatprep.subr.mxu0 0.0
  %4732 = vmatpush1.msra.mxu0 0.0
  %4733 = vmatprep.subr.mxu0 0.0
  %4734 = vmatpush1.msra.mxu0 0.0
  %4735 = vmatprep.subr.mxu0 0.0
  %4736 = vmatpush1.msra.mxu0 0.0
  %4737 = vmatprep.subr.mxu0 0.0
  %4738 = vmatpush1.msra.mxu0 0.0
  %4739 = vmatprep.subr.mxu0 0.0
  %4740 = vmatpush1.msra.mxu0 0.0
  %4741 = vmatprep.subr.mxu0 0.0
  %4742 = vmatpush1.msra.mxu0 0.0
  %4743 = vmatprep.subr.mxu0 0.0
  %4744 = vmatpush1.msra.mxu0 0.0
  %4745 = vmatprep.subr.mxu0 0.0
  %4746 = vmatpush1.msra.mxu0 0.0
  %4747 = vmatprep.subr.mxu0 0.0
  %4748 = vmatpush1.msra.mxu0 0.0
  %4749 = vmatprep.subr.mxu0 0.0
  %4750 = vmatpush1.msra.mxu0 0.0
  %4751 = vmatprep.mubr.f32.mxu0 0.0
  %4752 = vmatmul.mubr.f32.gmra.mrb[0].mxu0 %v4685
  %v4753 = vpop.f32.mrb[0].mxu0
  %v4754 = vadd.f32 0.0, %v4753
  %v4755 = vpop.f32.mrb[0].mxu0
  %4756 = vdwg.mxu0
  %v4757 = vadd.f32 %v4678, %v4754
  %v4758 = vmax.f32 %v2776, %v2778
  %v4759 = vmax.f32 %v4758, %v3060
  %v4760 = vmax.f32 %v4759, %v3062
  %v4761 = vadd.f32 %v4760, %v4365
  %v4762 = vtanh.pop %v4761
  %v4764 = vsel %vm4374, %v4348, 0
  %4766 = vmatprep.subr.mxu0 0.0
  %4767 = vmatpush1.msra.mxu0 %v4762
  %4768 = vmatprep.subr.mxu0 0.0
  %4769 = vmatpush1.msra.mxu0 0.0
  %4770 = vmatprep.subr.mxu0 0.0
  %4771 = vmatpush1.msra.mxu0 0.0
  %4772 = vmatprep.subr.mxu0 0.0
  %4773 = vmatpush1.msra.mxu0 0.0
  %4774 = vmatprep.subr.mxu0 0.0
  %4775 = vmatpush1.msra.mxu0 0.0
  %4776 = vmatprep.subr.mxu0 0.0
  %4777 = vmatpush1.msra.mxu0 0.0
  %4778 = vmatprep.subr.mxu0 0.0
  %4779 = vmatpush1.msra.mxu0 0.0
  %4780 = vmatprep.subr.mxu0 0.0
  %4781 = vmatpush1.msra.mxu0 0.0
  %4782 = vmatprep.subr.mxu0 0.0
  %4783 = vmatpush1.msra.mxu0 0.0
  %4784 = vmatprep.subr.mxu0 0.0
  %4785 = vmatpush1.msra.mxu0 0.0
  %4786 = vmatprep.subr.mxu0 0.0
  %4787 = vmatpush1.msra.mxu0 0.0
  %4788 = vmatprep.subr.mxu0 0.0
  %4789 = vmatpush1.msra.mxu0 0.0
  %4790 = vmatprep.subr.mxu0 0.0
  %4791 = vmatpush1.msra.mxu0 0.0
  %4792 = vmatprep.subr.mxu0 0.0
  %4793 = vmatpush1.msra.mxu0 0.0
  %4794 = vmatprep.subr.mxu0 0.0
  %4795 = vmatpush1.msra.mxu0 0.0
  %4796 = vmatprep.subr.mxu0 0.0
  %4797 = vmatpush1.msra.mxu0 0.0
  %4798 = vmatprep.subr.mxu0 0.0
  %4799 = vmatpush1.msra.mxu0 0.0
  %4800 = vmatprep.subr.mxu0 0.0
  %4801 = vmatpush1.msra.mxu0 0.0
  %4802 = vmatprep.subr.mxu0 0.0
  %4803 = vmatpush1.msra.mxu0 0.0
  %4804 = vmatprep.subr.mxu0 0.0
  %4805 = vmatpush1.msra.mxu0 0.0
  %4806 = vmatprep.subr.mxu0 0.0
  %4807 = vmatpush1.msra.mxu0 0.0
  %4808 = vmatprep.subr.mxu0 0.0
  %4809 = vmatpush1.msra.mxu0 0.0
  %4810 = vmatprep.subr.mxu0 0.0
  %4811 = vmatpush1.msra.mxu0 0.0
  %4812 = vmatprep.subr.mxu0 0.0
  %4813 = vmatpush1.msra.mxu0 0.0
  %4814 = vmatprep.subr.mxu0 0.0
  %4815 = vmatpush1.msra.mxu0 0.0
  %4816 = vmatprep.subr.mxu0 0.0
  %4817 = vmatpush1.msra.mxu0 0.0
  %4818 = vmatprep.subr.mxu0 0.0
  %4819 = vmatpush1.msra.mxu0 0.0
  %4820 = vmatprep.subr.mxu0 0.0
  %4821 = vmatpush1.msra.mxu0 0.0
  %4822 = vmatprep.subr.mxu0 0.0
  %4823 = vmatpush1.msra.mxu0 0.0
  %4824 = vmatprep.subr.mxu0 0.0
  %4825 = vmatpush1.msra.mxu0 0.0
  %4826 = vmatprep.subr.mxu0 0.0
  %4827 = vmatpush1.msra.mxu0 0.0
  %4828 = vmatprep.subr.mxu0 0.0
  %4829 = vmatpush1.msra.mxu0 0.0
  %4830 = vmatprep.mubr.f32.mxu0 0.0
  %4831 = vmatmul.mubr.f32.gmra.mrb[0].mxu0 %v4764
  %v4832 = vpop.f32.mrb[0].mxu0
  %v4833 = vadd.f32 0.0, %v4832
  %v4834 = vpop.f32.mrb[0].mxu0
  %4835 = vdwg.mxu0
  %v4836 = vadd.f32 %v4757, %v4833
  %v4837 = vmax.f32 %v2847, %v2849
  %v4838 = vmax.f32 %v4837, %v3131
  %v4839 = vmax.f32 %v4838, %v3133
  %v4840 = vadd.f32 %v4839, %v4365
  %v4841 = vtanh.pop %v4840
  %v4843 = vsel %vm4374, %v4349, 0
  %4845 = vmatprep.subr.mxu0 0.0
  %4846 = vmatpush1.msra.mxu0 %v4841
  %4847 = vmatprep.subr.mxu0 0.0
  %4848 = vmatpush1.msra.mxu0 0.0
  %4849 = vmatprep.subr.mxu0 0.0
  %4850 = vmatpush1.msra.mxu0 0.0
  %4851 = vmatprep.subr.mxu0 0.0
  %4852 = vmatpush1.msra.mxu0 0.0
  %4853 = vmatprep.subr.mxu0 0.0
  %4854 = vmatpush1.msra.mxu0 0.0
  %4855 = vmatprep.subr.mxu0 0.0
  %4856 = vmatpush1.msra.mxu0 0.0
  %4857 = vmatprep.subr.mxu0 0.0
  %4858 = vmatpush1.msra.mxu0 0.0
  %4859 = vmatprep.subr.mxu0 0.0
  %4860 = vmatpush1.msra.mxu0 0.0
  %4861 = vmatprep.subr.mxu0 0.0
  %4862 = vmatpush1.msra.mxu0 0.0
  %4863 = vmatprep.subr.mxu0 0.0
  %4864 = vmatpush1.msra.mxu0 0.0
  %4865 = vmatprep.subr.mxu0 0.0
  %4866 = vmatpush1.msra.mxu0 0.0
  %4867 = vmatprep.subr.mxu0 0.0
  %4868 = vmatpush1.msra.mxu0 0.0
  %4869 = vmatprep.subr.mxu0 0.0
  %4870 = vmatpush1.msra.mxu0 0.0
  %4871 = vmatprep.subr.mxu0 0.0
  %4872 = vmatpush1.msra.mxu0 0.0
  %4873 = vmatprep.subr.mxu0 0.0
  %4874 = vmatpush1.msra.mxu0 0.0
  %4875 = vmatprep.subr.mxu0 0.0
  %4876 = vmatpush1.msra.mxu0 0.0
  %4877 = vmatprep.subr.mxu0 0.0
  %4878 = vmatpush1.msra.mxu0 0.0
  %4879 = vmatprep.subr.mxu0 0.0
  %4880 = vmatpush1.msra.mxu0 0.0
  %4881 = vmatprep.subr.mxu0 0.0
  %4882 = vmatpush1.msra.mxu0 0.0
  %4883 = vmatprep.subr.mxu0 0.0
  %4884 = vmatpush1.msra.mxu0 0.0
  %4885 = vmatprep.subr.mxu0 0.0
  %4886 = vmatpush1.msra.mxu0 0.0
  %4887 = vmatprep.subr.mxu0 0.0
  %4888 = vmatpush1.msra.mxu0 0.0
  %4889 = vmatprep.subr.mxu0 0.0
  %4890 = vmatpush1.msra.mxu0 0.0
  %4891 = vmatprep.subr.mxu0 0.0
  %4892 = vmatpush1.msra.mxu0 0.0
  %4893 = vmatprep.subr.mxu0 0.0
  %4894 = vmatpush1.msra.mxu0 0.0
  %4895 = vmatprep.subr.mxu0 0.0
  %4896 = vmatpush1.msra.mxu0 0.0
  %4897 = vmatprep.subr.mxu0 0.0
  %4898 = vmatpush1.msra.mxu0 0.0
  %4899 = vmatprep.subr.mxu0 0.0
  %4900 = vmatpush1.msra.mxu0 0.0
  %4901 = vmatprep.subr.mxu0 0.0
  %4902 = vmatpush1.msra.mxu0 0.0
  %4903 = vmatprep.subr.mxu0 0.0
  %4904 = vmatpush1.msra.mxu0 0.0
  %4905 = vmatprep.subr.mxu0 0.0
  %4906 = vmatpush1.msra.mxu0 0.0
  %4907 = vmatprep.subr.mxu0 0.0
  %4908 = vmatpush1.msra.mxu0 0.0
  %4909 = vmatprep.mubr.f32.mxu0 0.0
  %4910 = vmatmul.mubr.f32.gmra.mrb[0].mxu0 %v4843
  %v4911 = vpop.f32.mrb[0].mxu0
  %v4912 = vadd.f32 0.0, %v4911
  %v4913 = vpop.f32.mrb[0].mxu0
  %4914 = vdwg.mxu0
  %v4915 = vadd.f32 %v4836, %v4912
  %v4916 = vmax.f32 %v2918, %v2920
  %v4917 = vmax.f32 %v4916, %v3202
  %v4918 = vmax.f32 %v4917, %v3204
  %v4919 = vadd.f32 %v4918, %v4365
  %v4920 = vtanh.pop %v4919
  %v4922 = vsel %vm4374, %v4350, 0
  %4924 = vmatprep.subr.mxu0 0.0
  %4925 = vmatpush1.msra.mxu0 %v4920
  %4926 = vmatprep.subr.mxu0 0.0
  %4927 = vmatpush1.msra.mxu0 0.0
  %4928 = vmatprep.subr.mxu0 0.0
  %4929 = vmatpush1.msra.mxu0 0.0
  %4930 = vmatprep.subr.mxu0 0.0
  %4931 = vmatpush1.msra.mxu0 0.0
  %4932 = vmatprep.subr.mxu0 0.0
  %4933 = vmatpush1.msra.mxu0 0.0
  %4934 = vmatprep.subr.mxu0 0.0
  %4935 = vmatpush1.msra.mxu0 0.0
  %4936 = vmatprep.subr.mxu0 0.0
  %4937 = vmatpush1.msra.mxu0 0.0
  %4938 = vmatprep.subr.mxu0 0.0
  %4939 = vmatpush1.msra.mxu0 0.0
  %4940 = vmatprep.subr.mxu0 0.0
  %4941 = vmatpush1.msra.mxu0 0.0
  %4942 = vmatprep.subr.mxu0 0.0
  %4943 = vmatpush1.msra.mxu0 0.0
  %4944 = vmatprep.subr.mxu0 0.0
  %4945 = vmatpush1.msra.mxu0 0.0
  %4946 = vmatprep.subr.mxu0 0.0
  %4947 = vmatpush1.msra.mxu0 0.0
  %4948 = vmatprep.subr.mxu0 0.0
  %4949 = vmatpush1.msra.mxu0 0.0
  %4950 = vmatprep.subr.mxu0 0.0
  %4951 = vmatpush1.msra.mxu0 0.0
  %4952 = vmatprep.subr.mxu0 0.0
  %4953 = vmatpush1.msra.mxu0 0.0
  %4954 = vmatprep.subr.mxu0 0.0
  %4955 = vmatpush1.msra.mxu0 0.0
  %4956 = vmatprep.subr.mxu0 0.0
  %4957 = vmatpush1.msra.mxu0 0.0
  %4958 = vmatprep.subr.mxu0 0.0
  %4959 = vmatpush1.msra.mxu0 0.0
  %4960 = vmatprep.subr.mxu0 0.0
  %4961 = vmatpush1.msra.mxu0 0.0
  %4962 = vmatprep.subr.mxu0 0.0
  %4963 = vmatpush1.msra.mxu0 0.0
  %4964 = vmatprep.subr.mxu0 0.0
  %4965 = vmatpush1.msra.mxu0 0.0
  %4966 = vmatprep.subr.mxu0 0.0
  %4967 = vmatpush1.msra.mxu0 0.0
  %4968 = vmatprep.subr.mxu0 0.0
  %4969 = vmatpush1.msra.mxu0 0.0
  %4970 = vmatprep.subr.mxu0 0.0
  %4971 = vmatpush1.msra.mxu0 0.0
  %4972 = vmatprep.subr.mxu0 0.0
  %4973 = vmatpush1.msra.mxu0 0.0
  %4974 = vmatprep.subr.mxu0 0.0
  %4975 = vmatpush1.msra.mxu0 0.0
  %4976 = vmatprep.subr.mxu0 0.0
  %4977 = vmatpush1.msra.mxu0 0.0
  %4978 = vmatprep.subr.mxu0 0.0
  %4979 = vmatpush1.msra.mxu0 0.0
  %4980 = vmatprep.subr.mxu0 0.0
  %4981 = vmatpush1.msra.mxu0 0.0
  %4982 = vmatprep.subr.mxu0 0.0
  %4983 = vmatpush1.msra.mxu0 0.0
  %4984 = vmatprep.subr.mxu0 0.0
  %4985 = vmatpush1.msra.mxu0 0.0
  %4986 = vmatprep.subr.mxu0 0.0
  %4987 = vmatpush1.msra.mxu0 0.0
  %4988 = vmatprep.mubr.f32.mxu0 0.0
  %4989 = vmatmul.mubr.f32.gmra.mrb[0].mxu0 %v4922
  %v4990 = vpop.f32.mrb[0].mxu0
  %v4991 = vadd.f32 0.0, %v4990
  %v4992 = vpop.f32.mrb[0].mxu0
  %4993 = vdwg.mxu0
  %v4994 = vadd.f32 %v4915, %v4991
  %v4995 = vmax.f32 %v3273, %v3275
  %v4996 = vmax.f32 %v4995, %v3557
  %v4997 = vmax.f32 %v4996, %v3559
  %v4998 = vadd.f32 %v4997, %v4365
  %v4999 = vtanh.pop %v4998
  %v5001 = vsel %vm4374, %v4351, 0
  %5003 = vmatprep.subr.mxu0 0.0
  %5004 = vmatpush1.msra.mxu0 %v4999
  %5005 = vmatprep.subr.mxu0 0.0
  %5006 = vmatpush1.msra.mxu0 0.0
  %5007 = vmatprep.subr.mxu0 0.0
  %5008 = vmatpush1.msra.mxu0 0.0
  %5009 = vmatprep.subr.mxu0 0.0
  %5010 = vmatpush1.msra.mxu0 0.0
  %5011 = vmatprep.subr.mxu0 0.0
  %5012 = vmatpush1.msra.mxu0 0.0
  %5013 = vmatprep.subr.mxu0 0.0
  %5014 = vmatpush1.msra.mxu0 0.0
  %5015 = vmatprep.subr.mxu0 0.0
  %5016 = vmatpush1.msra.mxu0 0.0
  %5017 = vmatprep.subr.mxu0 0.0
  %5018 = vmatpush1.msra.mxu0 0.0
  %5019 = vmatprep.subr.mxu0 0.0
  %5020 = vmatpush1.msra.mxu0 0.0
  %5021 = vmatprep.subr.mxu0 0.0
  %5022 = vmatpush1.msra.mxu0 0.0
  %5023 = vmatprep.subr.mxu0 0.0
  %5024 = vmatpush1.msra.mxu0 0.0
  %5025 = vmatprep.subr.mxu0 0.0
  %5026 = vmatpush1.msra.mxu0 0.0
  %5027 = vmatprep.subr.mxu0 0.0
  %5028 = vmatpush1.msra.mxu0 0.0
  %5029 = vmatprep.subr.mxu0 0.0
  %5030 = vmatpush1.msra.mxu0 0.0
  %5031 = vmatprep.subr.mxu0 0.0
  %5032 = vmatpush1.msra.mxu0 0.0
  %5033 = vmatprep.subr.mxu0 0.0
  %5034 = vmatpush1.msra.mxu0 0.0
  %5035 = vmatprep.subr.mxu0 0.0
  %5036 = vmatpush1.msra.mxu0 0.0
  %5037 = vmatprep.subr.mxu0 0.0
  %5038 = vmatpush1.msra.mxu0 0.0
  %5039 = vmatprep.subr.mxu0 0.0
  %5040 = vmatpush1.msra.mxu0 0.0
  %5041 = vmatprep.subr.mxu0 0.0
  %5042 = vmatpush1.msra.mxu0 0.0
  %5043 = vmatprep.subr.mxu0 0.0
  %5044 = vmatpush1.msra.mxu0 0.0
  %5045 = vmatprep.subr.mxu0 0.0
  %5046 = vmatpush1.msra.mxu0 0.0
  %5047 = vmatprep.subr.mxu0 0.0
  %5048 = vmatpush1.msra.mxu0 0.0
  %5049 = vmatprep.subr.mxu0 0.0
  %5050 = vmatpush1.msra.mxu0 0.0
  %5051 = vmatprep.subr.mxu0 0.0
  %5052 = vmatpush1.msra.mxu0 0.0
  %5053 = vmatprep.subr.mxu0 0.0
  %5054 = vmatpush1.msra.mxu0 0.0
  %5055 = vmatprep.subr.mxu0 0.0
  %5056 = vmatpush1.msra.mxu0 0.0
  %5057 = vmatprep.subr.mxu0 0.0
  %5058 = vmatpush1.msra.mxu0 0.0
  %5059 = vmatprep.subr.mxu0 0.0
  %5060 = vmatpush1.msra.mxu0 0.0
  %5061 = vmatprep.subr.mxu0 0.0
  %5062 = vmatpush1.msra.mxu0 0.0
  %5063 = vmatprep.subr.mxu0 0.0
  %5064 = vmatpush1.msra.mxu0 0.0
  %5065 = vmatprep.subr.mxu0 0.0
  %5066 = vmatpush1.msra.mxu0 0.0
  %5067 = vmatprep.mubr.f32.mxu0 0.0
  %5068 = vmatmul.mubr.f32.gmra.mrb[0].mxu0 %v5001
  %v5069 = vpop.f32.mrb[0].mxu0
  %v5070 = vadd.f32 0.0, %v5069
  %v5071 = vpop.f32.mrb[0].mxu0
  %5072 = vdwg.mxu0
  %v5073 = vadd.f32 %v4994, %v5070
  %v5074 = vmax.f32 %v3344, %v3346
  %v5075 = vmax.f32 %v5074, %v3628
  %v5076 = vmax.f32 %v5075, %v3630
  %v5077 = vadd.f32 %v5076, %v4365
  %v5078 = vtanh.pop %v5077
  %v5080 = vsel %vm4374, %v4352, 0
  %5082 = vmatprep.subr.mxu0 0.0
  %5083 = vmatpush1.msra.mxu0 %v5078
  %5084 = vmatprep.subr.mxu0 0.0
  %5085 = vmatpush1.msra.mxu0 0.0
  %5086 = vmatprep.subr.mxu0 0.0
  %5087 = vmatpush1.msra.mxu0 0.0
  %5088 = vmatprep.subr.mxu0 0.0
  %5089 = vmatpush1.msra.mxu0 0.0
  %5090 = vmatprep.subr.mxu0 0.0
  %5091 = vmatpush1.msra.mxu0 0.0
  %5092 = vmatprep.subr.mxu0 0.0
  %5093 = vmatpush1.msra.mxu0 0.0
  %5094 = vmatprep.subr.mxu0 0.0
  %5095 = vmatpush1.msra.mxu0 0.0
  %5096 = vmatprep.subr.mxu0 0.0
  %5097 = vmatpush1.msra.mxu0 0.0
  %5098 = vmatprep.subr.mxu0 0.0
  %5099 = vmatpush1.msra.mxu0 0.0
  %5100 = vmatprep.subr.mxu0 0.0
  %5101 = vmatpush1.msra.mxu0 0.0
  %5102 = vmatprep.subr.mxu0 0.0
  %5103 = vmatpush1.msra.mxu0 0.0
  %5104 = vmatprep.subr.mxu0 0.0
  %5105 = vmatpush1.msra.mxu0 0.0
  %5106 = vmatprep.subr.mxu0 0.0
  %5107 = vmatpush1.msra.mxu0 0.0
  %5108 = vmatprep.subr.mxu0 0.0
  %5109 = vmatpush1.msra.mxu0 0.0
  %5110 = vmatprep.subr.mxu0 0.0
  %5111 = vmatpush1.msra.mxu0 0.0
  %5112 = vmatprep.subr.mxu0 0.0
  %5113 = vmatpush1.msra.mxu0 0.0
  %5114 = vmatprep.subr.mxu0 0.0
  %5115 = vmatpush1.msra.mxu0 0.0
  %5116 = vmatprep.subr.mxu0 0.0
  %5117 = vmatpush1.msra.mxu0 0.0
  %5118 = vmatprep.subr.mxu0 0.0
  %5119 = vmatpush1.msra.mxu0 0.0
  %5120 = vmatprep.subr.mxu0 0.0
  %5121 = vmatpush1.msra.mxu0 0.0
  %5122 = vmatprep.subr.mxu0 0.0
  %5123 = vmatpush1.msra.mxu0 0.0
  %5124 = vmatprep.subr.mxu0 0.0
  %5125 = vmatpush1.msra.mxu0 0.0
  %5126 = vmatprep.subr.mxu0 0.0
  %5127 = vmatpush1.msra.mxu0 0.0
  %5128 = vmatprep.subr.mxu0 0.0
  %5129 = vmatpush1.msra.mxu0 0.0
  %5130 = vmatprep.subr.mxu0 0.0
  %5131 = vmatpush1.msra.mxu0 0.0
  %5132 = vmatprep.subr.mxu0 0.0
  %5133 = vmatpush1.msra.mxu0 0.0
  %5134 = vmatprep.subr.mxu0 0.0
  %5135 = vmatpush1.msra.mxu0 0.0
  %5136 = vmatprep.subr.mxu0 0.0
  %5137 = vmatpush1.msra.mxu0 0.0
  %5138 = vmatprep.subr.mxu0 0.0
  %5139 = vmatpush1.msra.mxu0 0.0
  %5140 = vmatprep.subr.mxu0 0.0
  %5141 = vmatpush1.msra.mxu0 0.0
  %5142 = vmatprep.subr.mxu0 0.0
  %5143 = vmatpush1.msra.mxu0 0.0
  %5144 = vmatprep.subr.mxu0 0.0
  %5145 = vmatpush1.msra.mxu0 0.0
  %5146 = vmatprep.mubr.f32.mxu0 0.0
  %5147 = vmatmul.mubr.f32.gmra.mrb[0].mxu0 %v5080
  %v5148 = vpop.f32.mrb[0].mxu0
  %v5149 = vadd.f32 0.0, %v5148
  %v5150 = vpop.f32.mrb[0].mxu0
  %5151 = vdwg.mxu0
  %v5152 = vadd.f32 %v5073, %v5149
  %v5153 = vmax.f32 %v3415, %v3417
  %v5154 = vmax.f32 %v5153, %v3699
  %v5155 = vmax.f32 %v5154, %v3701
  %v5156 = vadd.f32 %v5155, %v4365
  %v5157 = vtanh.pop %v5156
  %v5159 = vsel %vm4374, %v4353, 0
  %5161 = vmatprep.subr.mxu0 0.0
  %5162 = vmatpush1.msra.mxu0 %v5157
  %5163 = vmatprep.subr.mxu0 0.0
  %5164 = vmatpush1.msra.mxu0 0.0
  %5165 = vmatprep.subr.mxu0 0.0
  %5166 = vmatpush1.msra.mxu0 0.0
  %5167 = vmatprep.subr.mxu0 0.0
  %5168 = vmatpush1.msra.mxu0 0.0
  %5169 = vmatprep.subr.mxu0 0.0
  %5170 = vmatpush1.msra.mxu0 0.0
  %5171 = vmatprep.subr.mxu0 0.0
  %5172 = vmatpush1.msra.mxu0 0.0
  %5173 = vmatprep.subr.mxu0 0.0
  %5174 = vmatpush1.msra.mxu0 0.0
  %5175 = vmatprep.subr.mxu0 0.0
  %5176 = vmatpush1.msra.mxu0 0.0
  %5177 = vmatprep.subr.mxu0 0.0
  %5178 = vmatpush1.msra.mxu0 0.0
  %5179 = vmatprep.subr.mxu0 0.0
  %5180 = vmatpush1.msra.mxu0 0.0
  %5181 = vmatprep.subr.mxu0 0.0
  %5182 = vmatpush1.msra.mxu0 0.0
  %5183 = vmatprep.subr.mxu0 0.0
  %5184 = vmatpush1.msra.mxu0 0.0
  %5185 = vmatprep.subr.mxu0 0.0
  %5186 = vmatpush1.msra.mxu0 0.0
  %5187 = vmatprep.subr.mxu0 0.0
  %5188 = vmatpush1.msra.mxu0 0.0
  %5189 = vmatprep.subr.mxu0 0.0
  %5190 = vmatpush1.msra.mxu0 0.0
  %5191 = vmatprep.subr.mxu0 0.0
  %5192 = vmatpush1.msra.mxu0 0.0
  %5193 = vmatprep.subr.mxu0 0.0
  %5194 = vmatpush1.msra.mxu0 0.0
  %5195 = vmatprep.subr.mxu0 0.0
  %5196 = vmatpush1.msra.mxu0 0.0
  %5197 = vmatprep.subr.mxu0 0.0
  %5198 = vmatpush1.msra.mxu0 0.0
  %5199 = vmatprep.subr.mxu0 0.0
  %5200 = vmatpush1.msra.mxu0 0.0
  %5201 = vmatprep.subr.mxu0 0.0
  %5202 = vmatpush1.msra.mxu0 0.0
  %5203 = vmatprep.subr.mxu0 0.0
  %5204 = vmatpush1.msra.mxu0 0.0
  %5205 = vmatprep.subr.mxu0 0.0
  %5206 = vmatpush1.msra.mxu0 0.0
  %5207 = vmatprep.subr.mxu0 0.0
  %5208 = vmatpush1.msra.mxu0 0.0
  %5209 = vmatprep.subr.mxu0 0.0
  %5210 = vmatpush1.msra.mxu0 0.0
  %5211 = vmatprep.subr.mxu0 0.0
  %5212 = vmatpush1.msra.mxu0 0.0
  %5213 = vmatprep.subr.mxu0 0.0
  %5214 = vmatpush1.msra.mxu0 0.0
  %5215 = vmatprep.subr.mxu0 0.0
  %5216 = vmatpush1.msra.mxu0 0.0
  %5217 = vmatprep.subr.mxu0 0.0
  %5218 = vmatpush1.msra.mxu0 0.0
  %5219 = vmatprep.subr.mxu0 0.0
  %5220 = vmatpush1.msra.mxu0 0.0
  %5221 = vmatprep.subr.mxu0 0.0
  %5222 = vmatpush1.msra.mxu0 0.0
  %5223 = vmatprep.subr.mxu0 0.0
  %5224 = vmatpush1.msra.mxu0 0.0
  %5225 = vmatprep.mubr.f32.mxu0 0.0
  %5226 = vmatmul.mubr.f32.gmra.mrb[0].mxu0 %v5159
  %v5227 = vpop.f32.mrb[0].mxu0
  %v5228 = vadd.f32 0.0, %v5227
  %v5229 = vpop.f32.mrb[0].mxu0
  %5230 = vdwg.mxu0
  %v5231 = vadd.f32 %v5152, %v5228
  %v5232 = vmax.f32 %v3486, %v3488
  %v5233 = vmax.f32 %v5232, %v3770
  %v5234 = vmax.f32 %v5233, %v3772
  %v5235 = vadd.f32 %v5234, %v4365
  %v5236 = vtanh.pop %v5235
  %v5238 = vsel %vm4374, %v4354, 0
  %5240 = vmatprep.subr.mxu0 0.0
  %5241 = vmatpush1.msra.mxu0 %v5236
  %5242 = vmatprep.subr.mxu0 0.0
  %5243 = vmatpush1.msra.mxu0 0.0
  %5244 = vmatprep.subr.mxu0 0.0
  %5245 = vmatpush1.msra.mxu0 0.0
  %5246 = vmatprep.subr.mxu0 0.0
  %5247 = vmatpush1.msra.mxu0 0.0
  %5248 = vmatprep.subr.mxu0 0.0
  %5249 = vmatpush1.msra.mxu0 0.0
  %5250 = vmatprep.subr.mxu0 0.0
  %5251 = vmatpush1.msra.mxu0 0.0
  %5252 = vmatprep.subr.mxu0 0.0
  %5253 = vmatpush1.msra.mxu0 0.0
  %5254 = vmatprep.subr.mxu0 0.0
  %5255 = vmatpush1.msra.mxu0 0.0
  %5256 = vmatprep.subr.mxu0 0.0
  %5257 = vmatpush1.msra.mxu0 0.0
  %5258 = vmatprep.subr.mxu0 0.0
  %5259 = vmatpush1.msra.mxu0 0.0
  %5260 = vmatprep.subr.mxu0 0.0
  %5261 = vmatpush1.msra.mxu0 0.0
  %5262 = vmatprep.subr.mxu0 0.0
  %5263 = vmatpush1.msra.mxu0 0.0
  %5264 = vmatprep.subr.mxu0 0.0
  %5265 = vmatpush1.msra.mxu0 0.0
  %5266 = vmatprep.subr.mxu0 0.0
  %5267 = vmatpush1.msra.mxu0 0.0
  %5268 = vmatprep.subr.mxu0 0.0
  %5269 = vmatpush1.msra.mxu0 0.0
  %5270 = vmatprep.subr.mxu0 0.0
  %5271 = vmatpush1.msra.mxu0 0.0
  %5272 = vmatprep.subr.mxu0 0.0
  %5273 = vmatpush1.msra.mxu0 0.0
  %5274 = vmatprep.subr.mxu0 0.0
  %5275 = vmatpush1.msra.mxu0 0.0
  %5276 = vmatprep.subr.mxu0 0.0
  %5277 = vmatpush1.msra.mxu0 0.0
  %5278 = vmatprep.subr.mxu0 0.0
  %5279 = vmatpush1.msra.mxu0 0.0
  %5280 = vmatprep.subr.mxu0 0.0
  %5281 = vmatpush1.msra.mxu0 0.0
  %5282 = vmatprep.subr.mxu0 0.0
  %5283 = vmatpush1.msra.mxu0 0.0
  %5284 = vmatprep.subr.mxu0 0.0
  %5285 = vmatpush1.msra.mxu0 0.0
  %5286 = vmatprep.subr.mxu0 0.0
  %5287 = vmatpush1.msra.mxu0 0.0
  %5288 = vmatprep.subr.mxu0 0.0
  %5289 = vmatpush1.msra.mxu0 0.0
  %5290 = vmatprep.subr.mxu0 0.0
  %5291 = vmatpush1.msra.mxu0 0.0
  %5292 = vmatprep.subr.mxu0 0.0
  %5293 = vmatpush1.msra.mxu0 0.0
  %5294 = vmatprep.subr.mxu0 0.0
  %5295 = vmatpush1.msra.mxu0 0.0
  %5296 = vmatprep.subr.mxu0 0.0
  %5297 = vmatpush1.msra.mxu0 0.0
  %5298 = vmatprep.subr.mxu0 0.0
  %5299 = vmatpush1.msra.mxu0 0.0
  %5300 = vmatprep.subr.mxu0 0.0
  %5301 = vmatpush1.msra.mxu0 0.0
  %5302 = vmatprep.subr.mxu0 0.0
  %5303 = vmatpush1.msra.mxu0 0.0
  %5304 = vmatprep.mubr.f32.mxu0 0.0
  %5305 = vmatmul.mubr.f32.gmra.mrb[0].mxu0 %v5238
  %v5306 = vpop.f32.mrb[0].mxu0
  %v5307 = vadd.f32 0.0, %v5306
  %v5308 = vpop.f32.mrb[0].mxu0
  %5309 = vdwg.mxu0
  %v5310 = vadd.f32 %v5231, %v5307
  %v5311 = vmax.f32 %v3841, %v3843
  %v5312 = vmax.f32 %v5311, %v4125
  %v5313 = vmax.f32 %v5312, %v4127
  %v5314 = vadd.f32 %v5313, %v4365
  %v5315 = vtanh.pop %v5314
  %v5317 = vsel %vm4374, %v4355, 0
  %5319 = vmatprep.subr.mxu0 0.0
  %5320 = vmatpush1.msra.mxu0 %v5315
  %5321 = vmatprep.subr.mxu0 0.0
  %5322 = vmatpush1.msra.mxu0 0.0
  %5323 = vmatprep.subr.mxu0 0.0
  %5324 = vmatpush1.msra.mxu0 0.0
  %5325 = vmatprep.subr.mxu0 0.0
  %5326 = vmatpush1.msra.mxu0 0.0
  %5327 = vmatprep.subr.mxu0 0.0
  %5328 = vmatpush1.msra.mxu0 0.0
  %5329 = vmatprep.subr.mxu0 0.0
  %5330 = vmatpush1.msra.mxu0 0.0
  %5331 = vmatprep.subr.mxu0 0.0
  %5332 = vmatpush1.msra.mxu0 0.0
  %5333 = vmatprep.subr.mxu0 0.0
  %5334 = vmatpush1.msra.mxu0 0.0
  %5335 = vmatprep.subr.mxu0 0.0
  %5336 = vmatpush1.msra.mxu0 0.0
  %5337 = vmatprep.subr.mxu0 0.0
  %5338 = vmatpush1.msra.mxu0 0.0
  %5339 = vmatprep.subr.mxu0 0.0
  %5340 = vmatpush1.msra.mxu0 0.0
  %5341 = vmatprep.subr.mxu0 0.0
  %5342 = vmatpush1.msra.mxu0 0.0
  %5343 = vmatprep.subr.mxu0 0.0
  %5344 = vmatpush1.msra.mxu0 0.0
  %5345 = vmatprep.subr.mxu0 0.0
  %5346 = vmatpush1.msra.mxu0 0.0
  %5347 = vmatprep.subr.mxu0 0.0
  %5348 = vmatpush1.msra.mxu0 0.0
  %5349 = vmatprep.subr.mxu0 0.0
  %5350 = vmatpush1.msra.mxu0 0.0
  %5351 = vmatprep.subr.mxu0 0.0
  %5352 = vmatpush1.msra.mxu0 0.0
  %5353 = vmatprep.subr.mxu0 0.0
  %5354 = vmatpush1.msra.mxu0 0.0
  %5355 = vmatprep.subr.mxu0 0.0
  %5356 = vmatpush1.msra.mxu0 0.0
  %5357 = vmatprep.subr.mxu0 0.0
  %5358 = vmatpush1.msra.mxu0 0.0
  %5359 = vmatprep.subr.mxu0 0.0
  %5360 = vmatpush1.msra.mxu0 0.0
  %5361 = vmatprep.subr.mxu0 0.0
  %5362 = vmatpush1.msra.mxu0 0.0
  %5363 = vmatprep.subr.mxu0 0.0
  %5364 = vmatpush1.msra.mxu0 0.0
  %5365 = vmatprep.subr.mxu0 0.0
  %5366 = vmatpush1.msra.mxu0 0.0
  %5367 = vmatprep.subr.mxu0 0.0
  %5368 = vmatpush1.msra.mxu0 0.0
  %5369 = vmatprep.subr.mxu0 0.0
  %5370 = vmatpush1.msra.mxu0 0.0
  %5371 = vmatprep.subr.mxu0 0.0
  %5372 = vmatpush1.msra.mxu0 0.0
  %5373 = vmatprep.subr.mxu0 0.0
  %5374 = vmatpush1.msra.mxu0 0.0
  %5375 = vmatprep.subr.mxu0 0.0
  %5376 = vmatpush1.msra.mxu0 0.0
  %5377 = vmatprep.subr.mxu0 0.0
  %5378 = vmatpush1.msra.mxu0 0.0
  %5379 = vmatprep.subr.mxu0 0.0
  %5380 = vmatpush1.msra.mxu0 0.0
  %5381 = vmatprep.subr.mxu0 0.0
  %5382 = vmatpush1.msra.mxu0 0.0
  %5383 = vmatprep.mubr.f32.mxu0 0.0
  %5384 = vmatmul.mubr.f32.gmra.mrb[0].mxu0 %v5317
  %v5385 = vpop.f32.mrb[0].mxu0
  %v5386 = vadd.f32 0.0, %v5385
  %v5387 = vpop.f32.mrb[0].mxu0
  %5388 = vdwg.mxu0
  %v5389 = vadd.f32 %v5310, %v5386
  %v5390 = vmax.f32 %v3912, %v3914
  %v5391 = vmax.f32 %v5390, %v4196
  %v5392 = vmax.f32 %v5391, %v4198
  %v5393 = vadd.f32 %v5392, %v4365
  %v5394 = vtanh.pop %v5393
  %v5396 = vsel %vm4374, %v4356, 0
  %5398 = vmatprep.subr.mxu0 0.0
  %5399 = vmatpush1.msra.mxu0 %v5394
  %5400 = vmatprep.subr.mxu0 0.0
  %5401 = vmatpush1.msra.mxu0 0.0
  %5402 = vmatprep.subr.mxu0 0.0
  %5403 = vmatpush1.msra.mxu0 0.0
  %5404 = vmatprep.subr.mxu0 0.0
  %5405 = vmatpush1.msra.mxu0 0.0
  %5406 = vmatprep.subr.mxu0 0.0
  %5407 = vmatpush1.msra.mxu0 0.0
  %5408 = vmatprep.subr.mxu0 0.0
  %5409 = vmatpush1.msra.mxu0 0.0
  %5410 = vmatprep.subr.mxu0 0.0
  %5411 = vmatpush1.msra.mxu0 0.0
  %5412 = vmatprep.subr.mxu0 0.0
  %5413 = vmatpush1.msra.mxu0 0.0
  %5414 = vmatprep.subr.mxu0 0.0
  %5415 = vmatpush1.msra.mxu0 0.0
  %5416 = vmatprep.subr.mxu0 0.0
  %5417 = vmatpush1.msra.mxu0 0.0
  %5418 = vmatprep.subr.mxu0 0.0
  %5419 = vmatpush1.msra.mxu0 0.0
  %5420 = vmatprep.subr.mxu0 0.0
  %5421 = vmatpush1.msra.mxu0 0.0
  %5422 = vmatprep.subr.mxu0 0.0
  %5423 = vmatpush1.msra.mxu0 0.0
  %5424 = vmatprep.subr.mxu0 0.0
  %5425 = vmatpush1.msra.mxu0 0.0
  %5426 = vmatprep.subr.mxu0 0.0
  %5427 = vmatpush1.msra.mxu0 0.0
  %5428 = vmatprep.subr.mxu0 0.0
  %5429 = vmatpush1.msra.mxu0 0.0
  %5430 = vmatprep.subr.mxu0 0.0
  %5431 = vmatpush1.msra.mxu0 0.0
  %5432 = vmatprep.subr.mxu0 0.0
  %5433 = vmatpush1.msra.mxu0 0.0
  %5434 = vmatprep.subr.mxu0 0.0
  %5435 = vmatpush1.msra.mxu0 0.0
  %5436 = vmatprep.subr.mxu0 0.0
  %5437 = vmatpush1.msra.mxu0 0.0
  %5438 = vmatprep.subr.mxu0 0.0
  %5439 = vmatpush1.msra.mxu0 0.0
  %5440 = vmatprep.subr.mxu0 0.0
  %5441 = vmatpush1.msra.mxu0 0.0
  %5442 = vmatprep.subr.mxu0 0.0
  %5443 = vmatpush1.msra.mxu0 0.0
  %5444 = vmatprep.subr.mxu0 0.0
  %5445 = vmatpush1.msra.mxu0 0.0
  %5446 = vmatprep.subr.mxu0 0.0
  %5447 = vmatpush1.msra.mxu0 0.0
  %5448 = vmatprep.subr.mxu0 0.0
  %5449 = vmatpush1.msra.mxu0 0.0
  %5450 = vmatprep.subr.mxu0 0.0
  %5451 = vmatpush1.msra.mxu0 0.0
  %5452 = vmatprep.subr.mxu0 0.0
  %5453 = vmatpush1.msra.mxu0 0.0
  %5454 = vmatprep.subr.mxu0 0.0
  %5455 = vmatpush1.msra.mxu0 0.0
  %5456 = vmatprep.subr.mxu0 0.0
  %5457 = vmatpush1.msra.mxu0 0.0
  %5458 = vmatprep.subr.mxu0 0.0
  %5459 = vmatpush1.msra.mxu0 0.0
  %5460 = vmatprep.subr.mxu0 0.0
  %5461 = vmatpush1.msra.mxu0 0.0
  %5462 = vmatprep.mubr.f32.mxu0 0.0
  %5463 = vmatmul.mubr.f32.gmra.mrb[0].mxu0 %v5396
  %v5464 = vpop.f32.mrb[0].mxu0
  %v5465 = vadd.f32 0.0, %v5464
  %v5466 = vpop.f32.mrb[0].mxu0
  %5467 = vdwg.mxu0
  %v5468 = vadd.f32 %v5389, %v5465
  %v5469 = vmax.f32 %v3983, %v3985
  %v5470 = vmax.f32 %v5469, %v4267
  %v5471 = vmax.f32 %v5470, %v4269
  %v5472 = vadd.f32 %v5471, %v4365
  %v5473 = vtanh.pop %v5472
  %v5475 = vsel %vm4374, %v4357, 0
  %5477 = vmatprep.subr.mxu0 0.0
  %5478 = vmatpush1.msra.mxu0 %v5473
  %5479 = vmatprep.subr.mxu0 0.0
  %5480 = vmatpush1.msra.mxu0 0.0
  %5481 = vmatprep.subr.mxu0 0.0
  %5482 = vmatpush1.msra.mxu0 0.0
  %5483 = vmatprep.subr.mxu0 0.0
  %5484 = vmatpush1.msra.mxu0 0.0
  %5485 = vmatprep.subr.mxu0 0.0
  %5486 = vmatpush1.msra.mxu0 0.0
  %5487 = vmatprep.subr.mxu0 0.0
  %5488 = vmatpush1.msra.mxu0 0.0
  %5489 = vmatprep.subr.mxu0 0.0
  %5490 = vmatpush1.msra.mxu0 0.0
  %5491 = vmatprep.subr.mxu0 0.0
  %5492 = vmatpush1.msra.mxu0 0.0
  %5493 = vmatprep.subr.mxu0 0.0
  %5494 = vmatpush1.msra.mxu0 0.0
  %5495 = vmatprep.subr.mxu0 0.0
  %5496 = vmatpush1.msra.mxu0 0.0
  %5497 = vmatprep.subr.mxu0 0.0
  %5498 = vmatpush1.msra.mxu0 0.0
  %5499 = vmatprep.subr.mxu0 0.0
  %5500 = vmatpush1.msra.mxu0 0.0
  %5501 = vmatprep.subr.mxu0 0.0
  %5502 = vmatpush1.msra.mxu0 0.0
  %5503 = vmatprep.subr.mxu0 0.0
  %5504 = vmatpush1.msra.mxu0 0.0
  %5505 = vmatprep.subr.mxu0 0.0
  %5506 = vmatpush1.msra.mxu0 0.0
  %5507 = vmatprep.subr.mxu0 0.0
  %5508 = vmatpush1.msra.mxu0 0.0
  %5509 = vmatprep.subr.mxu0 0.0
  %5510 = vmatpush1.msra.mxu0 0.0
  %5511 = vmatprep.subr.mxu0 0.0
  %5512 = vmatpush1.msra.mxu0 0.0
  %5513 = vmatprep.subr.mxu0 0.0
  %5514 = vmatpush1.msra.mxu0 0.0
  %5515 = vmatprep.subr.mxu0 0.0
  %5516 = vmatpush1.msra.mxu0 0.0
  %5517 = vmatprep.subr.mxu0 0.0
  %5518 = vmatpush1.msra.mxu0 0.0
  %5519 = vmatprep.subr.mxu0 0.0
  %5520 = vmatpush1.msra.mxu0 0.0
  %5521 = vmatprep.subr.mxu0 0.0
  %5522 = vmatpush1.msra.mxu0 0.0
  %5523 = vmatprep.subr.mxu0 0.0
  %5524 = vmatpush1.msra.mxu0 0.0
  %5525 = vmatprep.subr.mxu0 0.0
  %5526 = vmatpush1.msra.mxu0 0.0
  %5527 = vmatprep.subr.mxu0 0.0
  %5528 = vmatpush1.msra.mxu0 0.0
  %5529 = vmatprep.subr.mxu0 0.0
  %5530 = vmatpush1.msra.mxu0 0.0
  %5531 = vmatprep.subr.mxu0 0.0
  %5532 = vmatpush1.msra.mxu0 0.0
  %5533 = vmatprep.subr.mxu0 0.0
  %5534 = vmatpush1.msra.mxu0 0.0
  %5535 = vmatprep.subr.mxu0 0.0
  %5536 = vmatpush1.msra.mxu0 0.0
  %5537 = vmatprep.subr.mxu0 0.0
  %5538 = vmatpush1.msra.mxu0 0.0
  %5539 = vmatprep.subr.mxu0 0.0
  %5540 = vmatpush1.msra.mxu0 0.0
  %5541 = vmatprep.mubr.f32.mxu0 0.0
  %5542 = vmatmul.mubr.f32.gmra.mrb[0].mxu0 %v5475
  %v5543 = vpop.f32.mrb[0].mxu0
  %v5544 = vadd.f32 0.0, %v5543
  %v5545 = vpop.f32.mrb[0].mxu0
  %5546 = vdwg.mxu0
  %v5547 = vadd.f32 %v5468, %v5544
  %v5548 = vmax.f32 %v4054, %v4056
  %v5549 = vmax.f32 %v5548, %v4338
  %v5550 = vmax.f32 %v5549, %v4340
  %v5551 = vadd.f32 %v5550, %v4365
  %v5552 = vtanh.pop %v5551
  %v5554 = vsel %vm4374, %v4358, 0
  %5556 = vmatprep.subr.mxu0 0.0
  %5557 = vmatpush1.msra.mxu0 %v5552
  %5558 = vmatprep.subr.mxu0 0.0
  %5559 = vmatpush1.msra.mxu0 0.0
  %5560 = vmatprep.subr.mxu0 0.0
  %5561 = vmatpush1.msra.mxu0 0.0
  %5562 = vmatprep.subr.mxu0 0.0
  %5563 = vmatpush1.msra.mxu0 0.0
  %5564 = vmatprep.subr.mxu0 0.0
  %5565 = vmatpush1.msra.mxu0 0.0
  %5566 = vmatprep.subr.mxu0 0.0
  %5567 = vmatpush1.msra.mxu0 0.0
  %5568 = vmatprep.subr.mxu0 0.0
  %5569 = vmatpush1.msra.mxu0 0.0
  %5570 = vmatprep.subr.mxu0 0.0
  %5571 = vmatpush1.msra.mxu0 0.0
  %5572 = vmatprep.subr.mxu0 0.0
  %5573 = vmatpush1.msra.mxu0 0.0
  %5574 = vmatprep.subr.mxu0 0.0
  %5575 = vmatpush1.msra.mxu0 0.0
  %5576 = vmatprep.subr.mxu0 0.0
  %5577 = vmatpush1.msra.mxu0 0.0
  %5578 = vmatprep.subr.mxu0 0.0
  %5579 = vmatpush1.msra.mxu0 0.0
  %5580 = vmatprep.subr.mxu0 0.0
  %5581 = vmatpush1.msra.mxu0 0.0
  %5582 = vmatprep.subr.mxu0 0.0
  %5583 = vmatpush1.msra.mxu0 0.0
  %5584 = vmatprep.subr.mxu0 0.0
  %5585 = vmatpush1.msra.mxu0 0.0
  %5586 = vmatprep.subr.mxu0 0.0
  %5587 = vmatpush1.msra.mxu0 0.0
  %5588 = vmatprep.subr.mxu0 0.0
  %5589 = vmatpush1.msra.mxu0 0.0
  %5590 = vmatprep.subr.mxu0 0.0
  %5591 = vmatpush1.msra.mxu0 0.0
  %5592 = vmatprep.subr.mxu0 0.0
  %5593 = vmatpush1.msra.mxu0 0.0
  %5594 = vmatprep.subr.mxu0 0.0
  %5595 = vmatpush1.msra.mxu0 0.0
  %5596 = vmatprep.subr.mxu0 0.0
  %5597 = vmatpush1.msra.mxu0 0.0
  %5598 = vmatprep.subr.mxu0 0.0
  %5599 = vmatpush1.msra.mxu0 0.0
  %5600 = vmatprep.subr.mxu0 0.0
  %5601 = vmatpush1.msra.mxu0 0.0
  %5602 = vmatprep.subr.mxu0 0.0
  %5603 = vmatpush1.msra.mxu0 0.0
  %5604 = vmatprep.subr.mxu0 0.0
  %5605 = vmatpush1.msra.mxu0 0.0
  %5606 = vmatprep.subr.mxu0 0.0
  %5607 = vmatpush1.msra.mxu0 0.0
  %5608 = vmatprep.subr.mxu0 0.0
  %5609 = vmatpush1.msra.mxu0 0.0
  %5610 = vmatprep.subr.mxu0 0.0
  %5611 = vmatpush1.msra.mxu0 0.0
  %5612 = vmatprep.subr.mxu0 0.0
  %5613 = vmatpush1.msra.mxu0 0.0
  %5614 = vmatprep.subr.mxu0 0.0
  %5615 = vmatpush1.msra.mxu0 0.0
  %5616 = vmatprep.subr.mxu0 0.0
  %5617 = vmatpush1.msra.mxu0 0.0
  %5618 = vmatprep.subr.mxu0 0.0
  %5619 = vmatpush1.msra.mxu0 0.0
  %5620 = vmatprep.mubr.f32.mxu0 0.0
  %5621 = vmatmul.mubr.f32.gmra.mrb[0].mxu0 %v5554
  %v5622 = vpop.f32.mrb[0].mxu0
  %v5623 = vadd.f32 0.0, %v5622
  %v5624 = vpop.f32.mrb[0].mxu0
  %5625 = vdwg.mxu0
  %v5626 = vadd.f32 %v5547, %v5623
  %v5627 = vld [vmem:[%s4] sm:$0xff]
  %5629 = vset.pattern.permute.xlu0 0
  %5630 = vperm.xlu0 %5629, %v5627
  %v5631 = vpop.permute.xlu0 %5630
  %v5633 = vadd.f32 %v5626, %v5631
  %5634 = vst [vmem:[%s5] sm:$0xff] %v5633
  // Predicated region
  $region22: #{_convnet_forward.1} parent=0 // pred_check
    _
  $region23: #{_convnet_forward.1} parent=0 // pred_check_branch
    %5636 = sbr.rel (0) target = $region25
  $region24: #{_convnet_forward.1} parent=0 // pred_region
    _
  $region25: #{_convnet_forward.1} parent=0 // pred_fallthru
    _
  // Predicated region
  $region26: #{_convnet_forward.1} parent=0 // pred_check
    _
  $region27: #{_convnet_forward.1} parent=0 // pred_check_branch
    %5638 = sbr.rel (0) target = $region29
  $region28: #{_convnet_forward.1} parent=0 // pred_region
    _
  $region29: #{_convnet_forward.1} parent=0 // pred_fallthru
    _

</llo_original>
